<compile_context>
chip_gen: v6e
topology: v6e:2x2x1
jax: 0.10.0
libtpu: 0.0.40
codegen_flags: <defaults>
</compile_context>

<pallas_src>
import numpy as np

import jax
import jax.numpy as jnp
from jax.experimental import pallas as pl
from jax.experimental.pallas import tpu as pltpu


NOUT_PAD = 128   # lane-dense output block width (sliced to n_actions in wrapper)


# ----------------------------------------------------------------------------
# Fused forward builder
# ----------------------------------------------------------------------------
def make_qnet_forward(board_size=10, n_frames=2, n_actions=4,
                      c1=16, c2=32, dense=64, tb=64):
    """Returns a jitted forward(kernel_params, x_nchw) -> (B, n_actions).

    tb = batch elements per grid step.  64 is a good default everywhere; v6e
    can go to 128+, and on v7x keep ceil(B/tb) >= 2 so both TensorCores work.
    """
    H = W = board_size
    HP, WP = H + 2, W + 2             # zero-padded spatial extent ('same' 3x3)
    K1, L1, L2 = WP * n_frames, WP * c1, WP * c2
    R = HP * tb                       # rows per grid block, row = i*tb + b
    MI = H * tb                       # interior rows (conv outputs / dense in)

    def kernel(x_ref, w1_ref, b1_ref, w2_ref, b2_ref,
               wd_ref, bd_ref, wo_ref, bo_ref, o_ref):
        # ---- Conv2D(c1, 3x3, same) + ReLU ---------------------------------
        # Banded weight w1_ref[di] carries all three column taps dj and zeros
        # the left/right padding columns, so one matmul per row shift suffices.
        x = x_ref[...].astype(jnp.bfloat16)                       # (R, K1)
        acc1 = jnp.zeros((MI, L1), jnp.float32)
        for di in range(3):
            acc1 += jnp.dot(x[di * tb:di * tb + MI, :], w1_ref[di],
                            preferred_element_type=jnp.float32)
        a1 = jnp.maximum(acc1 + b1_ref[...], 0.0)                 # (MI, L1) f32
        # re-insert the zero top/bottom padding rows for the next conv
        zrow = jnp.zeros((tb, L1), jnp.bfloat16)
        a1p = jnp.concatenate([zrow, a1.astype(jnp.bfloat16), zrow], axis=0)

        # ---- Conv2D(c2, 3x3, same) + ReLU ---------------------------------
        acc2 = jnp.zeros((MI, L2), jnp.float32)
        for di in range(3):
            acc2 += jnp.dot(a1p[di * tb:di * tb + MI, :], w2_ref[di],
                            preferred_element_type=jnp.float32)
        z2 = jnp.maximum(acc2 + b2_ref[...], 0.0).astype(jnp.bfloat16)  # (MI, L2)

        # ---- Flatten + Dense(64) + ReLU ------------------------------------
        # The PyTorch NCHW flatten order is folded into wd's row permutation,
        # so one K=WP*c2 matmul per board row accumulates the dense layer.
        dacc = jnp.zeros((tb, dense), jnp.float32)
        for y in range(H):
            dacc += jnp.dot(z2[y * tb:(y + 1) * tb, :], wd_ref[y],
                            preferred_element_type=jnp.float32)
        h = jnp.maximum(dacc + bd_ref[...], 0.0).astype(jnp.bfloat16)   # (tb, dense)

        # ---- output Linear(n_actions), lane-dense (padded to 128) ----------
        o_ref[...] = (jnp.dot(h, wo_ref[...], preferred_element_type=jnp.float32)
                      + bo_ref[...]).astype(o_ref.dtype)

    @jax.jit
    def forward(kp, x_nchw):
        B = x_nchw.shape[0]
        nt = -(-B // tb)
        Bp = nt * tb
        x = x_nchw.astype(jnp.float32)
        if Bp != B:
            x = jnp.pad(x, ((0, Bp - B), (0, 0), (0, 0), (0, 0)))
        # NCHW -> zero-padded NHWC -> rows ordered (tile, padded_row, batch),
        # lanes ordered (padded_column, channel)
        x = jnp.transpose(x, (0, 2, 3, 1))                         # (Bp, H, W, C)
        x = jnp.pad(x, ((0, 0), (1, 1), (1, 1), (0, 0)))           # (Bp, HP, WP, C)
        x = x.reshape(Bp, HP, K1).reshape(nt, tb, HP, K1)
        x = x.transpose(0, 2, 1, 3).reshape(nt * R, K1)

        grid_spec = pltpu.PrefetchScalarGridSpec(
            num_scalar_prefetch=0,
            grid=(nt,),
            in_specs=[
                pl.BlockSpec((R, K1), lambda i: (i, 0)),             # x
                pl.BlockSpec((3, K1, L1), lambda i: (0, 0, 0)),      # w1 (banded)
                pl.BlockSpec((1, L1), lambda i: (0, 0)),             # b1
                pl.BlockSpec((3, L1, L2), lambda i: (0, 0, 0)),      # w2 (banded)
                pl.BlockSpec((1, L2), lambda i: (0, 0)),             # b2
                pl.BlockSpec((H, L2, dense), lambda i: (0, 0, 0)),   # wd (per row)
                pl.BlockSpec((1, dense), lambda i: (0, 0)),          # bd
                pl.BlockSpec((dense, NOUT_PAD), lambda i: (0, 0)),   # wo (padded)
                pl.BlockSpec((1, NOUT_PAD), lambda i: (0, 0)),       # bo (padded)
            ],
            out_specs=pl.BlockSpec((tb, NOUT_PAD), lambda i: (i, 0)),
        )
        out = pl.pallas_call(
            kernel,
            out_shape=jax.ShapeDtypeStruct((Bp, NOUT_PAD), jnp.float32),
            grid_spec=grid_spec,
            compiler_params=pltpu.CompilerParams(
                dimension_semantics=("parallel",)),
        )(x, kp["w1"], kp["b1"], kp["w2"], kp["b2"],
          kp["wd"], kp["bd"], kp["wo"], kp["bo"])
        return out[:B, :n_actions]

    return forward


# ----------------------------------------------------------------------------
# Deterministic PyTorch-layout parameter init + one-time kernel weight prep
# ----------------------------------------------------------------------------
def _uniform(key, shape, fan_in):
    bound = 1.0 / float(np.sqrt(fan_in))
    return jax.random.uniform(key, shape, jnp.float32, -bound, bound)


def init_qnet_params(key, board_size=10, n_frames=2, n_actions=4,
                     c1=16, c2=32, dense=64):
    """Torch-default-style params: Conv2d OIHW weights, Linear stored (in, out)."""
    ks = jax.random.split(key, 8)
    flat = c2 * board_size * board_size
    return {
        "conv1_w": _uniform(ks[0], (c1, n_frames, 3, 3), n_frames * 9),
        "conv1_b": _uniform(ks[1], (c1,), n_frames * 9),
        "conv2_w": _uniform(ks[2], (c2, c1, 3, 3), c1 * 9),
        "conv2_b": _uniform(ks[3], (c2,), c1 * 9),
        "dense_w": _uniform(ks[4], (flat, dense), flat),
        "dense_b": _uniform(ks[5], (dense,), flat),
        "out_w": _uniform(ks[6], (dense, n_actions), dense),
        "out_b": _uniform(ks[7], (n_actions,), dense),
    }


def _conv_band(w_oihw, W, WP):
    """Banded per-row-shift conv weight: (3, WP*Cin, WP*Cout).

    band[di][(j+dj-1)*Cin + ci, j*Cout + co] = w[co, ci, di, dj] for interior
    output columns j in [1, W]; output columns 0 and WP-1 ('same' padding) stay
    all-zero so the conv output is already correctly zero left/right padded.
    """
    w = np.asarray(w_oihw, np.float32)                 # (Cout, Cin, 3, 3)
    c_out, c_in = w.shape[0], w.shape[1]
    band = np.zeros((3, WP * c_in, WP * c_out), np.float32)
    for di in range(3):
        for dj in range(3):
            blk = w[:, :, di, dj].T                    # (Cin, Cout)
            for j in range(1, W + 1):
                jin = j + dj - 1
                band[di, jin * c_in:(jin + 1) * c_in,
                     j * c_out:(j + 1) * c_out] = blk
    return band


def _col_bias(b, W, WP):
    """(1, WP*C) bias row, zero on the left/right padding columns."""
    b = np.asarray(b, np.float32)
    c = b.shape[0]
    out = np.zeros((1, WP * c), np.float32)
    out[0, c:(W + 1) * c] = np.tile(b, W)
    return out


def prepare_kernel_params(params, board_size=10, n_actions=4):
    """One-time conversion of PyTorch-layout params into kernel-ready matrices."""
    H = W = board_size
    WP = W + 2
    c2 = params["conv2_w"].shape[0]
    dense = params["dense_w"].shape[1]
    # dense rows: PyTorch NCHW-flatten order (c, y, x) -> per-board-row banded
    # layout wd[y, j*c2 + c, :] with j = x+1 and zero rows for padding columns.
    dw = np.asarray(params["dense_w"], np.float32).reshape(c2, H, W, dense)
    wd = np.zeros((H, WP * c2, dense), np.float32)
    wd[:, c2:(W + 1) * c2, :] = dw.transpose(1, 2, 0, 3).reshape(H, W * c2, dense)
    # output layer padded to a lane-dense 128-wide block (zeros sliced off later)
    wo = np.zeros((dense, NOUT_PAD), np.float32)
    wo[:, :n_actions] = np.asarray(params["out_w"], np.float32)
    bo = np.zeros((1, NOUT_PAD), np.float32)
    bo[0, :n_actions] = np.asarray(params["out_b"], np.float32)
    return {
        "w1": jnp.asarray(_conv_band(params["conv1_w"], W, WP), jnp.bfloat16),
        "b1": jnp.asarray(_col_bias(params["conv1_b"], W, WP), jnp.float32),
        "w2": jnp.asarray(_conv_band(params["conv2_w"], W, WP), jnp.bfloat16),
        "b2": jnp.asarray(_col_bias(params["conv2_b"], W, WP), jnp.float32),
        "wd": jnp.asarray(wd, jnp.bfloat16),
        "bd": jnp.asarray(params["dense_b"], jnp.float32).reshape(1, -1),
        "wo": jnp.asarray(wo, jnp.bfloat16),
        "bo": jnp.asarray(bo, jnp.float32),
    }


if __name__ == "__main__":
    board_size, n_frames, n_actions = 10, 2, 4
    batch = 4

    key = jax.random.PRNGKey(0)
    k_params, k_x = jax.random.split(key)
    params = init_qnet_params(k_params, board_size, n_frames, n_actions)
    kparams = prepare_kernel_params(params, board_size, n_actions)

    qnet_forward = make_qnet_forward(board_size, n_frames, n_actions)

    x = jax.random.uniform(
        k_x, (batch, n_frames, board_size, board_size), jnp.float32
    )

    out = qnet_forward(kparams, x)
    out = jax.block_until_ready(out)
    assert out.shape == (batch, n_actions), out.shape
    print("KERNEL_OK")
</pallas_src>

<mosaic_0001>
module attributes {stable_mosaic.version = 11 : i64} {
  func.func @kernel(%arg0: i32, %arg1: memref<768x24xf32, #tpu.memory_space<vmem>>, %arg2: memref<3x24x192xbf16, #tpu.memory_space<vmem>>, %arg3: memref<1x192xf32, #tpu.memory_space<vmem>>, %arg4: memref<3x192x384xbf16, #tpu.memory_space<vmem>>, %arg5: memref<1x384xf32, #tpu.memory_space<vmem>>, %arg6: memref<10x384x64xbf16, #tpu.memory_space<vmem>>, %arg7: memref<1x64xf32, #tpu.memory_space<vmem>>, %arg8: memref<64x128xbf16, #tpu.memory_space<vmem>>, %arg9: memref<1x128xf32, #tpu.memory_space<vmem>>, %arg10: memref<64x128xf32, #tpu.memory_space<vmem>>) attributes {dimension_semantics = [#tpu.dimension_semantics<parallel>], iteration_bounds = array<i64: 1>, scalar_prefetch = 0 : i64, scratch_operands = 0 : i64, tpu.core_type = #tpu.core_type<tc>, window_params = [{transform_indices = @transform_0, window_bounds = array<i64: 768, 24>}, {pipeline_mode = #tpu.pipeline_mode<synchronous>, transform_indices = @transform_1, window_bounds = array<i64: 3, 24, 192>}, {pipeline_mode = #tpu.pipeline_mode<synchronous>, transform_indices = @transform_2, window_bounds = array<i64: 1, 192>}, {pipeline_mode = #tpu.pipeline_mode<synchronous>, transform_indices = @transform_3, window_bounds = array<i64: 3, 192, 384>}, {pipeline_mode = #tpu.pipeline_mode<synchronous>, transform_indices = @transform_4, window_bounds = array<i64: 1, 384>}, {pipeline_mode = #tpu.pipeline_mode<synchronous>, transform_indices = @transform_5, window_bounds = array<i64: 10, 384, 64>}, {pipeline_mode = #tpu.pipeline_mode<synchronous>, transform_indices = @transform_6, window_bounds = array<i64: 1, 64>}, {pipeline_mode = #tpu.pipeline_mode<synchronous>, transform_indices = @transform_7, window_bounds = array<i64: 64, 128>}, {pipeline_mode = #tpu.pipeline_mode<synchronous>, transform_indices = @transform_8, window_bounds = array<i64: 1, 128>}, {transform_indices = @transform_9, window_bounds = array<i64: 64, 128>}]} {
    %c0 = arith.constant 0 : index
    %c0_0 = arith.constant 0 : index
    %0 = vector.load %arg1[%c0, %c0_0] : memref<768x24xf32, #tpu.memory_space<vmem>>, vector<768x24xf32>
    %1 = arith.truncf %0 : vector<768x24xf32> to vector<768x24xbf16>
    %cst = arith.constant 0.000000e+00 : f32
    %2 = vector.broadcast %cst : f32 to vector<640x192xf32>
    %3 = vector.extract_strided_slice %1 {offsets = [0, 0], sizes = [640, 24], strides = [1, 1]} : vector<768x24xbf16> to vector<640x24xbf16>
    %c0_1 = arith.constant 0 : index
    %c0_2 = arith.constant 0 : index
    %c0_3 = arith.constant 0 : index
    %4 = vector.load %arg2[%c0_1, %c0_2, %c0_3] : memref<3x24x192xbf16, #tpu.memory_space<vmem>>, vector<1x24x192xbf16>
    %5 = vector.shape_cast %4 : vector<1x24x192xbf16> to vector<24x192xbf16>
    %cst_4 = arith.constant dense<0.000000e+00> : vector<640x192xf32>
    %6 = tpu.matmul %3, %5, %cst_4 {dimension_numbers = #tpu.dot_dimension_numbers<[1], [0], [0], [1], [0, 0, 1, 1], [], []>} : vector<640x24xbf16>, vector<24x192xbf16>, vector<640x192xf32> -> vector<640x192xf32>
    %7 = arith.addf %2, %6 : vector<640x192xf32>
    %8 = vector.extract_strided_slice %1 {offsets = [64, 0], sizes = [640, 24], strides = [1, 1]} : vector<768x24xbf16> to vector<640x24xbf16>
    %c1 = arith.constant 1 : index
    %c0_5 = arith.constant 0 : index
    %c0_6 = arith.constant 0 : index
    %9 = vector.load %arg2[%c1, %c0_5, %c0_6] : memref<3x24x192xbf16, #tpu.memory_space<vmem>>, vector<1x24x192xbf16>
    %10 = vector.shape_cast %9 : vector<1x24x192xbf16> to vector<24x192xbf16>
    %cst_7 = arith.constant dense<0.000000e+00> : vector<640x192xf32>
    %11 = tpu.matmul %8, %10, %cst_7 {dimension_numbers = #tpu.dot_dimension_numbers<[1], [0], [0], [1], [0, 0, 1, 1], [], []>} : vector<640x24xbf16>, vector<24x192xbf16>, vector<640x192xf32> -> vector<640x192xf32>
    %12 = arith.addf %7, %11 : vector<640x192xf32>
    %13 = vector.extract_strided_slice %1 {offsets = [128, 0], sizes = [640, 24], strides = [1, 1]} : vector<768x24xbf16> to vector<640x24xbf16>
    %c2 = arith.constant 2 : index
    %c0_8 = arith.constant 0 : index
    %c0_9 = arith.constant 0 : index
    %14 = vector.load %arg2[%c2, %c0_8, %c0_9] : memref<3x24x192xbf16, #tpu.memory_space<vmem>>, vector<1x24x192xbf16>
    %15 = vector.shape_cast %14 : vector<1x24x192xbf16> to vector<24x192xbf16>
    %cst_10 = arith.constant dense<0.000000e+00> : vector<640x192xf32>
    %16 = tpu.matmul %13, %15, %cst_10 {dimension_numbers = #tpu.dot_dimension_numbers<[1], [0], [0], [1], [0, 0, 1, 1], [], []>} : vector<640x24xbf16>, vector<24x192xbf16>, vector<640x192xf32> -> vector<640x192xf32>
    %17 = arith.addf %12, %16 : vector<640x192xf32>
    %c0_11 = arith.constant 0 : index
    %c0_12 = arith.constant 0 : index
    %18 = vector.load %arg3[%c0_11, %c0_12] : memref<1x192xf32, #tpu.memory_space<vmem>>, vector<1x192xf32>
    %19 = vector.broadcast %18 : vector<1x192xf32> to vector<640x192xf32>
    %20 = arith.addf %17, %19 : vector<640x192xf32>
    %cst_13 = arith.constant 0.000000e+00 : f32
    %21 = vector.broadcast %cst_13 : f32 to vector<640x192xf32>
    %22 = arith.maximumf %20, %21 : vector<640x192xf32>
    %cst_14 = arith.constant 0.000000e+00 : bf16
    %23 = vector.broadcast %cst_14 : bf16 to vector<64x192xbf16>
    %24 = arith.truncf %22 : vector<640x192xf32> to vector<640x192xbf16>
    %25 = tpu.concatenate %23, %24, %23 in 0 : vector<64x192xbf16>, vector<640x192xbf16>, vector<64x192xbf16> -> vector<768x192xbf16>
    %cst_15 = arith.constant 0.000000e+00 : f32
    %26 = vector.broadcast %cst_15 : f32 to vector<640x384xf32>
    %27 = vector.extract_strided_slice %25 {offsets = [0, 0], sizes = [640, 192], strides = [1, 1]} : vector<768x192xbf16> to vector<640x192xbf16>
    %c0_16 = arith.constant 0 : index
    %c0_17 = arith.constant 0 : index
    %c0_18 = arith.constant 0 : index
    %28 = vector.load %arg4[%c0_16, %c0_17, %c0_18] : memref<3x192x384xbf16, #tpu.memory_space<vmem>>, vector<1x192x384xbf16>
    %29 = vector.shape_cast %28 : vector<1x192x384xbf16> to vector<192x384xbf16>
    %cst_19 = arith.constant dense<0.000000e+00> : vector<640x384xf32>
    %30 = tpu.matmul %27, %29, %cst_19 {dimension_numbers = #tpu.dot_dimension_numbers<[1], [0], [0], [1], [0, 0, 1, 1], [], []>} : vector<640x192xbf16>, vector<192x384xbf16>, vector<640x384xf32> -> vector<640x384xf32>
    %31 = arith.addf %26, %30 : vector<640x384xf32>
    %32 = vector.extract_strided_slice %25 {offsets = [64, 0], sizes = [640, 192], strides = [1, 1]} : vector<768x192xbf16> to vector<640x192xbf16>
    %c1_20 = arith.constant 1 : index
    %c0_21 = arith.constant 0 : index
    %c0_22 = arith.constant 0 : index
    %33 = vector.load %arg4[%c1_20, %c0_21, %c0_22] : memref<3x192x384xbf16, #tpu.memory_space<vmem>>, vector<1x192x384xbf16>
    %34 = vector.shape_cast %33 : vector<1x192x384xbf16> to vector<192x384xbf16>
    %cst_23 = arith.constant dense<0.000000e+00> : vector<640x384xf32>
    %35 = tpu.matmul %32, %34, %cst_23 {dimension_numbers = #tpu.dot_dimension_numbers<[1], [0], [0], [1], [0, 0, 1, 1], [], []>} : vector<640x192xbf16>, vector<192x384xbf16>, vector<640x384xf32> -> vector<640x384xf32>
    %36 = arith.addf %31, %35 : vector<640x384xf32>
    %37 = vector.extract_strided_slice %25 {offsets = [128, 0], sizes = [640, 192], strides = [1, 1]} : vector<768x192xbf16> to vector<640x192xbf16>
    %c2_24 = arith.constant 2 : index
    %c0_25 = arith.constant 0 : index
    %c0_26 = arith.constant 0 : index
    %38 = vector.load %arg4[%c2_24, %c0_25, %c0_26] : memref<3x192x384xbf16, #tpu.memory_space<vmem>>, vector<1x192x384xbf16>
    %39 = vector.shape_cast %38 : vector<1x192x384xbf16> to vector<192x384xbf16>
    %cst_27 = arith.constant dense<0.000000e+00> : vector<640x384xf32>
    %40 = tpu.matmul %37, %39, %cst_27 {dimension_numbers = #tpu.dot_dimension_numbers<[1], [0], [0], [1], [0, 0, 1, 1], [], []>} : vector<640x192xbf16>, vector<192x384xbf16>, vector<640x384xf32> -> vector<640x384xf32>
    %41 = arith.addf %36, %40 : vector<640x384xf32>
    %c0_28 = arith.constant 0 : index
    %c0_29 = arith.constant 0 : index
    %42 = vector.load %arg5[%c0_28, %c0_29] : memref<1x384xf32, #tpu.memory_space<vmem>>, vector<1x384xf32>
    %43 = vector.broadcast %42 : vector<1x384xf32> to vector<640x384xf32>
    %44 = arith.addf %41, %43 : vector<640x384xf32>
    %cst_30 = arith.constant 0.000000e+00 : f32
    %45 = vector.broadcast %cst_30 : f32 to vector<640x384xf32>
    %46 = arith.maximumf %44, %45 : vector<640x384xf32>
    %47 = arith.truncf %46 : vector<640x384xf32> to vector<640x384xbf16>
    %cst_31 = arith.constant 0.000000e+00 : f32
    %48 = vector.broadcast %cst_31 : f32 to vector<64x64xf32>
    %49 = vector.extract_strided_slice %47 {offsets = [0, 0], sizes = [64, 384], strides = [1, 1]} : vector<640x384xbf16> to vector<64x384xbf16>
    %c0_32 = arith.constant 0 : index
    %c0_33 = arith.constant 0 : index
    %c0_34 = arith.constant 0 : index
    %50 = vector.load %arg6[%c0_32, %c0_33, %c0_34] : memref<10x384x64xbf16, #tpu.memory_space<vmem>>, vector<1x384x64xbf16>
    %51 = vector.shape_cast %50 : vector<1x384x64xbf16> to vector<384x64xbf16>
    %cst_35 = arith.constant dense<0.000000e+00> : vector<64x64xf32>
    %52 = tpu.matmul %49, %51, %cst_35 {dimension_numbers = #tpu.dot_dimension_numbers<[1], [0], [0], [1], [0, 0, 1, 1], [], []>} : vector<64x384xbf16>, vector<384x64xbf16>, vector<64x64xf32> -> vector<64x64xf32>
    %53 = arith.addf %48, %52 : vector<64x64xf32>
    %54 = vector.extract_strided_slice %47 {offsets = [64, 0], sizes = [64, 384], strides = [1, 1]} : vector<640x384xbf16> to vector<64x384xbf16>
    %c1_36 = arith.constant 1 : index
    %c0_37 = arith.constant 0 : index
    %c0_38 = arith.constant 0 : index
    %55 = vector.load %arg6[%c1_36, %c0_37, %c0_38] : memref<10x384x64xbf16, #tpu.memory_space<vmem>>, vector<1x384x64xbf16>
    %56 = vector.shape_cast %55 : vector<1x384x64xbf16> to vector<384x64xbf16>
    %cst_39 = arith.constant dense<0.000000e+00> : vector<64x64xf32>
    %57 = tpu.matmul %54, %56, %cst_39 {dimension_numbers = #tpu.dot_dimension_numbers<[1], [0], [0], [1], [0, 0, 1, 1], [], []>} : vector<64x384xbf16>, vector<384x64xbf16>, vector<64x64xf32> -> vector<64x64xf32>
    %58 = arith.addf %53, %57 : vector<64x64xf32>
    %59 = vector.extract_strided_slice %47 {offsets = [128, 0], sizes = [64, 384], strides = [1, 1]} : vector<640x384xbf16> to vector<64x384xbf16>
    %c2_40 = arith.constant 2 : index
    %c0_41 = arith.constant 0 : index
    %c0_42 = arith.constant 0 : index
    %60 = vector.load %arg6[%c2_40, %c0_41, %c0_42] : memref<10x384x64xbf16, #tpu.memory_space<vmem>>, vector<1x384x64xbf16>
    %61 = vector.shape_cast %60 : vector<1x384x64xbf16> to vector<384x64xbf16>
    %cst_43 = arith.constant dense<0.000000e+00> : vector<64x64xf32>
    %62 = tpu.matmul %59, %61, %cst_43 {dimension_numbers = #tpu.dot_dimension_numbers<[1], [0], [0], [1], [0, 0, 1, 1], [], []>} : vector<64x384xbf16>, vector<384x64xbf16>, vector<64x64xf32> -> vector<64x64xf32>
    %63 = arith.addf %58, %62 : vector<64x64xf32>
    %64 = vector.extract_strided_slice %47 {offsets = [192, 0], sizes = [64, 384], strides = [1, 1]} : vector<640x384xbf16> to vector<64x384xbf16>
    %c3 = arith.constant 3 : index
    %c0_44 = arith.constant 0 : index
    %c0_45 = arith.constant 0 : index
    %65 = vector.load %arg6[%c3, %c0_44, %c0_45] : memref<10x384x64xbf16, #tpu.memory_space<vmem>>, vector<1x384x64xbf16>
    %66 = vector.shape_cast %65 : vector<1x384x64xbf16> to vector<384x64xbf16>
    %cst_46 = arith.constant dense<0.000000e+00> : vector<64x64xf32>
    %67 = tpu.matmul %64, %66, %cst_46 {dimension_numbers = #tpu.dot_dimension_numbers<[1], [0], [0], [1], [0, 0, 1, 1], [], []>} : vector<64x384xbf16>, vector<384x64xbf16>, vector<64x64xf32> -> vector<64x64xf32>
    %68 = arith.addf %63, %67 : vector<64x64xf32>
    %69 = vector.extract_strided_slice %47 {offsets = [256, 0], sizes = [64, 384], strides = [1, 1]} : vector<640x384xbf16> to vector<64x384xbf16>
    %c4 = arith.constant 4 : index
    %c0_47 = arith.constant 0 : index
    %c0_48 = arith.constant 0 : index
    %70 = vector.load %arg6[%c4, %c0_47, %c0_48] : memref<10x384x64xbf16, #tpu.memory_space<vmem>>, vector<1x384x64xbf16>
    %71 = vector.shape_cast %70 : vector<1x384x64xbf16> to vector<384x64xbf16>
    %cst_49 = arith.constant dense<0.000000e+00> : vector<64x64xf32>
    %72 = tpu.matmul %69, %71, %cst_49 {dimension_numbers = #tpu.dot_dimension_numbers<[1], [0], [0], [1], [0, 0, 1, 1], [], []>} : vector<64x384xbf16>, vector<384x64xbf16>, vector<64x64xf32> -> vector<64x64xf32>
    %73 = arith.addf %68, %72 : vector<64x64xf32>
    %74 = vector.extract_strided_slice %47 {offsets = [320, 0], sizes = [64, 384], strides = [1, 1]} : vector<640x384xbf16> to vector<64x384xbf16>
    %c5 = arith.constant 5 : index
    %c0_50 = arith.constant 0 : index
    %c0_51 = arith.constant 0 : index
    %75 = vector.load %arg6[%c5, %c0_50, %c0_51] : memref<10x384x64xbf16, #tpu.memory_space<vmem>>, vector<1x384x64xbf16>
    %76 = vector.shape_cast %75 : vector<1x384x64xbf16> to vector<384x64xbf16>
    %cst_52 = arith.constant dense<0.000000e+00> : vector<64x64xf32>
    %77 = tpu.matmul %74, %76, %cst_52 {dimension_numbers = #tpu.dot_dimension_numbers<[1], [0], [0], [1], [0, 0, 1, 1], [], []>} : vector<64x384xbf16>, vector<384x64xbf16>, vector<64x64xf32> -> vector<64x64xf32>
    %78 = arith.addf %73, %77 : vector<64x64xf32>
    %79 = vector.extract_strided_slice %47 {offsets = [384, 0], sizes = [64, 384], strides = [1, 1]} : vector<640x384xbf16> to vector<64x384xbf16>
    %c6 = arith.constant 6 : index
    %c0_53 = arith.constant 0 : index
    %c0_54 = arith.constant 0 : index
    %80 = vector.load %arg6[%c6, %c0_53, %c0_54] : memref<10x384x64xbf16, #tpu.memory_space<vmem>>, vector<1x384x64xbf16>
    %81 = vector.shape_cast %80 : vector<1x384x64xbf16> to vector<384x64xbf16>
    %cst_55 = arith.constant dense<0.000000e+00> : vector<64x64xf32>
    %82 = tpu.matmul %79, %81, %cst_55 {dimension_numbers = #tpu.dot_dimension_numbers<[1], [0], [0], [1], [0, 0, 1, 1], [], []>} : vector<64x384xbf16>, vector<384x64xbf16>, vector<64x64xf32> -> vector<64x64xf32>
    %83 = arith.addf %78, %82 : vector<64x64xf32>
    %84 = vector.extract_strided_slice %47 {offsets = [448, 0], sizes = [64, 384], strides = [1, 1]} : vector<640x384xbf16> to vector<64x384xbf16>
    %c7 = arith.constant 7 : index
    %c0_56 = arith.constant 0 : index
    %c0_57 = arith.constant 0 : index
    %85 = vector.load %arg6[%c7, %c0_56, %c0_57] : memref<10x384x64xbf16, #tpu.memory_space<vmem>>, vector<1x384x64xbf16>
    %86 = vector.shape_cast %85 : vector<1x384x64xbf16> to vector<384x64xbf16>
    %cst_58 = arith.constant dense<0.000000e+00> : vector<64x64xf32>
    %87 = tpu.matmul %84, %86, %cst_58 {dimension_numbers = #tpu.dot_dimension_numbers<[1], [0], [0], [1], [0, 0, 1, 1], [], []>} : vector<64x384xbf16>, vector<384x64xbf16>, vector<64x64xf32> -> vector<64x64xf32>
    %88 = arith.addf %83, %87 : vector<64x64xf32>
    %89 = vector.extract_strided_slice %47 {offsets = [512, 0], sizes = [64, 384], strides = [1, 1]} : vector<640x384xbf16> to vector<64x384xbf16>
    %c8 = arith.constant 8 : index
    %c0_59 = arith.constant 0 : index
    %c0_60 = arith.constant 0 : index
    %90 = vector.load %arg6[%c8, %c0_59, %c0_60] : memref<10x384x64xbf16, #tpu.memory_space<vmem>>, vector<1x384x64xbf16>
    %91 = vector.shape_cast %90 : vector<1x384x64xbf16> to vector<384x64xbf16>
    %cst_61 = arith.constant dense<0.000000e+00> : vector<64x64xf32>
    %92 = tpu.matmul %89, %91, %cst_61 {dimension_numbers = #tpu.dot_dimension_numbers<[1], [0], [0], [1], [0, 0, 1, 1], [], []>} : vector<64x384xbf16>, vector<384x64xbf16>, vector<64x64xf32> -> vector<64x64xf32>
    %93 = arith.addf %88, %92 : vector<64x64xf32>
    %94 = vector.extract_strided_slice %47 {offsets = [576, 0], sizes = [64, 384], strides = [1, 1]} : vector<640x384xbf16> to vector<64x384xbf16>
    %c9 = arith.constant 9 : index
    %c0_62 = arith.constant 0 : index
    %c0_63 = arith.constant 0 : index
    %95 = vector.load %arg6[%c9, %c0_62, %c0_63] : memref<10x384x64xbf16, #tpu.memory_space<vmem>>, vector<1x384x64xbf16>
    %96 = vector.shape_cast %95 : vector<1x384x64xbf16> to vector<384x64xbf16>
    %cst_64 = arith.constant dense<0.000000e+00> : vector<64x64xf32>
    %97 = tpu.matmul %94, %96, %cst_64 {dimension_numbers = #tpu.dot_dimension_numbers<[1], [0], [0], [1], [0, 0, 1, 1], [], []>} : vector<64x384xbf16>, vector<384x64xbf16>, vector<64x64xf32> -> vector<64x64xf32>
    %98 = arith.addf %93, %97 : vector<64x64xf32>
    %c0_65 = arith.constant 0 : index
    %c0_66 = arith.constant 0 : index
    %99 = vector.load %arg7[%c0_65, %c0_66] : memref<1x64xf32, #tpu.memory_space<vmem>>, vector<1x64xf32>
    %100 = vector.broadcast %99 : vector<1x64xf32> to vector<64x64xf32>
    %101 = arith.addf %98, %100 : vector<64x64xf32>
    %cst_67 = arith.constant 0.000000e+00 : f32
    %102 = vector.broadcast %cst_67 : f32 to vector<64x64xf32>
    %103 = arith.maximumf %101, %102 : vector<64x64xf32>
    %104 = arith.truncf %103 : vector<64x64xf32> to vector<64x64xbf16>
    %c0_68 = arith.constant 0 : index
    %c0_69 = arith.constant 0 : index
    %105 = vector.load %arg8[%c0_68, %c0_69] : memref<64x128xbf16, #tpu.memory_space<vmem>>, vector<64x128xbf16>
    %cst_70 = arith.constant dense<0.000000e+00> : vector<64x128xf32>
    %106 = tpu.matmul %104, %105, %cst_70 {dimension_numbers = #tpu.dot_dimension_numbers<[1], [0], [0], [1], [0, 0, 1, 1], [], []>} : vector<64x64xbf16>, vector<64x128xbf16>, vector<64x128xf32> -> vector<64x128xf32>
    %c0_71 = arith.constant 0 : index
    %c0_72 = arith.constant 0 : index
    %107 = vector.load %arg9[%c0_71, %c0_72] : memref<1x128xf32, #tpu.memory_space<vmem>>, vector<1x128xf32>
    %108 = vector.broadcast %107 : vector<1x128xf32> to vector<64x128xf32>
    %109 = arith.addf %106, %108 : vector<64x128xf32>
    %c0_73 = arith.constant 0 : index
    %c0_74 = arith.constant 0 : index
    %110 = vector.load %arg10[%c0_73, %c0_74] : memref<64x128xf32, #tpu.memory_space<vmem>>, vector<64x128xf32>
    tpu.vector_store %arg10[%c0_73, %c0_74], %109 {strides = array<i32>} : memref<64x128xf32, #tpu.memory_space<vmem>>, vector<64x128xf32>,
    return
  }
  func.func @transform_0(%arg0: i32) -> (i32, i32) {
    %c0_i32 = arith.constant 0 : i32
    %c0_i32_0 = arith.constant 0 : i32
    return %arg0, %c0_i32 : i32, i32
  }
  func.func @transform_1(%arg0: i32) -> (i32, i32, i32) {
    %c0_i32 = arith.constant 0 : i32
    %c0_i32_0 = arith.constant 0 : i32
    %c0_i32_1 = arith.constant 0 : i32
    %c0_i32_2 = arith.constant 0 : i32
    return %c0_i32, %c0_i32_0, %c0_i32_1 : i32, i32, i32
  }
  func.func @transform_2(%arg0: i32) -> (i32, i32) {
    %c0_i32 = arith.constant 0 : i32
    %c0_i32_0 = arith.constant 0 : i32
    %c0_i32_1 = arith.constant 0 : i32
    return %c0_i32, %c0_i32_0 : i32, i32
  }
  func.func @transform_3(%arg0: i32) -> (i32, i32, i32) {
    %c0_i32 = arith.constant 0 : i32
    %c0_i32_0 = arith.constant 0 : i32
    %c0_i32_1 = arith.constant 0 : i32
    %c0_i32_2 = arith.constant 0 : i32
    return %c0_i32, %c0_i32_0, %c0_i32_1 : i32, i32, i32
  }
  func.func @transform_4(%arg0: i32) -> (i32, i32) {
    %c0_i32 = arith.constant 0 : i32
    %c0_i32_0 = arith.constant 0 : i32
    %c0_i32_1 = arith.constant 0 : i32
    return %c0_i32, %c0_i32_0 : i32, i32
  }
  func.func @transform_5(%arg0: i32) -> (i32, i32, i32) {
    %c0_i32 = arith.constant 0 : i32
    %c0_i32_0 = arith.constant 0 : i32
    %c0_i32_1 = arith.constant 0 : i32
    %c0_i32_2 = arith.constant 0 : i32
    return %c0_i32, %c0_i32_0, %c0_i32_1 : i32, i32, i32
  }
  func.func @transform_6(%arg0: i32) -> (i32, i32) {
    %c0_i32 = arith.constant 0 : i32
    %c0_i32_0 = arith.constant 0 : i32
    %c0_i32_1 = arith.constant 0 : i32
    return %c0_i32, %c0_i32_0 : i32, i32
  }
  func.func @transform_7(%arg0: i32) -> (i32, i32) {
    %c0_i32 = arith.constant 0 : i32
    %c0_i32_0 = arith.constant 0 : i32
    %c0_i32_1 = arith.constant 0 : i32
    return %c0_i32, %c0_i32_0 : i32, i32
  }
  func.func @transform_8(%arg0: i32) -> (i32, i32) {
    %c0_i32 = arith.constant 0 : i32
    %c0_i32_0 = arith.constant 0 : i32
    %c0_i32_1 = arith.constant 0 : i32
    return %c0_i32, %c0_i32_0 : i32, i32
  }
  func.func @transform_9(%arg0: i32) -> (i32, i32) {
    %c0_i32 = arith.constant 0 : i32
    %c0_i32_0 = arith.constant 0 : i32
    return %arg0, %c0_i32 : i32, i32
  }
}

</mosaic_0001>

<llo_original>
// kernel: forward.1
$region0: #{forward.1}
  #allocation0 [shape = 'u32[]', space=smem, size = 0x4, offset = 0x4, fixed_abs, tag = 'smem constant byte address 0x4 - core index']
  #allocation1 [shape = 'u32[144,128]{1,0:T(1,128)}', space=vmem, size = 0x12000, scoped, tag = 'internal scratch']
  %s0 = inlined_call_operand.vmem [shape: f32[768,24], index: 0, kind: input, shape index: {}]
  %s1 = inlined_call_operand.vmem [shape: bf16[3,24,192], index: 1, kind: input, shape index: {}]
  %s2 = inlined_call_operand.vmem [shape: f32[1,192], index: 2, kind: input, shape index: {}]
  %s3 = inlined_call_operand.vmem [shape: bf16[3,192,384], index: 3, kind: input, shape index: {}]
  %s4 = inlined_call_operand.vmem [shape: f32[1,384], index: 4, kind: input, shape index: {}]
  %s5 = inlined_call_operand.vmem [shape: bf16[10,384,64], index: 5, kind: input, shape index: {}]
  %s6 = inlined_call_operand.vmem [shape: f32[1,64], index: 6, kind: input, shape index: {}]
  %s7 = inlined_call_operand.vmem [shape: bf16[64,128], index: 7, kind: input, shape index: {}]
  %s8 = inlined_call_operand.vmem [shape: f32[1,128], index: 8, kind: input, shape index: {}]
  %s9 = inlined_call_operand.vmem [shape: f32[64,128], index: 9, kind: output, shape index: {}]
  %s10 = sld [smem:[#allocation0]]
  $region46: #{forward.1} parent=0
    _
  %s12 = ssub.s32 1, %s10
  %s13 = scalar_select 0, %s12, %s10
  // Predicated region
  $region2: #{forward.1} parent=0 // pred_check
    _
  $region3: #{forward.1} parent=0 // pred_check_branch
    %15 = sbr.rel (0) target = $region5
  $region4: #{forward.1} parent=0 // pred_region
    _
  $region5: #{forward.1} parent=0 // pred_fallthru
    _
  // Predicated region
  $region6: #{forward.1} parent=0 // pred_check
    _
  $region7: #{forward.1} parent=0 // pred_check_branch
    %17 = sbr.rel (0) target = $region9
  $region8: #{forward.1} parent=0 // pred_region
    _
  $region9: #{forward.1} parent=0 // pred_fallthru
    _
  // Predicated region
  $region10: #{forward.1} parent=0 // pred_check
    _
  $region11: #{forward.1} parent=0 // pred_check_branch
    %19 = sbr.rel (0) target = $region13
  $region12: #{forward.1} parent=0 // pred_region
    _
  $region13: #{forward.1} parent=0 // pred_fallthru
    _
  // Predicated region
  $region14: #{forward.1} parent=0 // pred_check
    _
  $region15: #{forward.1} parent=0 // pred_check_branch
    %21 = sbr.rel (0) target = $region17
  $region16: #{forward.1} parent=0 // pred_region
    _
  $region17: #{forward.1} parent=0 // pred_fallthru
    _
  // Predicated region
  $region18: #{forward.1} parent=0 // pred_check
    _
  $region19: #{forward.1} parent=0 // pred_check_branch
    %23 = sbr.rel (0) target = $region21
  $region20: #{forward.1} parent=0 // pred_region
    _
  $region21: #{forward.1} parent=0 // pred_fallthru
    _
  // Predicated region
  $region22: #{forward.1} parent=0 // pred_check
    _
  $region23: #{forward.1} parent=0 // pred_check_branch
    %25 = sbr.rel (0) target = $region25
  $region24: #{forward.1} parent=0 // pred_region
    _
  $region25: #{forward.1} parent=0 // pred_fallthru
    _
  // Predicated region
  $region26: #{forward.1} parent=0 // pred_check
    _
  $region27: #{forward.1} parent=0 // pred_check_branch
    %27 = sbr.rel (0) target = $region29
  $region28: #{forward.1} parent=0 // pred_region
    _
  $region29: #{forward.1} parent=0 // pred_fallthru
    _
  // Predicated region
  $region30: #{forward.1} parent=0 // pred_check
    _
  $region31: #{forward.1} parent=0 // pred_check_branch
    %29 = sbr.rel (0) target = $region33
  $region32: #{forward.1} parent=0 // pred_region
    _
  $region33: #{forward.1} parent=0 // pred_fallthru
    _
  // Predicated region
  $region34: #{forward.1} parent=0 // pred_check
    _
  $region35: #{forward.1} parent=0 // pred_check_branch
    %31 = sbr.rel (0) target = $region37
  $region36: #{forward.1} parent=0 // pred_region
    _
  $region37: #{forward.1} parent=0 // pred_fallthru
    _
  %v33 = vld [vmem:[%s0] sm:$0xff]
  %v34 = vld [vmem:[%s0 + $0x8] sm:$0xff]
  %v35 = vld [vmem:[%s0 + $0x10] sm:$0xff]
  %v36 = vld [vmem:[%s0 + $0x18] sm:$0xff]
  %v37 = vld [vmem:[%s0 + $0x20] sm:$0xff]
  %v38 = vld [vmem:[%s0 + $0x28] sm:$0xff]
  %v39 = vld [vmem:[%s0 + $0x30] sm:$0xff]
  %v40 = vld [vmem:[%s0 + $0x38] sm:$0xff]
  %v41 = vld [vmem:[%s0 + $0x40] sm:$0xff]
  %v42 = vld [vmem:[%s0 + $0x48] sm:$0xff]
  %v43 = vld [vmem:[%s0 + $0x50] sm:$0xff]
  %v44 = vld [vmem:[%s0 + $0x58] sm:$0xff]
  %v45 = vld [vmem:[%s0 + $0x60] sm:$0xff]
  %v46 = vld [vmem:[%s0 + $0x68] sm:$0xff]
  %v47 = vld [vmem:[%s0 + $0x70] sm:$0xff]
  %v48 = vld [vmem:[%s0 + $0x78] sm:$0xff]
  %v49 = vld [vmem:[%s0 + $0x80] sm:$0xff]
  %v50 = vld [vmem:[%s0 + $0x88] sm:$0xff]
  %v51 = vld [vmem:[%s0 + $0x90] sm:$0xff]
  %v52 = vld [vmem:[%s0 + $0x98] sm:$0xff]
  %v53 = vld [vmem:[%s0 + $0xa0] sm:$0xff]
  %v54 = vld [vmem:[%s0 + $0xa8] sm:$0xff]
  %v55 = vld [vmem:[%s0 + $0xb0] sm:$0xff]
  %v56 = vld [vmem:[%s0 + $0xb8] sm:$0xff]
  %v57 = vld [vmem:[%s0 + $0xc0] sm:$0xff]
  %v58 = vld [vmem:[%s0 + $0xc8] sm:$0xff]
  %v59 = vld [vmem:[%s0 + $0xd0] sm:$0xff]
  %v60 = vld [vmem:[%s0 + $0xd8] sm:$0xff]
  %v61 = vld [vmem:[%s0 + $0xe0] sm:$0xff]
  %v62 = vld [vmem:[%s0 + $0xe8] sm:$0xff]
  %v63 = vld [vmem:[%s0 + $0xf0] sm:$0xff]
  %v64 = vld [vmem:[%s0 + $0xf8] sm:$0xff]
  %v65 = vld [vmem:[%s0 + $0x100] sm:$0xff]
  %v66 = vld [vmem:[%s0 + $0x108] sm:$0xff]
  %v67 = vld [vmem:[%s0 + $0x110] sm:$0xff]
  %v68 = vld [vmem:[%s0 + $0x118] sm:$0xff]
  %v69 = vld [vmem:[%s0 + $0x120] sm:$0xff]
  %v70 = vld [vmem:[%s0 + $0x128] sm:$0xff]
  %v71 = vld [vmem:[%s0 + $0x130] sm:$0xff]
  %v72 = vld [vmem:[%s0 + $0x138] sm:$0xff]
  %v73 = vld [vmem:[%s0 + $0x140] sm:$0xff]
  %v74 = vld [vmem:[%s0 + $0x148] sm:$0xff]
  %v75 = vld [vmem:[%s0 + $0x150] sm:$0xff]
  %v76 = vld [vmem:[%s0 + $0x158] sm:$0xff]
  %v77 = vld [vmem:[%s0 + $0x160] sm:$0xff]
  %v78 = vld [vmem:[%s0 + $0x168] sm:$0xff]
  %v79 = vld [vmem:[%s0 + $0x170] sm:$0xff]
  %v80 = vld [vmem:[%s0 + $0x178] sm:$0xff]
  %v81 = vld [vmem:[%s0 + $0x180] sm:$0xff]
  %v82 = vld [vmem:[%s0 + $0x188] sm:$0xff]
  %v83 = vld [vmem:[%s0 + $0x190] sm:$0xff]
  %v84 = vld [vmem:[%s0 + $0x198] sm:$0xff]
  %v85 = vld [vmem:[%s0 + $0x1a0] sm:$0xff]
  %v86 = vld [vmem:[%s0 + $0x1a8] sm:$0xff]
  %v87 = vld [vmem:[%s0 + $0x1b0] sm:$0xff]
  %v88 = vld [vmem:[%s0 + $0x1b8] sm:$0xff]
  %v89 = vld [vmem:[%s0 + $0x1c0] sm:$0xff]
  %v90 = vld [vmem:[%s0 + $0x1c8] sm:$0xff]
  %v91 = vld [vmem:[%s0 + $0x1d0] sm:$0xff]
  %v92 = vld [vmem:[%s0 + $0x1d8] sm:$0xff]
  %v93 = vld [vmem:[%s0 + $0x1e0] sm:$0xff]
  %v94 = vld [vmem:[%s0 + $0x1e8] sm:$0xff]
  %v95 = vld [vmem:[%s0 + $0x1f0] sm:$0xff]
  %v96 = vld [vmem:[%s0 + $0x1f8] sm:$0xff]
  %v97 = vld [vmem:[%s0 + $0x200] sm:$0xff]
  %v98 = vld [vmem:[%s0 + $0x208] sm:$0xff]
  %v99 = vld [vmem:[%s0 + $0x210] sm:$0xff]
  %v100 = vld [vmem:[%s0 + $0x218] sm:$0xff]
  %v101 = vld [vmem:[%s0 + $0x220] sm:$0xff]
  %v102 = vld [vmem:[%s0 + $0x228] sm:$0xff]
  %v103 = vld [vmem:[%s0 + $0x230] sm:$0xff]
  %v104 = vld [vmem:[%s0 + $0x238] sm:$0xff]
  %v105 = vld [vmem:[%s0 + $0x240] sm:$0xff]
  %v106 = vld [vmem:[%s0 + $0x248] sm:$0xff]
  %v107 = vld [vmem:[%s0 + $0x250] sm:$0xff]
  %v108 = vld [vmem:[%s0 + $0x258] sm:$0xff]
  %v109 = vld [vmem:[%s0 + $0x260] sm:$0xff]
  %v110 = vld [vmem:[%s0 + $0x268] sm:$0xff]
  %v111 = vld [vmem:[%s0 + $0x270] sm:$0xff]
  %v112 = vld [vmem:[%s0 + $0x278] sm:$0xff]
  %v113 = vld [vmem:[%s0 + $0x280] sm:$0xff]
  %v114 = vld [vmem:[%s0 + $0x288] sm:$0xff]
  %v115 = vld [vmem:[%s0 + $0x290] sm:$0xff]
  %v116 = vld [vmem:[%s0 + $0x298] sm:$0xff]
  %v117 = vld [vmem:[%s0 + $0x2a0] sm:$0xff]
  %v118 = vld [vmem:[%s0 + $0x2a8] sm:$0xff]
  %v119 = vld [vmem:[%s0 + $0x2b0] sm:$0xff]
  %v120 = vld [vmem:[%s0 + $0x2b8] sm:$0xff]
  %v121 = vld [vmem:[%s0 + $0x2c0] sm:$0xff]
  %v122 = vld [vmem:[%s0 + $0x2c8] sm:$0xff]
  %v123 = vld [vmem:[%s0 + $0x2d0] sm:$0xff]
  %v124 = vld [vmem:[%s0 + $0x2d8] sm:$0xff]
  %v125 = vld [vmem:[%s0 + $0x2e0] sm:$0xff]
  %v126 = vld [vmem:[%s0 + $0x2e8] sm:$0xff]
  %v127 = vld [vmem:[%s0 + $0x2f0] sm:$0xff]
  %v128 = vld [vmem:[%s0 + $0x2f8] sm:$0xff]
  %v129 = vpack.c.bf16 %v34, %v33
  %v130 = vpack.c.bf16 %v36, %v35
  %v131 = vpack.c.bf16 %v38, %v37
  %v132 = vpack.c.bf16 %v40, %v39
  %v133 = vpack.c.bf16 %v42, %v41
  %v134 = vpack.c.bf16 %v44, %v43
  %v135 = vpack.c.bf16 %v46, %v45
  %v136 = vpack.c.bf16 %v48, %v47
  %v137 = vpack.c.bf16 %v50, %v49
  %v138 = vpack.c.bf16 %v52, %v51
  %v139 = vpack.c.bf16 %v54, %v53
  %v140 = vpack.c.bf16 %v56, %v55
  %v141 = vpack.c.bf16 %v58, %v57
  %v142 = vpack.c.bf16 %v60, %v59
  %v143 = vpack.c.bf16 %v62, %v61
  %v144 = vpack.c.bf16 %v64, %v63
  %v145 = vpack.c.bf16 %v66, %v65
  %v146 = vpack.c.bf16 %v68, %v67
  %v147 = vpack.c.bf16 %v70, %v69
  %v148 = vpack.c.bf16 %v72, %v71
  %v149 = vpack.c.bf16 %v74, %v73
  %v150 = vpack.c.bf16 %v76, %v75
  %v151 = vpack.c.bf16 %v78, %v77
  %v152 = vpack.c.bf16 %v80, %v79
  %v153 = vpack.c.bf16 %v82, %v81
  %v154 = vpack.c.bf16 %v84, %v83
  %v155 = vpack.c.bf16 %v86, %v85
  %v156 = vpack.c.bf16 %v88, %v87
  %v157 = vpack.c.bf16 %v90, %v89
  %v158 = vpack.c.bf16 %v92, %v91
  %v159 = vpack.c.bf16 %v94, %v93
  %v160 = vpack.c.bf16 %v96, %v95
  %v161 = vpack.c.bf16 %v98, %v97
  %v162 = vpack.c.bf16 %v100, %v99
  %v163 = vpack.c.bf16 %v102, %v101
  %v164 = vpack.c.bf16 %v104, %v103
  %v165 = vpack.c.bf16 %v106, %v105
  %v166 = vpack.c.bf16 %v108, %v107
  %v167 = vpack.c.bf16 %v110, %v109
  %v168 = vpack.c.bf16 %v112, %v111
  %v169 = vpack.c.bf16 %v114, %v113
  %v170 = vpack.c.bf16 %v116, %v115
  %v171 = vpack.c.bf16 %v118, %v117
  %v172 = vpack.c.bf16 %v120, %v119
  %v173 = vpack.c.bf16 %v122, %v121
  %v174 = vpack.c.bf16 %v124, %v123
  %v175 = vpack.c.bf16 %v126, %v125
  %v176 = vpack.c.bf16 %v128, %v127
  %v177 = vld [vmem:[%s1] sm:$0xff]
  %v178 = vld [vmem:[%s1 + $0x8] sm:$0xff]
  %v179 = vld [vmem:[%s1 + $0x10] sm:$0xff]
  %s180 = scalar_lea.vmem %s1, 24
  %v181 = vld [vmem:[%s180] sm:$0xff]
  %v182 = vld [vmem:[%s180 + $0x8] sm:$0xff]
  %v183 = vld [vmem:[%s180 + $0x10] sm:$0xff]
  %v187 = vunpack.c.l.b16 %v181
  %v188 = vunpack.c.h.b16 %v181
  %v189 = vunpack.c.l.b16 %v182
  %v190 = vunpack.c.h.b16 %v182
  %v191 = vunpack.c.l.b16 %v183
  %v192 = vunpack.c.h.b16 %v183
  %v193 = vpack.c.b16 %v189, %v187
  %v194 = vpack.c.b16 %v190, %v188
  %v195 = vpack.c.b16 %v191, %v191
  %v196 = vpack.c.b16 %v192, %v192
  %vm199 = vcmask 195584
  %v201 = vsel %vm199, %v133, 0
  %v204 = vsel %vm199, %v134, 0
  %v207 = vsel %vm199, %v135, 0
  %v210 = vsel %vm199, %v136, 0
  %v213 = vsel %vm199, %v137, 0
  %v216 = vsel %vm199, %v138, 0
  %v219 = vsel %vm199, %v139, 0
  %v222 = vsel %vm199, %v140, 0
  %v225 = vsel %vm199, %v141, 0
  %v228 = vsel %vm199, %v142, 0
  %v231 = vsel %vm199, %v143, 0
  %v234 = vsel %vm199, %v144, 0
  %v237 = vsel %vm199, %v145, 0
  %v240 = vsel %vm199, %v146, 0
  %v243 = vsel %vm199, %v147, 0
  %v246 = vsel %vm199, %v148, 0
  %v249 = vsel %vm199, %v149, 0
  %v252 = vsel %vm199, %v150, 0
  %v255 = vsel %vm199, %v151, 0
  %v258 = vsel %vm199, %v152, 0
  %v261 = vsel %vm199, %v153, 0
  %v264 = vsel %vm199, %v154, 0
  %v267 = vsel %vm199, %v155, 0
  %v270 = vsel %vm199, %v156, 0
  %v273 = vsel %vm199, %v157, 0
  %v276 = vsel %vm199, %v158, 0
  %v279 = vsel %vm199, %v159, 0
  %v282 = vsel %vm199, %v160, 0
  %v285 = vsel %vm199, %v161, 0
  %v288 = vsel %vm199, %v162, 0
  %v291 = vsel %vm199, %v163, 0
  %v294 = vsel %vm199, %v164, 0
  %v297 = vsel %vm199, %v165, 0
  %v300 = vsel %vm199, %v166, 0
  %v303 = vsel %vm199, %v167, 0
  %v306 = vsel %vm199, %v168, 0
  %v309 = vsel %vm199, %v169, 0
  %v312 = vsel %vm199, %v170, 0
  %v315 = vsel %vm199, %v171, 0
  %v318 = vsel %vm199, %v172, 0
  %vm320 = vcmask 1043456
  %v322 = vsel %vm320, %v195, 0
  %v325 = vsel %vm320, %v196, 0
  %327 = vmatprep.subr.bf16.mxu0 0
  %328 = vmatpush1.bf16.msra.mxu0 0
  %329 = vmatprep.subr.bf16.mxu0 0
  %330 = vmatpush1.bf16.msra.mxu0 0
  %331 = vmatprep.subr.bf16.mxu0 0
  %332 = vmatpush1.bf16.msra.mxu0 0
  %333 = vmatprep.subr.bf16.mxu0 0
  %334 = vmatpush1.bf16.msra.mxu0 0
  %335 = vmatprep.subr.bf16.mxu0 0
  %336 = vmatpush1.bf16.msra.mxu0 0
  %337 = vmatprep.subr.bf16.mxu0 0
  %338 = vmatpush1.bf16.msra.mxu0 0
  %339 = vmatprep.subr.bf16.mxu0 %v325
  %340 = vmatpush1.bf16.msra.mxu0 %v322
  %341 = vmatprep.subr.bf16.mxu0 %v194
  %342 = vmatpush1.bf16.msra.mxu0 %v193
  %343 = vmatprep.subr.bf16.mxu0 0
  %344 = vmatpush2.bf16.msra.mxu0 0
  %345 = vmatprep.subr.bf16.mxu0 0
  %346 = vmatpush2.bf16.msra.mxu0 0
  %347 = vmatprep.subr.bf16.mxu0 0
  %348 = vmatpush2.bf16.msra.mxu0 0
  %349 = vmatprep.subr.bf16.mxu0 0
  %350 = vmatpush2.bf16.msra.mxu0 0
  %351 = vmatprep.subr.bf16.mxu0 0
  %352 = vmatpush2.bf16.msra.mxu0 0
  %353 = vmatprep.subr.bf16.mxu0 0
  %354 = vmatpush2.bf16.msra.mxu0 0
  %355 = vmatprep.subr.bf16.mxu0 0
  %356 = vmatpush2.bf16.msra.mxu0 0
  %357 = vmatprep.subr.bf16.mxu0 0
  %358 = vmatpush2.bf16.msra.mxu0 0
  %359 = vmatprep.mubr.bf16.mxu0 0
  %360 = vmatmul.mubr.bf16.gmra.mxu0 %v201
  %v361 = vpop.f32.mrf.mxu0
  %v362 = vadd.f32 0.0, %v361
  %v363 = vpop.f32.mrf.mxu0
  %v364 = vadd.f32 0.0, %v363
  %v365 = vpop.f32.mrf.mxu0
  %v366 = vadd.f32 0.0, %v365
  %v367 = vpop.f32.mrf.mxu0
  %v368 = vadd.f32 0.0, %v367
  %369 = vmatprep.mubr.bf16.mxu0 0
  %370 = vmatmul.mubr.bf16.gmra.mxu0 %v204
  %v371 = vpop.f32.mrf.mxu0
  %v372 = vadd.f32 0.0, %v371
  %v373 = vpop.f32.mrf.mxu0
  %v374 = vadd.f32 0.0, %v373
  %v375 = vpop.f32.mrf.mxu0
  %v376 = vadd.f32 0.0, %v375
  %v377 = vpop.f32.mrf.mxu0
  %v378 = vadd.f32 0.0, %v377
  %379 = vmatprep.mubr.bf16.mxu0 0
  %380 = vmatmul.mubr.bf16.gmra.mxu0 %v207
  %v381 = vpop.f32.mrf.mxu0
  %v382 = vadd.f32 0.0, %v381
  %v383 = vpop.f32.mrf.mxu0
  %v384 = vadd.f32 0.0, %v383
  %v385 = vpop.f32.mrf.mxu0
  %v386 = vadd.f32 0.0, %v385
  %v387 = vpop.f32.mrf.mxu0
  %v388 = vadd.f32 0.0, %v387
  %389 = vmatprep.mubr.bf16.mxu0 0
  %390 = vmatmul.mubr.bf16.gmra.mxu0 %v210
  %v391 = vpop.f32.mrf.mxu0
  %v392 = vadd.f32 0.0, %v391
  %v393 = vpop.f32.mrf.mxu0
  %v394 = vadd.f32 0.0, %v393
  %v395 = vpop.f32.mrf.mxu0
  %v396 = vadd.f32 0.0, %v395
  %v397 = vpop.f32.mrf.mxu0
  %v398 = vadd.f32 0.0, %v397
  %399 = vmatprep.mubr.bf16.mxu0 0
  %400 = vmatmul.mubr.bf16.gmra.mxu0 %v213
  %v401 = vpop.f32.mrf.mxu0
  %v402 = vadd.f32 0.0, %v401
  %v403 = vpop.f32.mrf.mxu0
  %v404 = vadd.f32 0.0, %v403
  %v405 = vpop.f32.mrf.mxu0
  %v406 = vadd.f32 0.0, %v405
  %v407 = vpop.f32.mrf.mxu0
  %v408 = vadd.f32 0.0, %v407
  %409 = vmatprep.mubr.bf16.mxu0 0
  %410 = vmatmul.mubr.bf16.gmra.mxu0 %v216
  %v411 = vpop.f32.mrf.mxu0
  %v412 = vadd.f32 0.0, %v411
  %v413 = vpop.f32.mrf.mxu0
  %v414 = vadd.f32 0.0, %v413
  %v415 = vpop.f32.mrf.mxu0
  %v416 = vadd.f32 0.0, %v415
  %v417 = vpop.f32.mrf.mxu0
  %v418 = vadd.f32 0.0, %v417
  %419 = vmatprep.mubr.bf16.mxu0 0
  %420 = vmatmul.mubr.bf16.gmra.mxu0 %v219
  %v421 = vpop.f32.mrf.mxu0
  %v422 = vadd.f32 0.0, %v421
  %v423 = vpop.f32.mrf.mxu0
  %v424 = vadd.f32 0.0, %v423
  %v425 = vpop.f32.mrf.mxu0
  %v426 = vadd.f32 0.0, %v425
  %v427 = vpop.f32.mrf.mxu0
  %v428 = vadd.f32 0.0, %v427
  %429 = vmatprep.mubr.bf16.mxu0 0
  %430 = vmatmul.mubr.bf16.gmra.mxu0 %v222
  %v431 = vpop.f32.mrf.mxu0
  %v432 = vadd.f32 0.0, %v431
  %v433 = vpop.f32.mrf.mxu0
  %v434 = vadd.f32 0.0, %v433
  %v435 = vpop.f32.mrf.mxu0
  %v436 = vadd.f32 0.0, %v435
  %v437 = vpop.f32.mrf.mxu0
  %v438 = vadd.f32 0.0, %v437
  %439 = vmatprep.mubr.bf16.mxu0 0
  %440 = vmatmul.mubr.bf16.gmra.mxu0 %v225
  %v441 = vpop.f32.mrf.mxu0
  %v442 = vadd.f32 0.0, %v441
  %v443 = vpop.f32.mrf.mxu0
  %v444 = vadd.f32 0.0, %v443
  %v445 = vpop.f32.mrf.mxu0
  %v446 = vadd.f32 0.0, %v445
  %v447 = vpop.f32.mrf.mxu0
  %v448 = vadd.f32 0.0, %v447
  %449 = vmatprep.mubr.bf16.mxu0 0
  %450 = vmatmul.mubr.bf16.gmra.mxu0 %v228
  %v451 = vpop.f32.mrf.mxu0
  %v452 = vadd.f32 0.0, %v451
  %v453 = vpop.f32.mrf.mxu0
  %v454 = vadd.f32 0.0, %v453
  %v455 = vpop.f32.mrf.mxu0
  %v456 = vadd.f32 0.0, %v455
  %v457 = vpop.f32.mrf.mxu0
  %v458 = vadd.f32 0.0, %v457
  %459 = vmatprep.mubr.bf16.mxu0 0
  %460 = vmatmul.mubr.bf16.gmra.mxu0 %v231
  %v461 = vpop.f32.mrf.mxu0
  %v462 = vadd.f32 0.0, %v461
  %v463 = vpop.f32.mrf.mxu0
  %v464 = vadd.f32 0.0, %v463
  %v465 = vpop.f32.mrf.mxu0
  %v466 = vadd.f32 0.0, %v465
  %v467 = vpop.f32.mrf.mxu0
  %v468 = vadd.f32 0.0, %v467
  %469 = vmatprep.mubr.bf16.mxu0 0
  %470 = vmatmul.mubr.bf16.gmra.mxu0 %v234
  %v471 = vpop.f32.mrf.mxu0
  %v472 = vadd.f32 0.0, %v471
  %v473 = vpop.f32.mrf.mxu0
  %v474 = vadd.f32 0.0, %v473
  %v475 = vpop.f32.mrf.mxu0
  %v476 = vadd.f32 0.0, %v475
  %v477 = vpop.f32.mrf.mxu0
  %v478 = vadd.f32 0.0, %v477
  %479 = vmatprep.mubr.bf16.mxu0 0
  %480 = vmatmul.mubr.bf16.gmra.mxu0 %v237
  %v481 = vpop.f32.mrf.mxu0
  %v482 = vadd.f32 0.0, %v481
  %v483 = vpop.f32.mrf.mxu0
  %v484 = vadd.f32 0.0, %v483
  %v485 = vpop.f32.mrf.mxu0
  %v486 = vadd.f32 0.0, %v485
  %v487 = vpop.f32.mrf.mxu0
  %v488 = vadd.f32 0.0, %v487
  %489 = vmatprep.mubr.bf16.mxu0 0
  %490 = vmatmul.mubr.bf16.gmra.mxu0 %v240
  %v491 = vpop.f32.mrf.mxu0
  %v492 = vadd.f32 0.0, %v491
  %v493 = vpop.f32.mrf.mxu0
  %v494 = vadd.f32 0.0, %v493
  %v495 = vpop.f32.mrf.mxu0
  %v496 = vadd.f32 0.0, %v495
  %v497 = vpop.f32.mrf.mxu0
  %v498 = vadd.f32 0.0, %v497
  %499 = vmatprep.mubr.bf16.mxu0 0
  %500 = vmatmul.mubr.bf16.gmra.mxu0 %v243
  %v501 = vpop.f32.mrf.mxu0
  %v502 = vadd.f32 0.0, %v501
  %v503 = vpop.f32.mrf.mxu0
  %v504 = vadd.f32 0.0, %v503
  %v505 = vpop.f32.mrf.mxu0
  %v506 = vadd.f32 0.0, %v505
  %v507 = vpop.f32.mrf.mxu0
  %v508 = vadd.f32 0.0, %v507
  %509 = vmatprep.mubr.bf16.mxu0 0
  %510 = vmatmul.mubr.bf16.gmra.mxu0 %v246
  %v511 = vpop.f32.mrf.mxu0
  %v512 = vadd.f32 0.0, %v511
  %v513 = vpop.f32.mrf.mxu0
  %v514 = vadd.f32 0.0, %v513
  %v515 = vpop.f32.mrf.mxu0
  %v516 = vadd.f32 0.0, %v515
  %v517 = vpop.f32.mrf.mxu0
  %v518 = vadd.f32 0.0, %v517
  %519 = vmatprep.mubr.bf16.mxu0 0
  %520 = vmatmul.mubr.bf16.gmra.mxu0 %v249
  %v521 = vpop.f32.mrf.mxu0
  %v522 = vadd.f32 0.0, %v521
  %v523 = vpop.f32.mrf.mxu0
  %v524 = vadd.f32 0.0, %v523
  %v525 = vpop.f32.mrf.mxu0
  %v526 = vadd.f32 0.0, %v525
  %v527 = vpop.f32.mrf.mxu0
  %v528 = vadd.f32 0.0, %v527
  %529 = vmatprep.mubr.bf16.mxu0 0
  %530 = vmatmul.mubr.bf16.gmra.mxu0 %v252
  %v531 = vpop.f32.mrf.mxu0
  %v532 = vadd.f32 0.0, %v531
  %v533 = vpop.f32.mrf.mxu0
  %v534 = vadd.f32 0.0, %v533
  %v535 = vpop.f32.mrf.mxu0
  %v536 = vadd.f32 0.0, %v535
  %v537 = vpop.f32.mrf.mxu0
  %v538 = vadd.f32 0.0, %v537
  %539 = vmatprep.mubr.bf16.mxu0 0
  %540 = vmatmul.mubr.bf16.gmra.mxu0 %v255
  %v541 = vpop.f32.mrf.mxu0
  %v542 = vadd.f32 0.0, %v541
  %v543 = vpop.f32.mrf.mxu0
  %v544 = vadd.f32 0.0, %v543
  %v545 = vpop.f32.mrf.mxu0
  %v546 = vadd.f32 0.0, %v545
  %v547 = vpop.f32.mrf.mxu0
  %v548 = vadd.f32 0.0, %v547
  %549 = vmatprep.mubr.bf16.mxu0 0
  %550 = vmatmul.mubr.bf16.gmra.mxu0 %v258
  %v551 = vpop.f32.mrf.mxu0
  %v552 = vadd.f32 0.0, %v551
  %v553 = vpop.f32.mrf.mxu0
  %v554 = vadd.f32 0.0, %v553
  %v555 = vpop.f32.mrf.mxu0
  %v556 = vadd.f32 0.0, %v555
  %v557 = vpop.f32.mrf.mxu0
  %v558 = vadd.f32 0.0, %v557
  %559 = vmatprep.mubr.bf16.mxu0 0
  %560 = vmatmul.mubr.bf16.gmra.mxu0 %v261
  %v561 = vpop.f32.mrf.mxu0
  %v562 = vadd.f32 0.0, %v561
  %v563 = vpop.f32.mrf.mxu0
  %v564 = vadd.f32 0.0, %v563
  %v565 = vpop.f32.mrf.mxu0
  %v566 = vadd.f32 0.0, %v565
  %v567 = vpop.f32.mrf.mxu0
  %v568 = vadd.f32 0.0, %v567
  %569 = vmatprep.mubr.bf16.mxu0 0
  %570 = vmatmul.mubr.bf16.gmra.mxu0 %v264
  %v571 = vpop.f32.mrf.mxu0
  %v572 = vadd.f32 0.0, %v571
  %v573 = vpop.f32.mrf.mxu0
  %v574 = vadd.f32 0.0, %v573
  %v575 = vpop.f32.mrf.mxu0
  %v576 = vadd.f32 0.0, %v575
  %v577 = vpop.f32.mrf.mxu0
  %v578 = vadd.f32 0.0, %v577
  %579 = vmatprep.mubr.bf16.mxu0 0
  %580 = vmatmul.mubr.bf16.gmra.mxu0 %v267
  %v581 = vpop.f32.mrf.mxu0
  %v582 = vadd.f32 0.0, %v581
  %v583 = vpop.f32.mrf.mxu0
  %v584 = vadd.f32 0.0, %v583
  %v585 = vpop.f32.mrf.mxu0
  %v586 = vadd.f32 0.0, %v585
  %v587 = vpop.f32.mrf.mxu0
  %v588 = vadd.f32 0.0, %v587
  %589 = vmatprep.mubr.bf16.mxu0 0
  %590 = vmatmul.mubr.bf16.gmra.mxu0 %v270
  %v591 = vpop.f32.mrf.mxu0
  %v592 = vadd.f32 0.0, %v591
  %v593 = vpop.f32.mrf.mxu0
  %v594 = vadd.f32 0.0, %v593
  %v595 = vpop.f32.mrf.mxu0
  %v596 = vadd.f32 0.0, %v595
  %v597 = vpop.f32.mrf.mxu0
  %v598 = vadd.f32 0.0, %v597
  %599 = vmatprep.mubr.bf16.mxu0 0
  %600 = vmatmul.mubr.bf16.gmra.mxu0 %v273
  %v601 = vpop.f32.mrf.mxu0
  %v602 = vadd.f32 0.0, %v601
  %v603 = vpop.f32.mrf.mxu0
  %v604 = vadd.f32 0.0, %v603
  %v605 = vpop.f32.mrf.mxu0
  %v606 = vadd.f32 0.0, %v605
  %v607 = vpop.f32.mrf.mxu0
  %v608 = vadd.f32 0.0, %v607
  %609 = vmatprep.mubr.bf16.mxu0 0
  %610 = vmatmul.mubr.bf16.gmra.mxu0 %v276
  %v611 = vpop.f32.mrf.mxu0
  %v612 = vadd.f32 0.0, %v611
  %v613 = vpop.f32.mrf.mxu0
  %v614 = vadd.f32 0.0, %v613
  %v615 = vpop.f32.mrf.mxu0
  %v616 = vadd.f32 0.0, %v615
  %v617 = vpop.f32.mrf.mxu0
  %v618 = vadd.f32 0.0, %v617
  %619 = vmatprep.mubr.bf16.mxu0 0
  %620 = vmatmul.mubr.bf16.gmra.mxu0 %v279
  %v621 = vpop.f32.mrf.mxu0
  %v622 = vadd.f32 0.0, %v621
  %v623 = vpop.f32.mrf.mxu0
  %v624 = vadd.f32 0.0, %v623
  %v625 = vpop.f32.mrf.mxu0
  %v626 = vadd.f32 0.0, %v625
  %v627 = vpop.f32.mrf.mxu0
  %v628 = vadd.f32 0.0, %v627
  %629 = vmatprep.mubr.bf16.mxu0 0
  %630 = vmatmul.mubr.bf16.gmra.mxu0 %v282
  %v631 = vpop.f32.mrf.mxu0
  %v632 = vadd.f32 0.0, %v631
  %v633 = vpop.f32.mrf.mxu0
  %v634 = vadd.f32 0.0, %v633
  %v635 = vpop.f32.mrf.mxu0
  %v636 = vadd.f32 0.0, %v635
  %v637 = vpop.f32.mrf.mxu0
  %v638 = vadd.f32 0.0, %v637
  %639 = vmatprep.mubr.bf16.mxu0 0
  %640 = vmatmul.mubr.bf16.gmra.mxu0 %v285
  %v641 = vpop.f32.mrf.mxu0
  %v642 = vadd.f32 0.0, %v641
  %v643 = vpop.f32.mrf.mxu0
  %v644 = vadd.f32 0.0, %v643
  %v645 = vpop.f32.mrf.mxu0
  %v646 = vadd.f32 0.0, %v645
  %v647 = vpop.f32.mrf.mxu0
  %v648 = vadd.f32 0.0, %v647
  %649 = vmatprep.mubr.bf16.mxu0 0
  %650 = vmatmul.mubr.bf16.gmra.mxu0 %v288
  %v651 = vpop.f32.mrf.mxu0
  %v652 = vadd.f32 0.0, %v651
  %v653 = vpop.f32.mrf.mxu0
  %v654 = vadd.f32 0.0, %v653
  %v655 = vpop.f32.mrf.mxu0
  %v656 = vadd.f32 0.0, %v655
  %v657 = vpop.f32.mrf.mxu0
  %v658 = vadd.f32 0.0, %v657
  %659 = vmatprep.mubr.bf16.mxu0 0
  %660 = vmatmul.mubr.bf16.gmra.mxu0 %v291
  %v661 = vpop.f32.mrf.mxu0
  %v662 = vadd.f32 0.0, %v661
  %v663 = vpop.f32.mrf.mxu0
  %v664 = vadd.f32 0.0, %v663
  %v665 = vpop.f32.mrf.mxu0
  %v666 = vadd.f32 0.0, %v665
  %v667 = vpop.f32.mrf.mxu0
  %v668 = vadd.f32 0.0, %v667
  %669 = vmatprep.mubr.bf16.mxu0 0
  %670 = vmatmul.mubr.bf16.gmra.mxu0 %v294
  %v671 = vpop.f32.mrf.mxu0
  %v672 = vadd.f32 0.0, %v671
  %v673 = vpop.f32.mrf.mxu0
  %v674 = vadd.f32 0.0, %v673
  %v675 = vpop.f32.mrf.mxu0
  %v676 = vadd.f32 0.0, %v675
  %v677 = vpop.f32.mrf.mxu0
  %v678 = vadd.f32 0.0, %v677
  %679 = vmatprep.mubr.bf16.mxu0 0
  %680 = vmatmul.mubr.bf16.gmra.mxu0 %v297
  %v681 = vpop.f32.mrf.mxu0
  %v682 = vadd.f32 0.0, %v681
  %v683 = vpop.f32.mrf.mxu0
  %v684 = vadd.f32 0.0, %v683
  %v685 = vpop.f32.mrf.mxu0
  %v686 = vadd.f32 0.0, %v685
  %v687 = vpop.f32.mrf.mxu0
  %v688 = vadd.f32 0.0, %v687
  %689 = vmatprep.mubr.bf16.mxu0 0
  %690 = vmatmul.mubr.bf16.gmra.mxu0 %v300
  %v691 = vpop.f32.mrf.mxu0
  %v692 = vadd.f32 0.0, %v691
  %v693 = vpop.f32.mrf.mxu0
  %v694 = vadd.f32 0.0, %v693
  %v695 = vpop.f32.mrf.mxu0
  %v696 = vadd.f32 0.0, %v695
  %v697 = vpop.f32.mrf.mxu0
  %v698 = vadd.f32 0.0, %v697
  %699 = vmatprep.mubr.bf16.mxu0 0
  %700 = vmatmul.mubr.bf16.gmra.mxu0 %v303
  %v701 = vpop.f32.mrf.mxu0
  %v702 = vadd.f32 0.0, %v701
  %v703 = vpop.f32.mrf.mxu0
  %v704 = vadd.f32 0.0, %v703
  %v705 = vpop.f32.mrf.mxu0
  %v706 = vadd.f32 0.0, %v705
  %v707 = vpop.f32.mrf.mxu0
  %v708 = vadd.f32 0.0, %v707
  %709 = vmatprep.mubr.bf16.mxu0 0
  %710 = vmatmul.mubr.bf16.gmra.mxu0 %v306
  %v711 = vpop.f32.mrf.mxu0
  %v712 = vadd.f32 0.0, %v711
  %v713 = vpop.f32.mrf.mxu0
  %v714 = vadd.f32 0.0, %v713
  %v715 = vpop.f32.mrf.mxu0
  %v716 = vadd.f32 0.0, %v715
  %v717 = vpop.f32.mrf.mxu0
  %v718 = vadd.f32 0.0, %v717
  %719 = vmatprep.mubr.bf16.mxu0 0
  %720 = vmatmul.mubr.bf16.gmra.mxu0 %v309
  %v721 = vpop.f32.mrf.mxu0
  %v722 = vadd.f32 0.0, %v721
  %v723 = vpop.f32.mrf.mxu0
  %v724 = vadd.f32 0.0, %v723
  %v725 = vpop.f32.mrf.mxu0
  %v726 = vadd.f32 0.0, %v725
  %v727 = vpop.f32.mrf.mxu0
  %v728 = vadd.f32 0.0, %v727
  %729 = vmatprep.mubr.bf16.mxu0 0
  %730 = vmatmul.mubr.bf16.gmra.mxu0 %v312
  %v731 = vpop.f32.mrf.mxu0
  %v732 = vadd.f32 0.0, %v731
  %v733 = vpop.f32.mrf.mxu0
  %v734 = vadd.f32 0.0, %v733
  %v735 = vpop.f32.mrf.mxu0
  %v736 = vadd.f32 0.0, %v735
  %v737 = vpop.f32.mrf.mxu0
  %v738 = vadd.f32 0.0, %v737
  %739 = vmatprep.mubr.bf16.mxu0 0
  %740 = vmatmul.mubr.bf16.gmra.mxu0 %v315
  %v741 = vpop.f32.mrf.mxu0
  %v742 = vadd.f32 0.0, %v741
  %v743 = vpop.f32.mrf.mxu0
  %v744 = vadd.f32 0.0, %v743
  %v745 = vpop.f32.mrf.mxu0
  %v746 = vadd.f32 0.0, %v745
  %v747 = vpop.f32.mrf.mxu0
  %v748 = vadd.f32 0.0, %v747
  %749 = vmatprep.mubr.bf16.mxu0 0
  %750 = vmatmul.mubr.bf16.gmra.mxu0 %v318
  %v751 = vpop.f32.mrf.mxu0
  %v752 = vadd.f32 0.0, %v751
  %v753 = vpop.f32.mrf.mxu0
  %v754 = vadd.f32 0.0, %v753
  %v755 = vpop.f32.mrf.mxu0
  %v756 = vadd.f32 0.0, %v755
  %v757 = vpop.f32.mrf.mxu0
  %v758 = vadd.f32 0.0, %v757
  %759 = vdwg.mxu0
  %v763 = vunpack.c.l.b16 %v177
  %v764 = vunpack.c.h.b16 %v177
  %v765 = vunpack.c.l.b16 %v178
  %v766 = vunpack.c.h.b16 %v178
  %v767 = vunpack.c.l.b16 %v179
  %v768 = vunpack.c.h.b16 %v179
  %v769 = vpack.c.b16 %v765, %v763
  %v770 = vpack.c.b16 %v766, %v764
  %v771 = vpack.c.b16 %v767, %v767
  %v772 = vpack.c.b16 %v768, %v768
  %v776 = vsel %vm199, %v129, 0
  %v779 = vsel %vm199, %v130, 0
  %v782 = vsel %vm199, %v131, 0
  %v785 = vsel %vm199, %v132, 0
  %v788 = vsel %vm320, %v771, 0
  %v791 = vsel %vm320, %v772, 0
  %793 = vmatprep.subr.bf16.mxu0 0
  %794 = vmatpush1.bf16.msra.mxu0 0
  %795 = vmatprep.subr.bf16.mxu0 0
  %796 = vmatpush1.bf16.msra.mxu0 0
  %797 = vmatprep.subr.bf16.mxu0 0
  %798 = vmatpush1.bf16.msra.mxu0 0
  %799 = vmatprep.subr.bf16.mxu0 0
  %800 = vmatpush1.bf16.msra.mxu0 0
  %801 = vmatprep.subr.bf16.mxu0 0
  %802 = vmatpush1.bf16.msra.mxu0 0
  %803 = vmatprep.subr.bf16.mxu0 0
  %804 = vmatpush1.bf16.msra.mxu0 0
  %805 = vmatprep.subr.bf16.mxu0 %v791
  %806 = vmatpush1.bf16.msra.mxu0 %v788
  %807 = vmatprep.subr.bf16.mxu0 %v770
  %808 = vmatpush1.bf16.msra.mxu0 %v769
  %809 = vmatprep.subr.bf16.mxu0 0
  %810 = vmatpush2.bf16.msra.mxu0 0
  %811 = vmatprep.subr.bf16.mxu0 0
  %812 = vmatpush2.bf16.msra.mxu0 0
  %813 = vmatprep.subr.bf16.mxu0 0
  %814 = vmatpush2.bf16.msra.mxu0 0
  %815 = vmatprep.subr.bf16.mxu0 0
  %816 = vmatpush2.bf16.msra.mxu0 0
  %817 = vmatprep.subr.bf16.mxu0 0
  %818 = vmatpush2.bf16.msra.mxu0 0
  %819 = vmatprep.subr.bf16.mxu0 0
  %820 = vmatpush2.bf16.msra.mxu0 0
  %821 = vmatprep.subr.bf16.mxu0 0
  %822 = vmatpush2.bf16.msra.mxu0 0
  %823 = vmatprep.subr.bf16.mxu0 0
  %824 = vmatpush2.bf16.msra.mxu0 0
  %825 = vmatprep.mubr.bf16.mxu0 0
  %826 = vmatmul.mubr.bf16.gmra.mxu0 %v776
  %v827 = vpop.f32.mrf.mxu0
  %v828 = vadd.f32 %v362, %v827
  %v829 = vpop.f32.mrf.mxu0
  %v830 = vadd.f32 %v364, %v829
  %v831 = vpop.f32.mrf.mxu0
  %v832 = vadd.f32 %v366, %v831
  %v833 = vpop.f32.mrf.mxu0
  %v834 = vadd.f32 %v368, %v833
  %835 = vmatprep.mubr.bf16.mxu0 0
  %836 = vmatmul.mubr.bf16.gmra.mxu0 %v779
  %v837 = vpop.f32.mrf.mxu0
  %v838 = vadd.f32 %v372, %v837
  %v839 = vpop.f32.mrf.mxu0
  %v840 = vadd.f32 %v374, %v839
  %v841 = vpop.f32.mrf.mxu0
  %v842 = vadd.f32 %v376, %v841
  %v843 = vpop.f32.mrf.mxu0
  %v844 = vadd.f32 %v378, %v843
  %845 = vmatprep.mubr.bf16.mxu0 0
  %846 = vmatmul.mubr.bf16.gmra.mxu0 %v782
  %v847 = vpop.f32.mrf.mxu0
  %v848 = vadd.f32 %v382, %v847
  %v849 = vpop.f32.mrf.mxu0
  %v850 = vadd.f32 %v384, %v849
  %v851 = vpop.f32.mrf.mxu0
  %v852 = vadd.f32 %v386, %v851
  %v853 = vpop.f32.mrf.mxu0
  %v854 = vadd.f32 %v388, %v853
  %855 = vmatprep.mubr.bf16.mxu0 0
  %856 = vmatmul.mubr.bf16.gmra.mxu0 %v785
  %v857 = vpop.f32.mrf.mxu0
  %v858 = vadd.f32 %v392, %v857
  %v859 = vpop.f32.mrf.mxu0
  %v860 = vadd.f32 %v394, %v859
  %v861 = vpop.f32.mrf.mxu0
  %v862 = vadd.f32 %v396, %v861
  %v863 = vpop.f32.mrf.mxu0
  %v864 = vadd.f32 %v398, %v863
  %865 = vmatprep.mubr.bf16.mxu0 0
  %866 = vmatmul.mubr.bf16.gmra.mxu0 %v201
  %v867 = vpop.f32.mrf.mxu0
  %v868 = vadd.f32 %v402, %v867
  %v869 = vpop.f32.mrf.mxu0
  %v870 = vadd.f32 %v404, %v869
  %v871 = vpop.f32.mrf.mxu0
  %v872 = vadd.f32 %v406, %v871
  %v873 = vpop.f32.mrf.mxu0
  %v874 = vadd.f32 %v408, %v873
  %875 = vmatprep.mubr.bf16.mxu0 0
  %876 = vmatmul.mubr.bf16.gmra.mxu0 %v204
  %v877 = vpop.f32.mrf.mxu0
  %v878 = vadd.f32 %v412, %v877
  %v879 = vpop.f32.mrf.mxu0
  %v880 = vadd.f32 %v414, %v879
  %v881 = vpop.f32.mrf.mxu0
  %v882 = vadd.f32 %v416, %v881
  %v883 = vpop.f32.mrf.mxu0
  %v884 = vadd.f32 %v418, %v883
  %885 = vmatprep.mubr.bf16.mxu0 0
  %886 = vmatmul.mubr.bf16.gmra.mxu0 %v207
  %v887 = vpop.f32.mrf.mxu0
  %v888 = vadd.f32 %v422, %v887
  %v889 = vpop.f32.mrf.mxu0
  %v890 = vadd.f32 %v424, %v889
  %v891 = vpop.f32.mrf.mxu0
  %v892 = vadd.f32 %v426, %v891
  %v893 = vpop.f32.mrf.mxu0
  %v894 = vadd.f32 %v428, %v893
  %895 = vmatprep.mubr.bf16.mxu0 0
  %896 = vmatmul.mubr.bf16.gmra.mxu0 %v210
  %v897 = vpop.f32.mrf.mxu0
  %v898 = vadd.f32 %v432, %v897
  %v899 = vpop.f32.mrf.mxu0
  %v900 = vadd.f32 %v434, %v899
  %v901 = vpop.f32.mrf.mxu0
  %v902 = vadd.f32 %v436, %v901
  %v903 = vpop.f32.mrf.mxu0
  %v904 = vadd.f32 %v438, %v903
  %905 = vmatprep.mubr.bf16.mxu0 0
  %906 = vmatmul.mubr.bf16.gmra.mxu0 %v213
  %v907 = vpop.f32.mrf.mxu0
  %v908 = vadd.f32 %v442, %v907
  %v909 = vpop.f32.mrf.mxu0
  %v910 = vadd.f32 %v444, %v909
  %v911 = vpop.f32.mrf.mxu0
  %v912 = vadd.f32 %v446, %v911
  %v913 = vpop.f32.mrf.mxu0
  %v914 = vadd.f32 %v448, %v913
  %915 = vmatprep.mubr.bf16.mxu0 0
  %916 = vmatmul.mubr.bf16.gmra.mxu0 %v216
  %v917 = vpop.f32.mrf.mxu0
  %v918 = vadd.f32 %v452, %v917
  %v919 = vpop.f32.mrf.mxu0
  %v920 = vadd.f32 %v454, %v919
  %v921 = vpop.f32.mrf.mxu0
  %v922 = vadd.f32 %v456, %v921
  %v923 = vpop.f32.mrf.mxu0
  %v924 = vadd.f32 %v458, %v923
  %925 = vmatprep.mubr.bf16.mxu0 0
  %926 = vmatmul.mubr.bf16.gmra.mxu0 %v219
  %v927 = vpop.f32.mrf.mxu0
  %v928 = vadd.f32 %v462, %v927
  %v929 = vpop.f32.mrf.mxu0
  %v930 = vadd.f32 %v464, %v929
  %v931 = vpop.f32.mrf.mxu0
  %v932 = vadd.f32 %v466, %v931
  %v933 = vpop.f32.mrf.mxu0
  %v934 = vadd.f32 %v468, %v933
  %935 = vmatprep.mubr.bf16.mxu0 0
  %936 = vmatmul.mubr.bf16.gmra.mxu0 %v222
  %v937 = vpop.f32.mrf.mxu0
  %v938 = vadd.f32 %v472, %v937
  %v939 = vpop.f32.mrf.mxu0
  %v940 = vadd.f32 %v474, %v939
  %v941 = vpop.f32.mrf.mxu0
  %v942 = vadd.f32 %v476, %v941
  %v943 = vpop.f32.mrf.mxu0
  %v944 = vadd.f32 %v478, %v943
  %945 = vmatprep.mubr.bf16.mxu0 0
  %946 = vmatmul.mubr.bf16.gmra.mxu0 %v225
  %v947 = vpop.f32.mrf.mxu0
  %v948 = vadd.f32 %v482, %v947
  %v949 = vpop.f32.mrf.mxu0
  %v950 = vadd.f32 %v484, %v949
  %v951 = vpop.f32.mrf.mxu0
  %v952 = vadd.f32 %v486, %v951
  %v953 = vpop.f32.mrf.mxu0
  %v954 = vadd.f32 %v488, %v953
  %955 = vmatprep.mubr.bf16.mxu0 0
  %956 = vmatmul.mubr.bf16.gmra.mxu0 %v228
  %v957 = vpop.f32.mrf.mxu0
  %v958 = vadd.f32 %v492, %v957
  %v959 = vpop.f32.mrf.mxu0
  %v960 = vadd.f32 %v494, %v959
  %v961 = vpop.f32.mrf.mxu0
  %v962 = vadd.f32 %v496, %v961
  %v963 = vpop.f32.mrf.mxu0
  %v964 = vadd.f32 %v498, %v963
  %965 = vmatprep.mubr.bf16.mxu0 0
  %966 = vmatmul.mubr.bf16.gmra.mxu0 %v231
  %v967 = vpop.f32.mrf.mxu0
  %v968 = vadd.f32 %v502, %v967
  %v969 = vpop.f32.mrf.mxu0
  %v970 = vadd.f32 %v504, %v969
  %v971 = vpop.f32.mrf.mxu0
  %v972 = vadd.f32 %v506, %v971
  %v973 = vpop.f32.mrf.mxu0
  %v974 = vadd.f32 %v508, %v973
  %975 = vmatprep.mubr.bf16.mxu0 0
  %976 = vmatmul.mubr.bf16.gmra.mxu0 %v234
  %v977 = vpop.f32.mrf.mxu0
  %v978 = vadd.f32 %v512, %v977
  %v979 = vpop.f32.mrf.mxu0
  %v980 = vadd.f32 %v514, %v979
  %v981 = vpop.f32.mrf.mxu0
  %v982 = vadd.f32 %v516, %v981
  %v983 = vpop.f32.mrf.mxu0
  %v984 = vadd.f32 %v518, %v983
  %985 = vmatprep.mubr.bf16.mxu0 0
  %986 = vmatmul.mubr.bf16.gmra.mxu0 %v237
  %v987 = vpop.f32.mrf.mxu0
  %v988 = vadd.f32 %v522, %v987
  %v989 = vpop.f32.mrf.mxu0
  %v990 = vadd.f32 %v524, %v989
  %v991 = vpop.f32.mrf.mxu0
  %v992 = vadd.f32 %v526, %v991
  %v993 = vpop.f32.mrf.mxu0
  %v994 = vadd.f32 %v528, %v993
  %995 = vmatprep.mubr.bf16.mxu0 0
  %996 = vmatmul.mubr.bf16.gmra.mxu0 %v240
  %v997 = vpop.f32.mrf.mxu0
  %v998 = vadd.f32 %v532, %v997
  %v999 = vpop.f32.mrf.mxu0
  %v1000 = vadd.f32 %v534, %v999
  %v1001 = vpop.f32.mrf.mxu0
  %v1002 = vadd.f32 %v536, %v1001
  %v1003 = vpop.f32.mrf.mxu0
  %v1004 = vadd.f32 %v538, %v1003
  %1005 = vmatprep.mubr.bf16.mxu0 0
  %1006 = vmatmul.mubr.bf16.gmra.mxu0 %v243
  %v1007 = vpop.f32.mrf.mxu0
  %v1008 = vadd.f32 %v542, %v1007
  %v1009 = vpop.f32.mrf.mxu0
  %v1010 = vadd.f32 %v544, %v1009
  %v1011 = vpop.f32.mrf.mxu0
  %v1012 = vadd.f32 %v546, %v1011
  %v1013 = vpop.f32.mrf.mxu0
  %v1014 = vadd.f32 %v548, %v1013
  %1015 = vmatprep.mubr.bf16.mxu0 0
  %1016 = vmatmul.mubr.bf16.gmra.mxu0 %v246
  %v1017 = vpop.f32.mrf.mxu0
  %v1018 = vadd.f32 %v552, %v1017
  %v1019 = vpop.f32.mrf.mxu0
  %v1020 = vadd.f32 %v554, %v1019
  %v1021 = vpop.f32.mrf.mxu0
  %v1022 = vadd.f32 %v556, %v1021
  %v1023 = vpop.f32.mrf.mxu0
  %v1024 = vadd.f32 %v558, %v1023
  %1025 = vmatprep.mubr.bf16.mxu0 0
  %1026 = vmatmul.mubr.bf16.gmra.mxu0 %v249
  %v1027 = vpop.f32.mrf.mxu0
  %v1028 = vadd.f32 %v562, %v1027
  %v1029 = vpop.f32.mrf.mxu0
  %v1030 = vadd.f32 %v564, %v1029
  %v1031 = vpop.f32.mrf.mxu0
  %v1032 = vadd.f32 %v566, %v1031
  %v1033 = vpop.f32.mrf.mxu0
  %v1034 = vadd.f32 %v568, %v1033
  %1035 = vmatprep.mubr.bf16.mxu0 0
  %1036 = vmatmul.mubr.bf16.gmra.mxu0 %v252
  %v1037 = vpop.f32.mrf.mxu0
  %v1038 = vadd.f32 %v572, %v1037
  %v1039 = vpop.f32.mrf.mxu0
  %v1040 = vadd.f32 %v574, %v1039
  %v1041 = vpop.f32.mrf.mxu0
  %v1042 = vadd.f32 %v576, %v1041
  %v1043 = vpop.f32.mrf.mxu0
  %v1044 = vadd.f32 %v578, %v1043
  %1045 = vmatprep.mubr.bf16.mxu0 0
  %1046 = vmatmul.mubr.bf16.gmra.mxu0 %v255
  %v1047 = vpop.f32.mrf.mxu0
  %v1048 = vadd.f32 %v582, %v1047
  %v1049 = vpop.f32.mrf.mxu0
  %v1050 = vadd.f32 %v584, %v1049
  %v1051 = vpop.f32.mrf.mxu0
  %v1052 = vadd.f32 %v586, %v1051
  %v1053 = vpop.f32.mrf.mxu0
  %v1054 = vadd.f32 %v588, %v1053
  %1055 = vmatprep.mubr.bf16.mxu0 0
  %1056 = vmatmul.mubr.bf16.gmra.mxu0 %v258
  %v1057 = vpop.f32.mrf.mxu0
  %v1058 = vadd.f32 %v592, %v1057
  %v1059 = vpop.f32.mrf.mxu0
  %v1060 = vadd.f32 %v594, %v1059
  %v1061 = vpop.f32.mrf.mxu0
  %v1062 = vadd.f32 %v596, %v1061
  %v1063 = vpop.f32.mrf.mxu0
  %v1064 = vadd.f32 %v598, %v1063
  %1065 = vmatprep.mubr.bf16.mxu0 0
  %1066 = vmatmul.mubr.bf16.gmra.mxu0 %v261
  %v1067 = vpop.f32.mrf.mxu0
  %v1068 = vadd.f32 %v602, %v1067
  %v1069 = vpop.f32.mrf.mxu0
  %v1070 = vadd.f32 %v604, %v1069
  %v1071 = vpop.f32.mrf.mxu0
  %v1072 = vadd.f32 %v606, %v1071
  %v1073 = vpop.f32.mrf.mxu0
  %v1074 = vadd.f32 %v608, %v1073
  %1075 = vmatprep.mubr.bf16.mxu0 0
  %1076 = vmatmul.mubr.bf16.gmra.mxu0 %v264
  %v1077 = vpop.f32.mrf.mxu0
  %v1078 = vadd.f32 %v612, %v1077
  %v1079 = vpop.f32.mrf.mxu0
  %v1080 = vadd.f32 %v614, %v1079
  %v1081 = vpop.f32.mrf.mxu0
  %v1082 = vadd.f32 %v616, %v1081
  %v1083 = vpop.f32.mrf.mxu0
  %v1084 = vadd.f32 %v618, %v1083
  %1085 = vmatprep.mubr.bf16.mxu0 0
  %1086 = vmatmul.mubr.bf16.gmra.mxu0 %v267
  %v1087 = vpop.f32.mrf.mxu0
  %v1088 = vadd.f32 %v622, %v1087
  %v1089 = vpop.f32.mrf.mxu0
  %v1090 = vadd.f32 %v624, %v1089
  %v1091 = vpop.f32.mrf.mxu0
  %v1092 = vadd.f32 %v626, %v1091
  %v1093 = vpop.f32.mrf.mxu0
  %v1094 = vadd.f32 %v628, %v1093
  %1095 = vmatprep.mubr.bf16.mxu0 0
  %1096 = vmatmul.mubr.bf16.gmra.mxu0 %v270
  %v1097 = vpop.f32.mrf.mxu0
  %v1098 = vadd.f32 %v632, %v1097
  %v1099 = vpop.f32.mrf.mxu0
  %v1100 = vadd.f32 %v634, %v1099
  %v1101 = vpop.f32.mrf.mxu0
  %v1102 = vadd.f32 %v636, %v1101
  %v1103 = vpop.f32.mrf.mxu0
  %v1104 = vadd.f32 %v638, %v1103
  %1105 = vmatprep.mubr.bf16.mxu0 0
  %1106 = vmatmul.mubr.bf16.gmra.mxu0 %v273
  %v1107 = vpop.f32.mrf.mxu0
  %v1108 = vadd.f32 %v642, %v1107
  %v1109 = vpop.f32.mrf.mxu0
  %v1110 = vadd.f32 %v644, %v1109
  %v1111 = vpop.f32.mrf.mxu0
  %v1112 = vadd.f32 %v646, %v1111
  %v1113 = vpop.f32.mrf.mxu0
  %v1114 = vadd.f32 %v648, %v1113
  %1115 = vmatprep.mubr.bf16.mxu0 0
  %1116 = vmatmul.mubr.bf16.gmra.mxu0 %v276
  %v1117 = vpop.f32.mrf.mxu0
  %v1118 = vadd.f32 %v652, %v1117
  %v1119 = vpop.f32.mrf.mxu0
  %v1120 = vadd.f32 %v654, %v1119
  %v1121 = vpop.f32.mrf.mxu0
  %v1122 = vadd.f32 %v656, %v1121
  %v1123 = vpop.f32.mrf.mxu0
  %v1124 = vadd.f32 %v658, %v1123
  %1125 = vmatprep.mubr.bf16.mxu0 0
  %1126 = vmatmul.mubr.bf16.gmra.mxu0 %v279
  %v1127 = vpop.f32.mrf.mxu0
  %v1128 = vadd.f32 %v662, %v1127
  %v1129 = vpop.f32.mrf.mxu0
  %v1130 = vadd.f32 %v664, %v1129
  %v1131 = vpop.f32.mrf.mxu0
  %v1132 = vadd.f32 %v666, %v1131
  %v1133 = vpop.f32.mrf.mxu0
  %v1134 = vadd.f32 %v668, %v1133
  %1135 = vmatprep.mubr.bf16.mxu0 0
  %1136 = vmatmul.mubr.bf16.gmra.mxu0 %v282
  %v1137 = vpop.f32.mrf.mxu0
  %v1138 = vadd.f32 %v672, %v1137
  %v1139 = vpop.f32.mrf.mxu0
  %v1140 = vadd.f32 %v674, %v1139
  %v1141 = vpop.f32.mrf.mxu0
  %v1142 = vadd.f32 %v676, %v1141
  %v1143 = vpop.f32.mrf.mxu0
  %v1144 = vadd.f32 %v678, %v1143
  %1145 = vmatprep.mubr.bf16.mxu0 0
  %1146 = vmatmul.mubr.bf16.gmra.mxu0 %v285
  %v1147 = vpop.f32.mrf.mxu0
  %v1148 = vadd.f32 %v682, %v1147
  %v1149 = vpop.f32.mrf.mxu0
  %v1150 = vadd.f32 %v684, %v1149
  %v1151 = vpop.f32.mrf.mxu0
  %v1152 = vadd.f32 %v686, %v1151
  %v1153 = vpop.f32.mrf.mxu0
  %v1154 = vadd.f32 %v688, %v1153
  %1155 = vmatprep.mubr.bf16.mxu0 0
  %1156 = vmatmul.mubr.bf16.gmra.mxu0 %v288
  %v1157 = vpop.f32.mrf.mxu0
  %v1158 = vadd.f32 %v692, %v1157
  %v1159 = vpop.f32.mrf.mxu0
  %v1160 = vadd.f32 %v694, %v1159
  %v1161 = vpop.f32.mrf.mxu0
  %v1162 = vadd.f32 %v696, %v1161
  %v1163 = vpop.f32.mrf.mxu0
  %v1164 = vadd.f32 %v698, %v1163
  %1165 = vmatprep.mubr.bf16.mxu0 0
  %1166 = vmatmul.mubr.bf16.gmra.mxu0 %v291
  %v1167 = vpop.f32.mrf.mxu0
  %v1168 = vadd.f32 %v702, %v1167
  %v1169 = vpop.f32.mrf.mxu0
  %v1170 = vadd.f32 %v704, %v1169
  %v1171 = vpop.f32.mrf.mxu0
  %v1172 = vadd.f32 %v706, %v1171
  %v1173 = vpop.f32.mrf.mxu0
  %v1174 = vadd.f32 %v708, %v1173
  %1175 = vmatprep.mubr.bf16.mxu0 0
  %1176 = vmatmul.mubr.bf16.gmra.mxu0 %v294
  %v1177 = vpop.f32.mrf.mxu0
  %v1178 = vadd.f32 %v712, %v1177
  %v1179 = vpop.f32.mrf.mxu0
  %v1180 = vadd.f32 %v714, %v1179
  %v1181 = vpop.f32.mrf.mxu0
  %v1182 = vadd.f32 %v716, %v1181
  %v1183 = vpop.f32.mrf.mxu0
  %v1184 = vadd.f32 %v718, %v1183
  %1185 = vmatprep.mubr.bf16.mxu0 0
  %1186 = vmatmul.mubr.bf16.gmra.mxu0 %v297
  %v1187 = vpop.f32.mrf.mxu0
  %v1188 = vadd.f32 %v722, %v1187
  %v1189 = vpop.f32.mrf.mxu0
  %v1190 = vadd.f32 %v724, %v1189
  %v1191 = vpop.f32.mrf.mxu0
  %v1192 = vadd.f32 %v726, %v1191
  %v1193 = vpop.f32.mrf.mxu0
  %v1194 = vadd.f32 %v728, %v1193
  %1195 = vmatprep.mubr.bf16.mxu0 0
  %1196 = vmatmul.mubr.bf16.gmra.mxu0 %v300
  %v1197 = vpop.f32.mrf.mxu0
  %v1198 = vadd.f32 %v732, %v1197
  %v1199 = vpop.f32.mrf.mxu0
  %v1200 = vadd.f32 %v734, %v1199
  %v1201 = vpop.f32.mrf.mxu0
  %v1202 = vadd.f32 %v736, %v1201
  %v1203 = vpop.f32.mrf.mxu0
  %v1204 = vadd.f32 %v738, %v1203
  %1205 = vmatprep.mubr.bf16.mxu0 0
  %1206 = vmatmul.mubr.bf16.gmra.mxu0 %v303
  %v1207 = vpop.f32.mrf.mxu0
  %v1208 = vadd.f32 %v742, %v1207
  %v1209 = vpop.f32.mrf.mxu0
  %v1210 = vadd.f32 %v744, %v1209
  %v1211 = vpop.f32.mrf.mxu0
  %v1212 = vadd.f32 %v746, %v1211
  %v1213 = vpop.f32.mrf.mxu0
  %v1214 = vadd.f32 %v748, %v1213
  %1215 = vmatprep.mubr.bf16.mxu0 0
  %1216 = vmatmul.mubr.bf16.gmra.mxu0 %v306
  %v1217 = vpop.f32.mrf.mxu0
  %v1218 = vadd.f32 %v752, %v1217
  %v1219 = vpop.f32.mrf.mxu0
  %v1220 = vadd.f32 %v754, %v1219
  %v1221 = vpop.f32.mrf.mxu0
  %v1222 = vadd.f32 %v756, %v1221
  %v1223 = vpop.f32.mrf.mxu0
  %v1224 = vadd.f32 %v758, %v1223
  %1225 = vdwg.mxu0
  %s1226 = scalar_lea.vmem %s1, 48
  %v1227 = vld [vmem:[%s1226] sm:$0xff]
  %v1228 = vld [vmem:[%s1226 + $0x8] sm:$0xff]
  %v1229 = vld [vmem:[%s1226 + $0x10] sm:$0xff]
  %v1233 = vunpack.c.l.b16 %v1227
  %v1234 = vunpack.c.h.b16 %v1227
  %v1235 = vunpack.c.l.b16 %v1228
  %v1236 = vunpack.c.h.b16 %v1228
  %v1237 = vunpack.c.l.b16 %v1229
  %v1238 = vunpack.c.h.b16 %v1229
  %v1239 = vpack.c.b16 %v1235, %v1233
  %v1240 = vpack.c.b16 %v1236, %v1234
  %v1241 = vpack.c.b16 %v1237, %v1237
  %v1242 = vpack.c.b16 %v1238, %v1238
  %v1246 = vsel %vm199, %v173, 0
  %v1249 = vsel %vm199, %v174, 0
  %v1252 = vsel %vm199, %v175, 0
  %v1255 = vsel %vm199, %v176, 0
  %v1258 = vsel %vm320, %v1241, 0
  %v1261 = vsel %vm320, %v1242, 0
  %1263 = vmatprep.subr.bf16.mxu0 0
  %1264 = vmatpush1.bf16.msra.mxu0 0
  %1265 = vmatprep.subr.bf16.mxu0 0
  %1266 = vmatpush1.bf16.msra.mxu0 0
  %1267 = vmatprep.subr.bf16.mxu0 0
  %1268 = vmatpush1.bf16.msra.mxu0 0
  %1269 = vmatprep.subr.bf16.mxu0 0
  %1270 = vmatpush1.bf16.msra.mxu0 0
  %1271 = vmatprep.subr.bf16.mxu0 0
  %1272 = vmatpush1.bf16.msra.mxu0 0
  %1273 = vmatprep.subr.bf16.mxu0 0
  %1274 = vmatpush1.bf16.msra.mxu0 0
  %1275 = vmatprep.subr.bf16.mxu0 %v1261
  %1276 = vmatpush1.bf16.msra.mxu0 %v1258
  %1277 = vmatprep.subr.bf16.mxu0 %v1240
  %1278 = vmatpush1.bf16.msra.mxu0 %v1239
  %1279 = vmatprep.subr.bf16.mxu0 0
  %1280 = vmatpush2.bf16.msra.mxu0 0
  %1281 = vmatprep.subr.bf16.mxu0 0
  %1282 = vmatpush2.bf16.msra.mxu0 0
  %1283 = vmatprep.subr.bf16.mxu0 0
  %1284 = vmatpush2.bf16.msra.mxu0 0
  %1285 = vmatprep.subr.bf16.mxu0 0
  %1286 = vmatpush2.bf16.msra.mxu0 0
  %1287 = vmatprep.subr.bf16.mxu0 0
  %1288 = vmatpush2.bf16.msra.mxu0 0
  %1289 = vmatprep.subr.bf16.mxu0 0
  %1290 = vmatpush2.bf16.msra.mxu0 0
  %1291 = vmatprep.subr.bf16.mxu0 0
  %1292 = vmatpush2.bf16.msra.mxu0 0
  %1293 = vmatprep.subr.bf16.mxu0 0
  %1294 = vmatpush2.bf16.msra.mxu0 0
  %1295 = vmatprep.mubr.bf16.mxu0 0
  %1296 = vmatmul.mubr.bf16.gmra.mxu0 %v213
  %v1297 = vpop.f32.mrf.mxu0
  %v1298 = vadd.f32 0.0, %v1297
  %v1299 = vpop.f32.mrf.mxu0
  %v1300 = vadd.f32 0.0, %v1299
  %v1301 = vpop.f32.mrf.mxu0
  %v1302 = vadd.f32 0.0, %v1301
  %v1303 = vpop.f32.mrf.mxu0
  %v1304 = vadd.f32 0.0, %v1303
  %1305 = vmatprep.mubr.bf16.mxu0 0
  %1306 = vmatmul.mubr.bf16.gmra.mxu0 %v216
  %v1307 = vpop.f32.mrf.mxu0
  %v1308 = vadd.f32 0.0, %v1307
  %v1309 = vpop.f32.mrf.mxu0
  %v1310 = vadd.f32 0.0, %v1309
  %v1311 = vpop.f32.mrf.mxu0
  %v1312 = vadd.f32 0.0, %v1311
  %v1313 = vpop.f32.mrf.mxu0
  %v1314 = vadd.f32 0.0, %v1313
  %1315 = vmatprep.mubr.bf16.mxu0 0
  %1316 = vmatmul.mubr.bf16.gmra.mxu0 %v219
  %v1317 = vpop.f32.mrf.mxu0
  %v1318 = vadd.f32 0.0, %v1317
  %v1319 = vpop.f32.mrf.mxu0
  %v1320 = vadd.f32 0.0, %v1319
  %v1321 = vpop.f32.mrf.mxu0
  %v1322 = vadd.f32 0.0, %v1321
  %v1323 = vpop.f32.mrf.mxu0
  %v1324 = vadd.f32 0.0, %v1323
  %1325 = vmatprep.mubr.bf16.mxu0 0
  %1326 = vmatmul.mubr.bf16.gmra.mxu0 %v222
  %v1327 = vpop.f32.mrf.mxu0
  %v1328 = vadd.f32 0.0, %v1327
  %v1329 = vpop.f32.mrf.mxu0
  %v1330 = vadd.f32 0.0, %v1329
  %v1331 = vpop.f32.mrf.mxu0
  %v1332 = vadd.f32 0.0, %v1331
  %v1333 = vpop.f32.mrf.mxu0
  %v1334 = vadd.f32 0.0, %v1333
  %1335 = vmatprep.mubr.bf16.mxu0 0
  %1336 = vmatmul.mubr.bf16.gmra.mxu0 %v225
  %v1337 = vpop.f32.mrf.mxu0
  %v1338 = vadd.f32 0.0, %v1337
  %v1339 = vpop.f32.mrf.mxu0
  %v1340 = vadd.f32 0.0, %v1339
  %v1341 = vpop.f32.mrf.mxu0
  %v1342 = vadd.f32 0.0, %v1341
  %v1343 = vpop.f32.mrf.mxu0
  %v1344 = vadd.f32 0.0, %v1343
  %1345 = vmatprep.mubr.bf16.mxu0 0
  %1346 = vmatmul.mubr.bf16.gmra.mxu0 %v228
  %v1347 = vpop.f32.mrf.mxu0
  %v1348 = vadd.f32 0.0, %v1347
  %v1349 = vpop.f32.mrf.mxu0
  %v1350 = vadd.f32 0.0, %v1349
  %v1351 = vpop.f32.mrf.mxu0
  %v1352 = vadd.f32 0.0, %v1351
  %v1353 = vpop.f32.mrf.mxu0
  %v1354 = vadd.f32 0.0, %v1353
  %1355 = vmatprep.mubr.bf16.mxu0 0
  %1356 = vmatmul.mubr.bf16.gmra.mxu0 %v231
  %v1357 = vpop.f32.mrf.mxu0
  %v1358 = vadd.f32 0.0, %v1357
  %v1359 = vpop.f32.mrf.mxu0
  %v1360 = vadd.f32 0.0, %v1359
  %v1361 = vpop.f32.mrf.mxu0
  %v1362 = vadd.f32 0.0, %v1361
  %v1363 = vpop.f32.mrf.mxu0
  %v1364 = vadd.f32 0.0, %v1363
  %1365 = vmatprep.mubr.bf16.mxu0 0
  %1366 = vmatmul.mubr.bf16.gmra.mxu0 %v234
  %v1367 = vpop.f32.mrf.mxu0
  %v1368 = vadd.f32 0.0, %v1367
  %v1369 = vpop.f32.mrf.mxu0
  %v1370 = vadd.f32 0.0, %v1369
  %v1371 = vpop.f32.mrf.mxu0
  %v1372 = vadd.f32 0.0, %v1371
  %v1373 = vpop.f32.mrf.mxu0
  %v1374 = vadd.f32 0.0, %v1373
  %1375 = vmatprep.mubr.bf16.mxu0 0
  %1376 = vmatmul.mubr.bf16.gmra.mxu0 %v237
  %v1377 = vpop.f32.mrf.mxu0
  %v1378 = vadd.f32 0.0, %v1377
  %v1379 = vpop.f32.mrf.mxu0
  %v1380 = vadd.f32 0.0, %v1379
  %v1381 = vpop.f32.mrf.mxu0
  %v1382 = vadd.f32 0.0, %v1381
  %v1383 = vpop.f32.mrf.mxu0
  %v1384 = vadd.f32 0.0, %v1383
  %1385 = vmatprep.mubr.bf16.mxu0 0
  %1386 = vmatmul.mubr.bf16.gmra.mxu0 %v240
  %v1387 = vpop.f32.mrf.mxu0
  %v1388 = vadd.f32 0.0, %v1387
  %v1389 = vpop.f32.mrf.mxu0
  %v1390 = vadd.f32 0.0, %v1389
  %v1391 = vpop.f32.mrf.mxu0
  %v1392 = vadd.f32 0.0, %v1391
  %v1393 = vpop.f32.mrf.mxu0
  %v1394 = vadd.f32 0.0, %v1393
  %1395 = vmatprep.mubr.bf16.mxu0 0
  %1396 = vmatmul.mubr.bf16.gmra.mxu0 %v243
  %v1397 = vpop.f32.mrf.mxu0
  %v1398 = vadd.f32 0.0, %v1397
  %v1399 = vpop.f32.mrf.mxu0
  %v1400 = vadd.f32 0.0, %v1399
  %v1401 = vpop.f32.mrf.mxu0
  %v1402 = vadd.f32 0.0, %v1401
  %v1403 = vpop.f32.mrf.mxu0
  %v1404 = vadd.f32 0.0, %v1403
  %1405 = vmatprep.mubr.bf16.mxu0 0
  %1406 = vmatmul.mubr.bf16.gmra.mxu0 %v246
  %v1407 = vpop.f32.mrf.mxu0
  %v1408 = vadd.f32 0.0, %v1407
  %v1409 = vpop.f32.mrf.mxu0
  %v1410 = vadd.f32 0.0, %v1409
  %v1411 = vpop.f32.mrf.mxu0
  %v1412 = vadd.f32 0.0, %v1411
  %v1413 = vpop.f32.mrf.mxu0
  %v1414 = vadd.f32 0.0, %v1413
  %1415 = vmatprep.mubr.bf16.mxu0 0
  %1416 = vmatmul.mubr.bf16.gmra.mxu0 %v249
  %v1417 = vpop.f32.mrf.mxu0
  %v1418 = vadd.f32 0.0, %v1417
  %v1419 = vpop.f32.mrf.mxu0
  %v1420 = vadd.f32 0.0, %v1419
  %v1421 = vpop.f32.mrf.mxu0
  %v1422 = vadd.f32 0.0, %v1421
  %v1423 = vpop.f32.mrf.mxu0
  %v1424 = vadd.f32 0.0, %v1423
  %1425 = vmatprep.mubr.bf16.mxu0 0
  %1426 = vmatmul.mubr.bf16.gmra.mxu0 %v252
  %v1427 = vpop.f32.mrf.mxu0
  %v1428 = vadd.f32 0.0, %v1427
  %v1429 = vpop.f32.mrf.mxu0
  %v1430 = vadd.f32 0.0, %v1429
  %v1431 = vpop.f32.mrf.mxu0
  %v1432 = vadd.f32 0.0, %v1431
  %v1433 = vpop.f32.mrf.mxu0
  %v1434 = vadd.f32 0.0, %v1433
  %1435 = vmatprep.mubr.bf16.mxu0 0
  %1436 = vmatmul.mubr.bf16.gmra.mxu0 %v255
  %v1437 = vpop.f32.mrf.mxu0
  %v1438 = vadd.f32 0.0, %v1437
  %v1439 = vpop.f32.mrf.mxu0
  %v1440 = vadd.f32 0.0, %v1439
  %v1441 = vpop.f32.mrf.mxu0
  %v1442 = vadd.f32 0.0, %v1441
  %v1443 = vpop.f32.mrf.mxu0
  %v1444 = vadd.f32 0.0, %v1443
  %1445 = vmatprep.mubr.bf16.mxu0 0
  %1446 = vmatmul.mubr.bf16.gmra.mxu0 %v258
  %v1447 = vpop.f32.mrf.mxu0
  %v1448 = vadd.f32 0.0, %v1447
  %v1449 = vpop.f32.mrf.mxu0
  %v1450 = vadd.f32 0.0, %v1449
  %v1451 = vpop.f32.mrf.mxu0
  %v1452 = vadd.f32 0.0, %v1451
  %v1453 = vpop.f32.mrf.mxu0
  %v1454 = vadd.f32 0.0, %v1453
  %1455 = vmatprep.mubr.bf16.mxu0 0
  %1456 = vmatmul.mubr.bf16.gmra.mxu0 %v261
  %v1457 = vpop.f32.mrf.mxu0
  %v1458 = vadd.f32 0.0, %v1457
  %v1459 = vpop.f32.mrf.mxu0
  %v1460 = vadd.f32 0.0, %v1459
  %v1461 = vpop.f32.mrf.mxu0
  %v1462 = vadd.f32 0.0, %v1461
  %v1463 = vpop.f32.mrf.mxu0
  %v1464 = vadd.f32 0.0, %v1463
  %1465 = vmatprep.mubr.bf16.mxu0 0
  %1466 = vmatmul.mubr.bf16.gmra.mxu0 %v264
  %v1467 = vpop.f32.mrf.mxu0
  %v1468 = vadd.f32 0.0, %v1467
  %v1469 = vpop.f32.mrf.mxu0
  %v1470 = vadd.f32 0.0, %v1469
  %v1471 = vpop.f32.mrf.mxu0
  %v1472 = vadd.f32 0.0, %v1471
  %v1473 = vpop.f32.mrf.mxu0
  %v1474 = vadd.f32 0.0, %v1473
  %1475 = vmatprep.mubr.bf16.mxu0 0
  %1476 = vmatmul.mubr.bf16.gmra.mxu0 %v267
  %v1477 = vpop.f32.mrf.mxu0
  %v1478 = vadd.f32 0.0, %v1477
  %v1479 = vpop.f32.mrf.mxu0
  %v1480 = vadd.f32 0.0, %v1479
  %v1481 = vpop.f32.mrf.mxu0
  %v1482 = vadd.f32 0.0, %v1481
  %v1483 = vpop.f32.mrf.mxu0
  %v1484 = vadd.f32 0.0, %v1483
  %1485 = vmatprep.mubr.bf16.mxu0 0
  %1486 = vmatmul.mubr.bf16.gmra.mxu0 %v270
  %v1487 = vpop.f32.mrf.mxu0
  %v1488 = vadd.f32 0.0, %v1487
  %v1489 = vpop.f32.mrf.mxu0
  %v1490 = vadd.f32 0.0, %v1489
  %v1491 = vpop.f32.mrf.mxu0
  %v1492 = vadd.f32 0.0, %v1491
  %v1493 = vpop.f32.mrf.mxu0
  %v1494 = vadd.f32 0.0, %v1493
  %1495 = vmatprep.mubr.bf16.mxu0 0
  %1496 = vmatmul.mubr.bf16.gmra.mxu0 %v273
  %v1497 = vpop.f32.mrf.mxu0
  %v1498 = vadd.f32 0.0, %v1497
  %v1499 = vpop.f32.mrf.mxu0
  %v1500 = vadd.f32 0.0, %v1499
  %v1501 = vpop.f32.mrf.mxu0
  %v1502 = vadd.f32 0.0, %v1501
  %v1503 = vpop.f32.mrf.mxu0
  %v1504 = vadd.f32 0.0, %v1503
  %1505 = vmatprep.mubr.bf16.mxu0 0
  %1506 = vmatmul.mubr.bf16.gmra.mxu0 %v276
  %v1507 = vpop.f32.mrf.mxu0
  %v1508 = vadd.f32 0.0, %v1507
  %v1509 = vpop.f32.mrf.mxu0
  %v1510 = vadd.f32 0.0, %v1509
  %v1511 = vpop.f32.mrf.mxu0
  %v1512 = vadd.f32 0.0, %v1511
  %v1513 = vpop.f32.mrf.mxu0
  %v1514 = vadd.f32 0.0, %v1513
  %1515 = vmatprep.mubr.bf16.mxu0 0
  %1516 = vmatmul.mubr.bf16.gmra.mxu0 %v279
  %v1517 = vpop.f32.mrf.mxu0
  %v1518 = vadd.f32 0.0, %v1517
  %v1519 = vpop.f32.mrf.mxu0
  %v1520 = vadd.f32 0.0, %v1519
  %v1521 = vpop.f32.mrf.mxu0
  %v1522 = vadd.f32 0.0, %v1521
  %v1523 = vpop.f32.mrf.mxu0
  %v1524 = vadd.f32 0.0, %v1523
  %1525 = vmatprep.mubr.bf16.mxu0 0
  %1526 = vmatmul.mubr.bf16.gmra.mxu0 %v282
  %v1527 = vpop.f32.mrf.mxu0
  %v1528 = vadd.f32 0.0, %v1527
  %v1529 = vpop.f32.mrf.mxu0
  %v1530 = vadd.f32 0.0, %v1529
  %v1531 = vpop.f32.mrf.mxu0
  %v1532 = vadd.f32 0.0, %v1531
  %v1533 = vpop.f32.mrf.mxu0
  %v1534 = vadd.f32 0.0, %v1533
  %1535 = vmatprep.mubr.bf16.mxu0 0
  %1536 = vmatmul.mubr.bf16.gmra.mxu0 %v285
  %v1537 = vpop.f32.mrf.mxu0
  %v1538 = vadd.f32 0.0, %v1537
  %v1539 = vpop.f32.mrf.mxu0
  %v1540 = vadd.f32 0.0, %v1539
  %v1541 = vpop.f32.mrf.mxu0
  %v1542 = vadd.f32 0.0, %v1541
  %v1543 = vpop.f32.mrf.mxu0
  %v1544 = vadd.f32 0.0, %v1543
  %1545 = vmatprep.mubr.bf16.mxu0 0
  %1546 = vmatmul.mubr.bf16.gmra.mxu0 %v288
  %v1547 = vpop.f32.mrf.mxu0
  %v1548 = vadd.f32 0.0, %v1547
  %v1549 = vpop.f32.mrf.mxu0
  %v1550 = vadd.f32 0.0, %v1549
  %v1551 = vpop.f32.mrf.mxu0
  %v1552 = vadd.f32 0.0, %v1551
  %v1553 = vpop.f32.mrf.mxu0
  %v1554 = vadd.f32 0.0, %v1553
  %1555 = vmatprep.mubr.bf16.mxu0 0
  %1556 = vmatmul.mubr.bf16.gmra.mxu0 %v291
  %v1557 = vpop.f32.mrf.mxu0
  %v1558 = vadd.f32 0.0, %v1557
  %v1559 = vpop.f32.mrf.mxu0
  %v1560 = vadd.f32 0.0, %v1559
  %v1561 = vpop.f32.mrf.mxu0
  %v1562 = vadd.f32 0.0, %v1561
  %v1563 = vpop.f32.mrf.mxu0
  %v1564 = vadd.f32 0.0, %v1563
  %1565 = vmatprep.mubr.bf16.mxu0 0
  %1566 = vmatmul.mubr.bf16.gmra.mxu0 %v294
  %v1567 = vpop.f32.mrf.mxu0
  %v1568 = vadd.f32 0.0, %v1567
  %v1569 = vpop.f32.mrf.mxu0
  %v1570 = vadd.f32 0.0, %v1569
  %v1571 = vpop.f32.mrf.mxu0
  %v1572 = vadd.f32 0.0, %v1571
  %v1573 = vpop.f32.mrf.mxu0
  %v1574 = vadd.f32 0.0, %v1573
  %1575 = vmatprep.mubr.bf16.mxu0 0
  %1576 = vmatmul.mubr.bf16.gmra.mxu0 %v297
  %v1577 = vpop.f32.mrf.mxu0
  %v1578 = vadd.f32 0.0, %v1577
  %v1579 = vpop.f32.mrf.mxu0
  %v1580 = vadd.f32 0.0, %v1579
  %v1581 = vpop.f32.mrf.mxu0
  %v1582 = vadd.f32 0.0, %v1581
  %v1583 = vpop.f32.mrf.mxu0
  %v1584 = vadd.f32 0.0, %v1583
  %1585 = vmatprep.mubr.bf16.mxu0 0
  %1586 = vmatmul.mubr.bf16.gmra.mxu0 %v300
  %v1587 = vpop.f32.mrf.mxu0
  %v1588 = vadd.f32 0.0, %v1587
  %v1589 = vpop.f32.mrf.mxu0
  %v1590 = vadd.f32 0.0, %v1589
  %v1591 = vpop.f32.mrf.mxu0
  %v1592 = vadd.f32 0.0, %v1591
  %v1593 = vpop.f32.mrf.mxu0
  %v1594 = vadd.f32 0.0, %v1593
  %1595 = vmatprep.mubr.bf16.mxu0 0
  %1596 = vmatmul.mubr.bf16.gmra.mxu0 %v303
  %v1597 = vpop.f32.mrf.mxu0
  %v1598 = vadd.f32 0.0, %v1597
  %v1599 = vpop.f32.mrf.mxu0
  %v1600 = vadd.f32 0.0, %v1599
  %v1601 = vpop.f32.mrf.mxu0
  %v1602 = vadd.f32 0.0, %v1601
  %v1603 = vpop.f32.mrf.mxu0
  %v1604 = vadd.f32 0.0, %v1603
  %1605 = vmatprep.mubr.bf16.mxu0 0
  %1606 = vmatmul.mubr.bf16.gmra.mxu0 %v306
  %v1607 = vpop.f32.mrf.mxu0
  %v1608 = vadd.f32 0.0, %v1607
  %v1609 = vpop.f32.mrf.mxu0
  %v1610 = vadd.f32 0.0, %v1609
  %v1611 = vpop.f32.mrf.mxu0
  %v1612 = vadd.f32 0.0, %v1611
  %v1613 = vpop.f32.mrf.mxu0
  %v1614 = vadd.f32 0.0, %v1613
  %1615 = vmatprep.mubr.bf16.mxu0 0
  %1616 = vmatmul.mubr.bf16.gmra.mxu0 %v309
  %v1617 = vpop.f32.mrf.mxu0
  %v1618 = vadd.f32 0.0, %v1617
  %v1619 = vpop.f32.mrf.mxu0
  %v1620 = vadd.f32 0.0, %v1619
  %v1621 = vpop.f32.mrf.mxu0
  %v1622 = vadd.f32 0.0, %v1621
  %v1623 = vpop.f32.mrf.mxu0
  %v1624 = vadd.f32 0.0, %v1623
  %1625 = vmatprep.mubr.bf16.mxu0 0
  %1626 = vmatmul.mubr.bf16.gmra.mxu0 %v312
  %v1627 = vpop.f32.mrf.mxu0
  %v1628 = vadd.f32 0.0, %v1627
  %v1629 = vpop.f32.mrf.mxu0
  %v1630 = vadd.f32 0.0, %v1629
  %v1631 = vpop.f32.mrf.mxu0
  %v1632 = vadd.f32 0.0, %v1631
  %v1633 = vpop.f32.mrf.mxu0
  %v1634 = vadd.f32 0.0, %v1633
  %1635 = vmatprep.mubr.bf16.mxu0 0
  %1636 = vmatmul.mubr.bf16.gmra.mxu0 %v315
  %v1637 = vpop.f32.mrf.mxu0
  %v1638 = vadd.f32 0.0, %v1637
  %v1639 = vpop.f32.mrf.mxu0
  %v1640 = vadd.f32 0.0, %v1639
  %v1641 = vpop.f32.mrf.mxu0
  %v1642 = vadd.f32 0.0, %v1641
  %v1643 = vpop.f32.mrf.mxu0
  %v1644 = vadd.f32 0.0, %v1643
  %1645 = vmatprep.mubr.bf16.mxu0 0
  %1646 = vmatmul.mubr.bf16.gmra.mxu0 %v318
  %v1647 = vpop.f32.mrf.mxu0
  %v1648 = vadd.f32 0.0, %v1647
  %v1649 = vpop.f32.mrf.mxu0
  %v1650 = vadd.f32 0.0, %v1649
  %v1651 = vpop.f32.mrf.mxu0
  %v1652 = vadd.f32 0.0, %v1651
  %v1653 = vpop.f32.mrf.mxu0
  %v1654 = vadd.f32 0.0, %v1653
  %1655 = vmatprep.mubr.bf16.mxu0 0
  %1656 = vmatmul.mubr.bf16.gmra.mxu0 %v1246
  %v1657 = vpop.f32.mrf.mxu0
  %v1658 = vadd.f32 0.0, %v1657
  %v1659 = vpop.f32.mrf.mxu0
  %v1660 = vadd.f32 0.0, %v1659
  %v1661 = vpop.f32.mrf.mxu0
  %v1662 = vadd.f32 0.0, %v1661
  %v1663 = vpop.f32.mrf.mxu0
  %v1664 = vadd.f32 0.0, %v1663
  %1665 = vmatprep.mubr.bf16.mxu0 0
  %1666 = vmatmul.mubr.bf16.gmra.mxu0 %v1249
  %v1667 = vpop.f32.mrf.mxu0
  %v1668 = vadd.f32 0.0, %v1667
  %v1669 = vpop.f32.mrf.mxu0
  %v1670 = vadd.f32 0.0, %v1669
  %v1671 = vpop.f32.mrf.mxu0
  %v1672 = vadd.f32 0.0, %v1671
  %v1673 = vpop.f32.mrf.mxu0
  %v1674 = vadd.f32 0.0, %v1673
  %1675 = vmatprep.mubr.bf16.mxu0 0
  %1676 = vmatmul.mubr.bf16.gmra.mxu0 %v1252
  %v1677 = vpop.f32.mrf.mxu0
  %v1678 = vadd.f32 0.0, %v1677
  %v1679 = vpop.f32.mrf.mxu0
  %v1680 = vadd.f32 0.0, %v1679
  %v1681 = vpop.f32.mrf.mxu0
  %v1682 = vadd.f32 0.0, %v1681
  %v1683 = vpop.f32.mrf.mxu0
  %v1684 = vadd.f32 0.0, %v1683
  %1685 = vmatprep.mubr.bf16.mxu0 0
  %1686 = vmatmul.mubr.bf16.gmra.mxu0 %v1255
  %v1687 = vpop.f32.mrf.mxu0
  %v1688 = vadd.f32 0.0, %v1687
  %v1689 = vpop.f32.mrf.mxu0
  %v1690 = vadd.f32 0.0, %v1689
  %v1691 = vpop.f32.mrf.mxu0
  %v1692 = vadd.f32 0.0, %v1691
  %v1693 = vpop.f32.mrf.mxu0
  %v1694 = vadd.f32 0.0, %v1693
  %1695 = vdwg.mxu0
  %v1696 = vadd.f32 %v828, %v1298
  %v1697 = vadd.f32 %v830, %v1300
  %v1698 = vadd.f32 %v832, %v1302
  %v1699 = vadd.f32 %v834, %v1304
  %v1700 = vadd.f32 %v838, %v1308
  %v1701 = vadd.f32 %v840, %v1310
  %v1702 = vadd.f32 %v842, %v1312
  %v1703 = vadd.f32 %v844, %v1314
  %v1704 = vadd.f32 %v848, %v1318
  %v1705 = vadd.f32 %v850, %v1320
  %v1706 = vadd.f32 %v852, %v1322
  %v1707 = vadd.f32 %v854, %v1324
  %v1708 = vadd.f32 %v858, %v1328
  %v1709 = vadd.f32 %v860, %v1330
  %v1710 = vadd.f32 %v862, %v1332
  %v1711 = vadd.f32 %v864, %v1334
  %v1712 = vadd.f32 %v868, %v1338
  %v1713 = vadd.f32 %v870, %v1340
  %v1714 = vadd.f32 %v872, %v1342
  %v1715 = vadd.f32 %v874, %v1344
  %v1716 = vadd.f32 %v878, %v1348
  %v1717 = vadd.f32 %v880, %v1350
  %v1718 = vadd.f32 %v882, %v1352
  %v1719 = vadd.f32 %v884, %v1354
  %v1720 = vadd.f32 %v888, %v1358
  %v1721 = vadd.f32 %v890, %v1360
  %v1722 = vadd.f32 %v892, %v1362
  %v1723 = vadd.f32 %v894, %v1364
  %v1724 = vadd.f32 %v898, %v1368
  %v1725 = vadd.f32 %v900, %v1370
  %v1726 = vadd.f32 %v902, %v1372
  %v1727 = vadd.f32 %v904, %v1374
  %v1728 = vadd.f32 %v908, %v1378
  %v1729 = vadd.f32 %v910, %v1380
  %v1730 = vadd.f32 %v912, %v1382
  %v1731 = vadd.f32 %v914, %v1384
  %v1732 = vadd.f32 %v918, %v1388
  %v1733 = vadd.f32 %v920, %v1390
  %v1734 = vadd.f32 %v922, %v1392
  %v1735 = vadd.f32 %v924, %v1394
  %v1736 = vadd.f32 %v928, %v1398
  %v1737 = vadd.f32 %v930, %v1400
  %v1738 = vadd.f32 %v932, %v1402
  %v1739 = vadd.f32 %v934, %v1404
  %v1740 = vadd.f32 %v938, %v1408
  %v1741 = vadd.f32 %v940, %v1410
  %v1742 = vadd.f32 %v942, %v1412
  %v1743 = vadd.f32 %v944, %v1414
  %v1744 = vadd.f32 %v948, %v1418
  %v1745 = vadd.f32 %v950, %v1420
  %v1746 = vadd.f32 %v952, %v1422
  %v1747 = vadd.f32 %v954, %v1424
  %v1748 = vadd.f32 %v958, %v1428
  %v1749 = vadd.f32 %v960, %v1430
  %v1750 = vadd.f32 %v962, %v1432
  %v1751 = vadd.f32 %v964, %v1434
  %v1752 = vadd.f32 %v968, %v1438
  %v1753 = vadd.f32 %v970, %v1440
  %v1754 = vadd.f32 %v972, %v1442
  %v1755 = vadd.f32 %v974, %v1444
  %v1756 = vadd.f32 %v978, %v1448
  %v1757 = vadd.f32 %v980, %v1450
  %v1758 = vadd.f32 %v982, %v1452
  %v1759 = vadd.f32 %v984, %v1454
  %v1760 = vadd.f32 %v988, %v1458
  %v1761 = vadd.f32 %v990, %v1460
  %v1762 = vadd.f32 %v992, %v1462
  %v1763 = vadd.f32 %v994, %v1464
  %v1764 = vadd.f32 %v998, %v1468
  %v1765 = vadd.f32 %v1000, %v1470
  %v1766 = vadd.f32 %v1002, %v1472
  %v1767 = vadd.f32 %v1004, %v1474
  %v1768 = vadd.f32 %v1008, %v1478
  %v1769 = vadd.f32 %v1010, %v1480
  %v1770 = vadd.f32 %v1012, %v1482
  %v1771 = vadd.f32 %v1014, %v1484
  %v1772 = vadd.f32 %v1018, %v1488
  %v1773 = vadd.f32 %v1020, %v1490
  %v1774 = vadd.f32 %v1022, %v1492
  %v1775 = vadd.f32 %v1024, %v1494
  %v1776 = vadd.f32 %v1028, %v1498
  %v1777 = vadd.f32 %v1030, %v1500
  %v1778 = vadd.f32 %v1032, %v1502
  %v1779 = vadd.f32 %v1034, %v1504
  %v1780 = vadd.f32 %v1038, %v1508
  %v1781 = vadd.f32 %v1040, %v1510
  %v1782 = vadd.f32 %v1042, %v1512
  %v1783 = vadd.f32 %v1044, %v1514
  %v1784 = vadd.f32 %v1048, %v1518
  %v1785 = vadd.f32 %v1050, %v1520
  %v1786 = vadd.f32 %v1052, %v1522
  %v1787 = vadd.f32 %v1054, %v1524
  %v1788 = vadd.f32 %v1058, %v1528
  %v1789 = vadd.f32 %v1060, %v1530
  %v1790 = vadd.f32 %v1062, %v1532
  %v1791 = vadd.f32 %v1064, %v1534
  %v1792 = vadd.f32 %v1068, %v1538
  %v1793 = vadd.f32 %v1070, %v1540
  %v1794 = vadd.f32 %v1072, %v1542
  %v1795 = vadd.f32 %v1074, %v1544
  %v1796 = vadd.f32 %v1078, %v1548
  %v1797 = vadd.f32 %v1080, %v1550
  %v1798 = vadd.f32 %v1082, %v1552
  %v1799 = vadd.f32 %v1084, %v1554
  %v1800 = vadd.f32 %v1088, %v1558
  %v1801 = vadd.f32 %v1090, %v1560
  %v1802 = vadd.f32 %v1092, %v1562
  %v1803 = vadd.f32 %v1094, %v1564
  %v1804 = vadd.f32 %v1098, %v1568
  %v1805 = vadd.f32 %v1100, %v1570
  %v1806 = vadd.f32 %v1102, %v1572
  %v1807 = vadd.f32 %v1104, %v1574
  %v1808 = vadd.f32 %v1108, %v1578
  %v1809 = vadd.f32 %v1110, %v1580
  %v1810 = vadd.f32 %v1112, %v1582
  %v1811 = vadd.f32 %v1114, %v1584
  %v1812 = vadd.f32 %v1118, %v1588
  %v1813 = vadd.f32 %v1120, %v1590
  %v1814 = vadd.f32 %v1122, %v1592
  %v1815 = vadd.f32 %v1124, %v1594
  %v1816 = vadd.f32 %v1128, %v1598
  %v1817 = vadd.f32 %v1130, %v1600
  %v1818 = vadd.f32 %v1132, %v1602
  %v1819 = vadd.f32 %v1134, %v1604
  %v1820 = vadd.f32 %v1138, %v1608
  %v1821 = vadd.f32 %v1140, %v1610
  %v1822 = vadd.f32 %v1142, %v1612
  %v1823 = vadd.f32 %v1144, %v1614
  %v1824 = vadd.f32 %v1148, %v1618
  %v1825 = vadd.f32 %v1150, %v1620
  %v1826 = vadd.f32 %v1152, %v1622
  %v1827 = vadd.f32 %v1154, %v1624
  %v1828 = vadd.f32 %v1158, %v1628
  %v1829 = vadd.f32 %v1160, %v1630
  %v1830 = vadd.f32 %v1162, %v1632
  %v1831 = vadd.f32 %v1164, %v1634
  %v1832 = vadd.f32 %v1168, %v1638
  %v1833 = vadd.f32 %v1170, %v1640
  %v1834 = vadd.f32 %v1172, %v1642
  %v1835 = vadd.f32 %v1174, %v1644
  %v1836 = vadd.f32 %v1178, %v1648
  %v1837 = vadd.f32 %v1180, %v1650
  %v1838 = vadd.f32 %v1182, %v1652
  %v1839 = vadd.f32 %v1184, %v1654
  %v1840 = vadd.f32 %v1188, %v1658
  %v1841 = vadd.f32 %v1190, %v1660
  %v1842 = vadd.f32 %v1192, %v1662
  %v1843 = vadd.f32 %v1194, %v1664
  %v1844 = vadd.f32 %v1198, %v1668
  %v1845 = vadd.f32 %v1200, %v1670
  %v1846 = vadd.f32 %v1202, %v1672
  %v1847 = vadd.f32 %v1204, %v1674
  %v1848 = vadd.f32 %v1208, %v1678
  %v1849 = vadd.f32 %v1210, %v1680
  %v1850 = vadd.f32 %v1212, %v1682
  %v1851 = vadd.f32 %v1214, %v1684
  %v1852 = vadd.f32 %v1218, %v1688
  %v1853 = vadd.f32 %v1220, %v1690
  %v1854 = vadd.f32 %v1222, %v1692
  %v1855 = vadd.f32 %v1224, %v1694
  %v1856 = vld [vmem:[%s2] sm:$0x3]
  %v1858 = vlaneseq
  %v1859 = vshrl.u32 %v1858, 7
  %v1860 = vsub.s32 0, %v1859
  %v1861 = vrot.slane %v1856, %v1860
  %v1862 = vlaneseq
  %v1863 = vshrl.u32 %v1862, 7
  %v1864 = vsub.s32 1, %v1863
  %v1865 = vrot.slane %v1856, %v1864
  %v1868 = vadd.f32 %v1696, %v1861
  %v1869 = vadd.f32 %v1697, %v1865
  %v1870 = vadd.f32 %v1698, %v1861
  %v1871 = vadd.f32 %v1699, %v1865
  %v1872 = vadd.f32 %v1700, %v1861
  %v1873 = vadd.f32 %v1701, %v1865
  %v1874 = vadd.f32 %v1702, %v1861
  %v1875 = vadd.f32 %v1703, %v1865
  %v1876 = vadd.f32 %v1704, %v1861
  %v1877 = vadd.f32 %v1705, %v1865
  %v1878 = vadd.f32 %v1706, %v1861
  %v1879 = vadd.f32 %v1707, %v1865
  %v1880 = vadd.f32 %v1708, %v1861
  %v1881 = vadd.f32 %v1709, %v1865
  %v1882 = vadd.f32 %v1710, %v1861
  %v1883 = vadd.f32 %v1711, %v1865
  %v1884 = vadd.f32 %v1712, %v1861
  %v1885 = vadd.f32 %v1713, %v1865
  %v1886 = vadd.f32 %v1714, %v1861
  %v1887 = vadd.f32 %v1715, %v1865
  %v1888 = vadd.f32 %v1716, %v1861
  %v1889 = vadd.f32 %v1717, %v1865
  %v1890 = vadd.f32 %v1718, %v1861
  %v1891 = vadd.f32 %v1719, %v1865
  %v1892 = vadd.f32 %v1720, %v1861
  %v1893 = vadd.f32 %v1721, %v1865
  %v1894 = vadd.f32 %v1722, %v1861
  %v1895 = vadd.f32 %v1723, %v1865
  %v1896 = vadd.f32 %v1724, %v1861
  %v1897 = vadd.f32 %v1725, %v1865
  %v1898 = vadd.f32 %v1726, %v1861
  %v1899 = vadd.f32 %v1727, %v1865
  %v1900 = vadd.f32 %v1728, %v1861
  %v1901 = vadd.f32 %v1729, %v1865
  %v1902 = vadd.f32 %v1730, %v1861
  %v1903 = vadd.f32 %v1731, %v1865
  %v1904 = vadd.f32 %v1732, %v1861
  %v1905 = vadd.f32 %v1733, %v1865
  %v1906 = vadd.f32 %v1734, %v1861
  %v1907 = vadd.f32 %v1735, %v1865
  %v1908 = vadd.f32 %v1736, %v1861
  %v1909 = vadd.f32 %v1737, %v1865
  %v1910 = vadd.f32 %v1738, %v1861
  %v1911 = vadd.f32 %v1739, %v1865
  %v1912 = vadd.f32 %v1740, %v1861
  %v1913 = vadd.f32 %v1741, %v1865
  %v1914 = vadd.f32 %v1742, %v1861
  %v1915 = vadd.f32 %v1743, %v1865
  %v1916 = vadd.f32 %v1744, %v1861
  %v1917 = vadd.f32 %v1745, %v1865
  %v1918 = vadd.f32 %v1746, %v1861
  %v1919 = vadd.f32 %v1747, %v1865
  %v1920 = vadd.f32 %v1748, %v1861
  %v1921 = vadd.f32 %v1749, %v1865
  %v1922 = vadd.f32 %v1750, %v1861
  %v1923 = vadd.f32 %v1751, %v1865
  %v1924 = vadd.f32 %v1752, %v1861
  %v1925 = vadd.f32 %v1753, %v1865
  %v1926 = vadd.f32 %v1754, %v1861
  %v1927 = vadd.f32 %v1755, %v1865
  %v1928 = vadd.f32 %v1756, %v1861
  %v1929 = vadd.f32 %v1757, %v1865
  %v1930 = vadd.f32 %v1758, %v1861
  %v1931 = vadd.f32 %v1759, %v1865
  %v1932 = vadd.f32 %v1760, %v1861
  %v1933 = vadd.f32 %v1761, %v1865
  %v1934 = vadd.f32 %v1762, %v1861
  %v1935 = vadd.f32 %v1763, %v1865
  %v1936 = vadd.f32 %v1764, %v1861
  %v1937 = vadd.f32 %v1765, %v1865
  %v1938 = vadd.f32 %v1766, %v1861
  %v1939 = vadd.f32 %v1767, %v1865
  %v1940 = vadd.f32 %v1768, %v1861
  %v1941 = vadd.f32 %v1769, %v1865
  %v1942 = vadd.f32 %v1770, %v1861
  %v1943 = vadd.f32 %v1771, %v1865
  %v1944 = vadd.f32 %v1772, %v1861
  %v1945 = vadd.f32 %v1773, %v1865
  %v1946 = vadd.f32 %v1774, %v1861
  %v1947 = vadd.f32 %v1775, %v1865
  %v1948 = vadd.f32 %v1776, %v1861
  %v1949 = vadd.f32 %v1777, %v1865
  %v1950 = vadd.f32 %v1778, %v1861
  %v1951 = vadd.f32 %v1779, %v1865
  %v1952 = vadd.f32 %v1780, %v1861
  %v1953 = vadd.f32 %v1781, %v1865
  %v1954 = vadd.f32 %v1782, %v1861
  %v1955 = vadd.f32 %v1783, %v1865
  %v1956 = vadd.f32 %v1784, %v1861
  %v1957 = vadd.f32 %v1785, %v1865
  %v1958 = vadd.f32 %v1786, %v1861
  %v1959 = vadd.f32 %v1787, %v1865
  %v1960 = vadd.f32 %v1788, %v1861
  %v1961 = vadd.f32 %v1789, %v1865
  %v1962 = vadd.f32 %v1790, %v1861
  %v1963 = vadd.f32 %v1791, %v1865
  %v1964 = vadd.f32 %v1792, %v1861
  %v1965 = vadd.f32 %v1793, %v1865
  %v1966 = vadd.f32 %v1794, %v1861
  %v1967 = vadd.f32 %v1795, %v1865
  %v1968 = vadd.f32 %v1796, %v1861
  %v1969 = vadd.f32 %v1797, %v1865
  %v1970 = vadd.f32 %v1798, %v1861
  %v1971 = vadd.f32 %v1799, %v1865
  %v1972 = vadd.f32 %v1800, %v1861
  %v1973 = vadd.f32 %v1801, %v1865
  %v1974 = vadd.f32 %v1802, %v1861
  %v1975 = vadd.f32 %v1803, %v1865
  %v1976 = vadd.f32 %v1804, %v1861
  %v1977 = vadd.f32 %v1805, %v1865
  %v1978 = vadd.f32 %v1806, %v1861
  %v1979 = vadd.f32 %v1807, %v1865
  %v1980 = vadd.f32 %v1808, %v1861
  %v1981 = vadd.f32 %v1809, %v1865
  %v1982 = vadd.f32 %v1810, %v1861
  %v1983 = vadd.f32 %v1811, %v1865
  %v1984 = vadd.f32 %v1812, %v1861
  %v1985 = vadd.f32 %v1813, %v1865
  %v1986 = vadd.f32 %v1814, %v1861
  %v1987 = vadd.f32 %v1815, %v1865
  %v1988 = vadd.f32 %v1816, %v1861
  %v1989 = vadd.f32 %v1817, %v1865
  %v1990 = vadd.f32 %v1818, %v1861
  %v1991 = vadd.f32 %v1819, %v1865
  %v1992 = vadd.f32 %v1820, %v1861
  %v1993 = vadd.f32 %v1821, %v1865
  %v1994 = vadd.f32 %v1822, %v1861
  %v1995 = vadd.f32 %v1823, %v1865
  %v1996 = vadd.f32 %v1824, %v1861
  %v1997 = vadd.f32 %v1825, %v1865
  %v1998 = vadd.f32 %v1826, %v1861
  %v1999 = vadd.f32 %v1827, %v1865
  %v2000 = vadd.f32 %v1828, %v1861
  %v2001 = vadd.f32 %v1829, %v1865
  %v2002 = vadd.f32 %v1830, %v1861
  %v2003 = vadd.f32 %v1831, %v1865
  %v2004 = vadd.f32 %v1832, %v1861
  %v2005 = vadd.f32 %v1833, %v1865
  %v2006 = vadd.f32 %v1834, %v1861
  %v2007 = vadd.f32 %v1835, %v1865
  %v2008 = vadd.f32 %v1836, %v1861
  %v2009 = vadd.f32 %v1837, %v1865
  %v2010 = vadd.f32 %v1838, %v1861
  %v2011 = vadd.f32 %v1839, %v1865
  %v2012 = vadd.f32 %v1840, %v1861
  %v2013 = vadd.f32 %v1841, %v1865
  %v2014 = vadd.f32 %v1842, %v1861
  %v2015 = vadd.f32 %v1843, %v1865
  %v2016 = vadd.f32 %v1844, %v1861
  %v2017 = vadd.f32 %v1845, %v1865
  %v2018 = vadd.f32 %v1846, %v1861
  %v2019 = vadd.f32 %v1847, %v1865
  %v2020 = vadd.f32 %v1848, %v1861
  %v2021 = vadd.f32 %v1849, %v1865
  %v2022 = vadd.f32 %v1850, %v1861
  %v2023 = vadd.f32 %v1851, %v1865
  %v2024 = vadd.f32 %v1852, %v1861
  %v2025 = vadd.f32 %v1853, %v1865
  %v2026 = vadd.f32 %v1854, %v1861
  %v2027 = vadd.f32 %v1855, %v1865
  %v2028 = vmax.f32 %v1868, 0.0
  %v2029 = vmax.f32 %v1869, 0.0
  %v2030 = vmax.f32 %v1870, 0.0
  %v2031 = vmax.f32 %v1871, 0.0
  %v2032 = vmax.f32 %v1872, 0.0
  %v2033 = vmax.f32 %v1873, 0.0
  %v2034 = vmax.f32 %v1874, 0.0
  %v2035 = vmax.f32 %v1875, 0.0
  %v2036 = vmax.f32 %v1876, 0.0
  %v2037 = vmax.f32 %v1877, 0.0
  %v2038 = vmax.f32 %v1878, 0.0
  %v2039 = vmax.f32 %v1879, 0.0
  %v2040 = vmax.f32 %v1880, 0.0
  %v2041 = vmax.f32 %v1881, 0.0
  %v2042 = vmax.f32 %v1882, 0.0
  %v2043 = vmax.f32 %v1883, 0.0
  %v2044 = vmax.f32 %v1884, 0.0
  %v2045 = vmax.f32 %v1885, 0.0
  %v2046 = vmax.f32 %v1886, 0.0
  %v2047 = vmax.f32 %v1887, 0.0
  %v2048 = vmax.f32 %v1888, 0.0
  %v2049 = vmax.f32 %v1889, 0.0
  %v2050 = vmax.f32 %v1890, 0.0
  %v2051 = vmax.f32 %v1891, 0.0
  %v2052 = vmax.f32 %v1892, 0.0
  %v2053 = vmax.f32 %v1893, 0.0
  %v2054 = vmax.f32 %v1894, 0.0
  %v2055 = vmax.f32 %v1895, 0.0
  %v2056 = vmax.f32 %v1896, 0.0
  %v2057 = vmax.f32 %v1897, 0.0
  %v2058 = vmax.f32 %v1898, 0.0
  %v2059 = vmax.f32 %v1899, 0.0
  %v2060 = vmax.f32 %v1900, 0.0
  %v2061 = vmax.f32 %v1901, 0.0
  %v2062 = vmax.f32 %v1902, 0.0
  %v2063 = vmax.f32 %v1903, 0.0
  %v2064 = vmax.f32 %v1904, 0.0
  %v2065 = vmax.f32 %v1905, 0.0
  %v2066 = vmax.f32 %v1906, 0.0
  %v2067 = vmax.f32 %v1907, 0.0
  %v2068 = vmax.f32 %v1908, 0.0
  %v2069 = vmax.f32 %v1909, 0.0
  %v2070 = vmax.f32 %v1910, 0.0
  %v2071 = vmax.f32 %v1911, 0.0
  %v2072 = vmax.f32 %v1912, 0.0
  %v2073 = vmax.f32 %v1913, 0.0
  %v2074 = vmax.f32 %v1914, 0.0
  %v2075 = vmax.f32 %v1915, 0.0
  %v2076 = vmax.f32 %v1916, 0.0
  %v2077 = vmax.f32 %v1917, 0.0
  %v2078 = vmax.f32 %v1918, 0.0
  %v2079 = vmax.f32 %v1919, 0.0
  %v2080 = vmax.f32 %v1920, 0.0
  %v2081 = vmax.f32 %v1921, 0.0
  %v2082 = vmax.f32 %v1922, 0.0
  %v2083 = vmax.f32 %v1923, 0.0
  %v2084 = vmax.f32 %v1924, 0.0
  %v2085 = vmax.f32 %v1925, 0.0
  %v2086 = vmax.f32 %v1926, 0.0
  %v2087 = vmax.f32 %v1927, 0.0
  %v2088 = vmax.f32 %v1928, 0.0
  %v2089 = vmax.f32 %v1929, 0.0
  %v2090 = vmax.f32 %v1930, 0.0
  %v2091 = vmax.f32 %v1931, 0.0
  %v2092 = vmax.f32 %v1932, 0.0
  %v2093 = vmax.f32 %v1933, 0.0
  %v2094 = vmax.f32 %v1934, 0.0
  %v2095 = vmax.f32 %v1935, 0.0
  %v2096 = vmax.f32 %v1936, 0.0
  %v2097 = vmax.f32 %v1937, 0.0
  %v2098 = vmax.f32 %v1938, 0.0
  %v2099 = vmax.f32 %v1939, 0.0
  %v2100 = vmax.f32 %v1940, 0.0
  %v2101 = vmax.f32 %v1941, 0.0
  %v2102 = vmax.f32 %v1942, 0.0
  %v2103 = vmax.f32 %v1943, 0.0
  %v2104 = vmax.f32 %v1944, 0.0
  %v2105 = vmax.f32 %v1945, 0.0
  %v2106 = vmax.f32 %v1946, 0.0
  %v2107 = vmax.f32 %v1947, 0.0
  %v2108 = vmax.f32 %v1948, 0.0
  %v2109 = vmax.f32 %v1949, 0.0
  %v2110 = vmax.f32 %v1950, 0.0
  %v2111 = vmax.f32 %v1951, 0.0
  %v2112 = vmax.f32 %v1952, 0.0
  %v2113 = vmax.f32 %v1953, 0.0
  %v2114 = vmax.f32 %v1954, 0.0
  %v2115 = vmax.f32 %v1955, 0.0
  %v2116 = vmax.f32 %v1956, 0.0
  %v2117 = vmax.f32 %v1957, 0.0
  %v2118 = vmax.f32 %v1958, 0.0
  %v2119 = vmax.f32 %v1959, 0.0
  %v2120 = vmax.f32 %v1960, 0.0
  %v2121 = vmax.f32 %v1961, 0.0
  %v2122 = vmax.f32 %v1962, 0.0
  %v2123 = vmax.f32 %v1963, 0.0
  %v2124 = vmax.f32 %v1964, 0.0
  %v2125 = vmax.f32 %v1965, 0.0
  %v2126 = vmax.f32 %v1966, 0.0
  %v2127 = vmax.f32 %v1967, 0.0
  %v2128 = vmax.f32 %v1968, 0.0
  %v2129 = vmax.f32 %v1969, 0.0
  %v2130 = vmax.f32 %v1970, 0.0
  %v2131 = vmax.f32 %v1971, 0.0
  %v2132 = vmax.f32 %v1972, 0.0
  %v2133 = vmax.f32 %v1973, 0.0
  %v2134 = vmax.f32 %v1974, 0.0
  %v2135 = vmax.f32 %v1975, 0.0
  %v2136 = vmax.f32 %v1976, 0.0
  %v2137 = vmax.f32 %v1977, 0.0
  %v2138 = vmax.f32 %v1978, 0.0
  %v2139 = vmax.f32 %v1979, 0.0
  %v2140 = vmax.f32 %v1980, 0.0
  %v2141 = vmax.f32 %v1981, 0.0
  %v2142 = vmax.f32 %v1982, 0.0
  %v2143 = vmax.f32 %v1983, 0.0
  %v2144 = vmax.f32 %v1984, 0.0
  %v2145 = vmax.f32 %v1985, 0.0
  %v2146 = vmax.f32 %v1986, 0.0
  %v2147 = vmax.f32 %v1987, 0.0
  %v2148 = vmax.f32 %v1988, 0.0
  %v2149 = vmax.f32 %v1989, 0.0
  %v2150 = vmax.f32 %v1990, 0.0
  %v2151 = vmax.f32 %v1991, 0.0
  %v2152 = vmax.f32 %v1992, 0.0
  %v2153 = vmax.f32 %v1993, 0.0
  %v2154 = vmax.f32 %v1994, 0.0
  %v2155 = vmax.f32 %v1995, 0.0
  %v2156 = vmax.f32 %v1996, 0.0
  %v2157 = vmax.f32 %v1997, 0.0
  %v2158 = vmax.f32 %v1998, 0.0
  %v2159 = vmax.f32 %v1999, 0.0
  %v2160 = vmax.f32 %v2000, 0.0
  %v2161 = vmax.f32 %v2001, 0.0
  %v2162 = vmax.f32 %v2002, 0.0
  %v2163 = vmax.f32 %v2003, 0.0
  %v2164 = vmax.f32 %v2004, 0.0
  %v2165 = vmax.f32 %v2005, 0.0
  %v2166 = vmax.f32 %v2006, 0.0
  %v2167 = vmax.f32 %v2007, 0.0
  %v2168 = vmax.f32 %v2008, 0.0
  %v2169 = vmax.f32 %v2009, 0.0
  %v2170 = vmax.f32 %v2010, 0.0
  %v2171 = vmax.f32 %v2011, 0.0
  %v2172 = vmax.f32 %v2012, 0.0
  %v2173 = vmax.f32 %v2013, 0.0
  %v2174 = vmax.f32 %v2014, 0.0
  %v2175 = vmax.f32 %v2015, 0.0
  %v2176 = vmax.f32 %v2016, 0.0
  %v2177 = vmax.f32 %v2017, 0.0
  %v2178 = vmax.f32 %v2018, 0.0
  %v2179 = vmax.f32 %v2019, 0.0
  %v2180 = vmax.f32 %v2020, 0.0
  %v2181 = vmax.f32 %v2021, 0.0
  %v2182 = vmax.f32 %v2022, 0.0
  %v2183 = vmax.f32 %v2023, 0.0
  %v2184 = vmax.f32 %v2024, 0.0
  %v2185 = vmax.f32 %v2025, 0.0
  %v2186 = vmax.f32 %v2026, 0.0
  %v2187 = vmax.f32 %v2027, 0.0
  %v2188 = vpack.c.bf16 %v2030, %v2028
  %v2189 = vpack.c.bf16 %v2031, %v2029
  %v2190 = vpack.c.bf16 %v2034, %v2032
  %v2191 = vpack.c.bf16 %v2035, %v2033
  %v2192 = vpack.c.bf16 %v2038, %v2036
  %v2193 = vpack.c.bf16 %v2039, %v2037
  %v2194 = vpack.c.bf16 %v2042, %v2040
  %v2195 = vpack.c.bf16 %v2043, %v2041
  %v2196 = vpack.c.bf16 %v2046, %v2044
  %v2197 = vpack.c.bf16 %v2047, %v2045
  %v2198 = vpack.c.bf16 %v2050, %v2048
  %v2199 = vpack.c.bf16 %v2051, %v2049
  %v2200 = vpack.c.bf16 %v2054, %v2052
  %v2201 = vpack.c.bf16 %v2055, %v2053
  %v2202 = vpack.c.bf16 %v2058, %v2056
  %v2203 = vpack.c.bf16 %v2059, %v2057
  %v2204 = vpack.c.bf16 %v2062, %v2060
  %v2205 = vpack.c.bf16 %v2063, %v2061
  %v2206 = vpack.c.bf16 %v2066, %v2064
  %v2207 = vpack.c.bf16 %v2067, %v2065
  %v2208 = vpack.c.bf16 %v2070, %v2068
  %v2209 = vpack.c.bf16 %v2071, %v2069
  %v2210 = vpack.c.bf16 %v2074, %v2072
  %v2211 = vpack.c.bf16 %v2075, %v2073
  %v2212 = vpack.c.bf16 %v2078, %v2076
  %v2213 = vpack.c.bf16 %v2079, %v2077
  %v2214 = vpack.c.bf16 %v2082, %v2080
  %v2215 = vpack.c.bf16 %v2083, %v2081
  %v2216 = vpack.c.bf16 %v2086, %v2084
  %v2217 = vpack.c.bf16 %v2087, %v2085
  %v2218 = vpack.c.bf16 %v2090, %v2088
  %v2219 = vpack.c.bf16 %v2091, %v2089
  %v2220 = vpack.c.bf16 %v2094, %v2092
  %v2221 = vpack.c.bf16 %v2095, %v2093
  %v2222 = vpack.c.bf16 %v2098, %v2096
  %v2223 = vpack.c.bf16 %v2099, %v2097
  %v2224 = vpack.c.bf16 %v2102, %v2100
  %v2225 = vpack.c.bf16 %v2103, %v2101
  %v2226 = vpack.c.bf16 %v2106, %v2104
  %v2227 = vpack.c.bf16 %v2107, %v2105
  %v2228 = vpack.c.bf16 %v2110, %v2108
  %v2229 = vpack.c.bf16 %v2111, %v2109
  %v2230 = vpack.c.bf16 %v2114, %v2112
  %v2231 = vpack.c.bf16 %v2115, %v2113
  %v2232 = vpack.c.bf16 %v2118, %v2116
  %v2233 = vpack.c.bf16 %v2119, %v2117
  %v2234 = vpack.c.bf16 %v2122, %v2120
  %v2235 = vpack.c.bf16 %v2123, %v2121
  %v2236 = vpack.c.bf16 %v2126, %v2124
  %v2237 = vpack.c.bf16 %v2127, %v2125
  %v2238 = vpack.c.bf16 %v2130, %v2128
  %v2239 = vpack.c.bf16 %v2131, %v2129
  %v2240 = vpack.c.bf16 %v2134, %v2132
  %v2241 = vpack.c.bf16 %v2135, %v2133
  %v2242 = vpack.c.bf16 %v2138, %v2136
  %v2243 = vpack.c.bf16 %v2139, %v2137
  %v2244 = vpack.c.bf16 %v2142, %v2140
  %v2245 = vpack.c.bf16 %v2143, %v2141
  %v2246 = vpack.c.bf16 %v2146, %v2144
  %v2247 = vpack.c.bf16 %v2147, %v2145
  %v2248 = vpack.c.bf16 %v2150, %v2148
  %v2249 = vpack.c.bf16 %v2151, %v2149
  %v2250 = vpack.c.bf16 %v2154, %v2152
  %v2251 = vpack.c.bf16 %v2155, %v2153
  %v2252 = vpack.c.bf16 %v2158, %v2156
  %v2253 = vpack.c.bf16 %v2159, %v2157
  %v2254 = vpack.c.bf16 %v2162, %v2160
  %v2255 = vpack.c.bf16 %v2163, %v2161
  %v2256 = vpack.c.bf16 %v2166, %v2164
  %v2257 = vpack.c.bf16 %v2167, %v2165
  %v2258 = vpack.c.bf16 %v2170, %v2168
  %v2259 = vpack.c.bf16 %v2171, %v2169
  %v2260 = vpack.c.bf16 %v2174, %v2172
  %v2261 = vpack.c.bf16 %v2175, %v2173
  %v2262 = vpack.c.bf16 %v2178, %v2176
  %v2263 = vpack.c.bf16 %v2179, %v2177
  %v2264 = vpack.c.bf16 %v2182, %v2180
  %v2265 = vpack.c.bf16 %v2183, %v2181
  %v2266 = vpack.c.bf16 %v2186, %v2184
  %v2267 = vpack.c.bf16 %v2187, %v2185
  %v2268 = vld [vmem:[%s3] sm:$0xff]
  %v2269 = vld [vmem:[%s3 + $0x8] sm:$0xf]
  %v2270 = vld [vmem:[%s3 + $0xc] sm:$0xff]
  %v2271 = vld [vmem:[%s3 + $0x14] sm:$0xf]
  %v2272 = vld [vmem:[%s3 + $0x18] sm:$0xff]
  %v2273 = vld [vmem:[%s3 + $0x20] sm:$0xf]
  %v2274 = vld [vmem:[%s3 + $0x24] sm:$0xff]
  %v2275 = vld [vmem:[%s3 + $0x2c] sm:$0xf]
  %v2276 = vld [vmem:[%s3 + $0x30] sm:$0xff]
  %v2277 = vld [vmem:[%s3 + $0x38] sm:$0xf]
  %v2278 = vld [vmem:[%s3 + $0x3c] sm:$0xff]
  %v2279 = vld [vmem:[%s3 + $0x44] sm:$0xf]
  %v2280 = vld [vmem:[%s3 + $0x48] sm:$0xff]
  %v2281 = vld [vmem:[%s3 + $0x50] sm:$0xf]
  %v2282 = vld [vmem:[%s3 + $0x54] sm:$0xff]
  %v2283 = vld [vmem:[%s3 + $0x5c] sm:$0xf]
  %v2284 = vld [vmem:[%s3 + $0x60] sm:$0xff]
  %v2285 = vld [vmem:[%s3 + $0x68] sm:$0xf]
  %v2286 = vld [vmem:[%s3 + $0x6c] sm:$0xff]
  %v2287 = vld [vmem:[%s3 + $0x74] sm:$0xf]
  %v2288 = vld [vmem:[%s3 + $0x78] sm:$0xff]
  %v2289 = vld [vmem:[%s3 + $0x80] sm:$0xf]
  %v2290 = vld [vmem:[%s3 + $0x84] sm:$0xff]
  %v2291 = vld [vmem:[%s3 + $0x8c] sm:$0xf]
  %v2292 = vld [vmem:[%s3 + $0x90] sm:$0xff]
  %v2293 = vld [vmem:[%s3 + $0x98] sm:$0xf]
  %v2294 = vld [vmem:[%s3 + $0x9c] sm:$0xff]
  %v2295 = vld [vmem:[%s3 + $0xa4] sm:$0xf]
  %v2296 = vld [vmem:[%s3 + $0xa8] sm:$0xff]
  %v2297 = vld [vmem:[%s3 + $0xb0] sm:$0xf]
  %v2298 = vld [vmem:[%s3 + $0xb4] sm:$0xff]
  %v2299 = vld [vmem:[%s3 + $0xbc] sm:$0xf]
  %v2300 = vld [vmem:[%s3 + $0xc0] sm:$0xff]
  %v2301 = vld [vmem:[%s3 + $0xc8] sm:$0xf]
  %v2302 = vld [vmem:[%s3 + $0xcc] sm:$0xff]
  %v2303 = vld [vmem:[%s3 + $0xd4] sm:$0xf]
  %v2304 = vld [vmem:[%s3 + $0xd8] sm:$0xff]
  %v2305 = vld [vmem:[%s3 + $0xe0] sm:$0xf]
  %v2306 = vld [vmem:[%s3 + $0xe4] sm:$0xff]
  %v2307 = vld [vmem:[%s3 + $0xec] sm:$0xf]
  %v2308 = vld [vmem:[%s3 + $0xf0] sm:$0xff]
  %v2309 = vld [vmem:[%s3 + $0xf8] sm:$0xf]
  %v2310 = vld [vmem:[%s3 + $0xfc] sm:$0xff]
  %v2311 = vld [vmem:[%s3 + $0x104] sm:$0xf]
  %v2312 = vld [vmem:[%s3 + $0x108] sm:$0xff]
  %v2313 = vld [vmem:[%s3 + $0x110] sm:$0xf]
  %v2314 = vld [vmem:[%s3 + $0x114] sm:$0xff]
  %v2315 = vld [vmem:[%s3 + $0x11c] sm:$0xf]
  %s2316 = scalar_lea.vmem %s3, 288
  %v2317 = vld [vmem:[%s2316] sm:$0xff]
  %v2318 = vld [vmem:[%s2316 + $0x8] sm:$0xf]
  %v2319 = vld [vmem:[%s2316 + $0xc] sm:$0xff]
  %v2320 = vld [vmem:[%s2316 + $0x14] sm:$0xf]
  %v2321 = vld [vmem:[%s2316 + $0x18] sm:$0xff]
  %v2322 = vld [vmem:[%s2316 + $0x20] sm:$0xf]
  %v2323 = vld [vmem:[%s2316 + $0x24] sm:$0xff]
  %v2324 = vld [vmem:[%s2316 + $0x2c] sm:$0xf]
  %v2325 = vld [vmem:[%s2316 + $0x30] sm:$0xff]
  %v2326 = vld [vmem:[%s2316 + $0x38] sm:$0xf]
  %v2327 = vld [vmem:[%s2316 + $0x3c] sm:$0xff]
  %v2328 = vld [vmem:[%s2316 + $0x44] sm:$0xf]
  %v2329 = vld [vmem:[%s2316 + $0x48] sm:$0xff]
  %v2330 = vld [vmem:[%s2316 + $0x50] sm:$0xf]
  %v2331 = vld [vmem:[%s2316 + $0x54] sm:$0xff]
  %v2332 = vld [vmem:[%s2316 + $0x5c] sm:$0xf]
  %v2333 = vld [vmem:[%s2316 + $0x60] sm:$0xff]
  %v2334 = vld [vmem:[%s2316 + $0x68] sm:$0xf]
  %v2335 = vld [vmem:[%s2316 + $0x6c] sm:$0xff]
  %v2336 = vld [vmem:[%s2316 + $0x74] sm:$0xf]
  %v2337 = vld [vmem:[%s2316 + $0x78] sm:$0xff]
  %v2338 = vld [vmem:[%s2316 + $0x80] sm:$0xf]
  %v2339 = vld [vmem:[%s2316 + $0x84] sm:$0xff]
  %v2340 = vld [vmem:[%s2316 + $0x8c] sm:$0xf]
  %v2341 = vld [vmem:[%s2316 + $0x90] sm:$0xff]
  %v2342 = vld [vmem:[%s2316 + $0x98] sm:$0xf]
  %v2343 = vld [vmem:[%s2316 + $0x9c] sm:$0xff]
  %v2344 = vld [vmem:[%s2316 + $0xa4] sm:$0xf]
  %v2345 = vld [vmem:[%s2316 + $0xa8] sm:$0xff]
  %v2346 = vld [vmem:[%s2316 + $0xb0] sm:$0xf]
  %v2347 = vld [vmem:[%s2316 + $0xb4] sm:$0xff]
  %v2348 = vld [vmem:[%s2316 + $0xbc] sm:$0xf]
  %v2349 = vld [vmem:[%s2316 + $0xc0] sm:$0xff]
  %v2350 = vld [vmem:[%s2316 + $0xc8] sm:$0xf]
  %v2351 = vld [vmem:[%s2316 + $0xcc] sm:$0xff]
  %v2352 = vld [vmem:[%s2316 + $0xd4] sm:$0xf]
  %v2353 = vld [vmem:[%s2316 + $0xd8] sm:$0xff]
  %v2354 = vld [vmem:[%s2316 + $0xe0] sm:$0xf]
  %v2355 = vld [vmem:[%s2316 + $0xe4] sm:$0xff]
  %v2356 = vld [vmem:[%s2316 + $0xec] sm:$0xf]
  %v2357 = vld [vmem:[%s2316 + $0xf0] sm:$0xff]
  %v2358 = vld [vmem:[%s2316 + $0xf8] sm:$0xf]
  %v2359 = vld [vmem:[%s2316 + $0xfc] sm:$0xff]
  %v2360 = vld [vmem:[%s2316 + $0x104] sm:$0xf]
  %v2361 = vld [vmem:[%s2316 + $0x108] sm:$0xff]
  %v2362 = vld [vmem:[%s2316 + $0x110] sm:$0xf]
  %v2363 = vld [vmem:[%s2316 + $0x114] sm:$0xff]
  %v2364 = vld [vmem:[%s2316 + $0x11c] sm:$0xf]
  %v2413 = vunpack.c.l.b16 %v2317
  %v2414 = vunpack.c.h.b16 %v2317
  %v2415 = vunpack.c.l.b16 %v2318
  %v2416 = vunpack.c.l.b16 %v2319
  %v2417 = vunpack.c.h.b16 %v2319
  %v2418 = vunpack.c.l.b16 %v2320
  %v2419 = vunpack.c.l.b16 %v2321
  %v2420 = vunpack.c.h.b16 %v2321
  %v2421 = vunpack.c.l.b16 %v2322
  %v2422 = vunpack.c.l.b16 %v2323
  %v2423 = vunpack.c.h.b16 %v2323
  %v2424 = vunpack.c.l.b16 %v2324
  %v2425 = vunpack.c.l.b16 %v2325
  %v2426 = vunpack.c.h.b16 %v2325
  %v2427 = vunpack.c.l.b16 %v2326
  %v2428 = vunpack.c.l.b16 %v2327
  %v2429 = vunpack.c.h.b16 %v2327
  %v2430 = vunpack.c.l.b16 %v2328
  %v2431 = vunpack.c.l.b16 %v2329
  %v2432 = vunpack.c.h.b16 %v2329
  %v2433 = vunpack.c.l.b16 %v2330
  %v2434 = vunpack.c.l.b16 %v2331
  %v2435 = vunpack.c.h.b16 %v2331
  %v2436 = vunpack.c.l.b16 %v2332
  %v2437 = vunpack.c.l.b16 %v2333
  %v2438 = vunpack.c.h.b16 %v2333
  %v2439 = vunpack.c.l.b16 %v2334
  %v2440 = vunpack.c.l.b16 %v2335
  %v2441 = vunpack.c.h.b16 %v2335
  %v2442 = vunpack.c.l.b16 %v2336
  %v2443 = vunpack.c.l.b16 %v2337
  %v2444 = vunpack.c.h.b16 %v2337
  %v2445 = vunpack.c.l.b16 %v2338
  %v2446 = vunpack.c.l.b16 %v2339
  %v2447 = vunpack.c.h.b16 %v2339
  %v2448 = vunpack.c.l.b16 %v2340
  %v2449 = vunpack.c.l.b16 %v2341
  %v2450 = vunpack.c.h.b16 %v2341
  %v2451 = vunpack.c.l.b16 %v2342
  %v2452 = vunpack.c.l.b16 %v2343
  %v2453 = vunpack.c.h.b16 %v2343
  %v2454 = vunpack.c.l.b16 %v2344
  %v2455 = vunpack.c.l.b16 %v2345
  %v2456 = vunpack.c.h.b16 %v2345
  %v2457 = vunpack.c.l.b16 %v2346
  %v2458 = vunpack.c.l.b16 %v2347
  %v2459 = vunpack.c.h.b16 %v2347
  %v2460 = vunpack.c.l.b16 %v2348
  %v2461 = vunpack.c.l.b16 %v2349
  %v2462 = vunpack.c.h.b16 %v2349
  %v2463 = vunpack.c.l.b16 %v2350
  %v2464 = vunpack.c.l.b16 %v2351
  %v2465 = vunpack.c.h.b16 %v2351
  %v2466 = vunpack.c.l.b16 %v2352
  %v2467 = vunpack.c.l.b16 %v2353
  %v2468 = vunpack.c.h.b16 %v2353
  %v2469 = vunpack.c.l.b16 %v2354
  %v2470 = vunpack.c.l.b16 %v2355
  %v2471 = vunpack.c.h.b16 %v2355
  %v2472 = vunpack.c.l.b16 %v2356
  %v2473 = vunpack.c.l.b16 %v2357
  %v2474 = vunpack.c.h.b16 %v2357
  %v2475 = vunpack.c.l.b16 %v2358
  %v2476 = vunpack.c.l.b16 %v2359
  %v2477 = vunpack.c.h.b16 %v2359
  %v2478 = vunpack.c.l.b16 %v2360
  %v2479 = vunpack.c.l.b16 %v2361
  %v2480 = vunpack.c.h.b16 %v2361
  %v2481 = vunpack.c.l.b16 %v2362
  %v2482 = vunpack.c.l.b16 %v2363
  %v2483 = vunpack.c.h.b16 %v2363
  %v2484 = vunpack.c.l.b16 %v2364
  %v2485 = vpack.c.b16 %v2416, %v2413
  %v2486 = vpack.c.b16 %v2417, %v2414
  %v2487 = vpack.c.b16 %v2418, %v2415
  %v2488 = vpack.c.b16 %v2422, %v2419
  %v2489 = vpack.c.b16 %v2423, %v2420
  %v2490 = vpack.c.b16 %v2424, %v2421
  %v2491 = vpack.c.b16 %v2428, %v2425
  %v2492 = vpack.c.b16 %v2429, %v2426
  %v2493 = vpack.c.b16 %v2430, %v2427
  %v2494 = vpack.c.b16 %v2434, %v2431
  %v2495 = vpack.c.b16 %v2435, %v2432
  %v2496 = vpack.c.b16 %v2436, %v2433
  %v2497 = vpack.c.b16 %v2440, %v2437
  %v2498 = vpack.c.b16 %v2441, %v2438
  %v2499 = vpack.c.b16 %v2442, %v2439
  %v2500 = vpack.c.b16 %v2446, %v2443
  %v2501 = vpack.c.b16 %v2447, %v2444
  %v2502 = vpack.c.b16 %v2448, %v2445
  %v2503 = vpack.c.b16 %v2452, %v2449
  %v2504 = vpack.c.b16 %v2453, %v2450
  %v2505 = vpack.c.b16 %v2454, %v2451
  %v2506 = vpack.c.b16 %v2458, %v2455
  %v2507 = vpack.c.b16 %v2459, %v2456
  %v2508 = vpack.c.b16 %v2460, %v2457
  %v2509 = vpack.c.b16 %v2464, %v2461
  %v2510 = vpack.c.b16 %v2465, %v2462
  %v2511 = vpack.c.b16 %v2466, %v2463
  %v2512 = vpack.c.b16 %v2470, %v2467
  %v2513 = vpack.c.b16 %v2471, %v2468
  %v2514 = vpack.c.b16 %v2472, %v2469
  %v2515 = vpack.c.b16 %v2476, %v2473
  %v2516 = vpack.c.b16 %v2477, %v2474
  %v2517 = vpack.c.b16 %v2478, %v2475
  %v2518 = vpack.c.b16 %v2482, %v2479
  %v2519 = vpack.c.b16 %v2483, %v2480
  %v2520 = vpack.c.b16 %v2484, %v2481
  %vm2557 = vcmask 523264
  %v2559 = vsel %vm2557, %v2189, 0
  %v2562 = vsel %vm2557, %v2191, 0
  %v2565 = vsel %vm2557, %v2193, 0
  %v2568 = vsel %vm2557, %v2195, 0
  %v2571 = vsel %vm2557, %v2197, 0
  %v2574 = vsel %vm2557, %v2199, 0
  %v2577 = vsel %vm2557, %v2201, 0
  %v2580 = vsel %vm2557, %v2203, 0
  %v2583 = vsel %vm2557, %v2205, 0
  %v2586 = vsel %vm2557, %v2207, 0
  %v2589 = vsel %vm2557, %v2209, 0
  %v2592 = vsel %vm2557, %v2211, 0
  %v2595 = vsel %vm2557, %v2213, 0
  %v2598 = vsel %vm2557, %v2215, 0
  %v2601 = vsel %vm2557, %v2217, 0
  %v2604 = vsel %vm2557, %v2219, 0
  %v2607 = vsel %vm2557, %v2221, 0
  %v2610 = vsel %vm2557, %v2223, 0
  %v2613 = vsel %vm2557, %v2225, 0
  %v2616 = vsel %vm2557, %v2227, 0
  %v2619 = vsel %vm2557, %v2229, 0
  %v2622 = vsel %vm2557, %v2231, 0
  %v2625 = vsel %vm2557, %v2233, 0
  %v2628 = vsel %vm2557, %v2235, 0
  %v2631 = vsel %vm2557, %v2237, 0
  %v2634 = vsel %vm2557, %v2239, 0
  %v2637 = vsel %vm2557, %v2241, 0
  %v2640 = vsel %vm2557, %v2243, 0
  %v2643 = vsel %vm2557, %v2245, 0
  %v2646 = vsel %vm2557, %v2247, 0
  %v2649 = vsel %vm2557, %v2249, 0
  %v2652 = vsel %vm2557, %v2251, 0
  %v2655 = vsel %vm2557, %v2253, 0
  %v2658 = vsel %vm2557, %v2255, 0
  %v2661 = vsel %vm2557, %v2257, 0
  %v2664 = vsel %vm2557, %v2259, 0
  %v2667 = vsel %vm2557, %v2261, 0
  %v2670 = vsel %vm2557, %v2263, 0
  %v2673 = vsel %vm2557, %v2265, 0
  %v2676 = vsel %vm2557, %v2267, 0
  %2678 = vmatprep.subr.bf16.mxu0 %v2507
  %2679 = vmatpush1.bf16.msra.mxu0 %v2506
  %2680 = vmatprep.subr.bf16.mxu0 %v2504
  %2681 = vmatpush1.bf16.msra.mxu0 %v2503
  %2682 = vmatprep.subr.bf16.mxu0 %v2501
  %2683 = vmatpush1.bf16.msra.mxu0 %v2500
  %2684 = vmatprep.subr.bf16.mxu0 %v2498
  %2685 = vmatpush1.bf16.msra.mxu0 %v2497
  %2686 = vmatprep.subr.bf16.mxu0 %v2495
  %2687 = vmatpush1.bf16.msra.mxu0 %v2494
  %2688 = vmatprep.subr.bf16.mxu0 %v2492
  %2689 = vmatpush1.bf16.msra.mxu0 %v2491
  %2690 = vmatprep.subr.bf16.mxu0 %v2489
  %2691 = vmatpush1.bf16.msra.mxu0 %v2488
  %2692 = vmatprep.subr.bf16.mxu0 %v2486
  %2693 = vmatpush1.bf16.msra.mxu0 %v2485
  %2694 = vmatprep.subr.bf16.mxu0 0
  %2695 = vmatpush2.bf16.msra.mxu0 0
  %2696 = vmatprep.subr.bf16.mxu0 0
  %2697 = vmatpush2.bf16.msra.mxu0 0
  %2698 = vmatprep.subr.bf16.mxu0 0
  %2699 = vmatpush2.bf16.msra.mxu0 0
  %2700 = vmatprep.subr.bf16.mxu0 0
  %2701 = vmatpush2.bf16.msra.mxu0 0
  %2702 = vmatprep.subr.bf16.mxu0 %v2519
  %2703 = vmatpush2.bf16.msra.mxu0 %v2518
  %2704 = vmatprep.subr.bf16.mxu0 %v2516
  %2705 = vmatpush2.bf16.msra.mxu0 %v2515
  %2706 = vmatprep.subr.bf16.mxu0 %v2513
  %2707 = vmatpush2.bf16.msra.mxu0 %v2512
  %2708 = vmatprep.subr.bf16.mxu0 %v2510
  %2709 = vmatpush2.bf16.msra.mxu0 %v2509
  %2710 = vmatprep.mubr.bf16.mxu0 %v2559
  %2711 = vmatmul.mubr.bf16.gmra.mxu0 %v2188
  %v2712 = vpop.f32.mrf.mxu0
  %v2713 = vadd.f32 0.0, %v2712
  %v2714 = vpop.f32.mrf.mxu0
  %v2715 = vadd.f32 0.0, %v2714
  %v2716 = vpop.f32.mrf.mxu0
  %v2717 = vadd.f32 0.0, %v2716
  %v2718 = vpop.f32.mrf.mxu0
  %v2719 = vadd.f32 0.0, %v2718
  %2720 = vmatprep.mubr.bf16.mxu0 %v2562
  %2721 = vmatmul.mubr.bf16.gmra.mxu0 %v2190
  %v2722 = vpop.f32.mrf.mxu0
  %v2723 = vadd.f32 0.0, %v2722
  %v2724 = vpop.f32.mrf.mxu0
  %v2725 = vadd.f32 0.0, %v2724
  %v2726 = vpop.f32.mrf.mxu0
  %v2727 = vadd.f32 0.0, %v2726
  %v2728 = vpop.f32.mrf.mxu0
  %v2729 = vadd.f32 0.0, %v2728
  %2730 = vmatprep.mubr.bf16.mxu0 %v2565
  %2731 = vmatmul.mubr.bf16.gmra.mxu0 %v2192
  %v2732 = vpop.f32.mrf.mxu0
  %v2733 = vadd.f32 0.0, %v2732
  %v2734 = vpop.f32.mrf.mxu0
  %v2735 = vadd.f32 0.0, %v2734
  %v2736 = vpop.f32.mrf.mxu0
  %v2737 = vadd.f32 0.0, %v2736
  %v2738 = vpop.f32.mrf.mxu0
  %v2739 = vadd.f32 0.0, %v2738
  %2740 = vmatprep.mubr.bf16.mxu0 %v2568
  %2741 = vmatmul.mubr.bf16.gmra.mxu0 %v2194
  %v2742 = vpop.f32.mrf.mxu0
  %v2743 = vadd.f32 0.0, %v2742
  %v2744 = vpop.f32.mrf.mxu0
  %v2745 = vadd.f32 0.0, %v2744
  %v2746 = vpop.f32.mrf.mxu0
  %v2747 = vadd.f32 0.0, %v2746
  %v2748 = vpop.f32.mrf.mxu0
  %v2749 = vadd.f32 0.0, %v2748
  %2750 = vmatprep.mubr.bf16.mxu0 %v2571
  %2751 = vmatmul.mubr.bf16.gmra.mxu0 %v2196
  %v2752 = vpop.f32.mrf.mxu0
  %v2753 = vadd.f32 0.0, %v2752
  %v2754 = vpop.f32.mrf.mxu0
  %v2755 = vadd.f32 0.0, %v2754
  %v2756 = vpop.f32.mrf.mxu0
  %v2757 = vadd.f32 0.0, %v2756
  %v2758 = vpop.f32.mrf.mxu0
  %v2759 = vadd.f32 0.0, %v2758
  %2760 = vmatprep.mubr.bf16.mxu0 %v2574
  %2761 = vmatmul.mubr.bf16.gmra.mxu0 %v2198
  %v2762 = vpop.f32.mrf.mxu0
  %v2763 = vadd.f32 0.0, %v2762
  %v2764 = vpop.f32.mrf.mxu0
  %v2765 = vadd.f32 0.0, %v2764
  %v2766 = vpop.f32.mrf.mxu0
  %v2767 = vadd.f32 0.0, %v2766
  %v2768 = vpop.f32.mrf.mxu0
  %v2769 = vadd.f32 0.0, %v2768
  %2770 = vmatprep.mubr.bf16.mxu0 %v2577
  %2771 = vmatmul.mubr.bf16.gmra.mxu0 %v2200
  %v2772 = vpop.f32.mrf.mxu0
  %v2773 = vadd.f32 0.0, %v2772
  %v2774 = vpop.f32.mrf.mxu0
  %v2775 = vadd.f32 0.0, %v2774
  %v2776 = vpop.f32.mrf.mxu0
  %v2777 = vadd.f32 0.0, %v2776
  %v2778 = vpop.f32.mrf.mxu0
  %v2779 = vadd.f32 0.0, %v2778
  %2780 = vmatprep.mubr.bf16.mxu0 %v2580
  %2781 = vmatmul.mubr.bf16.gmra.mxu0 %v2202
  %v2782 = vpop.f32.mrf.mxu0
  %v2783 = vadd.f32 0.0, %v2782
  %v2784 = vpop.f32.mrf.mxu0
  %v2785 = vadd.f32 0.0, %v2784
  %v2786 = vpop.f32.mrf.mxu0
  %v2787 = vadd.f32 0.0, %v2786
  %v2788 = vpop.f32.mrf.mxu0
  %v2789 = vadd.f32 0.0, %v2788
  %2790 = vmatprep.mubr.bf16.mxu0 %v2583
  %2791 = vmatmul.mubr.bf16.gmra.mxu0 %v2204
  %v2792 = vpop.f32.mrf.mxu0
  %v2793 = vadd.f32 0.0, %v2792
  %v2794 = vpop.f32.mrf.mxu0
  %v2795 = vadd.f32 0.0, %v2794
  %v2796 = vpop.f32.mrf.mxu0
  %v2797 = vadd.f32 0.0, %v2796
  %v2798 = vpop.f32.mrf.mxu0
  %v2799 = vadd.f32 0.0, %v2798
  %2800 = vmatprep.mubr.bf16.mxu0 %v2586
  %2801 = vmatmul.mubr.bf16.gmra.mxu0 %v2206
  %v2802 = vpop.f32.mrf.mxu0
  %v2803 = vadd.f32 0.0, %v2802
  %v2804 = vpop.f32.mrf.mxu0
  %v2805 = vadd.f32 0.0, %v2804
  %v2806 = vpop.f32.mrf.mxu0
  %v2807 = vadd.f32 0.0, %v2806
  %v2808 = vpop.f32.mrf.mxu0
  %v2809 = vadd.f32 0.0, %v2808
  %2810 = vmatprep.mubr.bf16.mxu0 %v2589
  %2811 = vmatmul.mubr.bf16.gmra.mxu0 %v2208
  %v2812 = vpop.f32.mrf.mxu0
  %v2813 = vadd.f32 0.0, %v2812
  %v2814 = vpop.f32.mrf.mxu0
  %v2815 = vadd.f32 0.0, %v2814
  %v2816 = vpop.f32.mrf.mxu0
  %v2817 = vadd.f32 0.0, %v2816
  %v2818 = vpop.f32.mrf.mxu0
  %v2819 = vadd.f32 0.0, %v2818
  %2820 = vmatprep.mubr.bf16.mxu0 %v2592
  %2821 = vmatmul.mubr.bf16.gmra.mxu0 %v2210
  %v2822 = vpop.f32.mrf.mxu0
  %v2823 = vadd.f32 0.0, %v2822
  %v2824 = vpop.f32.mrf.mxu0
  %v2825 = vadd.f32 0.0, %v2824
  %v2826 = vpop.f32.mrf.mxu0
  %v2827 = vadd.f32 0.0, %v2826
  %v2828 = vpop.f32.mrf.mxu0
  %v2829 = vadd.f32 0.0, %v2828
  %2830 = vmatprep.mubr.bf16.mxu0 %v2595
  %2831 = vmatmul.mubr.bf16.gmra.mxu0 %v2212
  %v2832 = vpop.f32.mrf.mxu0
  %v2833 = vadd.f32 0.0, %v2832
  %v2834 = vpop.f32.mrf.mxu0
  %v2835 = vadd.f32 0.0, %v2834
  %v2836 = vpop.f32.mrf.mxu0
  %v2837 = vadd.f32 0.0, %v2836
  %v2838 = vpop.f32.mrf.mxu0
  %v2839 = vadd.f32 0.0, %v2838
  %2840 = vmatprep.mubr.bf16.mxu0 %v2598
  %2841 = vmatmul.mubr.bf16.gmra.mxu0 %v2214
  %v2842 = vpop.f32.mrf.mxu0
  %v2843 = vadd.f32 0.0, %v2842
  %v2844 = vpop.f32.mrf.mxu0
  %v2845 = vadd.f32 0.0, %v2844
  %v2846 = vpop.f32.mrf.mxu0
  %v2847 = vadd.f32 0.0, %v2846
  %v2848 = vpop.f32.mrf.mxu0
  %v2849 = vadd.f32 0.0, %v2848
  %2850 = vmatprep.mubr.bf16.mxu0 %v2601
  %2851 = vmatmul.mubr.bf16.gmra.mxu0 %v2216
  %v2852 = vpop.f32.mrf.mxu0
  %v2853 = vadd.f32 0.0, %v2852
  %v2854 = vpop.f32.mrf.mxu0
  %v2855 = vadd.f32 0.0, %v2854
  %v2856 = vpop.f32.mrf.mxu0
  %v2857 = vadd.f32 0.0, %v2856
  %v2858 = vpop.f32.mrf.mxu0
  %v2859 = vadd.f32 0.0, %v2858
  %2860 = vmatprep.mubr.bf16.mxu0 %v2604
  %2861 = vmatmul.mubr.bf16.gmra.mxu0 %v2218
  %v2862 = vpop.f32.mrf.mxu0
  %v2863 = vadd.f32 0.0, %v2862
  %v2864 = vpop.f32.mrf.mxu0
  %v2865 = vadd.f32 0.0, %v2864
  %v2866 = vpop.f32.mrf.mxu0
  %v2867 = vadd.f32 0.0, %v2866
  %v2868 = vpop.f32.mrf.mxu0
  %v2869 = vadd.f32 0.0, %v2868
  %2870 = vmatprep.mubr.bf16.mxu0 %v2607
  %2871 = vmatmul.mubr.bf16.gmra.mxu0 %v2220
  %v2872 = vpop.f32.mrf.mxu0
  %v2873 = vadd.f32 0.0, %v2872
  %v2874 = vpop.f32.mrf.mxu0
  %v2875 = vadd.f32 0.0, %v2874
  %v2876 = vpop.f32.mrf.mxu0
  %v2877 = vadd.f32 0.0, %v2876
  %v2878 = vpop.f32.mrf.mxu0
  %v2879 = vadd.f32 0.0, %v2878
  %2880 = vmatprep.mubr.bf16.mxu0 %v2610
  %2881 = vmatmul.mubr.bf16.gmra.mxu0 %v2222
  %v2882 = vpop.f32.mrf.mxu0
  %v2883 = vadd.f32 0.0, %v2882
  %v2884 = vpop.f32.mrf.mxu0
  %v2885 = vadd.f32 0.0, %v2884
  %v2886 = vpop.f32.mrf.mxu0
  %v2887 = vadd.f32 0.0, %v2886
  %v2888 = vpop.f32.mrf.mxu0
  %v2889 = vadd.f32 0.0, %v2888
  %2890 = vmatprep.mubr.bf16.mxu0 %v2613
  %2891 = vmatmul.mubr.bf16.gmra.mxu0 %v2224
  %v2892 = vpop.f32.mrf.mxu0
  %v2893 = vadd.f32 0.0, %v2892
  %v2894 = vpop.f32.mrf.mxu0
  %v2895 = vadd.f32 0.0, %v2894
  %v2896 = vpop.f32.mrf.mxu0
  %v2897 = vadd.f32 0.0, %v2896
  %v2898 = vpop.f32.mrf.mxu0
  %v2899 = vadd.f32 0.0, %v2898
  %2900 = vmatprep.mubr.bf16.mxu0 %v2616
  %2901 = vmatmul.mubr.bf16.gmra.mxu0 %v2226
  %v2902 = vpop.f32.mrf.mxu0
  %v2903 = vadd.f32 0.0, %v2902
  %v2904 = vpop.f32.mrf.mxu0
  %v2905 = vadd.f32 0.0, %v2904
  %v2906 = vpop.f32.mrf.mxu0
  %v2907 = vadd.f32 0.0, %v2906
  %v2908 = vpop.f32.mrf.mxu0
  %v2909 = vadd.f32 0.0, %v2908
  %2910 = vmatprep.mubr.bf16.mxu0 %v2619
  %2911 = vmatmul.mubr.bf16.gmra.mxu0 %v2228
  %v2912 = vpop.f32.mrf.mxu0
  %v2913 = vadd.f32 0.0, %v2912
  %v2914 = vpop.f32.mrf.mxu0
  %v2915 = vadd.f32 0.0, %v2914
  %v2916 = vpop.f32.mrf.mxu0
  %v2917 = vadd.f32 0.0, %v2916
  %v2918 = vpop.f32.mrf.mxu0
  %v2919 = vadd.f32 0.0, %v2918
  %2920 = vmatprep.mubr.bf16.mxu0 %v2622
  %2921 = vmatmul.mubr.bf16.gmra.mxu0 %v2230
  %v2922 = vpop.f32.mrf.mxu0
  %v2923 = vadd.f32 0.0, %v2922
  %v2924 = vpop.f32.mrf.mxu0
  %v2925 = vadd.f32 0.0, %v2924
  %v2926 = vpop.f32.mrf.mxu0
  %v2927 = vadd.f32 0.0, %v2926
  %v2928 = vpop.f32.mrf.mxu0
  %v2929 = vadd.f32 0.0, %v2928
  %2930 = vmatprep.mubr.bf16.mxu0 %v2625
  %2931 = vmatmul.mubr.bf16.gmra.mxu0 %v2232
  %v2932 = vpop.f32.mrf.mxu0
  %v2933 = vadd.f32 0.0, %v2932
  %v2934 = vpop.f32.mrf.mxu0
  %v2935 = vadd.f32 0.0, %v2934
  %v2936 = vpop.f32.mrf.mxu0
  %v2937 = vadd.f32 0.0, %v2936
  %v2938 = vpop.f32.mrf.mxu0
  %v2939 = vadd.f32 0.0, %v2938
  %2940 = vmatprep.mubr.bf16.mxu0 %v2628
  %2941 = vmatmul.mubr.bf16.gmra.mxu0 %v2234
  %v2942 = vpop.f32.mrf.mxu0
  %v2943 = vadd.f32 0.0, %v2942
  %v2944 = vpop.f32.mrf.mxu0
  %v2945 = vadd.f32 0.0, %v2944
  %v2946 = vpop.f32.mrf.mxu0
  %v2947 = vadd.f32 0.0, %v2946
  %v2948 = vpop.f32.mrf.mxu0
  %v2949 = vadd.f32 0.0, %v2948
  %2950 = vmatprep.mubr.bf16.mxu0 %v2631
  %2951 = vmatmul.mubr.bf16.gmra.mxu0 %v2236
  %v2952 = vpop.f32.mrf.mxu0
  %v2953 = vadd.f32 0.0, %v2952
  %v2954 = vpop.f32.mrf.mxu0
  %v2955 = vadd.f32 0.0, %v2954
  %v2956 = vpop.f32.mrf.mxu0
  %v2957 = vadd.f32 0.0, %v2956
  %v2958 = vpop.f32.mrf.mxu0
  %v2959 = vadd.f32 0.0, %v2958
  %2960 = vmatprep.mubr.bf16.mxu0 %v2634
  %2961 = vmatmul.mubr.bf16.gmra.mxu0 %v2238
  %v2962 = vpop.f32.mrf.mxu0
  %v2963 = vadd.f32 0.0, %v2962
  %v2964 = vpop.f32.mrf.mxu0
  %v2965 = vadd.f32 0.0, %v2964
  %v2966 = vpop.f32.mrf.mxu0
  %v2967 = vadd.f32 0.0, %v2966
  %v2968 = vpop.f32.mrf.mxu0
  %v2969 = vadd.f32 0.0, %v2968
  %2970 = vmatprep.mubr.bf16.mxu0 %v2637
  %2971 = vmatmul.mubr.bf16.gmra.mxu0 %v2240
  %v2972 = vpop.f32.mrf.mxu0
  %v2973 = vadd.f32 0.0, %v2972
  %v2974 = vpop.f32.mrf.mxu0
  %v2975 = vadd.f32 0.0, %v2974
  %v2976 = vpop.f32.mrf.mxu0
  %v2977 = vadd.f32 0.0, %v2976
  %v2978 = vpop.f32.mrf.mxu0
  %v2979 = vadd.f32 0.0, %v2978
  %2980 = vmatprep.mubr.bf16.mxu0 %v2640
  %2981 = vmatmul.mubr.bf16.gmra.mxu0 %v2242
  %v2982 = vpop.f32.mrf.mxu0
  %v2983 = vadd.f32 0.0, %v2982
  %v2984 = vpop.f32.mrf.mxu0
  %v2985 = vadd.f32 0.0, %v2984
  %v2986 = vpop.f32.mrf.mxu0
  %v2987 = vadd.f32 0.0, %v2986
  %v2988 = vpop.f32.mrf.mxu0
  %v2989 = vadd.f32 0.0, %v2988
  %2990 = vmatprep.mubr.bf16.mxu0 %v2643
  %2991 = vmatmul.mubr.bf16.gmra.mxu0 %v2244
  %v2992 = vpop.f32.mrf.mxu0
  %v2993 = vadd.f32 0.0, %v2992
  %v2994 = vpop.f32.mrf.mxu0
  %v2995 = vadd.f32 0.0, %v2994
  %v2996 = vpop.f32.mrf.mxu0
  %v2997 = vadd.f32 0.0, %v2996
  %v2998 = vpop.f32.mrf.mxu0
  %v2999 = vadd.f32 0.0, %v2998
  %3000 = vmatprep.mubr.bf16.mxu0 %v2646
  %3001 = vmatmul.mubr.bf16.gmra.mxu0 %v2246
  %v3002 = vpop.f32.mrf.mxu0
  %v3003 = vadd.f32 0.0, %v3002
  %v3004 = vpop.f32.mrf.mxu0
  %v3005 = vadd.f32 0.0, %v3004
  %v3006 = vpop.f32.mrf.mxu0
  %v3007 = vadd.f32 0.0, %v3006
  %v3008 = vpop.f32.mrf.mxu0
  %v3009 = vadd.f32 0.0, %v3008
  %3010 = vmatprep.mubr.bf16.mxu0 %v2649
  %3011 = vmatmul.mubr.bf16.gmra.mxu0 %v2248
  %v3012 = vpop.f32.mrf.mxu0
  %v3013 = vadd.f32 0.0, %v3012
  %v3014 = vpop.f32.mrf.mxu0
  %v3015 = vadd.f32 0.0, %v3014
  %v3016 = vpop.f32.mrf.mxu0
  %v3017 = vadd.f32 0.0, %v3016
  %v3018 = vpop.f32.mrf.mxu0
  %v3019 = vadd.f32 0.0, %v3018
  %3020 = vmatprep.mubr.bf16.mxu0 %v2652
  %3021 = vmatmul.mubr.bf16.gmra.mxu0 %v2250
  %v3022 = vpop.f32.mrf.mxu0
  %v3023 = vadd.f32 0.0, %v3022
  %v3024 = vpop.f32.mrf.mxu0
  %v3025 = vadd.f32 0.0, %v3024
  %v3026 = vpop.f32.mrf.mxu0
  %v3027 = vadd.f32 0.0, %v3026
  %v3028 = vpop.f32.mrf.mxu0
  %v3029 = vadd.f32 0.0, %v3028
  %3030 = vmatprep.mubr.bf16.mxu0 %v2655
  %3031 = vmatmul.mubr.bf16.gmra.mxu0 %v2252
  %v3032 = vpop.f32.mrf.mxu0
  %v3033 = vadd.f32 0.0, %v3032
  %v3034 = vpop.f32.mrf.mxu0
  %v3035 = vadd.f32 0.0, %v3034
  %v3036 = vpop.f32.mrf.mxu0
  %v3037 = vadd.f32 0.0, %v3036
  %v3038 = vpop.f32.mrf.mxu0
  %v3039 = vadd.f32 0.0, %v3038
  %3040 = vmatprep.mubr.bf16.mxu0 %v2658
  %3041 = vmatmul.mubr.bf16.gmra.mxu0 %v2254
  %v3042 = vpop.f32.mrf.mxu0
  %v3043 = vadd.f32 0.0, %v3042
  %v3044 = vpop.f32.mrf.mxu0
  %v3045 = vadd.f32 0.0, %v3044
  %v3046 = vpop.f32.mrf.mxu0
  %v3047 = vadd.f32 0.0, %v3046
  %v3048 = vpop.f32.mrf.mxu0
  %v3049 = vadd.f32 0.0, %v3048
  %3050 = vmatprep.mubr.bf16.mxu0 %v2661
  %3051 = vmatmul.mubr.bf16.gmra.mxu0 %v2256
  %v3052 = vpop.f32.mrf.mxu0
  %v3053 = vadd.f32 0.0, %v3052
  %v3054 = vpop.f32.mrf.mxu0
  %v3055 = vadd.f32 0.0, %v3054
  %v3056 = vpop.f32.mrf.mxu0
  %v3057 = vadd.f32 0.0, %v3056
  %v3058 = vpop.f32.mrf.mxu0
  %v3059 = vadd.f32 0.0, %v3058
  %3060 = vmatprep.mubr.bf16.mxu0 %v2664
  %3061 = vmatmul.mubr.bf16.gmra.mxu0 %v2258
  %v3062 = vpop.f32.mrf.mxu0
  %v3063 = vadd.f32 0.0, %v3062
  %v3064 = vpop.f32.mrf.mxu0
  %v3065 = vadd.f32 0.0, %v3064
  %v3066 = vpop.f32.mrf.mxu0
  %v3067 = vadd.f32 0.0, %v3066
  %v3068 = vpop.f32.mrf.mxu0
  %v3069 = vadd.f32 0.0, %v3068
  %3070 = vmatprep.mubr.bf16.mxu0 %v2667
  %3071 = vmatmul.mubr.bf16.gmra.mxu0 %v2260
  %v3072 = vpop.f32.mrf.mxu0
  %v3073 = vadd.f32 0.0, %v3072
  %v3074 = vpop.f32.mrf.mxu0
  %v3075 = vadd.f32 0.0, %v3074
  %v3076 = vpop.f32.mrf.mxu0
  %v3077 = vadd.f32 0.0, %v3076
  %v3078 = vpop.f32.mrf.mxu0
  %v3079 = vadd.f32 0.0, %v3078
  %3080 = vmatprep.mubr.bf16.mxu0 %v2670
  %3081 = vmatmul.mubr.bf16.gmra.mxu0 %v2262
  %v3082 = vpop.f32.mrf.mxu0
  %v3083 = vadd.f32 0.0, %v3082
  %v3084 = vpop.f32.mrf.mxu0
  %v3085 = vadd.f32 0.0, %v3084
  %v3086 = vpop.f32.mrf.mxu0
  %v3087 = vadd.f32 0.0, %v3086
  %v3088 = vpop.f32.mrf.mxu0
  %v3089 = vadd.f32 0.0, %v3088
  %3090 = vmatprep.mubr.bf16.mxu0 %v2673
  %3091 = vmatmul.mubr.bf16.gmra.mxu0 %v2264
  %v3092 = vpop.f32.mrf.mxu0
  %v3093 = vadd.f32 0.0, %v3092
  %v3094 = vpop.f32.mrf.mxu0
  %v3095 = vadd.f32 0.0, %v3094
  %v3096 = vpop.f32.mrf.mxu0
  %v3097 = vadd.f32 0.0, %v3096
  %v3098 = vpop.f32.mrf.mxu0
  %v3099 = vadd.f32 0.0, %v3098
  %3100 = vmatprep.mubr.bf16.mxu0 %v2676
  %3101 = vmatmul.mubr.bf16.gmra.mxu0 %v2266
  %v3102 = vpop.f32.mrf.mxu0
  %v3103 = vadd.f32 0.0, %v3102
  %v3104 = vpop.f32.mrf.mxu0
  %v3105 = vadd.f32 0.0, %v3104
  %v3106 = vpop.f32.mrf.mxu0
  %v3107 = vadd.f32 0.0, %v3106
  %v3108 = vpop.f32.mrf.mxu0
  %v3109 = vadd.f32 0.0, %v3108
  %3110 = vdwg.mxu0
  %3111 = vmatprep.subr.bf16.mxu0 0
  %3112 = vmatpush1.bf16.msra.mxu0 %v2508
  %3113 = vmatprep.subr.bf16.mxu0 0
  %3114 = vmatpush1.bf16.msra.mxu0 %v2505
  %3115 = vmatprep.subr.bf16.mxu0 0
  %3116 = vmatpush1.bf16.msra.mxu0 %v2502
  %3117 = vmatprep.subr.bf16.mxu0 0
  %3118 = vmatpush1.bf16.msra.mxu0 %v2499
  %3119 = vmatprep.subr.bf16.mxu0 0
  %3120 = vmatpush1.bf16.msra.mxu0 %v2496
  %3121 = vmatprep.subr.bf16.mxu0 0
  %3122 = vmatpush1.bf16.msra.mxu0 %v2493
  %3123 = vmatprep.subr.bf16.mxu0 0
  %3124 = vmatpush1.bf16.msra.mxu0 %v2490
  %3125 = vmatprep.subr.bf16.mxu0 0
  %3126 = vmatpush1.bf16.msra.mxu0 %v2487
  %3127 = vmatprep.subr.bf16.mxu0 0
  %3128 = vmatpush2.bf16.msra.mxu0 0
  %3129 = vmatprep.subr.bf16.mxu0 0
  %3130 = vmatpush2.bf16.msra.mxu0 0
  %3131 = vmatprep.subr.bf16.mxu0 0
  %3132 = vmatpush2.bf16.msra.mxu0 0
  %3133 = vmatprep.subr.bf16.mxu0 0
  %3134 = vmatpush2.bf16.msra.mxu0 0
  %3135 = vmatprep.subr.bf16.mxu0 0
  %3136 = vmatpush2.bf16.msra.mxu0 %v2520
  %3137 = vmatprep.subr.bf16.mxu0 0
  %3138 = vmatpush2.bf16.msra.mxu0 %v2517
  %3139 = vmatprep.subr.bf16.mxu0 0
  %3140 = vmatpush2.bf16.msra.mxu0 %v2514
  %3141 = vmatprep.subr.bf16.mxu0 0
  %3142 = vmatpush2.bf16.msra.mxu0 %v2511
  %3143 = vmatprep.mubr.bf16.mxu0 %v2559
  %3144 = vmatmul.mubr.bf16.gmra.mxu0 %v2188
  %v3145 = vpop.f32.mrf.mxu0
  %v3146 = vadd.f32 0.0, %v3145
  %v3147 = vpop.f32.mrf.mxu0
  %v3148 = vpop.f32.mrf.mxu0
  %v3149 = vadd.f32 0.0, %v3148
  %v3150 = vpop.f32.mrf.mxu0
  %3151 = vmatprep.mubr.bf16.mxu0 %v2562
  %3152 = vmatmul.mubr.bf16.gmra.mxu0 %v2190
  %v3153 = vpop.f32.mrf.mxu0
  %v3154 = vadd.f32 0.0, %v3153
  %v3155 = vpop.f32.mrf.mxu0
  %v3156 = vpop.f32.mrf.mxu0
  %v3157 = vadd.f32 0.0, %v3156
  %v3158 = vpop.f32.mrf.mxu0
  %3159 = vmatprep.mubr.bf16.mxu0 %v2565
  %3160 = vmatmul.mubr.bf16.gmra.mxu0 %v2192
  %v3161 = vpop.f32.mrf.mxu0
  %v3162 = vadd.f32 0.0, %v3161
  %v3163 = vpop.f32.mrf.mxu0
  %v3164 = vpop.f32.mrf.mxu0
  %v3165 = vadd.f32 0.0, %v3164
  %v3166 = vpop.f32.mrf.mxu0
  %3167 = vmatprep.mubr.bf16.mxu0 %v2568
  %3168 = vmatmul.mubr.bf16.gmra.mxu0 %v2194
  %v3169 = vpop.f32.mrf.mxu0
  %v3170 = vadd.f32 0.0, %v3169
  %v3171 = vpop.f32.mrf.mxu0
  %v3172 = vpop.f32.mrf.mxu0
  %v3173 = vadd.f32 0.0, %v3172
  %v3174 = vpop.f32.mrf.mxu0
  %3175 = vmatprep.mubr.bf16.mxu0 %v2571
  %3176 = vmatmul.mubr.bf16.gmra.mxu0 %v2196
  %v3177 = vpop.f32.mrf.mxu0
  %v3178 = vadd.f32 0.0, %v3177
  %v3179 = vpop.f32.mrf.mxu0
  %v3180 = vpop.f32.mrf.mxu0
  %v3181 = vadd.f32 0.0, %v3180
  %v3182 = vpop.f32.mrf.mxu0
  %3183 = vmatprep.mubr.bf16.mxu0 %v2574
  %3184 = vmatmul.mubr.bf16.gmra.mxu0 %v2198
  %v3185 = vpop.f32.mrf.mxu0
  %v3186 = vadd.f32 0.0, %v3185
  %v3187 = vpop.f32.mrf.mxu0
  %v3188 = vpop.f32.mrf.mxu0
  %v3189 = vadd.f32 0.0, %v3188
  %v3190 = vpop.f32.mrf.mxu0
  %3191 = vmatprep.mubr.bf16.mxu0 %v2577
  %3192 = vmatmul.mubr.bf16.gmra.mxu0 %v2200
  %v3193 = vpop.f32.mrf.mxu0
  %v3194 = vadd.f32 0.0, %v3193
  %v3195 = vpop.f32.mrf.mxu0
  %v3196 = vpop.f32.mrf.mxu0
  %v3197 = vadd.f32 0.0, %v3196
  %v3198 = vpop.f32.mrf.mxu0
  %3199 = vmatprep.mubr.bf16.mxu0 %v2580
  %3200 = vmatmul.mubr.bf16.gmra.mxu0 %v2202
  %v3201 = vpop.f32.mrf.mxu0
  %v3202 = vadd.f32 0.0, %v3201
  %v3203 = vpop.f32.mrf.mxu0
  %v3204 = vpop.f32.mrf.mxu0
  %v3205 = vadd.f32 0.0, %v3204
  %v3206 = vpop.f32.mrf.mxu0
  %3207 = vmatprep.mubr.bf16.mxu0 %v2583
  %3208 = vmatmul.mubr.bf16.gmra.mxu0 %v2204
  %v3209 = vpop.f32.mrf.mxu0
  %v3210 = vadd.f32 0.0, %v3209
  %v3211 = vpop.f32.mrf.mxu0
  %v3212 = vpop.f32.mrf.mxu0
  %v3213 = vadd.f32 0.0, %v3212
  %v3214 = vpop.f32.mrf.mxu0
  %3215 = vmatprep.mubr.bf16.mxu0 %v2586
  %3216 = vmatmul.mubr.bf16.gmra.mxu0 %v2206
  %v3217 = vpop.f32.mrf.mxu0
  %v3218 = vadd.f32 0.0, %v3217
  %v3219 = vpop.f32.mrf.mxu0
  %v3220 = vpop.f32.mrf.mxu0
  %v3221 = vadd.f32 0.0, %v3220
  %v3222 = vpop.f32.mrf.mxu0
  %3223 = vmatprep.mubr.bf16.mxu0 %v2589
  %3224 = vmatmul.mubr.bf16.gmra.mxu0 %v2208
  %v3225 = vpop.f32.mrf.mxu0
  %v3226 = vadd.f32 0.0, %v3225
  %v3227 = vpop.f32.mrf.mxu0
  %v3228 = vpop.f32.mrf.mxu0
  %v3229 = vadd.f32 0.0, %v3228
  %v3230 = vpop.f32.mrf.mxu0
  %3231 = vmatprep.mubr.bf16.mxu0 %v2592
  %3232 = vmatmul.mubr.bf16.gmra.mxu0 %v2210
  %v3233 = vpop.f32.mrf.mxu0
  %v3234 = vadd.f32 0.0, %v3233
  %v3235 = vpop.f32.mrf.mxu0
  %v3236 = vpop.f32.mrf.mxu0
  %v3237 = vadd.f32 0.0, %v3236
  %v3238 = vpop.f32.mrf.mxu0
  %3239 = vmatprep.mubr.bf16.mxu0 %v2595
  %3240 = vmatmul.mubr.bf16.gmra.mxu0 %v2212
  %v3241 = vpop.f32.mrf.mxu0
  %v3242 = vadd.f32 0.0, %v3241
  %v3243 = vpop.f32.mrf.mxu0
  %v3244 = vpop.f32.mrf.mxu0
  %v3245 = vadd.f32 0.0, %v3244
  %v3246 = vpop.f32.mrf.mxu0
  %3247 = vmatprep.mubr.bf16.mxu0 %v2598
  %3248 = vmatmul.mubr.bf16.gmra.mxu0 %v2214
  %v3249 = vpop.f32.mrf.mxu0
  %v3250 = vadd.f32 0.0, %v3249
  %v3251 = vpop.f32.mrf.mxu0
  %v3252 = vpop.f32.mrf.mxu0
  %v3253 = vadd.f32 0.0, %v3252
  %v3254 = vpop.f32.mrf.mxu0
  %3255 = vmatprep.mubr.bf16.mxu0 %v2601
  %3256 = vmatmul.mubr.bf16.gmra.mxu0 %v2216
  %v3257 = vpop.f32.mrf.mxu0
  %v3258 = vadd.f32 0.0, %v3257
  %v3259 = vpop.f32.mrf.mxu0
  %v3260 = vpop.f32.mrf.mxu0
  %v3261 = vadd.f32 0.0, %v3260
  %v3262 = vpop.f32.mrf.mxu0
  %3263 = vmatprep.mubr.bf16.mxu0 %v2604
  %3264 = vmatmul.mubr.bf16.gmra.mxu0 %v2218
  %v3265 = vpop.f32.mrf.mxu0
  %v3266 = vadd.f32 0.0, %v3265
  %v3267 = vpop.f32.mrf.mxu0
  %v3268 = vpop.f32.mrf.mxu0
  %v3269 = vadd.f32 0.0, %v3268
  %v3270 = vpop.f32.mrf.mxu0
  %3271 = vmatprep.mubr.bf16.mxu0 %v2607
  %3272 = vmatmul.mubr.bf16.gmra.mxu0 %v2220
  %v3273 = vpop.f32.mrf.mxu0
  %v3274 = vadd.f32 0.0, %v3273
  %v3275 = vpop.f32.mrf.mxu0
  %v3276 = vpop.f32.mrf.mxu0
  %v3277 = vadd.f32 0.0, %v3276
  %v3278 = vpop.f32.mrf.mxu0
  %3279 = vmatprep.mubr.bf16.mxu0 %v2610
  %3280 = vmatmul.mubr.bf16.gmra.mxu0 %v2222
  %v3281 = vpop.f32.mrf.mxu0
  %v3282 = vadd.f32 0.0, %v3281
  %v3283 = vpop.f32.mrf.mxu0
  %v3284 = vpop.f32.mrf.mxu0
  %v3285 = vadd.f32 0.0, %v3284
  %v3286 = vpop.f32.mrf.mxu0
  %3287 = vmatprep.mubr.bf16.mxu0 %v2613
  %3288 = vmatmul.mubr.bf16.gmra.mxu0 %v2224
  %v3289 = vpop.f32.mrf.mxu0
  %v3290 = vadd.f32 0.0, %v3289
  %v3291 = vpop.f32.mrf.mxu0
  %v3292 = vpop.f32.mrf.mxu0
  %v3293 = vadd.f32 0.0, %v3292
  %v3294 = vpop.f32.mrf.mxu0
  %3295 = vmatprep.mubr.bf16.mxu0 %v2616
  %3296 = vmatmul.mubr.bf16.gmra.mxu0 %v2226
  %v3297 = vpop.f32.mrf.mxu0
  %v3298 = vadd.f32 0.0, %v3297
  %v3299 = vpop.f32.mrf.mxu0
  %v3300 = vpop.f32.mrf.mxu0
  %v3301 = vadd.f32 0.0, %v3300
  %v3302 = vpop.f32.mrf.mxu0
  %3303 = vmatprep.mubr.bf16.mxu0 %v2619
  %3304 = vmatmul.mubr.bf16.gmra.mxu0 %v2228
  %v3305 = vpop.f32.mrf.mxu0
  %v3306 = vadd.f32 0.0, %v3305
  %v3307 = vpop.f32.mrf.mxu0
  %v3308 = vpop.f32.mrf.mxu0
  %v3309 = vadd.f32 0.0, %v3308
  %v3310 = vpop.f32.mrf.mxu0
  %3311 = vmatprep.mubr.bf16.mxu0 %v2622
  %3312 = vmatmul.mubr.bf16.gmra.mxu0 %v2230
  %v3313 = vpop.f32.mrf.mxu0
  %v3314 = vadd.f32 0.0, %v3313
  %v3315 = vpop.f32.mrf.mxu0
  %v3316 = vpop.f32.mrf.mxu0
  %v3317 = vadd.f32 0.0, %v3316
  %v3318 = vpop.f32.mrf.mxu0
  %3319 = vmatprep.mubr.bf16.mxu0 %v2625
  %3320 = vmatmul.mubr.bf16.gmra.mxu0 %v2232
  %v3321 = vpop.f32.mrf.mxu0
  %v3322 = vadd.f32 0.0, %v3321
  %v3323 = vpop.f32.mrf.mxu0
  %v3324 = vpop.f32.mrf.mxu0
  %v3325 = vadd.f32 0.0, %v3324
  %v3326 = vpop.f32.mrf.mxu0
  %3327 = vmatprep.mubr.bf16.mxu0 %v2628
  %3328 = vmatmul.mubr.bf16.gmra.mxu0 %v2234
  %v3329 = vpop.f32.mrf.mxu0
  %v3330 = vadd.f32 0.0, %v3329
  %v3331 = vpop.f32.mrf.mxu0
  %v3332 = vpop.f32.mrf.mxu0
  %v3333 = vadd.f32 0.0, %v3332
  %v3334 = vpop.f32.mrf.mxu0
  %3335 = vmatprep.mubr.bf16.mxu0 %v2631
  %3336 = vmatmul.mubr.bf16.gmra.mxu0 %v2236
  %v3337 = vpop.f32.mrf.mxu0
  %v3338 = vadd.f32 0.0, %v3337
  %v3339 = vpop.f32.mrf.mxu0
  %v3340 = vpop.f32.mrf.mxu0
  %v3341 = vadd.f32 0.0, %v3340
  %v3342 = vpop.f32.mrf.mxu0
  %3343 = vmatprep.mubr.bf16.mxu0 %v2634
  %3344 = vmatmul.mubr.bf16.gmra.mxu0 %v2238
  %v3345 = vpop.f32.mrf.mxu0
  %v3346 = vadd.f32 0.0, %v3345
  %v3347 = vpop.f32.mrf.mxu0
  %v3348 = vpop.f32.mrf.mxu0
  %v3349 = vadd.f32 0.0, %v3348
  %v3350 = vpop.f32.mrf.mxu0
  %3351 = vmatprep.mubr.bf16.mxu0 %v2637
  %3352 = vmatmul.mubr.bf16.gmra.mxu0 %v2240
  %v3353 = vpop.f32.mrf.mxu0
  %v3354 = vadd.f32 0.0, %v3353
  %v3355 = vpop.f32.mrf.mxu0
  %v3356 = vpop.f32.mrf.mxu0
  %v3357 = vadd.f32 0.0, %v3356
  %v3358 = vpop.f32.mrf.mxu0
  %3359 = vmatprep.mubr.bf16.mxu0 %v2640
  %3360 = vmatmul.mubr.bf16.gmra.mxu0 %v2242
  %v3361 = vpop.f32.mrf.mxu0
  %v3362 = vadd.f32 0.0, %v3361
  %v3363 = vpop.f32.mrf.mxu0
  %v3364 = vpop.f32.mrf.mxu0
  %v3365 = vadd.f32 0.0, %v3364
  %v3366 = vpop.f32.mrf.mxu0
  %3367 = vmatprep.mubr.bf16.mxu0 %v2643
  %3368 = vmatmul.mubr.bf16.gmra.mxu0 %v2244
  %v3369 = vpop.f32.mrf.mxu0
  %v3370 = vadd.f32 0.0, %v3369
  %v3371 = vpop.f32.mrf.mxu0
  %v3372 = vpop.f32.mrf.mxu0
  %v3373 = vadd.f32 0.0, %v3372
  %v3374 = vpop.f32.mrf.mxu0
  %3375 = vmatprep.mubr.bf16.mxu0 %v2646
  %3376 = vmatmul.mubr.bf16.gmra.mxu0 %v2246
  %v3377 = vpop.f32.mrf.mxu0
  %v3378 = vadd.f32 0.0, %v3377
  %v3379 = vpop.f32.mrf.mxu0
  %v3380 = vpop.f32.mrf.mxu0
  %v3381 = vadd.f32 0.0, %v3380
  %v3382 = vpop.f32.mrf.mxu0
  %3383 = vmatprep.mubr.bf16.mxu0 %v2649
  %3384 = vmatmul.mubr.bf16.gmra.mxu0 %v2248
  %v3385 = vpop.f32.mrf.mxu0
  %v3386 = vadd.f32 0.0, %v3385
  %v3387 = vpop.f32.mrf.mxu0
  %v3388 = vpop.f32.mrf.mxu0
  %v3389 = vadd.f32 0.0, %v3388
  %v3390 = vpop.f32.mrf.mxu0
  %3391 = vmatprep.mubr.bf16.mxu0 %v2652
  %3392 = vmatmul.mubr.bf16.gmra.mxu0 %v2250
  %v3393 = vpop.f32.mrf.mxu0
  %v3394 = vadd.f32 0.0, %v3393
  %v3395 = vpop.f32.mrf.mxu0
  %v3396 = vpop.f32.mrf.mxu0
  %v3397 = vadd.f32 0.0, %v3396
  %v3398 = vpop.f32.mrf.mxu0
  %3399 = vmatprep.mubr.bf16.mxu0 %v2655
  %3400 = vmatmul.mubr.bf16.gmra.mxu0 %v2252
  %v3401 = vpop.f32.mrf.mxu0
  %v3402 = vadd.f32 0.0, %v3401
  %v3403 = vpop.f32.mrf.mxu0
  %v3404 = vpop.f32.mrf.mxu0
  %v3405 = vadd.f32 0.0, %v3404
  %v3406 = vpop.f32.mrf.mxu0
  %3407 = vmatprep.mubr.bf16.mxu0 %v2658
  %3408 = vmatmul.mubr.bf16.gmra.mxu0 %v2254
  %v3409 = vpop.f32.mrf.mxu0
  %v3410 = vadd.f32 0.0, %v3409
  %v3411 = vpop.f32.mrf.mxu0
  %v3412 = vpop.f32.mrf.mxu0
  %v3413 = vadd.f32 0.0, %v3412
  %v3414 = vpop.f32.mrf.mxu0
  %3415 = vmatprep.mubr.bf16.mxu0 %v2661
  %3416 = vmatmul.mubr.bf16.gmra.mxu0 %v2256
  %v3417 = vpop.f32.mrf.mxu0
  %v3418 = vadd.f32 0.0, %v3417
  %v3419 = vpop.f32.mrf.mxu0
  %v3420 = vpop.f32.mrf.mxu0
  %v3421 = vadd.f32 0.0, %v3420
  %v3422 = vpop.f32.mrf.mxu0
  %3423 = vmatprep.mubr.bf16.mxu0 %v2664
  %3424 = vmatmul.mubr.bf16.gmra.mxu0 %v2258
  %v3425 = vpop.f32.mrf.mxu0
  %v3426 = vadd.f32 0.0, %v3425
  %v3427 = vpop.f32.mrf.mxu0
  %v3428 = vpop.f32.mrf.mxu0
  %v3429 = vadd.f32 0.0, %v3428
  %v3430 = vpop.f32.mrf.mxu0
  %3431 = vmatprep.mubr.bf16.mxu0 %v2667
  %3432 = vmatmul.mubr.bf16.gmra.mxu0 %v2260
  %v3433 = vpop.f32.mrf.mxu0
  %v3434 = vadd.f32 0.0, %v3433
  %v3435 = vpop.f32.mrf.mxu0
  %v3436 = vpop.f32.mrf.mxu0
  %v3437 = vadd.f32 0.0, %v3436
  %v3438 = vpop.f32.mrf.mxu0
  %3439 = vmatprep.mubr.bf16.mxu0 %v2670
  %3440 = vmatmul.mubr.bf16.gmra.mxu0 %v2262
  %v3441 = vpop.f32.mrf.mxu0
  %v3442 = vadd.f32 0.0, %v3441
  %v3443 = vpop.f32.mrf.mxu0
  %v3444 = vpop.f32.mrf.mxu0
  %v3445 = vadd.f32 0.0, %v3444
  %v3446 = vpop.f32.mrf.mxu0
  %3447 = vmatprep.mubr.bf16.mxu0 %v2673
  %3448 = vmatmul.mubr.bf16.gmra.mxu0 %v2264
  %v3449 = vpop.f32.mrf.mxu0
  %v3450 = vadd.f32 0.0, %v3449
  %v3451 = vpop.f32.mrf.mxu0
  %v3452 = vpop.f32.mrf.mxu0
  %v3453 = vadd.f32 0.0, %v3452
  %v3454 = vpop.f32.mrf.mxu0
  %3455 = vmatprep.mubr.bf16.mxu0 %v2676
  %3456 = vmatmul.mubr.bf16.gmra.mxu0 %v2266
  %v3457 = vpop.f32.mrf.mxu0
  %v3458 = vadd.f32 0.0, %v3457
  %v3459 = vpop.f32.mrf.mxu0
  %v3460 = vpop.f32.mrf.mxu0
  %v3461 = vadd.f32 0.0, %v3460
  %v3462 = vpop.f32.mrf.mxu0
  %3463 = vdwg.mxu0
  %v3512 = vunpack.c.l.b16 %v2268
  %v3513 = vunpack.c.h.b16 %v2268
  %v3514 = vunpack.c.l.b16 %v2269
  %v3515 = vunpack.c.l.b16 %v2270
  %v3516 = vunpack.c.h.b16 %v2270
  %v3517 = vunpack.c.l.b16 %v2271
  %v3518 = vunpack.c.l.b16 %v2272
  %v3519 = vunpack.c.h.b16 %v2272
  %v3520 = vunpack.c.l.b16 %v2273
  %v3521 = vunpack.c.l.b16 %v2274
  %v3522 = vunpack.c.h.b16 %v2274
  %v3523 = vunpack.c.l.b16 %v2275
  %v3524 = vunpack.c.l.b16 %v2276
  %v3525 = vunpack.c.h.b16 %v2276
  %v3526 = vunpack.c.l.b16 %v2277
  %v3527 = vunpack.c.l.b16 %v2278
  %v3528 = vunpack.c.h.b16 %v2278
  %v3529 = vunpack.c.l.b16 %v2279
  %v3530 = vunpack.c.l.b16 %v2280
  %v3531 = vunpack.c.h.b16 %v2280
  %v3532 = vunpack.c.l.b16 %v2281
  %v3533 = vunpack.c.l.b16 %v2282
  %v3534 = vunpack.c.h.b16 %v2282
  %v3535 = vunpack.c.l.b16 %v2283
  %v3536 = vunpack.c.l.b16 %v2284
  %v3537 = vunpack.c.h.b16 %v2284
  %v3538 = vunpack.c.l.b16 %v2285
  %v3539 = vunpack.c.l.b16 %v2286
  %v3540 = vunpack.c.h.b16 %v2286
  %v3541 = vunpack.c.l.b16 %v2287
  %v3542 = vunpack.c.l.b16 %v2288
  %v3543 = vunpack.c.h.b16 %v2288
  %v3544 = vunpack.c.l.b16 %v2289
  %v3545 = vunpack.c.l.b16 %v2290
  %v3546 = vunpack.c.h.b16 %v2290
  %v3547 = vunpack.c.l.b16 %v2291
  %v3548 = vunpack.c.l.b16 %v2292
  %v3549 = vunpack.c.h.b16 %v2292
  %v3550 = vunpack.c.l.b16 %v2293
  %v3551 = vunpack.c.l.b16 %v2294
  %v3552 = vunpack.c.h.b16 %v2294
  %v3553 = vunpack.c.l.b16 %v2295
  %v3554 = vunpack.c.l.b16 %v2296
  %v3555 = vunpack.c.h.b16 %v2296
  %v3556 = vunpack.c.l.b16 %v2297
  %v3557 = vunpack.c.l.b16 %v2298
  %v3558 = vunpack.c.h.b16 %v2298
  %v3559 = vunpack.c.l.b16 %v2299
  %v3560 = vunpack.c.l.b16 %v2300
  %v3561 = vunpack.c.h.b16 %v2300
  %v3562 = vunpack.c.l.b16 %v2301
  %v3563 = vunpack.c.l.b16 %v2302
  %v3564 = vunpack.c.h.b16 %v2302
  %v3565 = vunpack.c.l.b16 %v2303
  %v3566 = vunpack.c.l.b16 %v2304
  %v3567 = vunpack.c.h.b16 %v2304
  %v3568 = vunpack.c.l.b16 %v2305
  %v3569 = vunpack.c.l.b16 %v2306
  %v3570 = vunpack.c.h.b16 %v2306
  %v3571 = vunpack.c.l.b16 %v2307
  %v3572 = vunpack.c.l.b16 %v2308
  %v3573 = vunpack.c.h.b16 %v2308
  %v3574 = vunpack.c.l.b16 %v2309
  %v3575 = vunpack.c.l.b16 %v2310
  %v3576 = vunpack.c.h.b16 %v2310
  %v3577 = vunpack.c.l.b16 %v2311
  %v3578 = vunpack.c.l.b16 %v2312
  %v3579 = vunpack.c.h.b16 %v2312
  %v3580 = vunpack.c.l.b16 %v2313
  %v3581 = vunpack.c.l.b16 %v2314
  %v3582 = vunpack.c.h.b16 %v2314
  %v3583 = vunpack.c.l.b16 %v2315
  %v3584 = vpack.c.b16 %v3515, %v3512
  %v3585 = vpack.c.b16 %v3516, %v3513
  %v3586 = vpack.c.b16 %v3517, %v3514
  %v3587 = vpack.c.b16 %v3521, %v3518
  %v3588 = vpack.c.b16 %v3522, %v3519
  %v3589 = vpack.c.b16 %v3523, %v3520
  %v3590 = vpack.c.b16 %v3527, %v3524
  %v3591 = vpack.c.b16 %v3528, %v3525
  %v3592 = vpack.c.b16 %v3529, %v3526
  %v3593 = vpack.c.b16 %v3533, %v3530
  %v3594 = vpack.c.b16 %v3534, %v3531
  %v3595 = vpack.c.b16 %v3535, %v3532
  %v3596 = vpack.c.b16 %v3539, %v3536
  %v3597 = vpack.c.b16 %v3540, %v3537
  %v3598 = vpack.c.b16 %v3541, %v3538
  %v3599 = vpack.c.b16 %v3545, %v3542
  %v3600 = vpack.c.b16 %v3546, %v3543
  %v3601 = vpack.c.b16 %v3547, %v3544
  %v3602 = vpack.c.b16 %v3551, %v3548
  %v3603 = vpack.c.b16 %v3552, %v3549
  %v3604 = vpack.c.b16 %v3553, %v3550
  %v3605 = vpack.c.b16 %v3557, %v3554
  %v3606 = vpack.c.b16 %v3558, %v3555
  %v3607 = vpack.c.b16 %v3559, %v3556
  %v3608 = vpack.c.b16 %v3563, %v3560
  %v3609 = vpack.c.b16 %v3564, %v3561
  %v3610 = vpack.c.b16 %v3565, %v3562
  %v3611 = vpack.c.b16 %v3569, %v3566
  %v3612 = vpack.c.b16 %v3570, %v3567
  %v3613 = vpack.c.b16 %v3571, %v3568
  %v3614 = vpack.c.b16 %v3575, %v3572
  %v3615 = vpack.c.b16 %v3576, %v3573
  %v3616 = vpack.c.b16 %v3577, %v3574
  %v3617 = vpack.c.b16 %v3581, %v3578
  %v3618 = vpack.c.b16 %v3582, %v3579
  %v3619 = vpack.c.b16 %v3583, %v3580
  %v3657 = vsel %vm2557, 0, 0
  %3659 = vmatprep.subr.bf16.mxu0 %v3606
  %3660 = vmatpush1.bf16.msra.mxu0 %v3605
  %3661 = vmatprep.subr.bf16.mxu0 %v3603
  %3662 = vmatpush1.bf16.msra.mxu0 %v3602
  %3663 = vmatprep.subr.bf16.mxu0 %v3600
  %3664 = vmatpush1.bf16.msra.mxu0 %v3599
  %3665 = vmatprep.subr.bf16.mxu0 %v3597
  %3666 = vmatpush1.bf16.msra.mxu0 %v3596
  %3667 = vmatprep.subr.bf16.mxu0 %v3594
  %3668 = vmatpush1.bf16.msra.mxu0 %v3593
  %3669 = vmatprep.subr.bf16.mxu0 %v3591
  %3670 = vmatpush1.bf16.msra.mxu0 %v3590
  %3671 = vmatprep.subr.bf16.mxu0 %v3588
  %3672 = vmatpush1.bf16.msra.mxu0 %v3587
  %3673 = vmatprep.subr.bf16.mxu0 %v3585
  %3674 = vmatpush1.bf16.msra.mxu0 %v3584
  %3675 = vmatprep.subr.bf16.mxu0 0
  %3676 = vmatpush2.bf16.msra.mxu0 0
  %3677 = vmatprep.subr.bf16.mxu0 0
  %3678 = vmatpush2.bf16.msra.mxu0 0
  %3679 = vmatprep.subr.bf16.mxu0 0
  %3680 = vmatpush2.bf16.msra.mxu0 0
  %3681 = vmatprep.subr.bf16.mxu0 0
  %3682 = vmatpush2.bf16.msra.mxu0 0
  %3683 = vmatprep.subr.bf16.mxu0 %v3618
  %3684 = vmatpush2.bf16.msra.mxu0 %v3617
  %3685 = vmatprep.subr.bf16.mxu0 %v3615
  %3686 = vmatpush2.bf16.msra.mxu0 %v3614
  %3687 = vmatprep.subr.bf16.mxu0 %v3612
  %3688 = vmatpush2.bf16.msra.mxu0 %v3611
  %3689 = vmatprep.subr.bf16.mxu0 %v3609
  %3690 = vmatpush2.bf16.msra.mxu0 %v3608
  %3691 = vmatprep.mubr.bf16.mxu0 %v3657
  %3692 = vmatmul.mubr.bf16.gmra.mxu0 0
  %v3693 = vpop.f32.mrf.mxu0
  %v3694 = vadd.f32 %v2713, %v3693
  %v3695 = vpop.f32.mrf.mxu0
  %v3696 = vadd.f32 %v2715, %v3695
  %v3697 = vpop.f32.mrf.mxu0
  %v3698 = vadd.f32 %v2717, %v3697
  %v3699 = vpop.f32.mrf.mxu0
  %v3700 = vadd.f32 %v2719, %v3699
  %3701 = vmatprep.mubr.bf16.mxu0 %v3657
  %3702 = vmatmul.mubr.bf16.gmra.mxu0 0
  %v3703 = vpop.f32.mrf.mxu0
  %v3704 = vadd.f32 %v2723, %v3703
  %v3705 = vpop.f32.mrf.mxu0
  %v3706 = vadd.f32 %v2725, %v3705
  %v3707 = vpop.f32.mrf.mxu0
  %v3708 = vadd.f32 %v2727, %v3707
  %v3709 = vpop.f32.mrf.mxu0
  %v3710 = vadd.f32 %v2729, %v3709
  %3711 = vmatprep.mubr.bf16.mxu0 %v3657
  %3712 = vmatmul.mubr.bf16.gmra.mxu0 0
  %v3713 = vpop.f32.mrf.mxu0
  %v3714 = vadd.f32 %v2733, %v3713
  %v3715 = vpop.f32.mrf.mxu0
  %v3716 = vadd.f32 %v2735, %v3715
  %v3717 = vpop.f32.mrf.mxu0
  %v3718 = vadd.f32 %v2737, %v3717
  %v3719 = vpop.f32.mrf.mxu0
  %v3720 = vadd.f32 %v2739, %v3719
  %3721 = vmatprep.mubr.bf16.mxu0 %v3657
  %3722 = vmatmul.mubr.bf16.gmra.mxu0 0
  %v3723 = vpop.f32.mrf.mxu0
  %v3724 = vadd.f32 %v2743, %v3723
  %v3725 = vpop.f32.mrf.mxu0
  %v3726 = vadd.f32 %v2745, %v3725
  %v3727 = vpop.f32.mrf.mxu0
  %v3728 = vadd.f32 %v2747, %v3727
  %v3729 = vpop.f32.mrf.mxu0
  %v3730 = vadd.f32 %v2749, %v3729
  %3731 = vmatprep.mubr.bf16.mxu0 %v2559
  %3732 = vmatmul.mubr.bf16.gmra.mxu0 %v2188
  %v3733 = vpop.f32.mrf.mxu0
  %v3734 = vadd.f32 %v2753, %v3733
  %v3735 = vpop.f32.mrf.mxu0
  %v3736 = vadd.f32 %v2755, %v3735
  %v3737 = vpop.f32.mrf.mxu0
  %v3738 = vadd.f32 %v2757, %v3737
  %v3739 = vpop.f32.mrf.mxu0
  %v3740 = vadd.f32 %v2759, %v3739
  %3741 = vmatprep.mubr.bf16.mxu0 %v2562
  %3742 = vmatmul.mubr.bf16.gmra.mxu0 %v2190
  %v3743 = vpop.f32.mrf.mxu0
  %v3744 = vadd.f32 %v2763, %v3743
  %v3745 = vpop.f32.mrf.mxu0
  %v3746 = vadd.f32 %v2765, %v3745
  %v3747 = vpop.f32.mrf.mxu0
  %v3748 = vadd.f32 %v2767, %v3747
  %v3749 = vpop.f32.mrf.mxu0
  %v3750 = vadd.f32 %v2769, %v3749
  %3751 = vmatprep.mubr.bf16.mxu0 %v2565
  %3752 = vmatmul.mubr.bf16.gmra.mxu0 %v2192
  %v3753 = vpop.f32.mrf.mxu0
  %v3754 = vadd.f32 %v2773, %v3753
  %v3755 = vpop.f32.mrf.mxu0
  %v3756 = vadd.f32 %v2775, %v3755
  %v3757 = vpop.f32.mrf.mxu0
  %v3758 = vadd.f32 %v2777, %v3757
  %v3759 = vpop.f32.mrf.mxu0
  %v3760 = vadd.f32 %v2779, %v3759
  %3761 = vmatprep.mubr.bf16.mxu0 %v2568
  %3762 = vmatmul.mubr.bf16.gmra.mxu0 %v2194
  %v3763 = vpop.f32.mrf.mxu0
  %v3764 = vadd.f32 %v2783, %v3763
  %v3765 = vpop.f32.mrf.mxu0
  %v3766 = vadd.f32 %v2785, %v3765
  %v3767 = vpop.f32.mrf.mxu0
  %v3768 = vadd.f32 %v2787, %v3767
  %v3769 = vpop.f32.mrf.mxu0
  %v3770 = vadd.f32 %v2789, %v3769
  %3771 = vmatprep.mubr.bf16.mxu0 %v2571
  %3772 = vmatmul.mubr.bf16.gmra.mxu0 %v2196
  %v3773 = vpop.f32.mrf.mxu0
  %v3774 = vadd.f32 %v2793, %v3773
  %v3775 = vpop.f32.mrf.mxu0
  %v3776 = vadd.f32 %v2795, %v3775
  %v3777 = vpop.f32.mrf.mxu0
  %v3778 = vadd.f32 %v2797, %v3777
  %v3779 = vpop.f32.mrf.mxu0
  %v3780 = vadd.f32 %v2799, %v3779
  %3781 = vmatprep.mubr.bf16.mxu0 %v2574
  %3782 = vmatmul.mubr.bf16.gmra.mxu0 %v2198
  %v3783 = vpop.f32.mrf.mxu0
  %v3784 = vadd.f32 %v2803, %v3783
  %v3785 = vpop.f32.mrf.mxu0
  %v3786 = vadd.f32 %v2805, %v3785
  %v3787 = vpop.f32.mrf.mxu0
  %v3788 = vadd.f32 %v2807, %v3787
  %v3789 = vpop.f32.mrf.mxu0
  %v3790 = vadd.f32 %v2809, %v3789
  %3791 = vmatprep.mubr.bf16.mxu0 %v2577
  %3792 = vmatmul.mubr.bf16.gmra.mxu0 %v2200
  %v3793 = vpop.f32.mrf.mxu0
  %v3794 = vadd.f32 %v2813, %v3793
  %v3795 = vpop.f32.mrf.mxu0
  %v3796 = vadd.f32 %v2815, %v3795
  %v3797 = vpop.f32.mrf.mxu0
  %v3798 = vadd.f32 %v2817, %v3797
  %v3799 = vpop.f32.mrf.mxu0
  %v3800 = vadd.f32 %v2819, %v3799
  %3801 = vmatprep.mubr.bf16.mxu0 %v2580
  %3802 = vmatmul.mubr.bf16.gmra.mxu0 %v2202
  %v3803 = vpop.f32.mrf.mxu0
  %v3804 = vadd.f32 %v2823, %v3803
  %v3805 = vpop.f32.mrf.mxu0
  %v3806 = vadd.f32 %v2825, %v3805
  %v3807 = vpop.f32.mrf.mxu0
  %v3808 = vadd.f32 %v2827, %v3807
  %v3809 = vpop.f32.mrf.mxu0
  %v3810 = vadd.f32 %v2829, %v3809
  %3811 = vmatprep.mubr.bf16.mxu0 %v2583
  %3812 = vmatmul.mubr.bf16.gmra.mxu0 %v2204
  %v3813 = vpop.f32.mrf.mxu0
  %v3814 = vadd.f32 %v2833, %v3813
  %v3815 = vpop.f32.mrf.mxu0
  %v3816 = vadd.f32 %v2835, %v3815
  %v3817 = vpop.f32.mrf.mxu0
  %v3818 = vadd.f32 %v2837, %v3817
  %v3819 = vpop.f32.mrf.mxu0
  %v3820 = vadd.f32 %v2839, %v3819
  %3821 = vmatprep.mubr.bf16.mxu0 %v2586
  %3822 = vmatmul.mubr.bf16.gmra.mxu0 %v2206
  %v3823 = vpop.f32.mrf.mxu0
  %v3824 = vadd.f32 %v2843, %v3823
  %v3825 = vpop.f32.mrf.mxu0
  %v3826 = vadd.f32 %v2845, %v3825
  %v3827 = vpop.f32.mrf.mxu0
  %v3828 = vadd.f32 %v2847, %v3827
  %v3829 = vpop.f32.mrf.mxu0
  %v3830 = vadd.f32 %v2849, %v3829
  %3831 = vmatprep.mubr.bf16.mxu0 %v2589
  %3832 = vmatmul.mubr.bf16.gmra.mxu0 %v2208
  %v3833 = vpop.f32.mrf.mxu0
  %v3834 = vadd.f32 %v2853, %v3833
  %v3835 = vpop.f32.mrf.mxu0
  %v3836 = vadd.f32 %v2855, %v3835
  %v3837 = vpop.f32.mrf.mxu0
  %v3838 = vadd.f32 %v2857, %v3837
  %v3839 = vpop.f32.mrf.mxu0
  %v3840 = vadd.f32 %v2859, %v3839
  %3841 = vmatprep.mubr.bf16.mxu0 %v2592
  %3842 = vmatmul.mubr.bf16.gmra.mxu0 %v2210
  %v3843 = vpop.f32.mrf.mxu0
  %v3844 = vadd.f32 %v2863, %v3843
  %v3845 = vpop.f32.mrf.mxu0
  %v3846 = vadd.f32 %v2865, %v3845
  %v3847 = vpop.f32.mrf.mxu0
  %v3848 = vadd.f32 %v2867, %v3847
  %v3849 = vpop.f32.mrf.mxu0
  %v3850 = vadd.f32 %v2869, %v3849
  %3851 = vmatprep.mubr.bf16.mxu0 %v2595
  %3852 = vmatmul.mubr.bf16.gmra.mxu0 %v2212
  %v3853 = vpop.f32.mrf.mxu0
  %v3854 = vadd.f32 %v2873, %v3853
  %v3855 = vpop.f32.mrf.mxu0
  %v3856 = vadd.f32 %v2875, %v3855
  %v3857 = vpop.f32.mrf.mxu0
  %v3858 = vadd.f32 %v2877, %v3857
  %v3859 = vpop.f32.mrf.mxu0
  %v3860 = vadd.f32 %v2879, %v3859
  %3861 = vmatprep.mubr.bf16.mxu0 %v2598
  %3862 = vmatmul.mubr.bf16.gmra.mxu0 %v2214
  %v3863 = vpop.f32.mrf.mxu0
  %v3864 = vadd.f32 %v2883, %v3863
  %v3865 = vpop.f32.mrf.mxu0
  %v3866 = vadd.f32 %v2885, %v3865
  %v3867 = vpop.f32.mrf.mxu0
  %v3868 = vadd.f32 %v2887, %v3867
  %v3869 = vpop.f32.mrf.mxu0
  %v3870 = vadd.f32 %v2889, %v3869
  %3871 = vmatprep.mubr.bf16.mxu0 %v2601
  %3872 = vmatmul.mubr.bf16.gmra.mxu0 %v2216
  %v3873 = vpop.f32.mrf.mxu0
  %v3874 = vadd.f32 %v2893, %v3873
  %v3875 = vpop.f32.mrf.mxu0
  %v3876 = vadd.f32 %v2895, %v3875
  %v3877 = vpop.f32.mrf.mxu0
  %v3878 = vadd.f32 %v2897, %v3877
  %v3879 = vpop.f32.mrf.mxu0
  %v3880 = vadd.f32 %v2899, %v3879
  %3881 = vmatprep.mubr.bf16.mxu0 %v2604
  %3882 = vmatmul.mubr.bf16.gmra.mxu0 %v2218
  %v3883 = vpop.f32.mrf.mxu0
  %v3884 = vadd.f32 %v2903, %v3883
  %v3885 = vpop.f32.mrf.mxu0
  %v3886 = vadd.f32 %v2905, %v3885
  %v3887 = vpop.f32.mrf.mxu0
  %v3888 = vadd.f32 %v2907, %v3887
  %v3889 = vpop.f32.mrf.mxu0
  %v3890 = vadd.f32 %v2909, %v3889
  %3891 = vmatprep.mubr.bf16.mxu0 %v2607
  %3892 = vmatmul.mubr.bf16.gmra.mxu0 %v2220
  %v3893 = vpop.f32.mrf.mxu0
  %v3894 = vadd.f32 %v2913, %v3893
  %v3895 = vpop.f32.mrf.mxu0
  %v3896 = vadd.f32 %v2915, %v3895
  %v3897 = vpop.f32.mrf.mxu0
  %v3898 = vadd.f32 %v2917, %v3897
  %v3899 = vpop.f32.mrf.mxu0
  %v3900 = vadd.f32 %v2919, %v3899
  %3901 = vmatprep.mubr.bf16.mxu0 %v2610
  %3902 = vmatmul.mubr.bf16.gmra.mxu0 %v2222
  %v3903 = vpop.f32.mrf.mxu0
  %v3904 = vadd.f32 %v2923, %v3903
  %v3905 = vpop.f32.mrf.mxu0
  %v3906 = vadd.f32 %v2925, %v3905
  %v3907 = vpop.f32.mrf.mxu0
  %v3908 = vadd.f32 %v2927, %v3907
  %v3909 = vpop.f32.mrf.mxu0
  %v3910 = vadd.f32 %v2929, %v3909
  %3911 = vmatprep.mubr.bf16.mxu0 %v2613
  %3912 = vmatmul.mubr.bf16.gmra.mxu0 %v2224
  %v3913 = vpop.f32.mrf.mxu0
  %v3914 = vadd.f32 %v2933, %v3913
  %v3915 = vpop.f32.mrf.mxu0
  %v3916 = vadd.f32 %v2935, %v3915
  %v3917 = vpop.f32.mrf.mxu0
  %v3918 = vadd.f32 %v2937, %v3917
  %v3919 = vpop.f32.mrf.mxu0
  %v3920 = vadd.f32 %v2939, %v3919
  %3921 = vmatprep.mubr.bf16.mxu0 %v2616
  %3922 = vmatmul.mubr.bf16.gmra.mxu0 %v2226
  %v3923 = vpop.f32.mrf.mxu0
  %v3924 = vadd.f32 %v2943, %v3923
  %v3925 = vpop.f32.mrf.mxu0
  %v3926 = vadd.f32 %v2945, %v3925
  %v3927 = vpop.f32.mrf.mxu0
  %v3928 = vadd.f32 %v2947, %v3927
  %v3929 = vpop.f32.mrf.mxu0
  %v3930 = vadd.f32 %v2949, %v3929
  %3931 = vmatprep.mubr.bf16.mxu0 %v2619
  %3932 = vmatmul.mubr.bf16.gmra.mxu0 %v2228
  %v3933 = vpop.f32.mrf.mxu0
  %v3934 = vadd.f32 %v2953, %v3933
  %v3935 = vpop.f32.mrf.mxu0
  %v3936 = vadd.f32 %v2955, %v3935
  %v3937 = vpop.f32.mrf.mxu0
  %v3938 = vadd.f32 %v2957, %v3937
  %v3939 = vpop.f32.mrf.mxu0
  %v3940 = vadd.f32 %v2959, %v3939
  %3941 = vmatprep.mubr.bf16.mxu0 %v2622
  %3942 = vmatmul.mubr.bf16.gmra.mxu0 %v2230
  %v3943 = vpop.f32.mrf.mxu0
  %v3944 = vadd.f32 %v2963, %v3943
  %v3945 = vpop.f32.mrf.mxu0
  %v3946 = vadd.f32 %v2965, %v3945
  %v3947 = vpop.f32.mrf.mxu0
  %v3948 = vadd.f32 %v2967, %v3947
  %v3949 = vpop.f32.mrf.mxu0
  %v3950 = vadd.f32 %v2969, %v3949
  %3951 = vmatprep.mubr.bf16.mxu0 %v2625
  %3952 = vmatmul.mubr.bf16.gmra.mxu0 %v2232
  %v3953 = vpop.f32.mrf.mxu0
  %v3954 = vadd.f32 %v2973, %v3953
  %v3955 = vpop.f32.mrf.mxu0
  %v3956 = vadd.f32 %v2975, %v3955
  %v3957 = vpop.f32.mrf.mxu0
  %v3958 = vadd.f32 %v2977, %v3957
  %v3959 = vpop.f32.mrf.mxu0
  %v3960 = vadd.f32 %v2979, %v3959
  %3961 = vmatprep.mubr.bf16.mxu0 %v2628
  %3962 = vmatmul.mubr.bf16.gmra.mxu0 %v2234
  %v3963 = vpop.f32.mrf.mxu0
  %v3964 = vadd.f32 %v2983, %v3963
  %v3965 = vpop.f32.mrf.mxu0
  %v3966 = vadd.f32 %v2985, %v3965
  %v3967 = vpop.f32.mrf.mxu0
  %v3968 = vadd.f32 %v2987, %v3967
  %v3969 = vpop.f32.mrf.mxu0
  %v3970 = vadd.f32 %v2989, %v3969
  %3971 = vmatprep.mubr.bf16.mxu0 %v2631
  %3972 = vmatmul.mubr.bf16.gmra.mxu0 %v2236
  %v3973 = vpop.f32.mrf.mxu0
  %v3974 = vadd.f32 %v2993, %v3973
  %v3975 = vpop.f32.mrf.mxu0
  %v3976 = vadd.f32 %v2995, %v3975
  %v3977 = vpop.f32.mrf.mxu0
  %v3978 = vadd.f32 %v2997, %v3977
  %v3979 = vpop.f32.mrf.mxu0
  %v3980 = vadd.f32 %v2999, %v3979
  %3981 = vmatprep.mubr.bf16.mxu0 %v2634
  %3982 = vmatmul.mubr.bf16.gmra.mxu0 %v2238
  %v3983 = vpop.f32.mrf.mxu0
  %v3984 = vadd.f32 %v3003, %v3983
  %v3985 = vpop.f32.mrf.mxu0
  %v3986 = vadd.f32 %v3005, %v3985
  %v3987 = vpop.f32.mrf.mxu0
  %v3988 = vadd.f32 %v3007, %v3987
  %v3989 = vpop.f32.mrf.mxu0
  %v3990 = vadd.f32 %v3009, %v3989
  %3991 = vmatprep.mubr.bf16.mxu0 %v2637
  %3992 = vmatmul.mubr.bf16.gmra.mxu0 %v2240
  %v3993 = vpop.f32.mrf.mxu0
  %v3994 = vadd.f32 %v3013, %v3993
  %v3995 = vpop.f32.mrf.mxu0
  %v3996 = vadd.f32 %v3015, %v3995
  %v3997 = vpop.f32.mrf.mxu0
  %v3998 = vadd.f32 %v3017, %v3997
  %v3999 = vpop.f32.mrf.mxu0
  %v4000 = vadd.f32 %v3019, %v3999
  %4001 = vmatprep.mubr.bf16.mxu0 %v2640
  %4002 = vmatmul.mubr.bf16.gmra.mxu0 %v2242
  %v4003 = vpop.f32.mrf.mxu0
  %v4004 = vadd.f32 %v3023, %v4003
  %v4005 = vpop.f32.mrf.mxu0
  %v4006 = vadd.f32 %v3025, %v4005
  %v4007 = vpop.f32.mrf.mxu0
  %v4008 = vadd.f32 %v3027, %v4007
  %v4009 = vpop.f32.mrf.mxu0
  %v4010 = vadd.f32 %v3029, %v4009
  %4011 = vmatprep.mubr.bf16.mxu0 %v2643
  %4012 = vmatmul.mubr.bf16.gmra.mxu0 %v2244
  %v4013 = vpop.f32.mrf.mxu0
  %v4014 = vadd.f32 %v3033, %v4013
  %v4015 = vpop.f32.mrf.mxu0
  %v4016 = vadd.f32 %v3035, %v4015
  %v4017 = vpop.f32.mrf.mxu0
  %v4018 = vadd.f32 %v3037, %v4017
  %v4019 = vpop.f32.mrf.mxu0
  %v4020 = vadd.f32 %v3039, %v4019
  %4021 = vmatprep.mubr.bf16.mxu0 %v2646
  %4022 = vmatmul.mubr.bf16.gmra.mxu0 %v2246
  %v4023 = vpop.f32.mrf.mxu0
  %v4024 = vadd.f32 %v3043, %v4023
  %v4025 = vpop.f32.mrf.mxu0
  %v4026 = vadd.f32 %v3045, %v4025
  %v4027 = vpop.f32.mrf.mxu0
  %v4028 = vadd.f32 %v3047, %v4027
  %v4029 = vpop.f32.mrf.mxu0
  %v4030 = vadd.f32 %v3049, %v4029
  %4031 = vmatprep.mubr.bf16.mxu0 %v2649
  %4032 = vmatmul.mubr.bf16.gmra.mxu0 %v2248
  %v4033 = vpop.f32.mrf.mxu0
  %v4034 = vadd.f32 %v3053, %v4033
  %v4035 = vpop.f32.mrf.mxu0
  %v4036 = vadd.f32 %v3055, %v4035
  %v4037 = vpop.f32.mrf.mxu0
  %v4038 = vadd.f32 %v3057, %v4037
  %v4039 = vpop.f32.mrf.mxu0
  %v4040 = vadd.f32 %v3059, %v4039
  %4041 = vmatprep.mubr.bf16.mxu0 %v2652
  %4042 = vmatmul.mubr.bf16.gmra.mxu0 %v2250
  %v4043 = vpop.f32.mrf.mxu0
  %v4044 = vadd.f32 %v3063, %v4043
  %v4045 = vpop.f32.mrf.mxu0
  %v4046 = vadd.f32 %v3065, %v4045
  %v4047 = vpop.f32.mrf.mxu0
  %v4048 = vadd.f32 %v3067, %v4047
  %v4049 = vpop.f32.mrf.mxu0
  %v4050 = vadd.f32 %v3069, %v4049
  %4051 = vmatprep.mubr.bf16.mxu0 %v2655
  %4052 = vmatmul.mubr.bf16.gmra.mxu0 %v2252
  %v4053 = vpop.f32.mrf.mxu0
  %v4054 = vadd.f32 %v3073, %v4053
  %v4055 = vpop.f32.mrf.mxu0
  %v4056 = vadd.f32 %v3075, %v4055
  %v4057 = vpop.f32.mrf.mxu0
  %v4058 = vadd.f32 %v3077, %v4057
  %v4059 = vpop.f32.mrf.mxu0
  %v4060 = vadd.f32 %v3079, %v4059
  %4061 = vmatprep.mubr.bf16.mxu0 %v2658
  %4062 = vmatmul.mubr.bf16.gmra.mxu0 %v2254
  %v4063 = vpop.f32.mrf.mxu0
  %v4064 = vadd.f32 %v3083, %v4063
  %v4065 = vpop.f32.mrf.mxu0
  %v4066 = vadd.f32 %v3085, %v4065
  %v4067 = vpop.f32.mrf.mxu0
  %v4068 = vadd.f32 %v3087, %v4067
  %v4069 = vpop.f32.mrf.mxu0
  %v4070 = vadd.f32 %v3089, %v4069
  %4071 = vmatprep.mubr.bf16.mxu0 %v2661
  %4072 = vmatmul.mubr.bf16.gmra.mxu0 %v2256
  %v4073 = vpop.f32.mrf.mxu0
  %v4074 = vadd.f32 %v3093, %v4073
  %v4075 = vpop.f32.mrf.mxu0
  %v4076 = vadd.f32 %v3095, %v4075
  %v4077 = vpop.f32.mrf.mxu0
  %v4078 = vadd.f32 %v3097, %v4077
  %v4079 = vpop.f32.mrf.mxu0
  %v4080 = vadd.f32 %v3099, %v4079
  %4081 = vmatprep.mubr.bf16.mxu0 %v2664
  %4082 = vmatmul.mubr.bf16.gmra.mxu0 %v2258
  %v4083 = vpop.f32.mrf.mxu0
  %v4084 = vadd.f32 %v3103, %v4083
  %v4085 = vpop.f32.mrf.mxu0
  %v4086 = vadd.f32 %v3105, %v4085
  %v4087 = vpop.f32.mrf.mxu0
  %v4088 = vadd.f32 %v3107, %v4087
  %v4089 = vpop.f32.mrf.mxu0
  %v4090 = vadd.f32 %v3109, %v4089
  %4091 = vdwg.mxu0
  %4092 = vmatprep.subr.bf16.mxu0 0
  %4093 = vmatpush1.bf16.msra.mxu0 %v3607
  %4094 = vmatprep.subr.bf16.mxu0 0
  %4095 = vmatpush1.bf16.msra.mxu0 %v3604
  %4096 = vmatprep.subr.bf16.mxu0 0
  %4097 = vmatpush1.bf16.msra.mxu0 %v3601
  %4098 = vmatprep.subr.bf16.mxu0 0
  %4099 = vmatpush1.bf16.msra.mxu0 %v3598
  %4100 = vmatprep.subr.bf16.mxu0 0
  %4101 = vmatpush1.bf16.msra.mxu0 %v3595
  %4102 = vmatprep.subr.bf16.mxu0 0
  %4103 = vmatpush1.bf16.msra.mxu0 %v3592
  %4104 = vmatprep.subr.bf16.mxu0 0
  %4105 = vmatpush1.bf16.msra.mxu0 %v3589
  %4106 = vmatprep.subr.bf16.mxu0 0
  %4107 = vmatpush1.bf16.msra.mxu0 %v3586
  %4108 = vmatprep.subr.bf16.mxu0 0
  %4109 = vmatpush2.bf16.msra.mxu0 0
  %4110 = vmatprep.subr.bf16.mxu0 0
  %4111 = vmatpush2.bf16.msra.mxu0 0
  %4112 = vmatprep.subr.bf16.mxu0 0
  %4113 = vmatpush2.bf16.msra.mxu0 0
  %4114 = vmatprep.subr.bf16.mxu0 0
  %4115 = vmatpush2.bf16.msra.mxu0 0
  %4116 = vmatprep.subr.bf16.mxu0 0
  %4117 = vmatpush2.bf16.msra.mxu0 %v3619
  %4118 = vmatprep.subr.bf16.mxu0 0
  %4119 = vmatpush2.bf16.msra.mxu0 %v3616
  %4120 = vmatprep.subr.bf16.mxu0 0
  %4121 = vmatpush2.bf16.msra.mxu0 %v3613
  %4122 = vmatprep.subr.bf16.mxu0 0
  %4123 = vmatpush2.bf16.msra.mxu0 %v3610
  %4124 = vmatprep.mubr.bf16.mxu0 %v3657
  %4125 = vmatmul.mubr.bf16.gmra.mxu0 0
  %v4126 = vpop.f32.mrf.mxu0
  %v4127 = vadd.f32 %v3146, %v4126
  %v4128 = vpop.f32.mrf.mxu0
  %v4129 = vpop.f32.mrf.mxu0
  %v4130 = vadd.f32 %v3149, %v4129
  %v4131 = vpop.f32.mrf.mxu0
  %4132 = vmatprep.mubr.bf16.mxu0 %v3657
  %4133 = vmatmul.mubr.bf16.gmra.mxu0 0
  %v4134 = vpop.f32.mrf.mxu0
  %v4135 = vadd.f32 %v3154, %v4134
  %v4136 = vpop.f32.mrf.mxu0
  %v4137 = vpop.f32.mrf.mxu0
  %v4138 = vadd.f32 %v3157, %v4137
  %v4139 = vpop.f32.mrf.mxu0
  %4140 = vmatprep.mubr.bf16.mxu0 %v3657
  %4141 = vmatmul.mubr.bf16.gmra.mxu0 0
  %v4142 = vpop.f32.mrf.mxu0
  %v4143 = vadd.f32 %v3162, %v4142
  %v4144 = vpop.f32.mrf.mxu0
  %v4145 = vpop.f32.mrf.mxu0
  %v4146 = vadd.f32 %v3165, %v4145
  %v4147 = vpop.f32.mrf.mxu0
  %4148 = vmatprep.mubr.bf16.mxu0 %v3657
  %4149 = vmatmul.mubr.bf16.gmra.mxu0 0
  %v4150 = vpop.f32.mrf.mxu0
  %v4151 = vadd.f32 %v3170, %v4150
  %v4152 = vpop.f32.mrf.mxu0
  %v4153 = vpop.f32.mrf.mxu0
  %v4154 = vadd.f32 %v3173, %v4153
  %v4155 = vpop.f32.mrf.mxu0
  %4156 = vmatprep.mubr.bf16.mxu0 %v2559
  %4157 = vmatmul.mubr.bf16.gmra.mxu0 %v2188
  %v4158 = vpop.f32.mrf.mxu0
  %v4159 = vadd.f32 %v3178, %v4158
  %v4160 = vpop.f32.mrf.mxu0
  %v4161 = vpop.f32.mrf.mxu0
  %v4162 = vadd.f32 %v3181, %v4161
  %v4163 = vpop.f32.mrf.mxu0
  %4164 = vmatprep.mubr.bf16.mxu0 %v2562
  %4165 = vmatmul.mubr.bf16.gmra.mxu0 %v2190
  %v4166 = vpop.f32.mrf.mxu0
  %v4167 = vadd.f32 %v3186, %v4166
  %v4168 = vpop.f32.mrf.mxu0
  %v4169 = vpop.f32.mrf.mxu0
  %v4170 = vadd.f32 %v3189, %v4169
  %v4171 = vpop.f32.mrf.mxu0
  %4172 = vmatprep.mubr.bf16.mxu0 %v2565
  %4173 = vmatmul.mubr.bf16.gmra.mxu0 %v2192
  %v4174 = vpop.f32.mrf.mxu0
  %v4175 = vadd.f32 %v3194, %v4174
  %v4176 = vpop.f32.mrf.mxu0
  %v4177 = vpop.f32.mrf.mxu0
  %v4178 = vadd.f32 %v3197, %v4177
  %v4179 = vpop.f32.mrf.mxu0
  %4180 = vmatprep.mubr.bf16.mxu0 %v2568
  %4181 = vmatmul.mubr.bf16.gmra.mxu0 %v2194
  %v4182 = vpop.f32.mrf.mxu0
  %v4183 = vadd.f32 %v3202, %v4182
  %v4184 = vpop.f32.mrf.mxu0
  %v4185 = vpop.f32.mrf.mxu0
  %v4186 = vadd.f32 %v3205, %v4185
  %v4187 = vpop.f32.mrf.mxu0
  %4188 = vmatprep.mubr.bf16.mxu0 %v2571
  %4189 = vmatmul.mubr.bf16.gmra.mxu0 %v2196
  %v4190 = vpop.f32.mrf.mxu0
  %v4191 = vadd.f32 %v3210, %v4190
  %v4192 = vpop.f32.mrf.mxu0
  %v4193 = vpop.f32.mrf.mxu0
  %v4194 = vadd.f32 %v3213, %v4193
  %v4195 = vpop.f32.mrf.mxu0
  %4196 = vmatprep.mubr.bf16.mxu0 %v2574
  %4197 = vmatmul.mubr.bf16.gmra.mxu0 %v2198
  %v4198 = vpop.f32.mrf.mxu0
  %v4199 = vadd.f32 %v3218, %v4198
  %v4200 = vpop.f32.mrf.mxu0
  %v4201 = vpop.f32.mrf.mxu0
  %v4202 = vadd.f32 %v3221, %v4201
  %v4203 = vpop.f32.mrf.mxu0
  %4204 = vmatprep.mubr.bf16.mxu0 %v2577
  %4205 = vmatmul.mubr.bf16.gmra.mxu0 %v2200
  %v4206 = vpop.f32.mrf.mxu0
  %v4207 = vadd.f32 %v3226, %v4206
  %v4208 = vpop.f32.mrf.mxu0
  %v4209 = vpop.f32.mrf.mxu0
  %v4210 = vadd.f32 %v3229, %v4209
  %v4211 = vpop.f32.mrf.mxu0
  %4212 = vmatprep.mubr.bf16.mxu0 %v2580
  %4213 = vmatmul.mubr.bf16.gmra.mxu0 %v2202
  %v4214 = vpop.f32.mrf.mxu0
  %v4215 = vadd.f32 %v3234, %v4214
  %v4216 = vpop.f32.mrf.mxu0
  %v4217 = vpop.f32.mrf.mxu0
  %v4218 = vadd.f32 %v3237, %v4217
  %v4219 = vpop.f32.mrf.mxu0
  %4220 = vmatprep.mubr.bf16.mxu0 %v2583
  %4221 = vmatmul.mubr.bf16.gmra.mxu0 %v2204
  %v4222 = vpop.f32.mrf.mxu0
  %v4223 = vadd.f32 %v3242, %v4222
  %v4224 = vpop.f32.mrf.mxu0
  %v4225 = vpop.f32.mrf.mxu0
  %v4226 = vadd.f32 %v3245, %v4225
  %v4227 = vpop.f32.mrf.mxu0
  %4228 = vmatprep.mubr.bf16.mxu0 %v2586
  %4229 = vmatmul.mubr.bf16.gmra.mxu0 %v2206
  %v4230 = vpop.f32.mrf.mxu0
  %v4231 = vadd.f32 %v3250, %v4230
  %v4232 = vpop.f32.mrf.mxu0
  %v4233 = vpop.f32.mrf.mxu0
  %v4234 = vadd.f32 %v3253, %v4233
  %v4235 = vpop.f32.mrf.mxu0
  %4236 = vmatprep.mubr.bf16.mxu0 %v2589
  %4237 = vmatmul.mubr.bf16.gmra.mxu0 %v2208
  %v4238 = vpop.f32.mrf.mxu0
  %v4239 = vadd.f32 %v3258, %v4238
  %v4240 = vpop.f32.mrf.mxu0
  %v4241 = vpop.f32.mrf.mxu0
  %v4242 = vadd.f32 %v3261, %v4241
  %v4243 = vpop.f32.mrf.mxu0
  %4244 = vmatprep.mubr.bf16.mxu0 %v2592
  %4245 = vmatmul.mubr.bf16.gmra.mxu0 %v2210
  %v4246 = vpop.f32.mrf.mxu0
  %v4247 = vadd.f32 %v3266, %v4246
  %v4248 = vpop.f32.mrf.mxu0
  %v4249 = vpop.f32.mrf.mxu0
  %v4250 = vadd.f32 %v3269, %v4249
  %v4251 = vpop.f32.mrf.mxu0
  %4252 = vmatprep.mubr.bf16.mxu0 %v2595
  %4253 = vmatmul.mubr.bf16.gmra.mxu0 %v2212
  %v4254 = vpop.f32.mrf.mxu0
  %v4255 = vadd.f32 %v3274, %v4254
  %v4256 = vpop.f32.mrf.mxu0
  %v4257 = vpop.f32.mrf.mxu0
  %v4258 = vadd.f32 %v3277, %v4257
  %v4259 = vpop.f32.mrf.mxu0
  %4260 = vmatprep.mubr.bf16.mxu0 %v2598
  %4261 = vmatmul.mubr.bf16.gmra.mxu0 %v2214
  %v4262 = vpop.f32.mrf.mxu0
  %v4263 = vadd.f32 %v3282, %v4262
  %v4264 = vpop.f32.mrf.mxu0
  %v4265 = vpop.f32.mrf.mxu0
  %v4266 = vadd.f32 %v3285, %v4265
  %v4267 = vpop.f32.mrf.mxu0
  %4268 = vmatprep.mubr.bf16.mxu0 %v2601
  %4269 = vmatmul.mubr.bf16.gmra.mxu0 %v2216
  %v4270 = vpop.f32.mrf.mxu0
  %v4271 = vadd.f32 %v3290, %v4270
  %v4272 = vpop.f32.mrf.mxu0
  %v4273 = vpop.f32.mrf.mxu0
  %v4274 = vadd.f32 %v3293, %v4273
  %v4275 = vpop.f32.mrf.mxu0
  %4276 = vmatprep.mubr.bf16.mxu0 %v2604
  %4277 = vmatmul.mubr.bf16.gmra.mxu0 %v2218
  %v4278 = vpop.f32.mrf.mxu0
  %v4279 = vadd.f32 %v3298, %v4278
  %v4280 = vpop.f32.mrf.mxu0
  %v4281 = vpop.f32.mrf.mxu0
  %v4282 = vadd.f32 %v3301, %v4281
  %v4283 = vpop.f32.mrf.mxu0
  %4284 = vmatprep.mubr.bf16.mxu0 %v2607
  %4285 = vmatmul.mubr.bf16.gmra.mxu0 %v2220
  %v4286 = vpop.f32.mrf.mxu0
  %v4287 = vadd.f32 %v3306, %v4286
  %v4288 = vpop.f32.mrf.mxu0
  %v4289 = vpop.f32.mrf.mxu0
  %v4290 = vadd.f32 %v3309, %v4289
  %v4291 = vpop.f32.mrf.mxu0
  %4292 = vmatprep.mubr.bf16.mxu0 %v2610
  %4293 = vmatmul.mubr.bf16.gmra.mxu0 %v2222
  %v4294 = vpop.f32.mrf.mxu0
  %v4295 = vadd.f32 %v3314, %v4294
  %v4296 = vpop.f32.mrf.mxu0
  %v4297 = vpop.f32.mrf.mxu0
  %v4298 = vadd.f32 %v3317, %v4297
  %v4299 = vpop.f32.mrf.mxu0
  %4300 = vmatprep.mubr.bf16.mxu0 %v2613
  %4301 = vmatmul.mubr.bf16.gmra.mxu0 %v2224
  %v4302 = vpop.f32.mrf.mxu0
  %v4303 = vadd.f32 %v3322, %v4302
  %v4304 = vpop.f32.mrf.mxu0
  %v4305 = vpop.f32.mrf.mxu0
  %v4306 = vadd.f32 %v3325, %v4305
  %v4307 = vpop.f32.mrf.mxu0
  %4308 = vmatprep.mubr.bf16.mxu0 %v2616
  %4309 = vmatmul.mubr.bf16.gmra.mxu0 %v2226
  %v4310 = vpop.f32.mrf.mxu0
  %v4311 = vadd.f32 %v3330, %v4310
  %v4312 = vpop.f32.mrf.mxu0
  %v4313 = vpop.f32.mrf.mxu0
  %v4314 = vadd.f32 %v3333, %v4313
  %v4315 = vpop.f32.mrf.mxu0
  %4316 = vmatprep.mubr.bf16.mxu0 %v2619
  %4317 = vmatmul.mubr.bf16.gmra.mxu0 %v2228
  %v4318 = vpop.f32.mrf.mxu0
  %v4319 = vadd.f32 %v3338, %v4318
  %v4320 = vpop.f32.mrf.mxu0
  %v4321 = vpop.f32.mrf.mxu0
  %v4322 = vadd.f32 %v3341, %v4321
  %v4323 = vpop.f32.mrf.mxu0
  %4324 = vmatprep.mubr.bf16.mxu0 %v2622
  %4325 = vmatmul.mubr.bf16.gmra.mxu0 %v2230
  %v4326 = vpop.f32.mrf.mxu0
  %v4327 = vadd.f32 %v3346, %v4326
  %v4328 = vpop.f32.mrf.mxu0
  %v4329 = vpop.f32.mrf.mxu0
  %v4330 = vadd.f32 %v3349, %v4329
  %v4331 = vpop.f32.mrf.mxu0
  %4332 = vmatprep.mubr.bf16.mxu0 %v2625
  %4333 = vmatmul.mubr.bf16.gmra.mxu0 %v2232
  %v4334 = vpop.f32.mrf.mxu0
  %v4335 = vadd.f32 %v3354, %v4334
  %v4336 = vpop.f32.mrf.mxu0
  %v4337 = vpop.f32.mrf.mxu0
  %v4338 = vadd.f32 %v3357, %v4337
  %v4339 = vpop.f32.mrf.mxu0
  %4340 = vmatprep.mubr.bf16.mxu0 %v2628
  %4341 = vmatmul.mubr.bf16.gmra.mxu0 %v2234
  %v4342 = vpop.f32.mrf.mxu0
  %v4343 = vadd.f32 %v3362, %v4342
  %v4344 = vpop.f32.mrf.mxu0
  %v4345 = vpop.f32.mrf.mxu0
  %v4346 = vadd.f32 %v3365, %v4345
  %v4347 = vpop.f32.mrf.mxu0
  %4348 = vmatprep.mubr.bf16.mxu0 %v2631
  %4349 = vmatmul.mubr.bf16.gmra.mxu0 %v2236
  %v4350 = vpop.f32.mrf.mxu0
  %v4351 = vadd.f32 %v3370, %v4350
  %v4352 = vpop.f32.mrf.mxu0
  %v4353 = vpop.f32.mrf.mxu0
  %v4354 = vadd.f32 %v3373, %v4353
  %v4355 = vpop.f32.mrf.mxu0
  %4356 = vmatprep.mubr.bf16.mxu0 %v2634
  %4357 = vmatmul.mubr.bf16.gmra.mxu0 %v2238
  %v4358 = vpop.f32.mrf.mxu0
  %v4359 = vadd.f32 %v3378, %v4358
  %v4360 = vpop.f32.mrf.mxu0
  %v4361 = vpop.f32.mrf.mxu0
  %v4362 = vadd.f32 %v3381, %v4361
  %v4363 = vpop.f32.mrf.mxu0
  %4364 = vmatprep.mubr.bf16.mxu0 %v2637
  %4365 = vmatmul.mubr.bf16.gmra.mxu0 %v2240
  %v4366 = vpop.f32.mrf.mxu0
  %v4367 = vadd.f32 %v3386, %v4366
  %v4368 = vpop.f32.mrf.mxu0
  %v4369 = vpop.f32.mrf.mxu0
  %v4370 = vadd.f32 %v3389, %v4369
  %v4371 = vpop.f32.mrf.mxu0
  %4372 = vmatprep.mubr.bf16.mxu0 %v2640
  %4373 = vmatmul.mubr.bf16.gmra.mxu0 %v2242
  %v4374 = vpop.f32.mrf.mxu0
  %v4375 = vadd.f32 %v3394, %v4374
  %v4376 = vpop.f32.mrf.mxu0
  %v4377 = vpop.f32.mrf.mxu0
  %v4378 = vadd.f32 %v3397, %v4377
  %v4379 = vpop.f32.mrf.mxu0
  %4380 = vmatprep.mubr.bf16.mxu0 %v2643
  %4381 = vmatmul.mubr.bf16.gmra.mxu0 %v2244
  %v4382 = vpop.f32.mrf.mxu0
  %v4383 = vadd.f32 %v3402, %v4382
  %v4384 = vpop.f32.mrf.mxu0
  %v4385 = vpop.f32.mrf.mxu0
  %v4386 = vadd.f32 %v3405, %v4385
  %v4387 = vpop.f32.mrf.mxu0
  %4388 = vmatprep.mubr.bf16.mxu0 %v2646
  %4389 = vmatmul.mubr.bf16.gmra.mxu0 %v2246
  %v4390 = vpop.f32.mrf.mxu0
  %v4391 = vadd.f32 %v3410, %v4390
  %v4392 = vpop.f32.mrf.mxu0
  %v4393 = vpop.f32.mrf.mxu0
  %v4394 = vadd.f32 %v3413, %v4393
  %v4395 = vpop.f32.mrf.mxu0
  %4396 = vmatprep.mubr.bf16.mxu0 %v2649
  %4397 = vmatmul.mubr.bf16.gmra.mxu0 %v2248
  %v4398 = vpop.f32.mrf.mxu0
  %v4399 = vadd.f32 %v3418, %v4398
  %v4400 = vpop.f32.mrf.mxu0
  %v4401 = vpop.f32.mrf.mxu0
  %v4402 = vadd.f32 %v3421, %v4401
  %v4403 = vpop.f32.mrf.mxu0
  %4404 = vmatprep.mubr.bf16.mxu0 %v2652
  %4405 = vmatmul.mubr.bf16.gmra.mxu0 %v2250
  %v4406 = vpop.f32.mrf.mxu0
  %v4407 = vadd.f32 %v3426, %v4406
  %v4408 = vpop.f32.mrf.mxu0
  %v4409 = vpop.f32.mrf.mxu0
  %v4410 = vadd.f32 %v3429, %v4409
  %v4411 = vpop.f32.mrf.mxu0
  %4412 = vmatprep.mubr.bf16.mxu0 %v2655
  %4413 = vmatmul.mubr.bf16.gmra.mxu0 %v2252
  %v4414 = vpop.f32.mrf.mxu0
  %v4415 = vadd.f32 %v3434, %v4414
  %v4416 = vpop.f32.mrf.mxu0
  %v4417 = vpop.f32.mrf.mxu0
  %v4418 = vadd.f32 %v3437, %v4417
  %v4419 = vpop.f32.mrf.mxu0
  %4420 = vmatprep.mubr.bf16.mxu0 %v2658
  %4421 = vmatmul.mubr.bf16.gmra.mxu0 %v2254
  %v4422 = vpop.f32.mrf.mxu0
  %v4423 = vadd.f32 %v3442, %v4422
  %v4424 = vpop.f32.mrf.mxu0
  %v4425 = vpop.f32.mrf.mxu0
  %v4426 = vadd.f32 %v3445, %v4425
  %v4427 = vpop.f32.mrf.mxu0
  %4428 = vmatprep.mubr.bf16.mxu0 %v2661
  %4429 = vmatmul.mubr.bf16.gmra.mxu0 %v2256
  %v4430 = vpop.f32.mrf.mxu0
  %v4431 = vadd.f32 %v3450, %v4430
  %v4432 = vpop.f32.mrf.mxu0
  %v4433 = vpop.f32.mrf.mxu0
  %v4434 = vadd.f32 %v3453, %v4433
  %v4435 = vpop.f32.mrf.mxu0
  %4436 = vmatprep.mubr.bf16.mxu0 %v2664
  %4437 = vmatmul.mubr.bf16.gmra.mxu0 %v2258
  %v4438 = vpop.f32.mrf.mxu0
  %v4439 = vadd.f32 %v3458, %v4438
  %v4440 = vpop.f32.mrf.mxu0
  %v4441 = vpop.f32.mrf.mxu0
  %v4442 = vadd.f32 %v3461, %v4441
  %v4443 = vpop.f32.mrf.mxu0
  %4444 = vdwg.mxu0
  %s4445 = scalar_lea.vmem %s3, 576
  %v4446 = vld [vmem:[%s4445] sm:$0xff]
  %v4447 = vld [vmem:[%s4445 + $0x8] sm:$0xf]
  %v4448 = vld [vmem:[%s4445 + $0xc] sm:$0xff]
  %v4449 = vld [vmem:[%s4445 + $0x14] sm:$0xf]
  %v4450 = vld [vmem:[%s4445 + $0x18] sm:$0xff]
  %v4451 = vld [vmem:[%s4445 + $0x20] sm:$0xf]
  %v4452 = vld [vmem:[%s4445 + $0x24] sm:$0xff]
  %v4453 = vld [vmem:[%s4445 + $0x2c] sm:$0xf]
  %v4454 = vld [vmem:[%s4445 + $0x30] sm:$0xff]
  %v4455 = vld [vmem:[%s4445 + $0x38] sm:$0xf]
  %v4456 = vld [vmem:[%s4445 + $0x3c] sm:$0xff]
  %v4457 = vld [vmem:[%s4445 + $0x44] sm:$0xf]
  %v4458 = vld [vmem:[%s4445 + $0x48] sm:$0xff]
  %v4459 = vld [vmem:[%s4445 + $0x50] sm:$0xf]
  %v4460 = vld [vmem:[%s4445 + $0x54] sm:$0xff]
  %v4461 = vld [vmem:[%s4445 + $0x5c] sm:$0xf]
  %v4462 = vld [vmem:[%s4445 + $0x60] sm:$0xff]
  %v4463 = vld [vmem:[%s4445 + $0x68] sm:$0xf]
  %v4464 = vld [vmem:[%s4445 + $0x6c] sm:$0xff]
  %v4465 = vld [vmem:[%s4445 + $0x74] sm:$0xf]
  %v4466 = vld [vmem:[%s4445 + $0x78] sm:$0xff]
  %v4467 = vld [vmem:[%s4445 + $0x80] sm:$0xf]
  %v4468 = vld [vmem:[%s4445 + $0x84] sm:$0xff]
  %v4469 = vld [vmem:[%s4445 + $0x8c] sm:$0xf]
  %v4470 = vld [vmem:[%s4445 + $0x90] sm:$0xff]
  %v4471 = vld [vmem:[%s4445 + $0x98] sm:$0xf]
  %v4472 = vld [vmem:[%s4445 + $0x9c] sm:$0xff]
  %v4473 = vld [vmem:[%s4445 + $0xa4] sm:$0xf]
  %v4474 = vld [vmem:[%s4445 + $0xa8] sm:$0xff]
  %v4475 = vld [vmem:[%s4445 + $0xb0] sm:$0xf]
  %v4476 = vld [vmem:[%s4445 + $0xb4] sm:$0xff]
  %v4477 = vld [vmem:[%s4445 + $0xbc] sm:$0xf]
  %v4478 = vld [vmem:[%s4445 + $0xc0] sm:$0xff]
  %v4479 = vld [vmem:[%s4445 + $0xc8] sm:$0xf]
  %v4480 = vld [vmem:[%s4445 + $0xcc] sm:$0xff]
  %v4481 = vld [vmem:[%s4445 + $0xd4] sm:$0xf]
  %v4482 = vld [vmem:[%s4445 + $0xd8] sm:$0xff]
  %v4483 = vld [vmem:[%s4445 + $0xe0] sm:$0xf]
  %v4484 = vld [vmem:[%s4445 + $0xe4] sm:$0xff]
  %v4485 = vld [vmem:[%s4445 + $0xec] sm:$0xf]
  %v4486 = vld [vmem:[%s4445 + $0xf0] sm:$0xff]
  %v4487 = vld [vmem:[%s4445 + $0xf8] sm:$0xf]
  %v4488 = vld [vmem:[%s4445 + $0xfc] sm:$0xff]
  %v4489 = vld [vmem:[%s4445 + $0x104] sm:$0xf]
  %v4490 = vld [vmem:[%s4445 + $0x108] sm:$0xff]
  %v4491 = vld [vmem:[%s4445 + $0x110] sm:$0xf]
  %v4492 = vld [vmem:[%s4445 + $0x114] sm:$0xff]
  %v4493 = vld [vmem:[%s4445 + $0x11c] sm:$0xf]
  %v4542 = vunpack.c.l.b16 %v4446
  %v4543 = vunpack.c.h.b16 %v4446
  %v4544 = vunpack.c.l.b16 %v4447
  %v4545 = vunpack.c.l.b16 %v4448
  %v4546 = vunpack.c.h.b16 %v4448
  %v4547 = vunpack.c.l.b16 %v4449
  %v4548 = vunpack.c.l.b16 %v4450
  %v4549 = vunpack.c.h.b16 %v4450
  %v4550 = vunpack.c.l.b16 %v4451
  %v4551 = vunpack.c.l.b16 %v4452
  %v4552 = vunpack.c.h.b16 %v4452
  %v4553 = vunpack.c.l.b16 %v4453
  %v4554 = vunpack.c.l.b16 %v4454
  %v4555 = vunpack.c.h.b16 %v4454
  %v4556 = vunpack.c.l.b16 %v4455
  %v4557 = vunpack.c.l.b16 %v4456
  %v4558 = vunpack.c.h.b16 %v4456
  %v4559 = vunpack.c.l.b16 %v4457
  %v4560 = vunpack.c.l.b16 %v4458
  %v4561 = vunpack.c.h.b16 %v4458
  %v4562 = vunpack.c.l.b16 %v4459
  %v4563 = vunpack.c.l.b16 %v4460
  %v4564 = vunpack.c.h.b16 %v4460
  %v4565 = vunpack.c.l.b16 %v4461
  %v4566 = vunpack.c.l.b16 %v4462
  %v4567 = vunpack.c.h.b16 %v4462
  %v4568 = vunpack.c.l.b16 %v4463
  %v4569 = vunpack.c.l.b16 %v4464
  %v4570 = vunpack.c.h.b16 %v4464
  %v4571 = vunpack.c.l.b16 %v4465
  %v4572 = vunpack.c.l.b16 %v4466
  %v4573 = vunpack.c.h.b16 %v4466
  %v4574 = vunpack.c.l.b16 %v4467
  %v4575 = vunpack.c.l.b16 %v4468
  %v4576 = vunpack.c.h.b16 %v4468
  %v4577 = vunpack.c.l.b16 %v4469
  %v4578 = vunpack.c.l.b16 %v4470
  %v4579 = vunpack.c.h.b16 %v4470
  %v4580 = vunpack.c.l.b16 %v4471
  %v4581 = vunpack.c.l.b16 %v4472
  %v4582 = vunpack.c.h.b16 %v4472
  %v4583 = vunpack.c.l.b16 %v4473
  %v4584 = vunpack.c.l.b16 %v4474
  %v4585 = vunpack.c.h.b16 %v4474
  %v4586 = vunpack.c.l.b16 %v4475
  %v4587 = vunpack.c.l.b16 %v4476
  %v4588 = vunpack.c.h.b16 %v4476
  %v4589 = vunpack.c.l.b16 %v4477
  %v4590 = vunpack.c.l.b16 %v4478
  %v4591 = vunpack.c.h.b16 %v4478
  %v4592 = vunpack.c.l.b16 %v4479
  %v4593 = vunpack.c.l.b16 %v4480
  %v4594 = vunpack.c.h.b16 %v4480
  %v4595 = vunpack.c.l.b16 %v4481
  %v4596 = vunpack.c.l.b16 %v4482
  %v4597 = vunpack.c.h.b16 %v4482
  %v4598 = vunpack.c.l.b16 %v4483
  %v4599 = vunpack.c.l.b16 %v4484
  %v4600 = vunpack.c.h.b16 %v4484
  %v4601 = vunpack.c.l.b16 %v4485
  %v4602 = vunpack.c.l.b16 %v4486
  %v4603 = vunpack.c.h.b16 %v4486
  %v4604 = vunpack.c.l.b16 %v4487
  %v4605 = vunpack.c.l.b16 %v4488
  %v4606 = vunpack.c.h.b16 %v4488
  %v4607 = vunpack.c.l.b16 %v4489
  %v4608 = vunpack.c.l.b16 %v4490
  %v4609 = vunpack.c.h.b16 %v4490
  %v4610 = vunpack.c.l.b16 %v4491
  %v4611 = vunpack.c.l.b16 %v4492
  %v4612 = vunpack.c.h.b16 %v4492
  %v4613 = vunpack.c.l.b16 %v4493
  %v4614 = vpack.c.b16 %v4545, %v4542
  %v4615 = vpack.c.b16 %v4546, %v4543
  %v4616 = vpack.c.b16 %v4547, %v4544
  %v4617 = vpack.c.b16 %v4551, %v4548
  %v4618 = vpack.c.b16 %v4552, %v4549
  %v4619 = vpack.c.b16 %v4553, %v4550
  %v4620 = vpack.c.b16 %v4557, %v4554
  %v4621 = vpack.c.b16 %v4558, %v4555
  %v4622 = vpack.c.b16 %v4559, %v4556
  %v4623 = vpack.c.b16 %v4563, %v4560
  %v4624 = vpack.c.b16 %v4564, %v4561
  %v4625 = vpack.c.b16 %v4565, %v4562
  %v4626 = vpack.c.b16 %v4569, %v4566
  %v4627 = vpack.c.b16 %v4570, %v4567
  %v4628 = vpack.c.b16 %v4571, %v4568
  %v4629 = vpack.c.b16 %v4575, %v4572
  %v4630 = vpack.c.b16 %v4576, %v4573
  %v4631 = vpack.c.b16 %v4577, %v4574
  %v4632 = vpack.c.b16 %v4581, %v4578
  %v4633 = vpack.c.b16 %v4582, %v4579
  %v4634 = vpack.c.b16 %v4583, %v4580
  %v4635 = vpack.c.b16 %v4587, %v4584
  %v4636 = vpack.c.b16 %v4588, %v4585
  %v4637 = vpack.c.b16 %v4589, %v4586
  %v4638 = vpack.c.b16 %v4593, %v4590
  %v4639 = vpack.c.b16 %v4594, %v4591
  %v4640 = vpack.c.b16 %v4595, %v4592
  %v4641 = vpack.c.b16 %v4599, %v4596
  %v4642 = vpack.c.b16 %v4600, %v4597
  %v4643 = vpack.c.b16 %v4601, %v4598
  %v4644 = vpack.c.b16 %v4605, %v4602
  %v4645 = vpack.c.b16 %v4606, %v4603
  %v4646 = vpack.c.b16 %v4607, %v4604
  %v4647 = vpack.c.b16 %v4611, %v4608
  %v4648 = vpack.c.b16 %v4612, %v4609
  %v4649 = vpack.c.b16 %v4613, %v4610
  %4686 = vmatprep.subr.bf16.mxu0 %v4636
  %4687 = vmatpush1.bf16.msra.mxu0 %v4635
  %4688 = vmatprep.subr.bf16.mxu0 %v4633
  %4689 = vmatpush1.bf16.msra.mxu0 %v4632
  %4690 = vmatprep.subr.bf16.mxu0 %v4630
  %4691 = vmatpush1.bf16.msra.mxu0 %v4629
  %4692 = vmatprep.subr.bf16.mxu0 %v4627
  %4693 = vmatpush1.bf16.msra.mxu0 %v4626
  %4694 = vmatprep.subr.bf16.mxu0 %v4624
  %4695 = vmatpush1.bf16.msra.mxu0 %v4623
  %4696 = vmatprep.subr.bf16.mxu0 %v4621
  %4697 = vmatpush1.bf16.msra.mxu0 %v4620
  %4698 = vmatprep.subr.bf16.mxu0 %v4618
  %4699 = vmatpush1.bf16.msra.mxu0 %v4617
  %4700 = vmatprep.subr.bf16.mxu0 %v4615
  %4701 = vmatpush1.bf16.msra.mxu0 %v4614
  %4702 = vmatprep.subr.bf16.mxu0 0
  %4703 = vmatpush2.bf16.msra.mxu0 0
  %4704 = vmatprep.subr.bf16.mxu0 0
  %4705 = vmatpush2.bf16.msra.mxu0 0
  %4706 = vmatprep.subr.bf16.mxu0 0
  %4707 = vmatpush2.bf16.msra.mxu0 0
  %4708 = vmatprep.subr.bf16.mxu0 0
  %4709 = vmatpush2.bf16.msra.mxu0 0
  %4710 = vmatprep.subr.bf16.mxu0 %v4648
  %4711 = vmatpush2.bf16.msra.mxu0 %v4647
  %4712 = vmatprep.subr.bf16.mxu0 %v4645
  %4713 = vmatpush2.bf16.msra.mxu0 %v4644
  %4714 = vmatprep.subr.bf16.mxu0 %v4642
  %4715 = vmatpush2.bf16.msra.mxu0 %v4641
  %4716 = vmatprep.subr.bf16.mxu0 %v4639
  %4717 = vmatpush2.bf16.msra.mxu0 %v4638
  %4718 = vmatprep.mubr.bf16.mxu0 %v2571
  %4719 = vmatmul.mubr.bf16.gmra.mxu0 %v2196
  %v4720 = vpop.f32.mrf.mxu0
  %v4721 = vadd.f32 0.0, %v4720
  %v4722 = vpop.f32.mrf.mxu0
  %v4723 = vadd.f32 0.0, %v4722
  %v4724 = vpop.f32.mrf.mxu0
  %v4725 = vadd.f32 0.0, %v4724
  %v4726 = vpop.f32.mrf.mxu0
  %v4727 = vadd.f32 0.0, %v4726
  %4728 = vmatprep.mubr.bf16.mxu0 %v2574
  %4729 = vmatmul.mubr.bf16.gmra.mxu0 %v2198
  %v4730 = vpop.f32.mrf.mxu0
  %v4731 = vadd.f32 0.0, %v4730
  %v4732 = vpop.f32.mrf.mxu0
  %v4733 = vadd.f32 0.0, %v4732
  %v4734 = vpop.f32.mrf.mxu0
  %v4735 = vadd.f32 0.0, %v4734
  %v4736 = vpop.f32.mrf.mxu0
  %v4737 = vadd.f32 0.0, %v4736
  %4738 = vmatprep.mubr.bf16.mxu0 %v2577
  %4739 = vmatmul.mubr.bf16.gmra.mxu0 %v2200
  %v4740 = vpop.f32.mrf.mxu0
  %v4741 = vadd.f32 0.0, %v4740
  %v4742 = vpop.f32.mrf.mxu0
  %v4743 = vadd.f32 0.0, %v4742
  %v4744 = vpop.f32.mrf.mxu0
  %v4745 = vadd.f32 0.0, %v4744
  %v4746 = vpop.f32.mrf.mxu0
  %v4747 = vadd.f32 0.0, %v4746
  %4748 = vmatprep.mubr.bf16.mxu0 %v2580
  %4749 = vmatmul.mubr.bf16.gmra.mxu0 %v2202
  %v4750 = vpop.f32.mrf.mxu0
  %v4751 = vadd.f32 0.0, %v4750
  %v4752 = vpop.f32.mrf.mxu0
  %v4753 = vadd.f32 0.0, %v4752
  %v4754 = vpop.f32.mrf.mxu0
  %v4755 = vadd.f32 0.0, %v4754
  %v4756 = vpop.f32.mrf.mxu0
  %v4757 = vadd.f32 0.0, %v4756
  %4758 = vmatprep.mubr.bf16.mxu0 %v2583
  %4759 = vmatmul.mubr.bf16.gmra.mxu0 %v2204
  %v4760 = vpop.f32.mrf.mxu0
  %v4761 = vadd.f32 0.0, %v4760
  %v4762 = vpop.f32.mrf.mxu0
  %v4763 = vadd.f32 0.0, %v4762
  %v4764 = vpop.f32.mrf.mxu0
  %v4765 = vadd.f32 0.0, %v4764
  %v4766 = vpop.f32.mrf.mxu0
  %v4767 = vadd.f32 0.0, %v4766
  %4768 = vmatprep.mubr.bf16.mxu0 %v2586
  %4769 = vmatmul.mubr.bf16.gmra.mxu0 %v2206
  %v4770 = vpop.f32.mrf.mxu0
  %v4771 = vadd.f32 0.0, %v4770
  %v4772 = vpop.f32.mrf.mxu0
  %v4773 = vadd.f32 0.0, %v4772
  %v4774 = vpop.f32.mrf.mxu0
  %v4775 = vadd.f32 0.0, %v4774
  %v4776 = vpop.f32.mrf.mxu0
  %v4777 = vadd.f32 0.0, %v4776
  %4778 = vmatprep.mubr.bf16.mxu0 %v2589
  %4779 = vmatmul.mubr.bf16.gmra.mxu0 %v2208
  %v4780 = vpop.f32.mrf.mxu0
  %v4781 = vadd.f32 0.0, %v4780
  %v4782 = vpop.f32.mrf.mxu0
  %v4783 = vadd.f32 0.0, %v4782
  %v4784 = vpop.f32.mrf.mxu0
  %v4785 = vadd.f32 0.0, %v4784
  %v4786 = vpop.f32.mrf.mxu0
  %v4787 = vadd.f32 0.0, %v4786
  %4788 = vmatprep.mubr.bf16.mxu0 %v2592
  %4789 = vmatmul.mubr.bf16.gmra.mxu0 %v2210
  %v4790 = vpop.f32.mrf.mxu0
  %v4791 = vadd.f32 0.0, %v4790
  %v4792 = vpop.f32.mrf.mxu0
  %v4793 = vadd.f32 0.0, %v4792
  %v4794 = vpop.f32.mrf.mxu0
  %v4795 = vadd.f32 0.0, %v4794
  %v4796 = vpop.f32.mrf.mxu0
  %v4797 = vadd.f32 0.0, %v4796
  %4798 = vmatprep.mubr.bf16.mxu0 %v2595
  %4799 = vmatmul.mubr.bf16.gmra.mxu0 %v2212
  %v4800 = vpop.f32.mrf.mxu0
  %v4801 = vadd.f32 0.0, %v4800
  %v4802 = vpop.f32.mrf.mxu0
  %v4803 = vadd.f32 0.0, %v4802
  %v4804 = vpop.f32.mrf.mxu0
  %v4805 = vadd.f32 0.0, %v4804
  %v4806 = vpop.f32.mrf.mxu0
  %v4807 = vadd.f32 0.0, %v4806
  %4808 = vmatprep.mubr.bf16.mxu0 %v2598
  %4809 = vmatmul.mubr.bf16.gmra.mxu0 %v2214
  %v4810 = vpop.f32.mrf.mxu0
  %v4811 = vadd.f32 0.0, %v4810
  %v4812 = vpop.f32.mrf.mxu0
  %v4813 = vadd.f32 0.0, %v4812
  %v4814 = vpop.f32.mrf.mxu0
  %v4815 = vadd.f32 0.0, %v4814
  %v4816 = vpop.f32.mrf.mxu0
  %v4817 = vadd.f32 0.0, %v4816
  %4818 = vmatprep.mubr.bf16.mxu0 %v2601
  %4819 = vmatmul.mubr.bf16.gmra.mxu0 %v2216
  %v4820 = vpop.f32.mrf.mxu0
  %v4821 = vadd.f32 0.0, %v4820
  %v4822 = vpop.f32.mrf.mxu0
  %v4823 = vadd.f32 0.0, %v4822
  %v4824 = vpop.f32.mrf.mxu0
  %v4825 = vadd.f32 0.0, %v4824
  %v4826 = vpop.f32.mrf.mxu0
  %v4827 = vadd.f32 0.0, %v4826
  %4828 = vmatprep.mubr.bf16.mxu0 %v2604
  %4829 = vmatmul.mubr.bf16.gmra.mxu0 %v2218
  %v4830 = vpop.f32.mrf.mxu0
  %v4831 = vadd.f32 0.0, %v4830
  %v4832 = vpop.f32.mrf.mxu0
  %v4833 = vadd.f32 0.0, %v4832
  %v4834 = vpop.f32.mrf.mxu0
  %v4835 = vadd.f32 0.0, %v4834
  %v4836 = vpop.f32.mrf.mxu0
  %v4837 = vadd.f32 0.0, %v4836
  %4838 = vmatprep.mubr.bf16.mxu0 %v2607
  %4839 = vmatmul.mubr.bf16.gmra.mxu0 %v2220
  %v4840 = vpop.f32.mrf.mxu0
  %v4841 = vadd.f32 0.0, %v4840
  %v4842 = vpop.f32.mrf.mxu0
  %v4843 = vadd.f32 0.0, %v4842
  %v4844 = vpop.f32.mrf.mxu0
  %v4845 = vadd.f32 0.0, %v4844
  %v4846 = vpop.f32.mrf.mxu0
  %v4847 = vadd.f32 0.0, %v4846
  %4848 = vmatprep.mubr.bf16.mxu0 %v2610
  %4849 = vmatmul.mubr.bf16.gmra.mxu0 %v2222
  %v4850 = vpop.f32.mrf.mxu0
  %v4851 = vadd.f32 0.0, %v4850
  %v4852 = vpop.f32.mrf.mxu0
  %v4853 = vadd.f32 0.0, %v4852
  %v4854 = vpop.f32.mrf.mxu0
  %v4855 = vadd.f32 0.0, %v4854
  %v4856 = vpop.f32.mrf.mxu0
  %v4857 = vadd.f32 0.0, %v4856
  %4858 = vmatprep.mubr.bf16.mxu0 %v2613
  %4859 = vmatmul.mubr.bf16.gmra.mxu0 %v2224
  %v4860 = vpop.f32.mrf.mxu0
  %v4861 = vadd.f32 0.0, %v4860
  %v4862 = vpop.f32.mrf.mxu0
  %v4863 = vadd.f32 0.0, %v4862
  %v4864 = vpop.f32.mrf.mxu0
  %v4865 = vadd.f32 0.0, %v4864
  %v4866 = vpop.f32.mrf.mxu0
  %v4867 = vadd.f32 0.0, %v4866
  %4868 = vmatprep.mubr.bf16.mxu0 %v2616
  %4869 = vmatmul.mubr.bf16.gmra.mxu0 %v2226
  %v4870 = vpop.f32.mrf.mxu0
  %v4871 = vadd.f32 0.0, %v4870
  %v4872 = vpop.f32.mrf.mxu0
  %v4873 = vadd.f32 0.0, %v4872
  %v4874 = vpop.f32.mrf.mxu0
  %v4875 = vadd.f32 0.0, %v4874
  %v4876 = vpop.f32.mrf.mxu0
  %v4877 = vadd.f32 0.0, %v4876
  %4878 = vmatprep.mubr.bf16.mxu0 %v2619
  %4879 = vmatmul.mubr.bf16.gmra.mxu0 %v2228
  %v4880 = vpop.f32.mrf.mxu0
  %v4881 = vadd.f32 0.0, %v4880
  %v4882 = vpop.f32.mrf.mxu0
  %v4883 = vadd.f32 0.0, %v4882
  %v4884 = vpop.f32.mrf.mxu0
  %v4885 = vadd.f32 0.0, %v4884
  %v4886 = vpop.f32.mrf.mxu0
  %v4887 = vadd.f32 0.0, %v4886
  %4888 = vmatprep.mubr.bf16.mxu0 %v2622
  %4889 = vmatmul.mubr.bf16.gmra.mxu0 %v2230
  %v4890 = vpop.f32.mrf.mxu0
  %v4891 = vadd.f32 0.0, %v4890
  %v4892 = vpop.f32.mrf.mxu0
  %v4893 = vadd.f32 0.0, %v4892
  %v4894 = vpop.f32.mrf.mxu0
  %v4895 = vadd.f32 0.0, %v4894
  %v4896 = vpop.f32.mrf.mxu0
  %v4897 = vadd.f32 0.0, %v4896
  %4898 = vmatprep.mubr.bf16.mxu0 %v2625
  %4899 = vmatmul.mubr.bf16.gmra.mxu0 %v2232
  %v4900 = vpop.f32.mrf.mxu0
  %v4901 = vadd.f32 0.0, %v4900
  %v4902 = vpop.f32.mrf.mxu0
  %v4903 = vadd.f32 0.0, %v4902
  %v4904 = vpop.f32.mrf.mxu0
  %v4905 = vadd.f32 0.0, %v4904
  %v4906 = vpop.f32.mrf.mxu0
  %v4907 = vadd.f32 0.0, %v4906
  %4908 = vmatprep.mubr.bf16.mxu0 %v2628
  %4909 = vmatmul.mubr.bf16.gmra.mxu0 %v2234
  %v4910 = vpop.f32.mrf.mxu0
  %v4911 = vadd.f32 0.0, %v4910
  %v4912 = vpop.f32.mrf.mxu0
  %v4913 = vadd.f32 0.0, %v4912
  %v4914 = vpop.f32.mrf.mxu0
  %v4915 = vadd.f32 0.0, %v4914
  %v4916 = vpop.f32.mrf.mxu0
  %v4917 = vadd.f32 0.0, %v4916
  %4918 = vmatprep.mubr.bf16.mxu0 %v2631
  %4919 = vmatmul.mubr.bf16.gmra.mxu0 %v2236
  %v4920 = vpop.f32.mrf.mxu0
  %v4921 = vadd.f32 0.0, %v4920
  %v4922 = vpop.f32.mrf.mxu0
  %v4923 = vadd.f32 0.0, %v4922
  %v4924 = vpop.f32.mrf.mxu0
  %v4925 = vadd.f32 0.0, %v4924
  %v4926 = vpop.f32.mrf.mxu0
  %v4927 = vadd.f32 0.0, %v4926
  %4928 = vmatprep.mubr.bf16.mxu0 %v2634
  %4929 = vmatmul.mubr.bf16.gmra.mxu0 %v2238
  %v4930 = vpop.f32.mrf.mxu0
  %v4931 = vadd.f32 0.0, %v4930
  %v4932 = vpop.f32.mrf.mxu0
  %v4933 = vadd.f32 0.0, %v4932
  %v4934 = vpop.f32.mrf.mxu0
  %v4935 = vadd.f32 0.0, %v4934
  %v4936 = vpop.f32.mrf.mxu0
  %v4937 = vadd.f32 0.0, %v4936
  %4938 = vmatprep.mubr.bf16.mxu0 %v2637
  %4939 = vmatmul.mubr.bf16.gmra.mxu0 %v2240
  %v4940 = vpop.f32.mrf.mxu0
  %v4941 = vadd.f32 0.0, %v4940
  %v4942 = vpop.f32.mrf.mxu0
  %v4943 = vadd.f32 0.0, %v4942
  %v4944 = vpop.f32.mrf.mxu0
  %v4945 = vadd.f32 0.0, %v4944
  %v4946 = vpop.f32.mrf.mxu0
  %v4947 = vadd.f32 0.0, %v4946
  %4948 = vmatprep.mubr.bf16.mxu0 %v2640
  %4949 = vmatmul.mubr.bf16.gmra.mxu0 %v2242
  %v4950 = vpop.f32.mrf.mxu0
  %v4951 = vadd.f32 0.0, %v4950
  %v4952 = vpop.f32.mrf.mxu0
  %v4953 = vadd.f32 0.0, %v4952
  %v4954 = vpop.f32.mrf.mxu0
  %v4955 = vadd.f32 0.0, %v4954
  %v4956 = vpop.f32.mrf.mxu0
  %v4957 = vadd.f32 0.0, %v4956
  %4958 = vmatprep.mubr.bf16.mxu0 %v2643
  %4959 = vmatmul.mubr.bf16.gmra.mxu0 %v2244
  %v4960 = vpop.f32.mrf.mxu0
  %v4961 = vadd.f32 0.0, %v4960
  %v4962 = vpop.f32.mrf.mxu0
  %v4963 = vadd.f32 0.0, %v4962
  %v4964 = vpop.f32.mrf.mxu0
  %v4965 = vadd.f32 0.0, %v4964
  %v4966 = vpop.f32.mrf.mxu0
  %v4967 = vadd.f32 0.0, %v4966
  %4968 = vmatprep.mubr.bf16.mxu0 %v2646
  %4969 = vmatmul.mubr.bf16.gmra.mxu0 %v2246
  %v4970 = vpop.f32.mrf.mxu0
  %v4971 = vadd.f32 0.0, %v4970
  %v4972 = vpop.f32.mrf.mxu0
  %v4973 = vadd.f32 0.0, %v4972
  %v4974 = vpop.f32.mrf.mxu0
  %v4975 = vadd.f32 0.0, %v4974
  %v4976 = vpop.f32.mrf.mxu0
  %v4977 = vadd.f32 0.0, %v4976
  %4978 = vmatprep.mubr.bf16.mxu0 %v2649
  %4979 = vmatmul.mubr.bf16.gmra.mxu0 %v2248
  %v4980 = vpop.f32.mrf.mxu0
  %v4981 = vadd.f32 0.0, %v4980
  %v4982 = vpop.f32.mrf.mxu0
  %v4983 = vadd.f32 0.0, %v4982
  %v4984 = vpop.f32.mrf.mxu0
  %v4985 = vadd.f32 0.0, %v4984
  %v4986 = vpop.f32.mrf.mxu0
  %v4987 = vadd.f32 0.0, %v4986
  %4988 = vmatprep.mubr.bf16.mxu0 %v2652
  %4989 = vmatmul.mubr.bf16.gmra.mxu0 %v2250
  %v4990 = vpop.f32.mrf.mxu0
  %v4991 = vadd.f32 0.0, %v4990
  %v4992 = vpop.f32.mrf.mxu0
  %v4993 = vadd.f32 0.0, %v4992
  %v4994 = vpop.f32.mrf.mxu0
  %v4995 = vadd.f32 0.0, %v4994
  %v4996 = vpop.f32.mrf.mxu0
  %v4997 = vadd.f32 0.0, %v4996
  %4998 = vmatprep.mubr.bf16.mxu0 %v2655
  %4999 = vmatmul.mubr.bf16.gmra.mxu0 %v2252
  %v5000 = vpop.f32.mrf.mxu0
  %v5001 = vadd.f32 0.0, %v5000
  %v5002 = vpop.f32.mrf.mxu0
  %v5003 = vadd.f32 0.0, %v5002
  %v5004 = vpop.f32.mrf.mxu0
  %v5005 = vadd.f32 0.0, %v5004
  %v5006 = vpop.f32.mrf.mxu0
  %v5007 = vadd.f32 0.0, %v5006
  %5008 = vmatprep.mubr.bf16.mxu0 %v2658
  %5009 = vmatmul.mubr.bf16.gmra.mxu0 %v2254
  %v5010 = vpop.f32.mrf.mxu0
  %v5011 = vadd.f32 0.0, %v5010
  %v5012 = vpop.f32.mrf.mxu0
  %v5013 = vadd.f32 0.0, %v5012
  %v5014 = vpop.f32.mrf.mxu0
  %v5015 = vadd.f32 0.0, %v5014
  %v5016 = vpop.f32.mrf.mxu0
  %v5017 = vadd.f32 0.0, %v5016
  %5018 = vmatprep.mubr.bf16.mxu0 %v2661
  %5019 = vmatmul.mubr.bf16.gmra.mxu0 %v2256
  %v5020 = vpop.f32.mrf.mxu0
  %v5021 = vadd.f32 0.0, %v5020
  %v5022 = vpop.f32.mrf.mxu0
  %v5023 = vadd.f32 0.0, %v5022
  %v5024 = vpop.f32.mrf.mxu0
  %v5025 = vadd.f32 0.0, %v5024
  %v5026 = vpop.f32.mrf.mxu0
  %v5027 = vadd.f32 0.0, %v5026
  %5028 = vmatprep.mubr.bf16.mxu0 %v2664
  %5029 = vmatmul.mubr.bf16.gmra.mxu0 %v2258
  %v5030 = vpop.f32.mrf.mxu0
  %v5031 = vadd.f32 0.0, %v5030
  %v5032 = vpop.f32.mrf.mxu0
  %v5033 = vadd.f32 0.0, %v5032
  %v5034 = vpop.f32.mrf.mxu0
  %v5035 = vadd.f32 0.0, %v5034
  %v5036 = vpop.f32.mrf.mxu0
  %v5037 = vadd.f32 0.0, %v5036
  %5038 = vmatprep.mubr.bf16.mxu0 %v2667
  %5039 = vmatmul.mubr.bf16.gmra.mxu0 %v2260
  %v5040 = vpop.f32.mrf.mxu0
  %v5041 = vadd.f32 0.0, %v5040
  %v5042 = vpop.f32.mrf.mxu0
  %v5043 = vadd.f32 0.0, %v5042
  %v5044 = vpop.f32.mrf.mxu0
  %v5045 = vadd.f32 0.0, %v5044
  %v5046 = vpop.f32.mrf.mxu0
  %v5047 = vadd.f32 0.0, %v5046
  %5048 = vmatprep.mubr.bf16.mxu0 %v2670
  %5049 = vmatmul.mubr.bf16.gmra.mxu0 %v2262
  %v5050 = vpop.f32.mrf.mxu0
  %v5051 = vadd.f32 0.0, %v5050
  %v5052 = vpop.f32.mrf.mxu0
  %v5053 = vadd.f32 0.0, %v5052
  %v5054 = vpop.f32.mrf.mxu0
  %v5055 = vadd.f32 0.0, %v5054
  %v5056 = vpop.f32.mrf.mxu0
  %v5057 = vadd.f32 0.0, %v5056
  %5058 = vmatprep.mubr.bf16.mxu0 %v2673
  %5059 = vmatmul.mubr.bf16.gmra.mxu0 %v2264
  %v5060 = vpop.f32.mrf.mxu0
  %v5061 = vadd.f32 0.0, %v5060
  %v5062 = vpop.f32.mrf.mxu0
  %v5063 = vadd.f32 0.0, %v5062
  %v5064 = vpop.f32.mrf.mxu0
  %v5065 = vadd.f32 0.0, %v5064
  %v5066 = vpop.f32.mrf.mxu0
  %v5067 = vadd.f32 0.0, %v5066
  %5068 = vmatprep.mubr.bf16.mxu0 %v2676
  %5069 = vmatmul.mubr.bf16.gmra.mxu0 %v2266
  %v5070 = vpop.f32.mrf.mxu0
  %v5071 = vadd.f32 0.0, %v5070
  %v5072 = vpop.f32.mrf.mxu0
  %v5073 = vadd.f32 0.0, %v5072
  %v5074 = vpop.f32.mrf.mxu0
  %v5075 = vadd.f32 0.0, %v5074
  %v5076 = vpop.f32.mrf.mxu0
  %v5077 = vadd.f32 0.0, %v5076
  %5078 = vmatprep.mubr.bf16.mxu0 %v3657
  %5079 = vmatmul.mubr.bf16.gmra.mxu0 0
  %v5080 = vpop.f32.mrf.mxu0
  %v5081 = vadd.f32 0.0, %v5080
  %v5082 = vpop.f32.mrf.mxu0
  %v5083 = vadd.f32 0.0, %v5082
  %v5084 = vpop.f32.mrf.mxu0
  %v5085 = vadd.f32 0.0, %v5084
  %v5086 = vpop.f32.mrf.mxu0
  %v5087 = vadd.f32 0.0, %v5086
  %5088 = vmatprep.mubr.bf16.mxu0 %v3657
  %5089 = vmatmul.mubr.bf16.gmra.mxu0 0
  %v5090 = vpop.f32.mrf.mxu0
  %v5091 = vadd.f32 0.0, %v5090
  %v5092 = vpop.f32.mrf.mxu0
  %v5093 = vadd.f32 0.0, %v5092
  %v5094 = vpop.f32.mrf.mxu0
  %v5095 = vadd.f32 0.0, %v5094
  %v5096 = vpop.f32.mrf.mxu0
  %v5097 = vadd.f32 0.0, %v5096
  %5098 = vmatprep.mubr.bf16.mxu0 %v3657
  %5099 = vmatmul.mubr.bf16.gmra.mxu0 0
  %v5100 = vpop.f32.mrf.mxu0
  %v5101 = vadd.f32 0.0, %v5100
  %v5102 = vpop.f32.mrf.mxu0
  %v5103 = vadd.f32 0.0, %v5102
  %v5104 = vpop.f32.mrf.mxu0
  %v5105 = vadd.f32 0.0, %v5104
  %v5106 = vpop.f32.mrf.mxu0
  %v5107 = vadd.f32 0.0, %v5106
  %5108 = vmatprep.mubr.bf16.mxu0 %v3657
  %5109 = vmatmul.mubr.bf16.gmra.mxu0 0
  %v5110 = vpop.f32.mrf.mxu0
  %v5111 = vadd.f32 0.0, %v5110
  %v5112 = vpop.f32.mrf.mxu0
  %v5113 = vadd.f32 0.0, %v5112
  %v5114 = vpop.f32.mrf.mxu0
  %v5115 = vadd.f32 0.0, %v5114
  %v5116 = vpop.f32.mrf.mxu0
  %v5117 = vadd.f32 0.0, %v5116
  %5118 = vdwg.mxu0
  %5119 = vmatprep.subr.bf16.mxu0 0
  %5120 = vmatpush1.bf16.msra.mxu0 %v4637
  %5121 = vmatprep.subr.bf16.mxu0 0
  %5122 = vmatpush1.bf16.msra.mxu0 %v4634
  %5123 = vmatprep.subr.bf16.mxu0 0
  %5124 = vmatpush1.bf16.msra.mxu0 %v4631
  %5125 = vmatprep.subr.bf16.mxu0 0
  %5126 = vmatpush1.bf16.msra.mxu0 %v4628
  %5127 = vmatprep.subr.bf16.mxu0 0
  %5128 = vmatpush1.bf16.msra.mxu0 %v4625
  %5129 = vmatprep.subr.bf16.mxu0 0
  %5130 = vmatpush1.bf16.msra.mxu0 %v4622
  %5131 = vmatprep.subr.bf16.mxu0 0
  %5132 = vmatpush1.bf16.msra.mxu0 %v4619
  %5133 = vmatprep.subr.bf16.mxu0 0
  %5134 = vmatpush1.bf16.msra.mxu0 %v4616
  %5135 = vmatprep.subr.bf16.mxu0 0
  %5136 = vmatpush2.bf16.msra.mxu0 0
  %5137 = vmatprep.subr.bf16.mxu0 0
  %5138 = vmatpush2.bf16.msra.mxu0 0
  %5139 = vmatprep.subr.bf16.mxu0 0
  %5140 = vmatpush2.bf16.msra.mxu0 0
  %5141 = vmatprep.subr.bf16.mxu0 0
  %5142 = vmatpush2.bf16.msra.mxu0 0
  %5143 = vmatprep.subr.bf16.mxu0 0
  %5144 = vmatpush2.bf16.msra.mxu0 %v4649
  %5145 = vmatprep.subr.bf16.mxu0 0
  %5146 = vmatpush2.bf16.msra.mxu0 %v4646
  %5147 = vmatprep.subr.bf16.mxu0 0
  %5148 = vmatpush2.bf16.msra.mxu0 %v4643
  %5149 = vmatprep.subr.bf16.mxu0 0
  %5150 = vmatpush2.bf16.msra.mxu0 %v4640
  %5151 = vmatprep.mubr.bf16.mxu0 %v2571
  %5152 = vmatmul.mubr.bf16.gmra.mxu0 %v2196
  %v5153 = vpop.f32.mrf.mxu0
  %v5154 = vadd.f32 0.0, %v5153
  %v5155 = vpop.f32.mrf.mxu0
  %v5156 = vpop.f32.mrf.mxu0
  %v5157 = vadd.f32 0.0, %v5156
  %v5158 = vpop.f32.mrf.mxu0
  %5159 = vmatprep.mubr.bf16.mxu0 %v2574
  %5160 = vmatmul.mubr.bf16.gmra.mxu0 %v2198
  %v5161 = vpop.f32.mrf.mxu0
  %v5162 = vadd.f32 0.0, %v5161
  %v5163 = vpop.f32.mrf.mxu0
  %v5164 = vpop.f32.mrf.mxu0
  %v5165 = vadd.f32 0.0, %v5164
  %v5166 = vpop.f32.mrf.mxu0
  %5167 = vmatprep.mubr.bf16.mxu0 %v2577
  %5168 = vmatmul.mubr.bf16.gmra.mxu0 %v2200
  %v5169 = vpop.f32.mrf.mxu0
  %v5170 = vadd.f32 0.0, %v5169
  %v5171 = vpop.f32.mrf.mxu0
  %v5172 = vpop.f32.mrf.mxu0
  %v5173 = vadd.f32 0.0, %v5172
  %v5174 = vpop.f32.mrf.mxu0
  %5175 = vmatprep.mubr.bf16.mxu0 %v2580
  %5176 = vmatmul.mubr.bf16.gmra.mxu0 %v2202
  %v5177 = vpop.f32.mrf.mxu0
  %v5178 = vadd.f32 0.0, %v5177
  %v5179 = vpop.f32.mrf.mxu0
  %v5180 = vpop.f32.mrf.mxu0
  %v5181 = vadd.f32 0.0, %v5180
  %v5182 = vpop.f32.mrf.mxu0
  %5183 = vmatprep.mubr.bf16.mxu0 %v2583
  %5184 = vmatmul.mubr.bf16.gmra.mxu0 %v2204
  %v5185 = vpop.f32.mrf.mxu0
  %v5186 = vadd.f32 0.0, %v5185
  %v5187 = vpop.f32.mrf.mxu0
  %v5188 = vpop.f32.mrf.mxu0
  %v5189 = vadd.f32 0.0, %v5188
  %v5190 = vpop.f32.mrf.mxu0
  %5191 = vmatprep.mubr.bf16.mxu0 %v2586
  %5192 = vmatmul.mubr.bf16.gmra.mxu0 %v2206
  %v5193 = vpop.f32.mrf.mxu0
  %v5194 = vadd.f32 0.0, %v5193
  %v5195 = vpop.f32.mrf.mxu0
  %v5196 = vpop.f32.mrf.mxu0
  %v5197 = vadd.f32 0.0, %v5196
  %v5198 = vpop.f32.mrf.mxu0
  %5199 = vmatprep.mubr.bf16.mxu0 %v2589
  %5200 = vmatmul.mubr.bf16.gmra.mxu0 %v2208
  %v5201 = vpop.f32.mrf.mxu0
  %v5202 = vadd.f32 0.0, %v5201
  %v5203 = vpop.f32.mrf.mxu0
  %v5204 = vpop.f32.mrf.mxu0
  %v5205 = vadd.f32 0.0, %v5204
  %v5206 = vpop.f32.mrf.mxu0
  %5207 = vmatprep.mubr.bf16.mxu0 %v2592
  %5208 = vmatmul.mubr.bf16.gmra.mxu0 %v2210
  %v5209 = vpop.f32.mrf.mxu0
  %v5210 = vadd.f32 0.0, %v5209
  %v5211 = vpop.f32.mrf.mxu0
  %v5212 = vpop.f32.mrf.mxu0
  %v5213 = vadd.f32 0.0, %v5212
  %v5214 = vpop.f32.mrf.mxu0
  %5215 = vmatprep.mubr.bf16.mxu0 %v2595
  %5216 = vmatmul.mubr.bf16.gmra.mxu0 %v2212
  %v5217 = vpop.f32.mrf.mxu0
  %v5218 = vadd.f32 0.0, %v5217
  %v5219 = vpop.f32.mrf.mxu0
  %v5220 = vpop.f32.mrf.mxu0
  %v5221 = vadd.f32 0.0, %v5220
  %v5222 = vpop.f32.mrf.mxu0
  %5223 = vmatprep.mubr.bf16.mxu0 %v2598
  %5224 = vmatmul.mubr.bf16.gmra.mxu0 %v2214
  %v5225 = vpop.f32.mrf.mxu0
  %v5226 = vadd.f32 0.0, %v5225
  %v5227 = vpop.f32.mrf.mxu0
  %v5228 = vpop.f32.mrf.mxu0
  %v5229 = vadd.f32 0.0, %v5228
  %v5230 = vpop.f32.mrf.mxu0
  %5231 = vmatprep.mubr.bf16.mxu0 %v2601
  %5232 = vmatmul.mubr.bf16.gmra.mxu0 %v2216
  %v5233 = vpop.f32.mrf.mxu0
  %v5234 = vadd.f32 0.0, %v5233
  %v5235 = vpop.f32.mrf.mxu0
  %v5236 = vpop.f32.mrf.mxu0
  %v5237 = vadd.f32 0.0, %v5236
  %v5238 = vpop.f32.mrf.mxu0
  %5239 = vmatprep.mubr.bf16.mxu0 %v2604
  %5240 = vmatmul.mubr.bf16.gmra.mxu0 %v2218
  %v5241 = vpop.f32.mrf.mxu0
  %v5242 = vadd.f32 0.0, %v5241
  %v5243 = vpop.f32.mrf.mxu0
  %v5244 = vpop.f32.mrf.mxu0
  %v5245 = vadd.f32 0.0, %v5244
  %v5246 = vpop.f32.mrf.mxu0
  %5247 = vmatprep.mubr.bf16.mxu0 %v2607
  %5248 = vmatmul.mubr.bf16.gmra.mxu0 %v2220
  %v5249 = vpop.f32.mrf.mxu0
  %v5250 = vadd.f32 0.0, %v5249
  %v5251 = vpop.f32.mrf.mxu0
  %v5252 = vpop.f32.mrf.mxu0
  %v5253 = vadd.f32 0.0, %v5252
  %v5254 = vpop.f32.mrf.mxu0
  %5255 = vmatprep.mubr.bf16.mxu0 %v2610
  %5256 = vmatmul.mubr.bf16.gmra.mxu0 %v2222
  %v5257 = vpop.f32.mrf.mxu0
  %v5258 = vadd.f32 0.0, %v5257
  %v5259 = vpop.f32.mrf.mxu0
  %v5260 = vpop.f32.mrf.mxu0
  %v5261 = vadd.f32 0.0, %v5260
  %v5262 = vpop.f32.mrf.mxu0
  %5263 = vmatprep.mubr.bf16.mxu0 %v2613
  %5264 = vmatmul.mubr.bf16.gmra.mxu0 %v2224
  %v5265 = vpop.f32.mrf.mxu0
  %v5266 = vadd.f32 0.0, %v5265
  %v5267 = vpop.f32.mrf.mxu0
  %v5268 = vpop.f32.mrf.mxu0
  %v5269 = vadd.f32 0.0, %v5268
  %v5270 = vpop.f32.mrf.mxu0
  %5271 = vmatprep.mubr.bf16.mxu0 %v2616
  %5272 = vmatmul.mubr.bf16.gmra.mxu0 %v2226
  %v5273 = vpop.f32.mrf.mxu0
  %v5274 = vadd.f32 0.0, %v5273
  %v5275 = vpop.f32.mrf.mxu0
  %v5276 = vpop.f32.mrf.mxu0
  %v5277 = vadd.f32 0.0, %v5276
  %v5278 = vpop.f32.mrf.mxu0
  %5279 = vmatprep.mubr.bf16.mxu0 %v2619
  %5280 = vmatmul.mubr.bf16.gmra.mxu0 %v2228
  %v5281 = vpop.f32.mrf.mxu0
  %v5282 = vadd.f32 0.0, %v5281
  %v5283 = vpop.f32.mrf.mxu0
  %v5284 = vpop.f32.mrf.mxu0
  %v5285 = vadd.f32 0.0, %v5284
  %v5286 = vpop.f32.mrf.mxu0
  %5287 = vmatprep.mubr.bf16.mxu0 %v2622
  %5288 = vmatmul.mubr.bf16.gmra.mxu0 %v2230
  %v5289 = vpop.f32.mrf.mxu0
  %v5290 = vadd.f32 0.0, %v5289
  %v5291 = vpop.f32.mrf.mxu0
  %v5292 = vpop.f32.mrf.mxu0
  %v5293 = vadd.f32 0.0, %v5292
  %v5294 = vpop.f32.mrf.mxu0
  %5295 = vmatprep.mubr.bf16.mxu0 %v2625
  %5296 = vmatmul.mubr.bf16.gmra.mxu0 %v2232
  %v5297 = vpop.f32.mrf.mxu0
  %v5298 = vadd.f32 0.0, %v5297
  %v5299 = vpop.f32.mrf.mxu0
  %v5300 = vpop.f32.mrf.mxu0
  %v5301 = vadd.f32 0.0, %v5300
  %v5302 = vpop.f32.mrf.mxu0
  %5303 = vmatprep.mubr.bf16.mxu0 %v2628
  %5304 = vmatmul.mubr.bf16.gmra.mxu0 %v2234
  %v5305 = vpop.f32.mrf.mxu0
  %v5306 = vadd.f32 0.0, %v5305
  %v5307 = vpop.f32.mrf.mxu0
  %v5308 = vpop.f32.mrf.mxu0
  %v5309 = vadd.f32 0.0, %v5308
  %v5310 = vpop.f32.mrf.mxu0
  %5311 = vmatprep.mubr.bf16.mxu0 %v2631
  %5312 = vmatmul.mubr.bf16.gmra.mxu0 %v2236
  %v5313 = vpop.f32.mrf.mxu0
  %v5314 = vadd.f32 0.0, %v5313
  %v5315 = vpop.f32.mrf.mxu0
  %v5316 = vpop.f32.mrf.mxu0
  %v5317 = vadd.f32 0.0, %v5316
  %v5318 = vpop.f32.mrf.mxu0
  %5319 = vmatprep.mubr.bf16.mxu0 %v2634
  %5320 = vmatmul.mubr.bf16.gmra.mxu0 %v2238
  %v5321 = vpop.f32.mrf.mxu0
  %v5322 = vadd.f32 0.0, %v5321
  %v5323 = vpop.f32.mrf.mxu0
  %v5324 = vpop.f32.mrf.mxu0
  %v5325 = vadd.f32 0.0, %v5324
  %v5326 = vpop.f32.mrf.mxu0
  %5327 = vmatprep.mubr.bf16.mxu0 %v2637
  %5328 = vmatmul.mubr.bf16.gmra.mxu0 %v2240
  %v5329 = vpop.f32.mrf.mxu0
  %v5330 = vadd.f32 0.0, %v5329
  %v5331 = vpop.f32.mrf.mxu0
  %v5332 = vpop.f32.mrf.mxu0
  %v5333 = vadd.f32 0.0, %v5332
  %v5334 = vpop.f32.mrf.mxu0
  %5335 = vmatprep.mubr.bf16.mxu0 %v2640
  %5336 = vmatmul.mubr.bf16.gmra.mxu0 %v2242
  %v5337 = vpop.f32.mrf.mxu0
  %v5338 = vadd.f32 0.0, %v5337
  %v5339 = vpop.f32.mrf.mxu0
  %v5340 = vpop.f32.mrf.mxu0
  %v5341 = vadd.f32 0.0, %v5340
  %v5342 = vpop.f32.mrf.mxu0
  %5343 = vmatprep.mubr.bf16.mxu0 %v2643
  %5344 = vmatmul.mubr.bf16.gmra.mxu0 %v2244
  %v5345 = vpop.f32.mrf.mxu0
  %v5346 = vadd.f32 0.0, %v5345
  %v5347 = vpop.f32.mrf.mxu0
  %v5348 = vpop.f32.mrf.mxu0
  %v5349 = vadd.f32 0.0, %v5348
  %v5350 = vpop.f32.mrf.mxu0
  %5351 = vmatprep.mubr.bf16.mxu0 %v2646
  %5352 = vmatmul.mubr.bf16.gmra.mxu0 %v2246
  %v5353 = vpop.f32.mrf.mxu0
  %v5354 = vadd.f32 0.0, %v5353
  %v5355 = vpop.f32.mrf.mxu0
  %v5356 = vpop.f32.mrf.mxu0
  %v5357 = vadd.f32 0.0, %v5356
  %v5358 = vpop.f32.mrf.mxu0
  %5359 = vmatprep.mubr.bf16.mxu0 %v2649
  %5360 = vmatmul.mubr.bf16.gmra.mxu0 %v2248
  %v5361 = vpop.f32.mrf.mxu0
  %v5362 = vadd.f32 0.0, %v5361
  %v5363 = vpop.f32.mrf.mxu0
  %v5364 = vpop.f32.mrf.mxu0
  %v5365 = vadd.f32 0.0, %v5364
  %v5366 = vpop.f32.mrf.mxu0
  %5367 = vmatprep.mubr.bf16.mxu0 %v2652
  %5368 = vmatmul.mubr.bf16.gmra.mxu0 %v2250
  %v5369 = vpop.f32.mrf.mxu0
  %v5370 = vadd.f32 0.0, %v5369
  %v5371 = vpop.f32.mrf.mxu0
  %v5372 = vpop.f32.mrf.mxu0
  %v5373 = vadd.f32 0.0, %v5372
  %v5374 = vpop.f32.mrf.mxu0
  %5375 = vmatprep.mubr.bf16.mxu0 %v2655
  %5376 = vmatmul.mubr.bf16.gmra.mxu0 %v2252
  %v5377 = vpop.f32.mrf.mxu0
  %v5378 = vadd.f32 0.0, %v5377
  %v5379 = vpop.f32.mrf.mxu0
  %v5380 = vpop.f32.mrf.mxu0
  %v5381 = vadd.f32 0.0, %v5380
  %v5382 = vpop.f32.mrf.mxu0
  %5383 = vmatprep.mubr.bf16.mxu0 %v2658
  %5384 = vmatmul.mubr.bf16.gmra.mxu0 %v2254
  %v5385 = vpop.f32.mrf.mxu0
  %v5386 = vadd.f32 0.0, %v5385
  %v5387 = vpop.f32.mrf.mxu0
  %v5388 = vpop.f32.mrf.mxu0
  %v5389 = vadd.f32 0.0, %v5388
  %v5390 = vpop.f32.mrf.mxu0
  %5391 = vmatprep.mubr.bf16.mxu0 %v2661
  %5392 = vmatmul.mubr.bf16.gmra.mxu0 %v2256
  %v5393 = vpop.f32.mrf.mxu0
  %v5394 = vadd.f32 0.0, %v5393
  %v5395 = vpop.f32.mrf.mxu0
  %v5396 = vpop.f32.mrf.mxu0
  %v5397 = vadd.f32 0.0, %v5396
  %v5398 = vpop.f32.mrf.mxu0
  %5399 = vmatprep.mubr.bf16.mxu0 %v2664
  %5400 = vmatmul.mubr.bf16.gmra.mxu0 %v2258
  %v5401 = vpop.f32.mrf.mxu0
  %v5402 = vadd.f32 0.0, %v5401
  %v5403 = vpop.f32.mrf.mxu0
  %v5404 = vpop.f32.mrf.mxu0
  %v5405 = vadd.f32 0.0, %v5404
  %v5406 = vpop.f32.mrf.mxu0
  %5407 = vmatprep.mubr.bf16.mxu0 %v2667
  %5408 = vmatmul.mubr.bf16.gmra.mxu0 %v2260
  %v5409 = vpop.f32.mrf.mxu0
  %v5410 = vadd.f32 0.0, %v5409
  %v5411 = vpop.f32.mrf.mxu0
  %v5412 = vpop.f32.mrf.mxu0
  %v5413 = vadd.f32 0.0, %v5412
  %v5414 = vpop.f32.mrf.mxu0
  %5415 = vmatprep.mubr.bf16.mxu0 %v2670
  %5416 = vmatmul.mubr.bf16.gmra.mxu0 %v2262
  %v5417 = vpop.f32.mrf.mxu0
  %v5418 = vadd.f32 0.0, %v5417
  %v5419 = vpop.f32.mrf.mxu0
  %v5420 = vpop.f32.mrf.mxu0
  %v5421 = vadd.f32 0.0, %v5420
  %v5422 = vpop.f32.mrf.mxu0
  %5423 = vmatprep.mubr.bf16.mxu0 %v2673
  %5424 = vmatmul.mubr.bf16.gmra.mxu0 %v2264
  %v5425 = vpop.f32.mrf.mxu0
  %v5426 = vadd.f32 0.0, %v5425
  %v5427 = vpop.f32.mrf.mxu0
  %v5428 = vpop.f32.mrf.mxu0
  %v5429 = vadd.f32 0.0, %v5428
  %v5430 = vpop.f32.mrf.mxu0
  %5431 = vmatprep.mubr.bf16.mxu0 %v2676
  %5432 = vmatmul.mubr.bf16.gmra.mxu0 %v2266
  %v5433 = vpop.f32.mrf.mxu0
  %v5434 = vadd.f32 0.0, %v5433
  %v5435 = vpop.f32.mrf.mxu0
  %v5436 = vpop.f32.mrf.mxu0
  %v5437 = vadd.f32 0.0, %v5436
  %v5438 = vpop.f32.mrf.mxu0
  %5439 = vmatprep.mubr.bf16.mxu0 %v3657
  %5440 = vmatmul.mubr.bf16.gmra.mxu0 0
  %v5441 = vpop.f32.mrf.mxu0
  %v5442 = vadd.f32 0.0, %v5441
  %v5443 = vpop.f32.mrf.mxu0
  %v5444 = vpop.f32.mrf.mxu0
  %v5445 = vadd.f32 0.0, %v5444
  %v5446 = vpop.f32.mrf.mxu0
  %5447 = vmatprep.mubr.bf16.mxu0 %v3657
  %5448 = vmatmul.mubr.bf16.gmra.mxu0 0
  %v5449 = vpop.f32.mrf.mxu0
  %v5450 = vadd.f32 0.0, %v5449
  %v5451 = vpop.f32.mrf.mxu0
  %v5452 = vpop.f32.mrf.mxu0
  %v5453 = vadd.f32 0.0, %v5452
  %v5454 = vpop.f32.mrf.mxu0
  %5455 = vmatprep.mubr.bf16.mxu0 %v3657
  %5456 = vmatmul.mubr.bf16.gmra.mxu0 0
  %v5457 = vpop.f32.mrf.mxu0
  %v5458 = vadd.f32 0.0, %v5457
  %v5459 = vpop.f32.mrf.mxu0
  %v5460 = vpop.f32.mrf.mxu0
  %v5461 = vadd.f32 0.0, %v5460
  %v5462 = vpop.f32.mrf.mxu0
  %5463 = vmatprep.mubr.bf16.mxu0 %v3657
  %5464 = vmatmul.mubr.bf16.gmra.mxu0 0
  %v5465 = vpop.f32.mrf.mxu0
  %v5466 = vadd.f32 0.0, %v5465
  %v5467 = vpop.f32.mrf.mxu0
  %v5468 = vpop.f32.mrf.mxu0
  %v5469 = vadd.f32 0.0, %v5468
  %v5470 = vpop.f32.mrf.mxu0
  %5471 = vdwg.mxu0
  %v5472 = vadd.f32 %v3694, %v4721
  %v5473 = vadd.f32 %v3696, %v4723
  %v5474 = vadd.f32 %v4127, %v5154
  %v5475 = vadd.f32 %v3698, %v4725
  %v5476 = vadd.f32 %v3700, %v4727
  %v5477 = vadd.f32 %v4130, %v5157
  %v5478 = vadd.f32 %v3704, %v4731
  %v5479 = vadd.f32 %v3706, %v4733
  %v5480 = vadd.f32 %v4135, %v5162
  %v5481 = vadd.f32 %v3708, %v4735
  %v5482 = vadd.f32 %v3710, %v4737
  %v5483 = vadd.f32 %v4138, %v5165
  %v5484 = vadd.f32 %v3714, %v4741
  %v5485 = vadd.f32 %v3716, %v4743
  %v5486 = vadd.f32 %v4143, %v5170
  %v5487 = vadd.f32 %v3718, %v4745
  %v5488 = vadd.f32 %v3720, %v4747
  %v5489 = vadd.f32 %v4146, %v5173
  %v5490 = vadd.f32 %v3724, %v4751
  %v5491 = vadd.f32 %v3726, %v4753
  %v5492 = vadd.f32 %v4151, %v5178
  %v5493 = vadd.f32 %v3728, %v4755
  %v5494 = vadd.f32 %v3730, %v4757
  %v5495 = vadd.f32 %v4154, %v5181
  %v5496 = vadd.f32 %v3734, %v4761
  %v5497 = vadd.f32 %v3736, %v4763
  %v5498 = vadd.f32 %v4159, %v5186
  %v5499 = vadd.f32 %v3738, %v4765
  %v5500 = vadd.f32 %v3740, %v4767
  %v5501 = vadd.f32 %v4162, %v5189
  %v5502 = vadd.f32 %v3744, %v4771
  %v5503 = vadd.f32 %v3746, %v4773
  %v5504 = vadd.f32 %v4167, %v5194
  %v5505 = vadd.f32 %v3748, %v4775
  %v5506 = vadd.f32 %v3750, %v4777
  %v5507 = vadd.f32 %v4170, %v5197
  %v5508 = vadd.f32 %v3754, %v4781
  %v5509 = vadd.f32 %v3756, %v4783
  %v5510 = vadd.f32 %v4175, %v5202
  %v5511 = vadd.f32 %v3758, %v4785
  %v5512 = vadd.f32 %v3760, %v4787
  %v5513 = vadd.f32 %v4178, %v5205
  %v5514 = vadd.f32 %v3764, %v4791
  %v5515 = vadd.f32 %v3766, %v4793
  %v5516 = vadd.f32 %v4183, %v5210
  %v5517 = vadd.f32 %v3768, %v4795
  %v5518 = vadd.f32 %v3770, %v4797
  %v5519 = vadd.f32 %v4186, %v5213
  %v5520 = vadd.f32 %v3774, %v4801
  %v5521 = vadd.f32 %v3776, %v4803
  %v5522 = vadd.f32 %v4191, %v5218
  %v5523 = vadd.f32 %v3778, %v4805
  %v5524 = vadd.f32 %v3780, %v4807
  %v5525 = vadd.f32 %v4194, %v5221
  %v5526 = vadd.f32 %v3784, %v4811
  %v5527 = vadd.f32 %v3786, %v4813
  %v5528 = vadd.f32 %v4199, %v5226
  %v5529 = vadd.f32 %v3788, %v4815
  %v5530 = vadd.f32 %v3790, %v4817
  %v5531 = vadd.f32 %v4202, %v5229
  %v5532 = vadd.f32 %v3794, %v4821
  %v5533 = vadd.f32 %v3796, %v4823
  %v5534 = vadd.f32 %v4207, %v5234
  %v5535 = vadd.f32 %v3798, %v4825
  %v5536 = vadd.f32 %v3800, %v4827
  %v5537 = vadd.f32 %v4210, %v5237
  %v5538 = vadd.f32 %v3804, %v4831
  %v5539 = vadd.f32 %v3806, %v4833
  %v5540 = vadd.f32 %v4215, %v5242
  %v5541 = vadd.f32 %v3808, %v4835
  %v5542 = vadd.f32 %v3810, %v4837
  %v5543 = vadd.f32 %v4218, %v5245
  %v5544 = vadd.f32 %v3814, %v4841
  %v5545 = vadd.f32 %v3816, %v4843
  %v5546 = vadd.f32 %v4223, %v5250
  %v5547 = vadd.f32 %v3818, %v4845
  %v5548 = vadd.f32 %v3820, %v4847
  %v5549 = vadd.f32 %v4226, %v5253
  %v5550 = vadd.f32 %v3824, %v4851
  %v5551 = vadd.f32 %v3826, %v4853
  %v5552 = vadd.f32 %v4231, %v5258
  %v5553 = vadd.f32 %v3828, %v4855
  %v5554 = vadd.f32 %v3830, %v4857
  %v5555 = vadd.f32 %v4234, %v5261
  %v5556 = vadd.f32 %v3834, %v4861
  %v5557 = vadd.f32 %v3836, %v4863
  %v5558 = vadd.f32 %v4239, %v5266
  %v5559 = vadd.f32 %v3838, %v4865
  %v5560 = vadd.f32 %v3840, %v4867
  %v5561 = vadd.f32 %v4242, %v5269
  %v5562 = vadd.f32 %v3844, %v4871
  %v5563 = vadd.f32 %v3846, %v4873
  %v5564 = vadd.f32 %v4247, %v5274
  %v5565 = vadd.f32 %v3848, %v4875
  %v5566 = vadd.f32 %v3850, %v4877
  %v5567 = vadd.f32 %v4250, %v5277
  %v5568 = vadd.f32 %v3854, %v4881
  %v5569 = vadd.f32 %v3856, %v4883
  %v5570 = vadd.f32 %v4255, %v5282
  %v5571 = vadd.f32 %v3858, %v4885
  %v5572 = vadd.f32 %v3860, %v4887
  %v5573 = vadd.f32 %v4258, %v5285
  %v5574 = vadd.f32 %v3864, %v4891
  %v5575 = vadd.f32 %v3866, %v4893
  %v5576 = vadd.f32 %v4263, %v5290
  %v5577 = vadd.f32 %v3868, %v4895
  %v5578 = vadd.f32 %v3870, %v4897
  %v5579 = vadd.f32 %v4266, %v5293
  %v5580 = vadd.f32 %v3874, %v4901
  %v5581 = vadd.f32 %v3876, %v4903
  %v5582 = vadd.f32 %v4271, %v5298
  %v5583 = vadd.f32 %v3878, %v4905
  %v5584 = vadd.f32 %v3880, %v4907
  %v5585 = vadd.f32 %v4274, %v5301
  %v5586 = vadd.f32 %v3884, %v4911
  %v5587 = vadd.f32 %v3886, %v4913
  %v5588 = vadd.f32 %v4279, %v5306
  %v5589 = vadd.f32 %v3888, %v4915
  %v5590 = vadd.f32 %v3890, %v4917
  %v5591 = vadd.f32 %v4282, %v5309
  %v5592 = vadd.f32 %v3894, %v4921
  %v5593 = vadd.f32 %v3896, %v4923
  %v5594 = vadd.f32 %v4287, %v5314
  %v5595 = vadd.f32 %v3898, %v4925
  %v5596 = vadd.f32 %v3900, %v4927
  %v5597 = vadd.f32 %v4290, %v5317
  %v5598 = vadd.f32 %v3904, %v4931
  %v5599 = vadd.f32 %v3906, %v4933
  %v5600 = vadd.f32 %v4295, %v5322
  %v5601 = vadd.f32 %v3908, %v4935
  %v5602 = vadd.f32 %v3910, %v4937
  %v5603 = vadd.f32 %v4298, %v5325
  %v5604 = vadd.f32 %v3914, %v4941
  %v5605 = vadd.f32 %v3916, %v4943
  %v5606 = vadd.f32 %v4303, %v5330
  %v5607 = vadd.f32 %v3918, %v4945
  %v5608 = vadd.f32 %v3920, %v4947
  %v5609 = vadd.f32 %v4306, %v5333
  %v5610 = vadd.f32 %v3924, %v4951
  %v5611 = vadd.f32 %v3926, %v4953
  %v5612 = vadd.f32 %v4311, %v5338
  %v5613 = vadd.f32 %v3928, %v4955
  %v5614 = vadd.f32 %v3930, %v4957
  %v5615 = vadd.f32 %v4314, %v5341
  %v5616 = vadd.f32 %v3934, %v4961
  %v5617 = vadd.f32 %v3936, %v4963
  %v5618 = vadd.f32 %v4319, %v5346
  %v5619 = vadd.f32 %v3938, %v4965
  %v5620 = vadd.f32 %v3940, %v4967
  %v5621 = vadd.f32 %v4322, %v5349
  %v5622 = vadd.f32 %v3944, %v4971
  %v5623 = vadd.f32 %v3946, %v4973
  %v5624 = vadd.f32 %v4327, %v5354
  %v5625 = vadd.f32 %v3948, %v4975
  %v5626 = vadd.f32 %v3950, %v4977
  %v5627 = vadd.f32 %v4330, %v5357
  %v5628 = vadd.f32 %v3954, %v4981
  %v5629 = vadd.f32 %v3956, %v4983
  %v5630 = vadd.f32 %v4335, %v5362
  %v5631 = vadd.f32 %v3958, %v4985
  %v5632 = vadd.f32 %v3960, %v4987
  %v5633 = vadd.f32 %v4338, %v5365
  %v5634 = vadd.f32 %v3964, %v4991
  %v5635 = vadd.f32 %v3966, %v4993
  %v5636 = vadd.f32 %v4343, %v5370
  %v5637 = vadd.f32 %v3968, %v4995
  %v5638 = vadd.f32 %v3970, %v4997
  %v5639 = vadd.f32 %v4346, %v5373
  %v5640 = vadd.f32 %v3974, %v5001
  %v5641 = vadd.f32 %v3976, %v5003
  %v5642 = vadd.f32 %v4351, %v5378
  %v5643 = vadd.f32 %v3978, %v5005
  %v5644 = vadd.f32 %v3980, %v5007
  %v5645 = vadd.f32 %v4354, %v5381
  %v5646 = vadd.f32 %v3984, %v5011
  %v5647 = vadd.f32 %v3986, %v5013
  %v5648 = vadd.f32 %v4359, %v5386
  %v5649 = vadd.f32 %v3988, %v5015
  %v5650 = vadd.f32 %v3990, %v5017
  %v5651 = vadd.f32 %v4362, %v5389
  %v5652 = vadd.f32 %v3994, %v5021
  %v5653 = vadd.f32 %v3996, %v5023
  %v5654 = vadd.f32 %v4367, %v5394
  %v5655 = vadd.f32 %v3998, %v5025
  %v5656 = vadd.f32 %v4000, %v5027
  %v5657 = vadd.f32 %v4370, %v5397
  %v5658 = vadd.f32 %v4004, %v5031
  %v5659 = vadd.f32 %v4006, %v5033
  %v5660 = vadd.f32 %v4375, %v5402
  %v5661 = vadd.f32 %v4008, %v5035
  %v5662 = vadd.f32 %v4010, %v5037
  %v5663 = vadd.f32 %v4378, %v5405
  %v5664 = vadd.f32 %v4014, %v5041
  %v5665 = vadd.f32 %v4016, %v5043
  %v5666 = vadd.f32 %v4383, %v5410
  %v5667 = vadd.f32 %v4018, %v5045
  %v5668 = vadd.f32 %v4020, %v5047
  %v5669 = vadd.f32 %v4386, %v5413
  %v5670 = vadd.f32 %v4024, %v5051
  %v5671 = vadd.f32 %v4026, %v5053
  %v5672 = vadd.f32 %v4391, %v5418
  %v5673 = vadd.f32 %v4028, %v5055
  %v5674 = vadd.f32 %v4030, %v5057
  %v5675 = vadd.f32 %v4394, %v5421
  %v5676 = vadd.f32 %v4034, %v5061
  %v5677 = vadd.f32 %v4036, %v5063
  %v5678 = vadd.f32 %v4399, %v5426
  %v5679 = vadd.f32 %v4038, %v5065
  %v5680 = vadd.f32 %v4040, %v5067
  %v5681 = vadd.f32 %v4402, %v5429
  %v5682 = vadd.f32 %v4044, %v5071
  %v5683 = vadd.f32 %v4046, %v5073
  %v5684 = vadd.f32 %v4407, %v5434
  %v5685 = vadd.f32 %v4048, %v5075
  %v5686 = vadd.f32 %v4050, %v5077
  %v5687 = vadd.f32 %v4410, %v5437
  %v5688 = vadd.f32 %v4054, %v5081
  %v5689 = vadd.f32 %v4056, %v5083
  %v5690 = vadd.f32 %v4415, %v5442
  %v5691 = vadd.f32 %v4058, %v5085
  %v5692 = vadd.f32 %v4060, %v5087
  %v5693 = vadd.f32 %v4418, %v5445
  %v5694 = vadd.f32 %v4064, %v5091
  %v5695 = vadd.f32 %v4066, %v5093
  %v5696 = vadd.f32 %v4423, %v5450
  %v5697 = vadd.f32 %v4068, %v5095
  %v5698 = vadd.f32 %v4070, %v5097
  %v5699 = vadd.f32 %v4426, %v5453
  %v5700 = vadd.f32 %v4074, %v5101
  %v5701 = vadd.f32 %v4076, %v5103
  %v5702 = vadd.f32 %v4431, %v5458
  %v5703 = vadd.f32 %v4078, %v5105
  %v5704 = vadd.f32 %v4080, %v5107
  %v5705 = vadd.f32 %v4434, %v5461
  %v5706 = vadd.f32 %v4084, %v5111
  %v5707 = vadd.f32 %v4086, %v5113
  %v5708 = vadd.f32 %v4439, %v5466
  %v5709 = vadd.f32 %v4088, %v5115
  %v5710 = vadd.f32 %v4090, %v5117
  %v5711 = vadd.f32 %v4442, %v5469
  %v5712 = vld [vmem:[%s4] sm:$0x7]
  %v5714 = vlaneseq
  %v5715 = vshrl.u32 %v5714, 7
  %v5716 = vsub.s32 0, %v5715
  %v5717 = vrot.slane %v5712, %v5716
  %v5718 = vlaneseq
  %v5719 = vshrl.u32 %v5718, 7
  %v5720 = vsub.s32 1, %v5719
  %v5721 = vrot.slane %v5712, %v5720
  %v5722 = vlaneseq
  %v5723 = vshrl.u32 %v5722, 7
  %v5724 = vsub.s32 2, %v5723
  %v5725 = vrot.slane %v5712, %v5724
  %v5729 = vadd.f32 %v5472, %v5717
  %v5730 = vadd.f32 %v5473, %v5721
  %v5731 = vadd.f32 %v5474, %v5725
  %v5732 = vadd.f32 %v5475, %v5717
  %v5733 = vadd.f32 %v5476, %v5721
  %v5734 = vadd.f32 %v5477, %v5725
  %v5735 = vadd.f32 %v5478, %v5717
  %v5736 = vadd.f32 %v5479, %v5721
  %v5737 = vadd.f32 %v5480, %v5725
  %v5738 = vadd.f32 %v5481, %v5717
  %v5739 = vadd.f32 %v5482, %v5721
  %v5740 = vadd.f32 %v5483, %v5725
  %v5741 = vadd.f32 %v5484, %v5717
  %v5742 = vadd.f32 %v5485, %v5721
  %v5743 = vadd.f32 %v5486, %v5725
  %v5744 = vadd.f32 %v5487, %v5717
  %v5745 = vadd.f32 %v5488, %v5721
  %v5746 = vadd.f32 %v5489, %v5725
  %v5747 = vadd.f32 %v5490, %v5717
  %v5748 = vadd.f32 %v5491, %v5721
  %v5749 = vadd.f32 %v5492, %v5725
  %v5750 = vadd.f32 %v5493, %v5717
  %v5751 = vadd.f32 %v5494, %v5721
  %v5752 = vadd.f32 %v5495, %v5725
  %v5753 = vadd.f32 %v5496, %v5717
  %v5754 = vadd.f32 %v5497, %v5721
  %v5755 = vadd.f32 %v5498, %v5725
  %v5756 = vadd.f32 %v5499, %v5717
  %v5757 = vadd.f32 %v5500, %v5721
  %v5758 = vadd.f32 %v5501, %v5725
  %v5759 = vadd.f32 %v5502, %v5717
  %v5760 = vadd.f32 %v5503, %v5721
  %v5761 = vadd.f32 %v5504, %v5725
  %v5762 = vadd.f32 %v5505, %v5717
  %v5763 = vadd.f32 %v5506, %v5721
  %v5764 = vadd.f32 %v5507, %v5725
  %v5765 = vadd.f32 %v5508, %v5717
  %v5766 = vadd.f32 %v5509, %v5721
  %v5767 = vadd.f32 %v5510, %v5725
  %v5768 = vadd.f32 %v5511, %v5717
  %v5769 = vadd.f32 %v5512, %v5721
  %v5770 = vadd.f32 %v5513, %v5725
  %v5771 = vadd.f32 %v5514, %v5717
  %v5772 = vadd.f32 %v5515, %v5721
  %v5773 = vadd.f32 %v5516, %v5725
  %v5774 = vadd.f32 %v5517, %v5717
  %v5775 = vadd.f32 %v5518, %v5721
  %v5776 = vadd.f32 %v5519, %v5725
  %v5777 = vadd.f32 %v5520, %v5717
  %v5778 = vadd.f32 %v5521, %v5721
  %v5779 = vadd.f32 %v5522, %v5725
  %v5780 = vadd.f32 %v5523, %v5717
  %v5781 = vadd.f32 %v5524, %v5721
  %v5782 = vadd.f32 %v5525, %v5725
  %v5783 = vadd.f32 %v5526, %v5717
  %v5784 = vadd.f32 %v5527, %v5721
  %v5785 = vadd.f32 %v5528, %v5725
  %v5786 = vadd.f32 %v5529, %v5717
  %v5787 = vadd.f32 %v5530, %v5721
  %v5788 = vadd.f32 %v5531, %v5725
  %v5789 = vadd.f32 %v5532, %v5717
  %v5790 = vadd.f32 %v5533, %v5721
  %v5791 = vadd.f32 %v5534, %v5725
  %v5792 = vadd.f32 %v5535, %v5717
  %v5793 = vadd.f32 %v5536, %v5721
  %v5794 = vadd.f32 %v5537, %v5725
  %v5795 = vadd.f32 %v5538, %v5717
  %v5796 = vadd.f32 %v5539, %v5721
  %v5797 = vadd.f32 %v5540, %v5725
  %v5798 = vadd.f32 %v5541, %v5717
  %v5799 = vadd.f32 %v5542, %v5721
  %v5800 = vadd.f32 %v5543, %v5725
  %v5801 = vadd.f32 %v5544, %v5717
  %v5802 = vadd.f32 %v5545, %v5721
  %v5803 = vadd.f32 %v5546, %v5725
  %v5804 = vadd.f32 %v5547, %v5717
  %v5805 = vadd.f32 %v5548, %v5721
  %v5806 = vadd.f32 %v5549, %v5725
  %v5807 = vadd.f32 %v5550, %v5717
  %v5808 = vadd.f32 %v5551, %v5721
  %v5809 = vadd.f32 %v5552, %v5725
  %v5810 = vadd.f32 %v5553, %v5717
  %v5811 = vadd.f32 %v5554, %v5721
  %v5812 = vadd.f32 %v5555, %v5725
  %v5813 = vadd.f32 %v5556, %v5717
  %v5814 = vadd.f32 %v5557, %v5721
  %v5815 = vadd.f32 %v5558, %v5725
  %v5816 = vadd.f32 %v5559, %v5717
  %v5817 = vadd.f32 %v5560, %v5721
  %v5818 = vadd.f32 %v5561, %v5725
  %v5819 = vadd.f32 %v5562, %v5717
  %v5820 = vadd.f32 %v5563, %v5721
  %v5821 = vadd.f32 %v5564, %v5725
  %v5822 = vadd.f32 %v5565, %v5717
  %v5823 = vadd.f32 %v5566, %v5721
  %v5824 = vadd.f32 %v5567, %v5725
  %v5825 = vadd.f32 %v5568, %v5717
  %v5826 = vadd.f32 %v5569, %v5721
  %v5827 = vadd.f32 %v5570, %v5725
  %v5828 = vadd.f32 %v5571, %v5717
  %v5829 = vadd.f32 %v5572, %v5721
  %v5830 = vadd.f32 %v5573, %v5725
  %v5831 = vadd.f32 %v5574, %v5717
  %v5832 = vadd.f32 %v5575, %v5721
  %v5833 = vadd.f32 %v5576, %v5725
  %v5834 = vadd.f32 %v5577, %v5717
  %v5835 = vadd.f32 %v5578, %v5721
  %v5836 = vadd.f32 %v5579, %v5725
  %v5837 = vadd.f32 %v5580, %v5717
  %v5838 = vadd.f32 %v5581, %v5721
  %v5839 = vadd.f32 %v5582, %v5725
  %v5840 = vadd.f32 %v5583, %v5717
  %v5841 = vadd.f32 %v5584, %v5721
  %v5842 = vadd.f32 %v5585, %v5725
  %v5843 = vadd.f32 %v5586, %v5717
  %v5844 = vadd.f32 %v5587, %v5721
  %v5845 = vadd.f32 %v5588, %v5725
  %v5846 = vadd.f32 %v5589, %v5717
  %v5847 = vadd.f32 %v5590, %v5721
  %v5848 = vadd.f32 %v5591, %v5725
  %v5849 = vadd.f32 %v5592, %v5717
  %v5850 = vadd.f32 %v5593, %v5721
  %v5851 = vadd.f32 %v5594, %v5725
  %v5852 = vadd.f32 %v5595, %v5717
  %v5853 = vadd.f32 %v5596, %v5721
  %v5854 = vadd.f32 %v5597, %v5725
  %v5855 = vadd.f32 %v5598, %v5717
  %v5856 = vadd.f32 %v5599, %v5721
  %v5857 = vadd.f32 %v5600, %v5725
  %v5858 = vadd.f32 %v5601, %v5717
  %v5859 = vadd.f32 %v5602, %v5721
  %v5860 = vadd.f32 %v5603, %v5725
  %v5861 = vadd.f32 %v5604, %v5717
  %v5862 = vadd.f32 %v5605, %v5721
  %v5863 = vadd.f32 %v5606, %v5725
  %v5864 = vadd.f32 %v5607, %v5717
  %v5865 = vadd.f32 %v5608, %v5721
  %v5866 = vadd.f32 %v5609, %v5725
  %v5867 = vadd.f32 %v5610, %v5717
  %v5868 = vadd.f32 %v5611, %v5721
  %v5869 = vadd.f32 %v5612, %v5725
  %v5870 = vadd.f32 %v5613, %v5717
  %v5871 = vadd.f32 %v5614, %v5721
  %v5872 = vadd.f32 %v5615, %v5725
  %v5873 = vadd.f32 %v5616, %v5717
  %v5874 = vadd.f32 %v5617, %v5721
  %v5875 = vadd.f32 %v5618, %v5725
  %v5876 = vadd.f32 %v5619, %v5717
  %v5877 = vadd.f32 %v5620, %v5721
  %v5878 = vadd.f32 %v5621, %v5725
  %v5879 = vadd.f32 %v5622, %v5717
  %v5880 = vadd.f32 %v5623, %v5721
  %v5881 = vadd.f32 %v5624, %v5725
  %v5882 = vadd.f32 %v5625, %v5717
  %v5883 = vadd.f32 %v5626, %v5721
  %v5884 = vadd.f32 %v5627, %v5725
  %v5885 = vadd.f32 %v5628, %v5717
  %v5886 = vadd.f32 %v5629, %v5721
  %v5887 = vadd.f32 %v5630, %v5725
  %v5888 = vadd.f32 %v5631, %v5717
  %v5889 = vadd.f32 %v5632, %v5721
  %v5890 = vadd.f32 %v5633, %v5725
  %v5891 = vadd.f32 %v5634, %v5717
  %v5892 = vadd.f32 %v5635, %v5721
  %v5893 = vadd.f32 %v5636, %v5725
  %v5894 = vadd.f32 %v5637, %v5717
  %v5895 = vadd.f32 %v5638, %v5721
  %v5896 = vadd.f32 %v5639, %v5725
  %v5897 = vadd.f32 %v5640, %v5717
  %v5898 = vadd.f32 %v5641, %v5721
  %v5899 = vadd.f32 %v5642, %v5725
  %v5900 = vadd.f32 %v5643, %v5717
  %v5901 = vadd.f32 %v5644, %v5721
  %v5902 = vadd.f32 %v5645, %v5725
  %v5903 = vadd.f32 %v5646, %v5717
  %v5904 = vadd.f32 %v5647, %v5721
  %v5905 = vadd.f32 %v5648, %v5725
  %v5906 = vadd.f32 %v5649, %v5717
  %v5907 = vadd.f32 %v5650, %v5721
  %v5908 = vadd.f32 %v5651, %v5725
  %v5909 = vadd.f32 %v5652, %v5717
  %v5910 = vadd.f32 %v5653, %v5721
  %v5911 = vadd.f32 %v5654, %v5725
  %v5912 = vadd.f32 %v5655, %v5717
  %v5913 = vadd.f32 %v5656, %v5721
  %v5914 = vadd.f32 %v5657, %v5725
  %v5915 = vadd.f32 %v5658, %v5717
  %v5916 = vadd.f32 %v5659, %v5721
  %v5917 = vadd.f32 %v5660, %v5725
  %v5918 = vadd.f32 %v5661, %v5717
  %v5919 = vadd.f32 %v5662, %v5721
  %v5920 = vadd.f32 %v5663, %v5725
  %v5921 = vadd.f32 %v5664, %v5717
  %v5922 = vadd.f32 %v5665, %v5721
  %v5923 = vadd.f32 %v5666, %v5725
  %v5924 = vadd.f32 %v5667, %v5717
  %v5925 = vadd.f32 %v5668, %v5721
  %v5926 = vadd.f32 %v5669, %v5725
  %v5927 = vadd.f32 %v5670, %v5717
  %v5928 = vadd.f32 %v5671, %v5721
  %v5929 = vadd.f32 %v5672, %v5725
  %v5930 = vadd.f32 %v5673, %v5717
  %v5931 = vadd.f32 %v5674, %v5721
  %v5932 = vadd.f32 %v5675, %v5725
  %v5933 = vadd.f32 %v5676, %v5717
  %v5934 = vadd.f32 %v5677, %v5721
  %v5935 = vadd.f32 %v5678, %v5725
  %v5936 = vadd.f32 %v5679, %v5717
  %v5937 = vadd.f32 %v5680, %v5721
  %v5938 = vadd.f32 %v5681, %v5725
  %v5939 = vadd.f32 %v5682, %v5717
  %v5940 = vadd.f32 %v5683, %v5721
  %v5941 = vadd.f32 %v5684, %v5725
  %v5942 = vadd.f32 %v5685, %v5717
  %v5943 = vadd.f32 %v5686, %v5721
  %v5944 = vadd.f32 %v5687, %v5725
  %v5945 = vadd.f32 %v5688, %v5717
  %v5946 = vadd.f32 %v5689, %v5721
  %v5947 = vadd.f32 %v5690, %v5725
  %v5948 = vadd.f32 %v5691, %v5717
  %v5949 = vadd.f32 %v5692, %v5721
  %v5950 = vadd.f32 %v5693, %v5725
  %v5951 = vadd.f32 %v5694, %v5717
  %v5952 = vadd.f32 %v5695, %v5721
  %v5953 = vadd.f32 %v5696, %v5725
  %v5954 = vadd.f32 %v5697, %v5717
  %v5955 = vadd.f32 %v5698, %v5721
  %v5956 = vadd.f32 %v5699, %v5725
  %v5957 = vadd.f32 %v5700, %v5717
  %v5958 = vadd.f32 %v5701, %v5721
  %v5959 = vadd.f32 %v5702, %v5725
  %v5960 = vadd.f32 %v5703, %v5717
  %v5961 = vadd.f32 %v5704, %v5721
  %v5962 = vadd.f32 %v5705, %v5725
  %v5963 = vadd.f32 %v5706, %v5717
  %v5964 = vadd.f32 %v5707, %v5721
  %v5965 = vadd.f32 %v5708, %v5725
  %v5966 = vadd.f32 %v5709, %v5717
  %v5967 = vadd.f32 %v5710, %v5721
  %v5968 = vadd.f32 %v5711, %v5725
  %v5969 = vmax.f32 %v5729, 0.0
  %v5970 = vmax.f32 %v5730, 0.0
  %v5971 = vmax.f32 %v5731, 0.0
  %v5972 = vmax.f32 %v5732, 0.0
  %v5973 = vmax.f32 %v5733, 0.0
  %v5974 = vmax.f32 %v5734, 0.0
  %v5975 = vmax.f32 %v5735, 0.0
  %v5976 = vmax.f32 %v5736, 0.0
  %v5977 = vmax.f32 %v5737, 0.0
  %v5978 = vmax.f32 %v5738, 0.0
  %v5979 = vmax.f32 %v5739, 0.0
  %v5980 = vmax.f32 %v5740, 0.0
  %v5981 = vmax.f32 %v5741, 0.0
  %v5982 = vmax.f32 %v5742, 0.0
  %v5983 = vmax.f32 %v5743, 0.0
  %v5984 = vmax.f32 %v5744, 0.0
  %v5985 = vmax.f32 %v5745, 0.0
  %v5986 = vmax.f32 %v5746, 0.0
  %v5987 = vmax.f32 %v5747, 0.0
  %v5988 = vmax.f32 %v5748, 0.0
  %v5989 = vmax.f32 %v5749, 0.0
  %v5990 = vmax.f32 %v5750, 0.0
  %v5991 = vmax.f32 %v5751, 0.0
  %v5992 = vmax.f32 %v5752, 0.0
  %v5993 = vmax.f32 %v5753, 0.0
  %v5994 = vmax.f32 %v5754, 0.0
  %v5995 = vmax.f32 %v5755, 0.0
  %v5996 = vmax.f32 %v5756, 0.0
  %v5997 = vmax.f32 %v5757, 0.0
  %v5998 = vmax.f32 %v5758, 0.0
  %v5999 = vmax.f32 %v5759, 0.0
  %v6000 = vmax.f32 %v5760, 0.0
  %v6001 = vmax.f32 %v5761, 0.0
  %v6002 = vmax.f32 %v5762, 0.0
  %v6003 = vmax.f32 %v5763, 0.0
  %v6004 = vmax.f32 %v5764, 0.0
  %v6005 = vmax.f32 %v5765, 0.0
  %v6006 = vmax.f32 %v5766, 0.0
  %v6007 = vmax.f32 %v5767, 0.0
  %v6008 = vmax.f32 %v5768, 0.0
  %v6009 = vmax.f32 %v5769, 0.0
  %v6010 = vmax.f32 %v5770, 0.0
  %v6011 = vmax.f32 %v5771, 0.0
  %v6012 = vmax.f32 %v5772, 0.0
  %v6013 = vmax.f32 %v5773, 0.0
  %v6014 = vmax.f32 %v5774, 0.0
  %v6015 = vmax.f32 %v5775, 0.0
  %v6016 = vmax.f32 %v5776, 0.0
  %v6017 = vmax.f32 %v5777, 0.0
  %v6018 = vmax.f32 %v5778, 0.0
  %v6019 = vmax.f32 %v5779, 0.0
  %v6020 = vmax.f32 %v5780, 0.0
  %v6021 = vmax.f32 %v5781, 0.0
  %v6022 = vmax.f32 %v5782, 0.0
  %v6023 = vmax.f32 %v5783, 0.0
  %v6024 = vmax.f32 %v5784, 0.0
  %v6025 = vmax.f32 %v5785, 0.0
  %v6026 = vmax.f32 %v5786, 0.0
  %v6027 = vmax.f32 %v5787, 0.0
  %v6028 = vmax.f32 %v5788, 0.0
  %v6029 = vmax.f32 %v5789, 0.0
  %v6030 = vmax.f32 %v5790, 0.0
  %v6031 = vmax.f32 %v5791, 0.0
  %v6032 = vmax.f32 %v5792, 0.0
  %v6033 = vmax.f32 %v5793, 0.0
  %v6034 = vmax.f32 %v5794, 0.0
  %v6035 = vmax.f32 %v5795, 0.0
  %v6036 = vmax.f32 %v5796, 0.0
  %v6037 = vmax.f32 %v5797, 0.0
  %v6038 = vmax.f32 %v5798, 0.0
  %v6039 = vmax.f32 %v5799, 0.0
  %v6040 = vmax.f32 %v5800, 0.0
  %v6041 = vmax.f32 %v5801, 0.0
  %v6042 = vmax.f32 %v5802, 0.0
  %v6043 = vmax.f32 %v5803, 0.0
  %v6044 = vmax.f32 %v5804, 0.0
  %v6045 = vmax.f32 %v5805, 0.0
  %v6046 = vmax.f32 %v5806, 0.0
  %v6047 = vmax.f32 %v5807, 0.0
  %v6048 = vmax.f32 %v5808, 0.0
  %v6049 = vmax.f32 %v5809, 0.0
  %v6050 = vmax.f32 %v5810, 0.0
  %v6051 = vmax.f32 %v5811, 0.0
  %v6052 = vmax.f32 %v5812, 0.0
  %v6053 = vmax.f32 %v5813, 0.0
  %v6054 = vmax.f32 %v5814, 0.0
  %v6055 = vmax.f32 %v5815, 0.0
  %v6056 = vmax.f32 %v5816, 0.0
  %v6057 = vmax.f32 %v5817, 0.0
  %v6058 = vmax.f32 %v5818, 0.0
  %v6059 = vmax.f32 %v5819, 0.0
  %v6060 = vmax.f32 %v5820, 0.0
  %v6061 = vmax.f32 %v5821, 0.0
  %v6062 = vmax.f32 %v5822, 0.0
  %v6063 = vmax.f32 %v5823, 0.0
  %v6064 = vmax.f32 %v5824, 0.0
  %v6065 = vmax.f32 %v5825, 0.0
  %v6066 = vmax.f32 %v5826, 0.0
  %v6067 = vmax.f32 %v5827, 0.0
  %v6068 = vmax.f32 %v5828, 0.0
  %v6069 = vmax.f32 %v5829, 0.0
  %v6070 = vmax.f32 %v5830, 0.0
  %v6071 = vmax.f32 %v5831, 0.0
  %v6072 = vmax.f32 %v5832, 0.0
  %v6073 = vmax.f32 %v5833, 0.0
  %v6074 = vmax.f32 %v5834, 0.0
  %v6075 = vmax.f32 %v5835, 0.0
  %v6076 = vmax.f32 %v5836, 0.0
  %v6077 = vmax.f32 %v5837, 0.0
  %v6078 = vmax.f32 %v5838, 0.0
  %v6079 = vmax.f32 %v5839, 0.0
  %v6080 = vmax.f32 %v5840, 0.0
  %v6081 = vmax.f32 %v5841, 0.0
  %v6082 = vmax.f32 %v5842, 0.0
  %v6083 = vmax.f32 %v5843, 0.0
  %v6084 = vmax.f32 %v5844, 0.0
  %v6085 = vmax.f32 %v5845, 0.0
  %v6086 = vmax.f32 %v5846, 0.0
  %v6087 = vmax.f32 %v5847, 0.0
  %v6088 = vmax.f32 %v5848, 0.0
  %v6089 = vmax.f32 %v5849, 0.0
  %v6090 = vmax.f32 %v5850, 0.0
  %v6091 = vmax.f32 %v5851, 0.0
  %v6092 = vmax.f32 %v5852, 0.0
  %v6093 = vmax.f32 %v5853, 0.0
  %v6094 = vmax.f32 %v5854, 0.0
  %v6095 = vmax.f32 %v5855, 0.0
  %v6096 = vmax.f32 %v5856, 0.0
  %v6097 = vmax.f32 %v5857, 0.0
  %v6098 = vmax.f32 %v5858, 0.0
  %v6099 = vmax.f32 %v5859, 0.0
  %v6100 = vmax.f32 %v5860, 0.0
  %v6101 = vmax.f32 %v5861, 0.0
  %v6102 = vmax.f32 %v5862, 0.0
  %v6103 = vmax.f32 %v5863, 0.0
  %v6104 = vmax.f32 %v5864, 0.0
  %v6105 = vmax.f32 %v5865, 0.0
  %v6106 = vmax.f32 %v5866, 0.0
  %v6107 = vmax.f32 %v5867, 0.0
  %v6108 = vmax.f32 %v5868, 0.0
  %v6109 = vmax.f32 %v5869, 0.0
  %v6110 = vmax.f32 %v5870, 0.0
  %v6111 = vmax.f32 %v5871, 0.0
  %v6112 = vmax.f32 %v5872, 0.0
  %v6113 = vmax.f32 %v5873, 0.0
  %v6114 = vmax.f32 %v5874, 0.0
  %v6115 = vmax.f32 %v5875, 0.0
  %v6116 = vmax.f32 %v5876, 0.0
  %v6117 = vmax.f32 %v5877, 0.0
  %v6118 = vmax.f32 %v5878, 0.0
  %v6119 = vmax.f32 %v5879, 0.0
  %v6120 = vmax.f32 %v5880, 0.0
  %v6121 = vmax.f32 %v5881, 0.0
  %v6122 = vmax.f32 %v5882, 0.0
  %v6123 = vmax.f32 %v5883, 0.0
  %v6124 = vmax.f32 %v5884, 0.0
  %v6125 = vmax.f32 %v5885, 0.0
  %v6126 = vmax.f32 %v5886, 0.0
  %v6127 = vmax.f32 %v5887, 0.0
  %v6128 = vmax.f32 %v5888, 0.0
  %v6129 = vmax.f32 %v5889, 0.0
  %v6130 = vmax.f32 %v5890, 0.0
  %v6131 = vmax.f32 %v5891, 0.0
  %v6132 = vmax.f32 %v5892, 0.0
  %v6133 = vmax.f32 %v5893, 0.0
  %v6134 = vmax.f32 %v5894, 0.0
  %v6135 = vmax.f32 %v5895, 0.0
  %v6136 = vmax.f32 %v5896, 0.0
  %v6137 = vmax.f32 %v5897, 0.0
  %v6138 = vmax.f32 %v5898, 0.0
  %v6139 = vmax.f32 %v5899, 0.0
  %v6140 = vmax.f32 %v5900, 0.0
  %v6141 = vmax.f32 %v5901, 0.0
  %v6142 = vmax.f32 %v5902, 0.0
  %v6143 = vmax.f32 %v5903, 0.0
  %v6144 = vmax.f32 %v5904, 0.0
  %v6145 = vmax.f32 %v5905, 0.0
  %v6146 = vmax.f32 %v5906, 0.0
  %v6147 = vmax.f32 %v5907, 0.0
  %v6148 = vmax.f32 %v5908, 0.0
  %v6149 = vmax.f32 %v5909, 0.0
  %v6150 = vmax.f32 %v5910, 0.0
  %v6151 = vmax.f32 %v5911, 0.0
  %v6152 = vmax.f32 %v5912, 0.0
  %v6153 = vmax.f32 %v5913, 0.0
  %v6154 = vmax.f32 %v5914, 0.0
  %v6155 = vmax.f32 %v5915, 0.0
  %v6156 = vmax.f32 %v5916, 0.0
  %v6157 = vmax.f32 %v5917, 0.0
  %v6158 = vmax.f32 %v5918, 0.0
  %v6159 = vmax.f32 %v5919, 0.0
  %v6160 = vmax.f32 %v5920, 0.0
  %v6161 = vmax.f32 %v5921, 0.0
  %v6162 = vmax.f32 %v5922, 0.0
  %v6163 = vmax.f32 %v5923, 0.0
  %v6164 = vmax.f32 %v5924, 0.0
  %v6165 = vmax.f32 %v5925, 0.0
  %v6166 = vmax.f32 %v5926, 0.0
  %v6167 = vmax.f32 %v5927, 0.0
  %v6168 = vmax.f32 %v5928, 0.0
  %v6169 = vmax.f32 %v5929, 0.0
  %v6170 = vmax.f32 %v5930, 0.0
  %v6171 = vmax.f32 %v5931, 0.0
  %v6172 = vmax.f32 %v5932, 0.0
  %v6173 = vmax.f32 %v5933, 0.0
  %v6174 = vmax.f32 %v5934, 0.0
  %v6175 = vmax.f32 %v5935, 0.0
  %v6176 = vmax.f32 %v5936, 0.0
  %v6177 = vmax.f32 %v5937, 0.0
  %v6178 = vmax.f32 %v5938, 0.0
  %v6179 = vmax.f32 %v5939, 0.0
  %v6180 = vmax.f32 %v5940, 0.0
  %v6181 = vmax.f32 %v5941, 0.0
  %v6182 = vmax.f32 %v5942, 0.0
  %v6183 = vmax.f32 %v5943, 0.0
  %v6184 = vmax.f32 %v5944, 0.0
  %v6185 = vmax.f32 %v5945, 0.0
  %v6186 = vmax.f32 %v5946, 0.0
  %v6187 = vmax.f32 %v5947, 0.0
  %v6188 = vmax.f32 %v5948, 0.0
  %v6189 = vmax.f32 %v5949, 0.0
  %v6190 = vmax.f32 %v5950, 0.0
  %v6191 = vmax.f32 %v5951, 0.0
  %v6192 = vmax.f32 %v5952, 0.0
  %v6193 = vmax.f32 %v5953, 0.0
  %v6194 = vmax.f32 %v5954, 0.0
  %v6195 = vmax.f32 %v5955, 0.0
  %v6196 = vmax.f32 %v5956, 0.0
  %v6197 = vmax.f32 %v5957, 0.0
  %v6198 = vmax.f32 %v5958, 0.0
  %v6199 = vmax.f32 %v5959, 0.0
  %v6200 = vmax.f32 %v5960, 0.0
  %v6201 = vmax.f32 %v5961, 0.0
  %v6202 = vmax.f32 %v5962, 0.0
  %v6203 = vmax.f32 %v5963, 0.0
  %v6204 = vmax.f32 %v5964, 0.0
  %v6205 = vmax.f32 %v5965, 0.0
  %v6206 = vmax.f32 %v5966, 0.0
  %v6207 = vmax.f32 %v5967, 0.0
  %v6208 = vmax.f32 %v5968, 0.0
  %v6209 = vpack.c.bf16 %v5972, %v5969
  %v6210 = vpack.c.bf16 %v5973, %v5970
  %v6211 = vpack.c.bf16 %v5974, %v5971
  %v6212 = vpack.c.bf16 %v5978, %v5975
  %v6213 = vpack.c.bf16 %v5979, %v5976
  %v6214 = vpack.c.bf16 %v5980, %v5977
  %v6215 = vpack.c.bf16 %v5984, %v5981
  %v6216 = vpack.c.bf16 %v5985, %v5982
  %v6217 = vpack.c.bf16 %v5986, %v5983
  %v6218 = vpack.c.bf16 %v5990, %v5987
  %v6219 = vpack.c.bf16 %v5991, %v5988
  %v6220 = vpack.c.bf16 %v5992, %v5989
  %v6221 = vpack.c.bf16 %v5996, %v5993
  %v6222 = vpack.c.bf16 %v5997, %v5994
  %v6223 = vpack.c.bf16 %v5998, %v5995
  %v6224 = vpack.c.bf16 %v6002, %v5999
  %v6225 = vpack.c.bf16 %v6003, %v6000
  %v6226 = vpack.c.bf16 %v6004, %v6001
  %v6227 = vpack.c.bf16 %v6008, %v6005
  %v6228 = vpack.c.bf16 %v6009, %v6006
  %v6229 = vpack.c.bf16 %v6010, %v6007
  %v6230 = vpack.c.bf16 %v6014, %v6011
  %v6231 = vpack.c.bf16 %v6015, %v6012
  %v6232 = vpack.c.bf16 %v6016, %v6013
  %v6233 = vpack.c.bf16 %v6020, %v6017
  %v6234 = vpack.c.bf16 %v6021, %v6018
  %v6235 = vpack.c.bf16 %v6022, %v6019
  %v6236 = vpack.c.bf16 %v6026, %v6023
  %v6237 = vpack.c.bf16 %v6027, %v6024
  %v6238 = vpack.c.bf16 %v6028, %v6025
  %v6239 = vpack.c.bf16 %v6032, %v6029
  %v6240 = vpack.c.bf16 %v6033, %v6030
  %v6241 = vpack.c.bf16 %v6034, %v6031
  %v6242 = vpack.c.bf16 %v6038, %v6035
  %v6243 = vpack.c.bf16 %v6039, %v6036
  %v6244 = vpack.c.bf16 %v6040, %v6037
  %v6245 = vpack.c.bf16 %v6044, %v6041
  %v6246 = vpack.c.bf16 %v6045, %v6042
  %v6247 = vpack.c.bf16 %v6046, %v6043
  %v6248 = vpack.c.bf16 %v6050, %v6047
  %v6249 = vpack.c.bf16 %v6051, %v6048
  %v6250 = vpack.c.bf16 %v6052, %v6049
  %v6251 = vpack.c.bf16 %v6056, %v6053
  %v6252 = vpack.c.bf16 %v6057, %v6054
  %v6253 = vpack.c.bf16 %v6058, %v6055
  %v6254 = vpack.c.bf16 %v6062, %v6059
  %v6255 = vpack.c.bf16 %v6063, %v6060
  %v6256 = vpack.c.bf16 %v6064, %v6061
  %v6257 = vpack.c.bf16 %v6068, %v6065
  %v6258 = vpack.c.bf16 %v6069, %v6066
  %v6259 = vpack.c.bf16 %v6070, %v6067
  %v6260 = vpack.c.bf16 %v6074, %v6071
  %v6261 = vpack.c.bf16 %v6075, %v6072
  %v6262 = vpack.c.bf16 %v6076, %v6073
  %v6263 = vpack.c.bf16 %v6080, %v6077
  %v6264 = vpack.c.bf16 %v6081, %v6078
  %v6265 = vpack.c.bf16 %v6082, %v6079
  %v6266 = vpack.c.bf16 %v6086, %v6083
  %v6267 = vpack.c.bf16 %v6087, %v6084
  %v6268 = vpack.c.bf16 %v6088, %v6085
  %v6269 = vpack.c.bf16 %v6092, %v6089
  %v6270 = vpack.c.bf16 %v6093, %v6090
  %v6271 = vpack.c.bf16 %v6094, %v6091
  %v6272 = vpack.c.bf16 %v6098, %v6095
  %v6273 = vpack.c.bf16 %v6099, %v6096
  %v6274 = vpack.c.bf16 %v6100, %v6097
  %v6275 = vpack.c.bf16 %v6104, %v6101
  %v6276 = vpack.c.bf16 %v6105, %v6102
  %v6277 = vpack.c.bf16 %v6106, %v6103
  %v6278 = vpack.c.bf16 %v6110, %v6107
  %v6279 = vpack.c.bf16 %v6111, %v6108
  %v6280 = vpack.c.bf16 %v6112, %v6109
  %v6281 = vpack.c.bf16 %v6116, %v6113
  %v6282 = vpack.c.bf16 %v6117, %v6114
  %v6283 = vpack.c.bf16 %v6118, %v6115
  %v6284 = vpack.c.bf16 %v6122, %v6119
  %v6285 = vpack.c.bf16 %v6123, %v6120
  %v6286 = vpack.c.bf16 %v6124, %v6121
  %v6287 = vpack.c.bf16 %v6128, %v6125
  %v6288 = vpack.c.bf16 %v6129, %v6126
  %v6289 = vpack.c.bf16 %v6130, %v6127
  %v6290 = vpack.c.bf16 %v6134, %v6131
  %v6291 = vpack.c.bf16 %v6135, %v6132
  %v6292 = vpack.c.bf16 %v6136, %v6133
  %v6293 = vpack.c.bf16 %v6140, %v6137
  %v6294 = vpack.c.bf16 %v6141, %v6138
  %v6295 = vpack.c.bf16 %v6142, %v6139
  %v6296 = vpack.c.bf16 %v6146, %v6143
  %v6297 = vpack.c.bf16 %v6147, %v6144
  %v6298 = vpack.c.bf16 %v6148, %v6145
  %v6299 = vpack.c.bf16 %v6152, %v6149
  %v6300 = vpack.c.bf16 %v6153, %v6150
  %v6301 = vpack.c.bf16 %v6154, %v6151
  %v6302 = vpack.c.bf16 %v6158, %v6155
  %v6303 = vpack.c.bf16 %v6159, %v6156
  %v6304 = vpack.c.bf16 %v6160, %v6157
  %v6305 = vpack.c.bf16 %v6164, %v6161
  %v6306 = vpack.c.bf16 %v6165, %v6162
  %v6307 = vpack.c.bf16 %v6166, %v6163
  %v6308 = vpack.c.bf16 %v6170, %v6167
  %v6309 = vpack.c.bf16 %v6171, %v6168
  %v6310 = vpack.c.bf16 %v6172, %v6169
  %v6311 = vpack.c.bf16 %v6176, %v6173
  %v6312 = vpack.c.bf16 %v6177, %v6174
  %v6313 = vpack.c.bf16 %v6178, %v6175
  %v6314 = vpack.c.bf16 %v6182, %v6179
  %v6315 = vpack.c.bf16 %v6183, %v6180
  %v6316 = vpack.c.bf16 %v6184, %v6181
  %v6317 = vpack.c.bf16 %v6188, %v6185
  %v6318 = vpack.c.bf16 %v6189, %v6186
  %v6319 = vpack.c.bf16 %v6190, %v6187
  %v6320 = vpack.c.bf16 %v6194, %v6191
  %v6321 = vpack.c.bf16 %v6195, %v6192
  %v6322 = vpack.c.bf16 %v6196, %v6193
  %v6323 = vpack.c.bf16 %v6200, %v6197
  %v6324 = vpack.c.bf16 %v6201, %v6198
  %v6325 = vpack.c.bf16 %v6202, %v6199
  %v6326 = vpack.c.bf16 %v6206, %v6203
  %v6327 = vpack.c.bf16 %v6207, %v6204
  %v6328 = vpack.c.bf16 %v6208, %v6205
  %v6329 = vld [vmem:[%s5] sm:$0xf]
  %v6330 = vld [vmem:[%s5 + $0x4] sm:$0xf]
  %v6331 = vld [vmem:[%s5 + $0x8] sm:$0xf]
  %v6332 = vld [vmem:[%s5 + $0xc] sm:$0xf]
  %v6333 = vld [vmem:[%s5 + $0x10] sm:$0xf]
  %v6334 = vld [vmem:[%s5 + $0x14] sm:$0xf]
  %v6335 = vld [vmem:[%s5 + $0x18] sm:$0xf]
  %v6336 = vld [vmem:[%s5 + $0x1c] sm:$0xf]
  %v6337 = vld [vmem:[%s5 + $0x20] sm:$0xf]
  %v6338 = vld [vmem:[%s5 + $0x24] sm:$0xf]
  %v6339 = vld [vmem:[%s5 + $0x28] sm:$0xf]
  %v6340 = vld [vmem:[%s5 + $0x2c] sm:$0xf]
  %v6341 = vld [vmem:[%s5 + $0x30] sm:$0xf]
  %v6342 = vld [vmem:[%s5 + $0x34] sm:$0xf]
  %v6343 = vld [vmem:[%s5 + $0x38] sm:$0xf]
  %v6344 = vld [vmem:[%s5 + $0x3c] sm:$0xf]
  %v6345 = vld [vmem:[%s5 + $0x40] sm:$0xf]
  %v6346 = vld [vmem:[%s5 + $0x44] sm:$0xf]
  %v6347 = vld [vmem:[%s5 + $0x48] sm:$0xf]
  %v6348 = vld [vmem:[%s5 + $0x4c] sm:$0xf]
  %v6349 = vld [vmem:[%s5 + $0x50] sm:$0xf]
  %v6350 = vld [vmem:[%s5 + $0x54] sm:$0xf]
  %v6351 = vld [vmem:[%s5 + $0x58] sm:$0xf]
  %v6352 = vld [vmem:[%s5 + $0x5c] sm:$0xf]
  %v6353 = vld [vmem:[%s5 + $0x60] sm:$0xf]
  %v6354 = vld [vmem:[%s5 + $0x64] sm:$0xf]
  %v6355 = vld [vmem:[%s5 + $0x68] sm:$0xf]
  %v6356 = vld [vmem:[%s5 + $0x6c] sm:$0xf]
  %v6357 = vld [vmem:[%s5 + $0x70] sm:$0xf]
  %v6358 = vld [vmem:[%s5 + $0x74] sm:$0xf]
  %v6359 = vld [vmem:[%s5 + $0x78] sm:$0xf]
  %v6360 = vld [vmem:[%s5 + $0x7c] sm:$0xf]
  %v6361 = vld [vmem:[%s5 + $0x80] sm:$0xf]
  %v6362 = vld [vmem:[%s5 + $0x84] sm:$0xf]
  %v6363 = vld [vmem:[%s5 + $0x88] sm:$0xf]
  %v6364 = vld [vmem:[%s5 + $0x8c] sm:$0xf]
  %v6365 = vld [vmem:[%s5 + $0x90] sm:$0xf]
  %v6366 = vld [vmem:[%s5 + $0x94] sm:$0xf]
  %v6367 = vld [vmem:[%s5 + $0x98] sm:$0xf]
  %v6368 = vld [vmem:[%s5 + $0x9c] sm:$0xf]
  %v6369 = vld [vmem:[%s5 + $0xa0] sm:$0xf]
  %v6370 = vld [vmem:[%s5 + $0xa4] sm:$0xf]
  %v6371 = vld [vmem:[%s5 + $0xa8] sm:$0xf]
  %v6372 = vld [vmem:[%s5 + $0xac] sm:$0xf]
  %v6373 = vld [vmem:[%s5 + $0xb0] sm:$0xf]
  %v6374 = vld [vmem:[%s5 + $0xb4] sm:$0xf]
  %v6375 = vld [vmem:[%s5 + $0xb8] sm:$0xf]
  %v6376 = vld [vmem:[%s5 + $0xbc] sm:$0xf]
  %s6377 = scalar_lea.vmem %s5, 192
  %v6378 = vld [vmem:[%s6377] sm:$0xf]
  %v6379 = vld [vmem:[%s6377 + $0x4] sm:$0xf]
  %v6380 = vld [vmem:[%s6377 + $0x8] sm:$0xf]
  %v6381 = vld [vmem:[%s6377 + $0xc] sm:$0xf]
  %v6382 = vld [vmem:[%s6377 + $0x10] sm:$0xf]
  %v6383 = vld [vmem:[%s6377 + $0x14] sm:$0xf]
  %v6384 = vld [vmem:[%s6377 + $0x18] sm:$0xf]
  %v6385 = vld [vmem:[%s6377 + $0x1c] sm:$0xf]
  %v6386 = vld [vmem:[%s6377 + $0x20] sm:$0xf]
  %v6387 = vld [vmem:[%s6377 + $0x24] sm:$0xf]
  %v6388 = vld [vmem:[%s6377 + $0x28] sm:$0xf]
  %v6389 = vld [vmem:[%s6377 + $0x2c] sm:$0xf]
  %v6390 = vld [vmem:[%s6377 + $0x30] sm:$0xf]
  %v6391 = vld [vmem:[%s6377 + $0x34] sm:$0xf]
  %v6392 = vld [vmem:[%s6377 + $0x38] sm:$0xf]
  %v6393 = vld [vmem:[%s6377 + $0x3c] sm:$0xf]
  %v6394 = vld [vmem:[%s6377 + $0x40] sm:$0xf]
  %v6395 = vld [vmem:[%s6377 + $0x44] sm:$0xf]
  %v6396 = vld [vmem:[%s6377 + $0x48] sm:$0xf]
  %v6397 = vld [vmem:[%s6377 + $0x4c] sm:$0xf]
  %v6398 = vld [vmem:[%s6377 + $0x50] sm:$0xf]
  %v6399 = vld [vmem:[%s6377 + $0x54] sm:$0xf]
  %v6400 = vld [vmem:[%s6377 + $0x58] sm:$0xf]
  %v6401 = vld [vmem:[%s6377 + $0x5c] sm:$0xf]
  %v6402 = vld [vmem:[%s6377 + $0x60] sm:$0xf]
  %v6403 = vld [vmem:[%s6377 + $0x64] sm:$0xf]
  %v6404 = vld [vmem:[%s6377 + $0x68] sm:$0xf]
  %v6405 = vld [vmem:[%s6377 + $0x6c] sm:$0xf]
  %v6406 = vld [vmem:[%s6377 + $0x70] sm:$0xf]
  %v6407 = vld [vmem:[%s6377 + $0x74] sm:$0xf]
  %v6408 = vld [vmem:[%s6377 + $0x78] sm:$0xf]
  %v6409 = vld [vmem:[%s6377 + $0x7c] sm:$0xf]
  %v6410 = vld [vmem:[%s6377 + $0x80] sm:$0xf]
  %v6411 = vld [vmem:[%s6377 + $0x84] sm:$0xf]
  %v6412 = vld [vmem:[%s6377 + $0x88] sm:$0xf]
  %v6413 = vld [vmem:[%s6377 + $0x8c] sm:$0xf]
  %v6414 = vld [vmem:[%s6377 + $0x90] sm:$0xf]
  %v6415 = vld [vmem:[%s6377 + $0x94] sm:$0xf]
  %v6416 = vld [vmem:[%s6377 + $0x98] sm:$0xf]
  %v6417 = vld [vmem:[%s6377 + $0x9c] sm:$0xf]
  %v6418 = vld [vmem:[%s6377 + $0xa0] sm:$0xf]
  %v6419 = vld [vmem:[%s6377 + $0xa4] sm:$0xf]
  %v6420 = vld [vmem:[%s6377 + $0xa8] sm:$0xf]
  %v6421 = vld [vmem:[%s6377 + $0xac] sm:$0xf]
  %v6422 = vld [vmem:[%s6377 + $0xb0] sm:$0xf]
  %v6423 = vld [vmem:[%s6377 + $0xb4] sm:$0xf]
  %v6424 = vld [vmem:[%s6377 + $0xb8] sm:$0xf]
  %v6425 = vld [vmem:[%s6377 + $0xbc] sm:$0xf]
  %v6474 = vunpack.c.l.b16 %v6378
  %v6475 = vunpack.c.l.b16 %v6379
  %v6476 = vunpack.c.l.b16 %v6380
  %v6477 = vunpack.c.l.b16 %v6381
  %v6478 = vunpack.c.l.b16 %v6382
  %v6479 = vunpack.c.l.b16 %v6383
  %v6480 = vunpack.c.l.b16 %v6384
  %v6481 = vunpack.c.l.b16 %v6385
  %v6482 = vunpack.c.l.b16 %v6386
  %v6483 = vunpack.c.l.b16 %v6387
  %v6484 = vunpack.c.l.b16 %v6388
  %v6485 = vunpack.c.l.b16 %v6389
  %v6486 = vunpack.c.l.b16 %v6390
  %v6487 = vunpack.c.l.b16 %v6391
  %v6488 = vunpack.c.l.b16 %v6392
  %v6489 = vunpack.c.l.b16 %v6393
  %v6490 = vunpack.c.l.b16 %v6394
  %v6491 = vunpack.c.l.b16 %v6395
  %v6492 = vunpack.c.l.b16 %v6396
  %v6493 = vunpack.c.l.b16 %v6397
  %v6494 = vunpack.c.l.b16 %v6398
  %v6495 = vunpack.c.l.b16 %v6399
  %v6496 = vunpack.c.l.b16 %v6400
  %v6497 = vunpack.c.l.b16 %v6401
  %v6498 = vunpack.c.l.b16 %v6402
  %v6499 = vunpack.c.l.b16 %v6403
  %v6500 = vunpack.c.l.b16 %v6404
  %v6501 = vunpack.c.l.b16 %v6405
  %v6502 = vunpack.c.l.b16 %v6406
  %v6503 = vunpack.c.l.b16 %v6407
  %v6504 = vunpack.c.l.b16 %v6408
  %v6505 = vunpack.c.l.b16 %v6409
  %v6506 = vunpack.c.l.b16 %v6410
  %v6507 = vunpack.c.l.b16 %v6411
  %v6508 = vunpack.c.l.b16 %v6412
  %v6509 = vunpack.c.l.b16 %v6413
  %v6510 = vunpack.c.l.b16 %v6414
  %v6511 = vunpack.c.l.b16 %v6415
  %v6512 = vunpack.c.l.b16 %v6416
  %v6513 = vunpack.c.l.b16 %v6417
  %v6514 = vunpack.c.l.b16 %v6418
  %v6515 = vunpack.c.l.b16 %v6419
  %v6516 = vunpack.c.l.b16 %v6420
  %v6517 = vunpack.c.l.b16 %v6421
  %v6518 = vunpack.c.l.b16 %v6422
  %v6519 = vunpack.c.l.b16 %v6423
  %v6520 = vunpack.c.l.b16 %v6424
  %v6521 = vunpack.c.l.b16 %v6425
  %v6522 = vpack.c.b16 %v6475, %v6474
  %v6523 = vpack.c.b16 %v6477, %v6476
  %v6524 = vpack.c.b16 %v6479, %v6478
  %v6525 = vpack.c.b16 %v6481, %v6480
  %v6526 = vpack.c.b16 %v6483, %v6482
  %v6527 = vpack.c.b16 %v6485, %v6484
  %v6528 = vpack.c.b16 %v6487, %v6486
  %v6529 = vpack.c.b16 %v6489, %v6488
  %v6530 = vpack.c.b16 %v6491, %v6490
  %v6531 = vpack.c.b16 %v6493, %v6492
  %v6532 = vpack.c.b16 %v6495, %v6494
  %v6533 = vpack.c.b16 %v6497, %v6496
  %v6534 = vpack.c.b16 %v6499, %v6498
  %v6535 = vpack.c.b16 %v6501, %v6500
  %v6536 = vpack.c.b16 %v6503, %v6502
  %v6537 = vpack.c.b16 %v6505, %v6504
  %v6538 = vpack.c.b16 %v6507, %v6506
  %v6539 = vpack.c.b16 %v6509, %v6508
  %v6540 = vpack.c.b16 %v6511, %v6510
  %v6541 = vpack.c.b16 %v6513, %v6512
  %v6542 = vpack.c.b16 %v6515, %v6514
  %v6543 = vpack.c.b16 %v6517, %v6516
  %v6544 = vpack.c.b16 %v6519, %v6518
  %v6545 = vpack.c.b16 %v6521, %v6520
  %6570 = vmatprep.subr.bf16.mxu0 0
  %6571 = vmatpush1.bf16.msra.mxu0 %v6529
  %6572 = vmatprep.subr.bf16.mxu0 0
  %6573 = vmatpush1.bf16.msra.mxu0 %v6528
  %6574 = vmatprep.subr.bf16.mxu0 0
  %6575 = vmatpush1.bf16.msra.mxu0 %v6527
  %6576 = vmatprep.subr.bf16.mxu0 0
  %6577 = vmatpush1.bf16.msra.mxu0 %v6526
  %6578 = vmatprep.subr.bf16.mxu0 0
  %6579 = vmatpush1.bf16.msra.mxu0 %v6525
  %6580 = vmatprep.subr.bf16.mxu0 0
  %6581 = vmatpush1.bf16.msra.mxu0 %v6524
  %6582 = vmatprep.subr.bf16.mxu0 0
  %6583 = vmatpush1.bf16.msra.mxu0 %v6523
  %6584 = vmatprep.subr.bf16.mxu0 0
  %6585 = vmatpush1.bf16.msra.mxu0 %v6522
  %6586 = vmatprep.subr.bf16.mxu0 0
  %6587 = vmatpush2.bf16.msra.mxu0 %v6537
  %6588 = vmatprep.subr.bf16.mxu0 0
  %6589 = vmatpush2.bf16.msra.mxu0 %v6536
  %6590 = vmatprep.subr.bf16.mxu0 0
  %6591 = vmatpush2.bf16.msra.mxu0 %v6535
  %6592 = vmatprep.subr.bf16.mxu0 0
  %6593 = vmatpush2.bf16.msra.mxu0 %v6534
  %6594 = vmatprep.subr.bf16.mxu0 0
  %6595 = vmatpush2.bf16.msra.mxu0 %v6533
  %6596 = vmatprep.subr.bf16.mxu0 0
  %6597 = vmatpush2.bf16.msra.mxu0 %v6532
  %6598 = vmatprep.subr.bf16.mxu0 0
  %6599 = vmatpush2.bf16.msra.mxu0 %v6531
  %6600 = vmatprep.subr.bf16.mxu0 0
  %6601 = vmatpush2.bf16.msra.mxu0 %v6530
  %6602 = vmatprep.mubr.bf16.mxu0 %v6222
  %6603 = vmatmul.mubr.bf16.gmra.mxu0 %v6221
  %v6604 = vpop.f32.mrf.mxu0
  %v6605 = vadd.f32 0.0, %v6604
  %v6606 = vpop.f32.mrf.mxu0
  %v6607 = vpop.f32.mrf.mxu0
  %v6608 = vadd.f32 0.0, %v6607
  %v6609 = vpop.f32.mrf.mxu0
  %6610 = vmatprep.mubr.bf16.mxu0 %v6225
  %6611 = vmatmul.mubr.bf16.gmra.mxu0 %v6224
  %v6612 = vpop.f32.mrf.mxu0
  %v6613 = vadd.f32 0.0, %v6612
  %v6614 = vpop.f32.mrf.mxu0
  %v6615 = vpop.f32.mrf.mxu0
  %v6616 = vadd.f32 0.0, %v6615
  %v6617 = vpop.f32.mrf.mxu0
  %6618 = vmatprep.mubr.bf16.mxu0 %v6228
  %6619 = vmatmul.mubr.bf16.gmra.mxu0 %v6227
  %v6620 = vpop.f32.mrf.mxu0
  %v6621 = vadd.f32 0.0, %v6620
  %v6622 = vpop.f32.mrf.mxu0
  %v6623 = vpop.f32.mrf.mxu0
  %v6624 = vadd.f32 0.0, %v6623
  %v6625 = vpop.f32.mrf.mxu0
  %6626 = vmatprep.mubr.bf16.mxu0 %v6231
  %6627 = vmatmul.mubr.bf16.gmra.mxu0 %v6230
  %v6628 = vpop.f32.mrf.mxu0
  %v6629 = vadd.f32 0.0, %v6628
  %v6630 = vpop.f32.mrf.mxu0
  %v6631 = vpop.f32.mrf.mxu0
  %v6632 = vadd.f32 0.0, %v6631
  %v6633 = vpop.f32.mrf.mxu0
  %6634 = vdwg.mxu0
  %6635 = vmatprep.subr.bf16.mxu0 0
  %6636 = vmatpush1.bf16.msra.mxu0 %v6545
  %6637 = vmatprep.subr.bf16.mxu0 0
  %6638 = vmatpush1.bf16.msra.mxu0 %v6544
  %6639 = vmatprep.subr.bf16.mxu0 0
  %6640 = vmatpush1.bf16.msra.mxu0 %v6543
  %6641 = vmatprep.subr.bf16.mxu0 0
  %6642 = vmatpush1.bf16.msra.mxu0 %v6542
  %6643 = vmatprep.subr.bf16.mxu0 0
  %6644 = vmatpush1.bf16.msra.mxu0 %v6541
  %6645 = vmatprep.subr.bf16.mxu0 0
  %6646 = vmatpush1.bf16.msra.mxu0 %v6540
  %6647 = vmatprep.subr.bf16.mxu0 0
  %6648 = vmatpush1.bf16.msra.mxu0 %v6539
  %6649 = vmatprep.subr.bf16.mxu0 0
  %6650 = vmatpush1.bf16.msra.mxu0 %v6538
  %6651 = vmatprep.subr.bf16.mxu0 0
  %6652 = vmatpush2.bf16.msra.mxu0 0
  %6653 = vmatprep.subr.bf16.mxu0 0
  %6654 = vmatpush2.bf16.msra.mxu0 0
  %6655 = vmatprep.subr.bf16.mxu0 0
  %6656 = vmatpush2.bf16.msra.mxu0 0
  %6657 = vmatprep.subr.bf16.mxu0 0
  %6658 = vmatpush2.bf16.msra.mxu0 0
  %6659 = vmatprep.subr.bf16.mxu0 0
  %6660 = vmatpush2.bf16.msra.mxu0 0
  %6661 = vmatprep.subr.bf16.mxu0 0
  %6662 = vmatpush2.bf16.msra.mxu0 0
  %6663 = vmatprep.subr.bf16.mxu0 0
  %6664 = vmatpush2.bf16.msra.mxu0 0
  %6665 = vmatprep.subr.bf16.mxu0 0
  %6666 = vmatpush2.bf16.msra.mxu0 0
  %6667 = vmatprep.mubr.bf16.mxu0 0
  %6668 = vmatmul.mubr.bf16.gmra.mxu0 %v6223
  %v6669 = vpop.f32.mrf.mxu0
  %v6670 = vadd.f32 %v6605, %v6669
  %v6671 = vpop.f32.mrf.mxu0
  %v6672 = vpop.f32.mrf.mxu0
  %v6673 = vadd.f32 %v6608, %v6672
  %v6674 = vpop.f32.mrf.mxu0
  %6675 = vmatprep.mubr.bf16.mxu0 0
  %6676 = vmatmul.mubr.bf16.gmra.mxu0 %v6226
  %v6677 = vpop.f32.mrf.mxu0
  %v6678 = vadd.f32 %v6613, %v6677
  %v6679 = vpop.f32.mrf.mxu0
  %v6680 = vpop.f32.mrf.mxu0
  %v6681 = vadd.f32 %v6616, %v6680
  %v6682 = vpop.f32.mrf.mxu0
  %6683 = vmatprep.mubr.bf16.mxu0 0
  %6684 = vmatmul.mubr.bf16.gmra.mxu0 %v6229
  %v6685 = vpop.f32.mrf.mxu0
  %v6686 = vadd.f32 %v6621, %v6685
  %v6687 = vpop.f32.mrf.mxu0
  %v6688 = vpop.f32.mrf.mxu0
  %v6689 = vadd.f32 %v6624, %v6688
  %v6690 = vpop.f32.mrf.mxu0
  %6691 = vmatprep.mubr.bf16.mxu0 0
  %6692 = vmatmul.mubr.bf16.gmra.mxu0 %v6232
  %v6693 = vpop.f32.mrf.mxu0
  %v6694 = vadd.f32 %v6629, %v6693
  %v6695 = vpop.f32.mrf.mxu0
  %v6696 = vpop.f32.mrf.mxu0
  %v6697 = vadd.f32 %v6632, %v6696
  %v6698 = vpop.f32.mrf.mxu0
  %6699 = vdwg.mxu0
  %v6748 = vunpack.c.l.b16 %v6329
  %v6749 = vunpack.c.l.b16 %v6330
  %v6750 = vunpack.c.l.b16 %v6331
  %v6751 = vunpack.c.l.b16 %v6332
  %v6752 = vunpack.c.l.b16 %v6333
  %v6753 = vunpack.c.l.b16 %v6334
  %v6754 = vunpack.c.l.b16 %v6335
  %v6755 = vunpack.c.l.b16 %v6336
  %v6756 = vunpack.c.l.b16 %v6337
  %v6757 = vunpack.c.l.b16 %v6338
  %v6758 = vunpack.c.l.b16 %v6339
  %v6759 = vunpack.c.l.b16 %v6340
  %v6760 = vunpack.c.l.b16 %v6341
  %v6761 = vunpack.c.l.b16 %v6342
  %v6762 = vunpack.c.l.b16 %v6343
  %v6763 = vunpack.c.l.b16 %v6344
  %v6764 = vunpack.c.l.b16 %v6345
  %v6765 = vunpack.c.l.b16 %v6346
  %v6766 = vunpack.c.l.b16 %v6347
  %v6767 = vunpack.c.l.b16 %v6348
  %v6768 = vunpack.c.l.b16 %v6349
  %v6769 = vunpack.c.l.b16 %v6350
  %v6770 = vunpack.c.l.b16 %v6351
  %v6771 = vunpack.c.l.b16 %v6352
  %v6772 = vunpack.c.l.b16 %v6353
  %v6773 = vunpack.c.l.b16 %v6354
  %v6774 = vunpack.c.l.b16 %v6355
  %v6775 = vunpack.c.l.b16 %v6356
  %v6776 = vunpack.c.l.b16 %v6357
  %v6777 = vunpack.c.l.b16 %v6358
  %v6778 = vunpack.c.l.b16 %v6359
  %v6779 = vunpack.c.l.b16 %v6360
  %v6780 = vunpack.c.l.b16 %v6361
  %v6781 = vunpack.c.l.b16 %v6362
  %v6782 = vunpack.c.l.b16 %v6363
  %v6783 = vunpack.c.l.b16 %v6364
  %v6784 = vunpack.c.l.b16 %v6365
  %v6785 = vunpack.c.l.b16 %v6366
  %v6786 = vunpack.c.l.b16 %v6367
  %v6787 = vunpack.c.l.b16 %v6368
  %v6788 = vunpack.c.l.b16 %v6369
  %v6789 = vunpack.c.l.b16 %v6370
  %v6790 = vunpack.c.l.b16 %v6371
  %v6791 = vunpack.c.l.b16 %v6372
  %v6792 = vunpack.c.l.b16 %v6373
  %v6793 = vunpack.c.l.b16 %v6374
  %v6794 = vunpack.c.l.b16 %v6375
  %v6795 = vunpack.c.l.b16 %v6376
  %v6796 = vpack.c.b16 %v6749, %v6748
  %v6797 = vpack.c.b16 %v6751, %v6750
  %v6798 = vpack.c.b16 %v6753, %v6752
  %v6799 = vpack.c.b16 %v6755, %v6754
  %v6800 = vpack.c.b16 %v6757, %v6756
  %v6801 = vpack.c.b16 %v6759, %v6758
  %v6802 = vpack.c.b16 %v6761, %v6760
  %v6803 = vpack.c.b16 %v6763, %v6762
  %v6804 = vpack.c.b16 %v6765, %v6764
  %v6805 = vpack.c.b16 %v6767, %v6766
  %v6806 = vpack.c.b16 %v6769, %v6768
  %v6807 = vpack.c.b16 %v6771, %v6770
  %v6808 = vpack.c.b16 %v6773, %v6772
  %v6809 = vpack.c.b16 %v6775, %v6774
  %v6810 = vpack.c.b16 %v6777, %v6776
  %v6811 = vpack.c.b16 %v6779, %v6778
  %v6812 = vpack.c.b16 %v6781, %v6780
  %v6813 = vpack.c.b16 %v6783, %v6782
  %v6814 = vpack.c.b16 %v6785, %v6784
  %v6815 = vpack.c.b16 %v6787, %v6786
  %v6816 = vpack.c.b16 %v6789, %v6788
  %v6817 = vpack.c.b16 %v6791, %v6790
  %v6818 = vpack.c.b16 %v6793, %v6792
  %v6819 = vpack.c.b16 %v6795, %v6794
  %6844 = vmatprep.subr.bf16.mxu0 0
  %6845 = vmatpush1.bf16.msra.mxu0 %v6803
  %6846 = vmatprep.subr.bf16.mxu0 0
  %6847 = vmatpush1.bf16.msra.mxu0 %v6802
  %6848 = vmatprep.subr.bf16.mxu0 0
  %6849 = vmatpush1.bf16.msra.mxu0 %v6801
  %6850 = vmatprep.subr.bf16.mxu0 0
  %6851 = vmatpush1.bf16.msra.mxu0 %v6800
  %6852 = vmatprep.subr.bf16.mxu0 0
  %6853 = vmatpush1.bf16.msra.mxu0 %v6799
  %6854 = vmatprep.subr.bf16.mxu0 0
  %6855 = vmatpush1.bf16.msra.mxu0 %v6798
  %6856 = vmatprep.subr.bf16.mxu0 0
  %6857 = vmatpush1.bf16.msra.mxu0 %v6797
  %6858 = vmatprep.subr.bf16.mxu0 0
  %6859 = vmatpush1.bf16.msra.mxu0 %v6796
  %6860 = vmatprep.subr.bf16.mxu0 0
  %6861 = vmatpush2.bf16.msra.mxu0 %v6811
  %6862 = vmatprep.subr.bf16.mxu0 0
  %6863 = vmatpush2.bf16.msra.mxu0 %v6810
  %6864 = vmatprep.subr.bf16.mxu0 0
  %6865 = vmatpush2.bf16.msra.mxu0 %v6809
  %6866 = vmatprep.subr.bf16.mxu0 0
  %6867 = vmatpush2.bf16.msra.mxu0 %v6808
  %6868 = vmatprep.subr.bf16.mxu0 0
  %6869 = vmatpush2.bf16.msra.mxu0 %v6807
  %6870 = vmatprep.subr.bf16.mxu0 0
  %6871 = vmatpush2.bf16.msra.mxu0 %v6806
  %6872 = vmatprep.subr.bf16.mxu0 0
  %6873 = vmatpush2.bf16.msra.mxu0 %v6805
  %6874 = vmatprep.subr.bf16.mxu0 0
  %6875 = vmatpush2.bf16.msra.mxu0 %v6804
  %6876 = vmatprep.mubr.bf16.mxu0 %v6210
  %6877 = vmatmul.mubr.bf16.gmra.mxu0 %v6209
  %v6878 = vpop.f32.mrf.mxu0
  %v6879 = vadd.f32 %v6670, %v6878
  %v6880 = vpop.f32.mrf.mxu0
  %v6881 = vpop.f32.mrf.mxu0
  %v6882 = vadd.f32 %v6673, %v6881
  %v6883 = vpop.f32.mrf.mxu0
  %6884 = vmatprep.mubr.bf16.mxu0 %v6213
  %6885 = vmatmul.mubr.bf16.gmra.mxu0 %v6212
  %v6886 = vpop.f32.mrf.mxu0
  %v6887 = vadd.f32 %v6678, %v6886
  %v6888 = vpop.f32.mrf.mxu0
  %v6889 = vpop.f32.mrf.mxu0
  %v6890 = vadd.f32 %v6681, %v6889
  %v6891 = vpop.f32.mrf.mxu0
  %6892 = vmatprep.mubr.bf16.mxu0 %v6216
  %6893 = vmatmul.mubr.bf16.gmra.mxu0 %v6215
  %v6894 = vpop.f32.mrf.mxu0
  %v6895 = vadd.f32 %v6686, %v6894
  %v6896 = vpop.f32.mrf.mxu0
  %v6897 = vpop.f32.mrf.mxu0
  %v6898 = vadd.f32 %v6689, %v6897
  %v6899 = vpop.f32.mrf.mxu0
  %6900 = vmatprep.mubr.bf16.mxu0 %v6219
  %6901 = vmatmul.mubr.bf16.gmra.mxu0 %v6218
  %v6902 = vpop.f32.mrf.mxu0
  %v6903 = vadd.f32 %v6694, %v6902
  %v6904 = vpop.f32.mrf.mxu0
  %v6905 = vpop.f32.mrf.mxu0
  %v6906 = vadd.f32 %v6697, %v6905
  %v6907 = vpop.f32.mrf.mxu0
  %6908 = vdwg.mxu0
  %6909 = vmatprep.subr.bf16.mxu0 0
  %6910 = vmatpush1.bf16.msra.mxu0 %v6819
  %6911 = vmatprep.subr.bf16.mxu0 0
  %6912 = vmatpush1.bf16.msra.mxu0 %v6818
  %6913 = vmatprep.subr.bf16.mxu0 0
  %6914 = vmatpush1.bf16.msra.mxu0 %v6817
  %6915 = vmatprep.subr.bf16.mxu0 0
  %6916 = vmatpush1.bf16.msra.mxu0 %v6816
  %6917 = vmatprep.subr.bf16.mxu0 0
  %6918 = vmatpush1.bf16.msra.mxu0 %v6815
  %6919 = vmatprep.subr.bf16.mxu0 0
  %6920 = vmatpush1.bf16.msra.mxu0 %v6814
  %6921 = vmatprep.subr.bf16.mxu0 0
  %6922 = vmatpush1.bf16.msra.mxu0 %v6813
  %6923 = vmatprep.subr.bf16.mxu0 0
  %6924 = vmatpush1.bf16.msra.mxu0 %v6812
  %6925 = vmatprep.subr.bf16.mxu0 0
  %6926 = vmatpush2.bf16.msra.mxu0 0
  %6927 = vmatprep.subr.bf16.mxu0 0
  %6928 = vmatpush2.bf16.msra.mxu0 0
  %6929 = vmatprep.subr.bf16.mxu0 0
  %6930 = vmatpush2.bf16.msra.mxu0 0
  %6931 = vmatprep.subr.bf16.mxu0 0
  %6932 = vmatpush2.bf16.msra.mxu0 0
  %6933 = vmatprep.subr.bf16.mxu0 0
  %6934 = vmatpush2.bf16.msra.mxu0 0
  %6935 = vmatprep.subr.bf16.mxu0 0
  %6936 = vmatpush2.bf16.msra.mxu0 0
  %6937 = vmatprep.subr.bf16.mxu0 0
  %6938 = vmatpush2.bf16.msra.mxu0 0
  %6939 = vmatprep.subr.bf16.mxu0 0
  %6940 = vmatpush2.bf16.msra.mxu0 0
  %6941 = vmatprep.mubr.bf16.mxu0 0
  %6942 = vmatmul.mubr.bf16.gmra.mxu0 %v6211
  %v6943 = vpop.f32.mrf.mxu0
  %v6944 = vadd.f32 %v6879, %v6943
  %v6945 = vpop.f32.mrf.mxu0
  %v6946 = vpop.f32.mrf.mxu0
  %v6947 = vadd.f32 %v6882, %v6946
  %v6948 = vpop.f32.mrf.mxu0
  %6949 = vmatprep.mubr.bf16.mxu0 0
  %6950 = vmatmul.mubr.bf16.gmra.mxu0 %v6214
  %v6951 = vpop.f32.mrf.mxu0
  %v6952 = vadd.f32 %v6887, %v6951
  %v6953 = vpop.f32.mrf.mxu0
  %v6954 = vpop.f32.mrf.mxu0
  %v6955 = vadd.f32 %v6890, %v6954
  %v6956 = vpop.f32.mrf.mxu0
  %6957 = vmatprep.mubr.bf16.mxu0 0
  %6958 = vmatmul.mubr.bf16.gmra.mxu0 %v6217
  %v6959 = vpop.f32.mrf.mxu0
  %v6960 = vadd.f32 %v6895, %v6959
  %v6961 = vpop.f32.mrf.mxu0
  %v6962 = vpop.f32.mrf.mxu0
  %v6963 = vadd.f32 %v6898, %v6962
  %v6964 = vpop.f32.mrf.mxu0
  %6965 = vmatprep.mubr.bf16.mxu0 0
  %6966 = vmatmul.mubr.bf16.gmra.mxu0 %v6220
  %v6967 = vpop.f32.mrf.mxu0
  %v6968 = vadd.f32 %v6903, %v6967
  %v6969 = vpop.f32.mrf.mxu0
  %v6970 = vpop.f32.mrf.mxu0
  %v6971 = vadd.f32 %v6906, %v6970
  %v6972 = vpop.f32.mrf.mxu0
  %6973 = vdwg.mxu0
  %s6974 = scalar_lea.vmem %s5, 384
  %v6975 = vld [vmem:[%s6974] sm:$0xf]
  %v6976 = vld [vmem:[%s6974 + $0x4] sm:$0xf]
  %v6977 = vld [vmem:[%s6974 + $0x8] sm:$0xf]
  %v6978 = vld [vmem:[%s6974 + $0xc] sm:$0xf]
  %v6979 = vld [vmem:[%s6974 + $0x10] sm:$0xf]
  %v6980 = vld [vmem:[%s6974 + $0x14] sm:$0xf]
  %v6981 = vld [vmem:[%s6974 + $0x18] sm:$0xf]
  %v6982 = vld [vmem:[%s6974 + $0x1c] sm:$0xf]
  %v6983 = vld [vmem:[%s6974 + $0x20] sm:$0xf]
  %v6984 = vld [vmem:[%s6974 + $0x24] sm:$0xf]
  %v6985 = vld [vmem:[%s6974 + $0x28] sm:$0xf]
  %v6986 = vld [vmem:[%s6974 + $0x2c] sm:$0xf]
  %v6987 = vld [vmem:[%s6974 + $0x30] sm:$0xf]
  %v6988 = vld [vmem:[%s6974 + $0x34] sm:$0xf]
  %v6989 = vld [vmem:[%s6974 + $0x38] sm:$0xf]
  %v6990 = vld [vmem:[%s6974 + $0x3c] sm:$0xf]
  %v6991 = vld [vmem:[%s6974 + $0x40] sm:$0xf]
  %v6992 = vld [vmem:[%s6974 + $0x44] sm:$0xf]
  %v6993 = vld [vmem:[%s6974 + $0x48] sm:$0xf]
  %v6994 = vld [vmem:[%s6974 + $0x4c] sm:$0xf]
  %v6995 = vld [vmem:[%s6974 + $0x50] sm:$0xf]
  %v6996 = vld [vmem:[%s6974 + $0x54] sm:$0xf]
  %v6997 = vld [vmem:[%s6974 + $0x58] sm:$0xf]
  %v6998 = vld [vmem:[%s6974 + $0x5c] sm:$0xf]
  %v6999 = vld [vmem:[%s6974 + $0x60] sm:$0xf]
  %v7000 = vld [vmem:[%s6974 + $0x64] sm:$0xf]
  %v7001 = vld [vmem:[%s6974 + $0x68] sm:$0xf]
  %v7002 = vld [vmem:[%s6974 + $0x6c] sm:$0xf]
  %v7003 = vld [vmem:[%s6974 + $0x70] sm:$0xf]
  %v7004 = vld [vmem:[%s6974 + $0x74] sm:$0xf]
  %v7005 = vld [vmem:[%s6974 + $0x78] sm:$0xf]
  %v7006 = vld [vmem:[%s6974 + $0x7c] sm:$0xf]
  %v7007 = vld [vmem:[%s6974 + $0x80] sm:$0xf]
  %v7008 = vld [vmem:[%s6974 + $0x84] sm:$0xf]
  %v7009 = vld [vmem:[%s6974 + $0x88] sm:$0xf]
  %v7010 = vld [vmem:[%s6974 + $0x8c] sm:$0xf]
  %v7011 = vld [vmem:[%s6974 + $0x90] sm:$0xf]
  %v7012 = vld [vmem:[%s6974 + $0x94] sm:$0xf]
  %v7013 = vld [vmem:[%s6974 + $0x98] sm:$0xf]
  %v7014 = vld [vmem:[%s6974 + $0x9c] sm:$0xf]
  %v7015 = vld [vmem:[%s6974 + $0xa0] sm:$0xf]
  %v7016 = vld [vmem:[%s6974 + $0xa4] sm:$0xf]
  %v7017 = vld [vmem:[%s6974 + $0xa8] sm:$0xf]
  %v7018 = vld [vmem:[%s6974 + $0xac] sm:$0xf]
  %v7019 = vld [vmem:[%s6974 + $0xb0] sm:$0xf]
  %v7020 = vld [vmem:[%s6974 + $0xb4] sm:$0xf]
  %v7021 = vld [vmem:[%s6974 + $0xb8] sm:$0xf]
  %v7022 = vld [vmem:[%s6974 + $0xbc] sm:$0xf]
  %v7071 = vunpack.c.l.b16 %v6975
  %v7072 = vunpack.c.l.b16 %v6976
  %v7073 = vunpack.c.l.b16 %v6977
  %v7074 = vunpack.c.l.b16 %v6978
  %v7075 = vunpack.c.l.b16 %v6979
  %v7076 = vunpack.c.l.b16 %v6980
  %v7077 = vunpack.c.l.b16 %v6981
  %v7078 = vunpack.c.l.b16 %v6982
  %v7079 = vunpack.c.l.b16 %v6983
  %v7080 = vunpack.c.l.b16 %v6984
  %v7081 = vunpack.c.l.b16 %v6985
  %v7082 = vunpack.c.l.b16 %v6986
  %v7083 = vunpack.c.l.b16 %v6987
  %v7084 = vunpack.c.l.b16 %v6988
  %v7085 = vunpack.c.l.b16 %v6989
  %v7086 = vunpack.c.l.b16 %v6990
  %v7087 = vunpack.c.l.b16 %v6991
  %v7088 = vunpack.c.l.b16 %v6992
  %v7089 = vunpack.c.l.b16 %v6993
  %v7090 = vunpack.c.l.b16 %v6994
  %v7091 = vunpack.c.l.b16 %v6995
  %v7092 = vunpack.c.l.b16 %v6996
  %v7093 = vunpack.c.l.b16 %v6997
  %v7094 = vunpack.c.l.b16 %v6998
  %v7095 = vunpack.c.l.b16 %v6999
  %v7096 = vunpack.c.l.b16 %v7000
  %v7097 = vunpack.c.l.b16 %v7001
  %v7098 = vunpack.c.l.b16 %v7002
  %v7099 = vunpack.c.l.b16 %v7003
  %v7100 = vunpack.c.l.b16 %v7004
  %v7101 = vunpack.c.l.b16 %v7005
  %v7102 = vunpack.c.l.b16 %v7006
  %v7103 = vunpack.c.l.b16 %v7007
  %v7104 = vunpack.c.l.b16 %v7008
  %v7105 = vunpack.c.l.b16 %v7009
  %v7106 = vunpack.c.l.b16 %v7010
  %v7107 = vunpack.c.l.b16 %v7011
  %v7108 = vunpack.c.l.b16 %v7012
  %v7109 = vunpack.c.l.b16 %v7013
  %v7110 = vunpack.c.l.b16 %v7014
  %v7111 = vunpack.c.l.b16 %v7015
  %v7112 = vunpack.c.l.b16 %v7016
  %v7113 = vunpack.c.l.b16 %v7017
  %v7114 = vunpack.c.l.b16 %v7018
  %v7115 = vunpack.c.l.b16 %v7019
  %v7116 = vunpack.c.l.b16 %v7020
  %v7117 = vunpack.c.l.b16 %v7021
  %v7118 = vunpack.c.l.b16 %v7022
  %v7119 = vpack.c.b16 %v7072, %v7071
  %v7120 = vpack.c.b16 %v7074, %v7073
  %v7121 = vpack.c.b16 %v7076, %v7075
  %v7122 = vpack.c.b16 %v7078, %v7077
  %v7123 = vpack.c.b16 %v7080, %v7079
  %v7124 = vpack.c.b16 %v7082, %v7081
  %v7125 = vpack.c.b16 %v7084, %v7083
  %v7126 = vpack.c.b16 %v7086, %v7085
  %v7127 = vpack.c.b16 %v7088, %v7087
  %v7128 = vpack.c.b16 %v7090, %v7089
  %v7129 = vpack.c.b16 %v7092, %v7091
  %v7130 = vpack.c.b16 %v7094, %v7093
  %v7131 = vpack.c.b16 %v7096, %v7095
  %v7132 = vpack.c.b16 %v7098, %v7097
  %v7133 = vpack.c.b16 %v7100, %v7099
  %v7134 = vpack.c.b16 %v7102, %v7101
  %v7135 = vpack.c.b16 %v7104, %v7103
  %v7136 = vpack.c.b16 %v7106, %v7105
  %v7137 = vpack.c.b16 %v7108, %v7107
  %v7138 = vpack.c.b16 %v7110, %v7109
  %v7139 = vpack.c.b16 %v7112, %v7111
  %v7140 = vpack.c.b16 %v7114, %v7113
  %v7141 = vpack.c.b16 %v7116, %v7115
  %v7142 = vpack.c.b16 %v7118, %v7117
  %7167 = vmatprep.subr.bf16.mxu0 0
  %7168 = vmatpush1.bf16.msra.mxu0 %v7126
  %7169 = vmatprep.subr.bf16.mxu0 0
  %7170 = vmatpush1.bf16.msra.mxu0 %v7125
  %7171 = vmatprep.subr.bf16.mxu0 0
  %7172 = vmatpush1.bf16.msra.mxu0 %v7124
  %7173 = vmatprep.subr.bf16.mxu0 0
  %7174 = vmatpush1.bf16.msra.mxu0 %v7123
  %7175 = vmatprep.subr.bf16.mxu0 0
  %7176 = vmatpush1.bf16.msra.mxu0 %v7122
  %7177 = vmatprep.subr.bf16.mxu0 0
  %7178 = vmatpush1.bf16.msra.mxu0 %v7121
  %7179 = vmatprep.subr.bf16.mxu0 0
  %7180 = vmatpush1.bf16.msra.mxu0 %v7120
  %7181 = vmatprep.subr.bf16.mxu0 0
  %7182 = vmatpush1.bf16.msra.mxu0 %v7119
  %7183 = vmatprep.subr.bf16.mxu0 0
  %7184 = vmatpush2.bf16.msra.mxu0 %v7134
  %7185 = vmatprep.subr.bf16.mxu0 0
  %7186 = vmatpush2.bf16.msra.mxu0 %v7133
  %7187 = vmatprep.subr.bf16.mxu0 0
  %7188 = vmatpush2.bf16.msra.mxu0 %v7132
  %7189 = vmatprep.subr.bf16.mxu0 0
  %7190 = vmatpush2.bf16.msra.mxu0 %v7131
  %7191 = vmatprep.subr.bf16.mxu0 0
  %7192 = vmatpush2.bf16.msra.mxu0 %v7130
  %7193 = vmatprep.subr.bf16.mxu0 0
  %7194 = vmatpush2.bf16.msra.mxu0 %v7129
  %7195 = vmatprep.subr.bf16.mxu0 0
  %7196 = vmatpush2.bf16.msra.mxu0 %v7128
  %7197 = vmatprep.subr.bf16.mxu0 0
  %7198 = vmatpush2.bf16.msra.mxu0 %v7127
  %7199 = vmatprep.mubr.bf16.mxu0 %v6234
  %7200 = vmatmul.mubr.bf16.gmra.mxu0 %v6233
  %v7201 = vpop.f32.mrf.mxu0
  %v7202 = vadd.f32 0.0, %v7201
  %v7203 = vpop.f32.mrf.mxu0
  %v7204 = vpop.f32.mrf.mxu0
  %v7205 = vadd.f32 0.0, %v7204
  %v7206 = vpop.f32.mrf.mxu0
  %7207 = vmatprep.mubr.bf16.mxu0 %v6237
  %7208 = vmatmul.mubr.bf16.gmra.mxu0 %v6236
  %v7209 = vpop.f32.mrf.mxu0
  %v7210 = vadd.f32 0.0, %v7209
  %v7211 = vpop.f32.mrf.mxu0
  %v7212 = vpop.f32.mrf.mxu0
  %v7213 = vadd.f32 0.0, %v7212
  %v7214 = vpop.f32.mrf.mxu0
  %7215 = vmatprep.mubr.bf16.mxu0 %v6240
  %7216 = vmatmul.mubr.bf16.gmra.mxu0 %v6239
  %v7217 = vpop.f32.mrf.mxu0
  %v7218 = vadd.f32 0.0, %v7217
  %v7219 = vpop.f32.mrf.mxu0
  %v7220 = vpop.f32.mrf.mxu0
  %v7221 = vadd.f32 0.0, %v7220
  %v7222 = vpop.f32.mrf.mxu0
  %7223 = vmatprep.mubr.bf16.mxu0 %v6243
  %7224 = vmatmul.mubr.bf16.gmra.mxu0 %v6242
  %v7225 = vpop.f32.mrf.mxu0
  %v7226 = vadd.f32 0.0, %v7225
  %v7227 = vpop.f32.mrf.mxu0
  %v7228 = vpop.f32.mrf.mxu0
  %v7229 = vadd.f32 0.0, %v7228
  %v7230 = vpop.f32.mrf.mxu0
  %7231 = vdwg.mxu0
  %7232 = vmatprep.subr.bf16.mxu0 0
  %7233 = vmatpush1.bf16.msra.mxu0 %v7142
  %7234 = vmatprep.subr.bf16.mxu0 0
  %7235 = vmatpush1.bf16.msra.mxu0 %v7141
  %7236 = vmatprep.subr.bf16.mxu0 0
  %7237 = vmatpush1.bf16.msra.mxu0 %v7140
  %7238 = vmatprep.subr.bf16.mxu0 0
  %7239 = vmatpush1.bf16.msra.mxu0 %v7139
  %7240 = vmatprep.subr.bf16.mxu0 0
  %7241 = vmatpush1.bf16.msra.mxu0 %v7138
  %7242 = vmatprep.subr.bf16.mxu0 0
  %7243 = vmatpush1.bf16.msra.mxu0 %v7137
  %7244 = vmatprep.subr.bf16.mxu0 0
  %7245 = vmatpush1.bf16.msra.mxu0 %v7136
  %7246 = vmatprep.subr.bf16.mxu0 0
  %7247 = vmatpush1.bf16.msra.mxu0 %v7135
  %7248 = vmatprep.subr.bf16.mxu0 0
  %7249 = vmatpush2.bf16.msra.mxu0 0
  %7250 = vmatprep.subr.bf16.mxu0 0
  %7251 = vmatpush2.bf16.msra.mxu0 0
  %7252 = vmatprep.subr.bf16.mxu0 0
  %7253 = vmatpush2.bf16.msra.mxu0 0
  %7254 = vmatprep.subr.bf16.mxu0 0
  %7255 = vmatpush2.bf16.msra.mxu0 0
  %7256 = vmatprep.subr.bf16.mxu0 0
  %7257 = vmatpush2.bf16.msra.mxu0 0
  %7258 = vmatprep.subr.bf16.mxu0 0
  %7259 = vmatpush2.bf16.msra.mxu0 0
  %7260 = vmatprep.subr.bf16.mxu0 0
  %7261 = vmatpush2.bf16.msra.mxu0 0
  %7262 = vmatprep.subr.bf16.mxu0 0
  %7263 = vmatpush2.bf16.msra.mxu0 0
  %7264 = vmatprep.mubr.bf16.mxu0 0
  %7265 = vmatmul.mubr.bf16.gmra.mxu0 %v6235
  %v7266 = vpop.f32.mrf.mxu0
  %v7267 = vadd.f32 %v7202, %v7266
  %v7268 = vpop.f32.mrf.mxu0
  %v7269 = vpop.f32.mrf.mxu0
  %v7270 = vadd.f32 %v7205, %v7269
  %v7271 = vpop.f32.mrf.mxu0
  %7272 = vmatprep.mubr.bf16.mxu0 0
  %7273 = vmatmul.mubr.bf16.gmra.mxu0 %v6238
  %v7274 = vpop.f32.mrf.mxu0
  %v7275 = vadd.f32 %v7210, %v7274
  %v7276 = vpop.f32.mrf.mxu0
  %v7277 = vpop.f32.mrf.mxu0
  %v7278 = vadd.f32 %v7213, %v7277
  %v7279 = vpop.f32.mrf.mxu0
  %7280 = vmatprep.mubr.bf16.mxu0 0
  %7281 = vmatmul.mubr.bf16.gmra.mxu0 %v6241
  %v7282 = vpop.f32.mrf.mxu0
  %v7283 = vadd.f32 %v7218, %v7282
  %v7284 = vpop.f32.mrf.mxu0
  %v7285 = vpop.f32.mrf.mxu0
  %v7286 = vadd.f32 %v7221, %v7285
  %v7287 = vpop.f32.mrf.mxu0
  %7288 = vmatprep.mubr.bf16.mxu0 0
  %7289 = vmatmul.mubr.bf16.gmra.mxu0 %v6244
  %v7290 = vpop.f32.mrf.mxu0
  %v7291 = vadd.f32 %v7226, %v7290
  %v7292 = vpop.f32.mrf.mxu0
  %v7293 = vpop.f32.mrf.mxu0
  %v7294 = vadd.f32 %v7229, %v7293
  %v7295 = vpop.f32.mrf.mxu0
  %7296 = vdwg.mxu0
  %v7297 = vadd.f32 %v6944, %v7267
  %v7298 = vadd.f32 %v6947, %v7270
  %v7299 = vadd.f32 %v6952, %v7275
  %v7300 = vadd.f32 %v6955, %v7278
  %v7301 = vadd.f32 %v6960, %v7283
  %v7302 = vadd.f32 %v6963, %v7286
  %v7303 = vadd.f32 %v6968, %v7291
  %v7304 = vadd.f32 %v6971, %v7294
  %s7305 = scalar_lea.vmem %s5, 576
  %v7306 = vld [vmem:[%s7305] sm:$0xf]
  %v7307 = vld [vmem:[%s7305 + $0x4] sm:$0xf]
  %v7308 = vld [vmem:[%s7305 + $0x8] sm:$0xf]
  %v7309 = vld [vmem:[%s7305 + $0xc] sm:$0xf]
  %v7310 = vld [vmem:[%s7305 + $0x10] sm:$0xf]
  %v7311 = vld [vmem:[%s7305 + $0x14] sm:$0xf]
  %v7312 = vld [vmem:[%s7305 + $0x18] sm:$0xf]
  %v7313 = vld [vmem:[%s7305 + $0x1c] sm:$0xf]
  %v7314 = vld [vmem:[%s7305 + $0x20] sm:$0xf]
  %v7315 = vld [vmem:[%s7305 + $0x24] sm:$0xf]
  %v7316 = vld [vmem:[%s7305 + $0x28] sm:$0xf]
  %v7317 = vld [vmem:[%s7305 + $0x2c] sm:$0xf]
  %v7318 = vld [vmem:[%s7305 + $0x30] sm:$0xf]
  %v7319 = vld [vmem:[%s7305 + $0x34] sm:$0xf]
  %v7320 = vld [vmem:[%s7305 + $0x38] sm:$0xf]
  %v7321 = vld [vmem:[%s7305 + $0x3c] sm:$0xf]
  %v7322 = vld [vmem:[%s7305 + $0x40] sm:$0xf]
  %v7323 = vld [vmem:[%s7305 + $0x44] sm:$0xf]
  %v7324 = vld [vmem:[%s7305 + $0x48] sm:$0xf]
  %v7325 = vld [vmem:[%s7305 + $0x4c] sm:$0xf]
  %v7326 = vld [vmem:[%s7305 + $0x50] sm:$0xf]
  %v7327 = vld [vmem:[%s7305 + $0x54] sm:$0xf]
  %v7328 = vld [vmem:[%s7305 + $0x58] sm:$0xf]
  %v7329 = vld [vmem:[%s7305 + $0x5c] sm:$0xf]
  %v7330 = vld [vmem:[%s7305 + $0x60] sm:$0xf]
  %v7331 = vld [vmem:[%s7305 + $0x64] sm:$0xf]
  %v7332 = vld [vmem:[%s7305 + $0x68] sm:$0xf]
  %v7333 = vld [vmem:[%s7305 + $0x6c] sm:$0xf]
  %v7334 = vld [vmem:[%s7305 + $0x70] sm:$0xf]
  %v7335 = vld [vmem:[%s7305 + $0x74] sm:$0xf]
  %v7336 = vld [vmem:[%s7305 + $0x78] sm:$0xf]
  %v7337 = vld [vmem:[%s7305 + $0x7c] sm:$0xf]
  %v7338 = vld [vmem:[%s7305 + $0x80] sm:$0xf]
  %v7339 = vld [vmem:[%s7305 + $0x84] sm:$0xf]
  %v7340 = vld [vmem:[%s7305 + $0x88] sm:$0xf]
  %v7341 = vld [vmem:[%s7305 + $0x8c] sm:$0xf]
  %v7342 = vld [vmem:[%s7305 + $0x90] sm:$0xf]
  %v7343 = vld [vmem:[%s7305 + $0x94] sm:$0xf]
  %v7344 = vld [vmem:[%s7305 + $0x98] sm:$0xf]
  %v7345 = vld [vmem:[%s7305 + $0x9c] sm:$0xf]
  %v7346 = vld [vmem:[%s7305 + $0xa0] sm:$0xf]
  %v7347 = vld [vmem:[%s7305 + $0xa4] sm:$0xf]
  %v7348 = vld [vmem:[%s7305 + $0xa8] sm:$0xf]
  %v7349 = vld [vmem:[%s7305 + $0xac] sm:$0xf]
  %v7350 = vld [vmem:[%s7305 + $0xb0] sm:$0xf]
  %v7351 = vld [vmem:[%s7305 + $0xb4] sm:$0xf]
  %v7352 = vld [vmem:[%s7305 + $0xb8] sm:$0xf]
  %v7353 = vld [vmem:[%s7305 + $0xbc] sm:$0xf]
  %v7402 = vunpack.c.l.b16 %v7306
  %v7403 = vunpack.c.l.b16 %v7307
  %v7404 = vunpack.c.l.b16 %v7308
  %v7405 = vunpack.c.l.b16 %v7309
  %v7406 = vunpack.c.l.b16 %v7310
  %v7407 = vunpack.c.l.b16 %v7311
  %v7408 = vunpack.c.l.b16 %v7312
  %v7409 = vunpack.c.l.b16 %v7313
  %v7410 = vunpack.c.l.b16 %v7314
  %v7411 = vunpack.c.l.b16 %v7315
  %v7412 = vunpack.c.l.b16 %v7316
  %v7413 = vunpack.c.l.b16 %v7317
  %v7414 = vunpack.c.l.b16 %v7318
  %v7415 = vunpack.c.l.b16 %v7319
  %v7416 = vunpack.c.l.b16 %v7320
  %v7417 = vunpack.c.l.b16 %v7321
  %v7418 = vunpack.c.l.b16 %v7322
  %v7419 = vunpack.c.l.b16 %v7323
  %v7420 = vunpack.c.l.b16 %v7324
  %v7421 = vunpack.c.l.b16 %v7325
  %v7422 = vunpack.c.l.b16 %v7326
  %v7423 = vunpack.c.l.b16 %v7327
  %v7424 = vunpack.c.l.b16 %v7328
  %v7425 = vunpack.c.l.b16 %v7329
  %v7426 = vunpack.c.l.b16 %v7330
  %v7427 = vunpack.c.l.b16 %v7331
  %v7428 = vunpack.c.l.b16 %v7332
  %v7429 = vunpack.c.l.b16 %v7333
  %v7430 = vunpack.c.l.b16 %v7334
  %v7431 = vunpack.c.l.b16 %v7335
  %v7432 = vunpack.c.l.b16 %v7336
  %v7433 = vunpack.c.l.b16 %v7337
  %v7434 = vunpack.c.l.b16 %v7338
  %v7435 = vunpack.c.l.b16 %v7339
  %v7436 = vunpack.c.l.b16 %v7340
  %v7437 = vunpack.c.l.b16 %v7341
  %v7438 = vunpack.c.l.b16 %v7342
  %v7439 = vunpack.c.l.b16 %v7343
  %v7440 = vunpack.c.l.b16 %v7344
  %v7441 = vunpack.c.l.b16 %v7345
  %v7442 = vunpack.c.l.b16 %v7346
  %v7443 = vunpack.c.l.b16 %v7347
  %v7444 = vunpack.c.l.b16 %v7348
  %v7445 = vunpack.c.l.b16 %v7349
  %v7446 = vunpack.c.l.b16 %v7350
  %v7447 = vunpack.c.l.b16 %v7351
  %v7448 = vunpack.c.l.b16 %v7352
  %v7449 = vunpack.c.l.b16 %v7353
  %v7450 = vpack.c.b16 %v7403, %v7402
  %v7451 = vpack.c.b16 %v7405, %v7404
  %v7452 = vpack.c.b16 %v7407, %v7406
  %v7453 = vpack.c.b16 %v7409, %v7408
  %v7454 = vpack.c.b16 %v7411, %v7410
  %v7455 = vpack.c.b16 %v7413, %v7412
  %v7456 = vpack.c.b16 %v7415, %v7414
  %v7457 = vpack.c.b16 %v7417, %v7416
  %v7458 = vpack.c.b16 %v7419, %v7418
  %v7459 = vpack.c.b16 %v7421, %v7420
  %v7460 = vpack.c.b16 %v7423, %v7422
  %v7461 = vpack.c.b16 %v7425, %v7424
  %v7462 = vpack.c.b16 %v7427, %v7426
  %v7463 = vpack.c.b16 %v7429, %v7428
  %v7464 = vpack.c.b16 %v7431, %v7430
  %v7465 = vpack.c.b16 %v7433, %v7432
  %v7466 = vpack.c.b16 %v7435, %v7434
  %v7467 = vpack.c.b16 %v7437, %v7436
  %v7468 = vpack.c.b16 %v7439, %v7438
  %v7469 = vpack.c.b16 %v7441, %v7440
  %v7470 = vpack.c.b16 %v7443, %v7442
  %v7471 = vpack.c.b16 %v7445, %v7444
  %v7472 = vpack.c.b16 %v7447, %v7446
  %v7473 = vpack.c.b16 %v7449, %v7448
  %7498 = vmatprep.subr.bf16.mxu0 0
  %7499 = vmatpush1.bf16.msra.mxu0 %v7457
  %7500 = vmatprep.subr.bf16.mxu0 0
  %7501 = vmatpush1.bf16.msra.mxu0 %v7456
  %7502 = vmatprep.subr.bf16.mxu0 0
  %7503 = vmatpush1.bf16.msra.mxu0 %v7455
  %7504 = vmatprep.subr.bf16.mxu0 0
  %7505 = vmatpush1.bf16.msra.mxu0 %v7454
  %7506 = vmatprep.subr.bf16.mxu0 0
  %7507 = vmatpush1.bf16.msra.mxu0 %v7453
  %7508 = vmatprep.subr.bf16.mxu0 0
  %7509 = vmatpush1.bf16.msra.mxu0 %v7452
  %7510 = vmatprep.subr.bf16.mxu0 0
  %7511 = vmatpush1.bf16.msra.mxu0 %v7451
  %7512 = vmatprep.subr.bf16.mxu0 0
  %7513 = vmatpush1.bf16.msra.mxu0 %v7450
  %7514 = vmatprep.subr.bf16.mxu0 0
  %7515 = vmatpush2.bf16.msra.mxu0 %v7465
  %7516 = vmatprep.subr.bf16.mxu0 0
  %7517 = vmatpush2.bf16.msra.mxu0 %v7464
  %7518 = vmatprep.subr.bf16.mxu0 0
  %7519 = vmatpush2.bf16.msra.mxu0 %v7463
  %7520 = vmatprep.subr.bf16.mxu0 0
  %7521 = vmatpush2.bf16.msra.mxu0 %v7462
  %7522 = vmatprep.subr.bf16.mxu0 0
  %7523 = vmatpush2.bf16.msra.mxu0 %v7461
  %7524 = vmatprep.subr.bf16.mxu0 0
  %7525 = vmatpush2.bf16.msra.mxu0 %v7460
  %7526 = vmatprep.subr.bf16.mxu0 0
  %7527 = vmatpush2.bf16.msra.mxu0 %v7459
  %7528 = vmatprep.subr.bf16.mxu0 0
  %7529 = vmatpush2.bf16.msra.mxu0 %v7458
  %7530 = vmatprep.mubr.bf16.mxu0 %v6246
  %7531 = vmatmul.mubr.bf16.gmra.mxu0 %v6245
  %v7532 = vpop.f32.mrf.mxu0
  %v7533 = vadd.f32 0.0, %v7532
  %v7534 = vpop.f32.mrf.mxu0
  %v7535 = vpop.f32.mrf.mxu0
  %v7536 = vadd.f32 0.0, %v7535
  %v7537 = vpop.f32.mrf.mxu0
  %7538 = vmatprep.mubr.bf16.mxu0 %v6249
  %7539 = vmatmul.mubr.bf16.gmra.mxu0 %v6248
  %v7540 = vpop.f32.mrf.mxu0
  %v7541 = vadd.f32 0.0, %v7540
  %v7542 = vpop.f32.mrf.mxu0
  %v7543 = vpop.f32.mrf.mxu0
  %v7544 = vadd.f32 0.0, %v7543
  %v7545 = vpop.f32.mrf.mxu0
  %7546 = vmatprep.mubr.bf16.mxu0 %v6252
  %7547 = vmatmul.mubr.bf16.gmra.mxu0 %v6251
  %v7548 = vpop.f32.mrf.mxu0
  %v7549 = vadd.f32 0.0, %v7548
  %v7550 = vpop.f32.mrf.mxu0
  %v7551 = vpop.f32.mrf.mxu0
  %v7552 = vadd.f32 0.0, %v7551
  %v7553 = vpop.f32.mrf.mxu0
  %7554 = vmatprep.mubr.bf16.mxu0 %v6255
  %7555 = vmatmul.mubr.bf16.gmra.mxu0 %v6254
  %v7556 = vpop.f32.mrf.mxu0
  %v7557 = vadd.f32 0.0, %v7556
  %v7558 = vpop.f32.mrf.mxu0
  %v7559 = vpop.f32.mrf.mxu0
  %v7560 = vadd.f32 0.0, %v7559
  %v7561 = vpop.f32.mrf.mxu0
  %7562 = vdwg.mxu0
  %7563 = vmatprep.subr.bf16.mxu0 0
  %7564 = vmatpush1.bf16.msra.mxu0 %v7473
  %7565 = vmatprep.subr.bf16.mxu0 0
  %7566 = vmatpush1.bf16.msra.mxu0 %v7472
  %7567 = vmatprep.subr.bf16.mxu0 0
  %7568 = vmatpush1.bf16.msra.mxu0 %v7471
  %7569 = vmatprep.subr.bf16.mxu0 0
  %7570 = vmatpush1.bf16.msra.mxu0 %v7470
  %7571 = vmatprep.subr.bf16.mxu0 0
  %7572 = vmatpush1.bf16.msra.mxu0 %v7469
  %7573 = vmatprep.subr.bf16.mxu0 0
  %7574 = vmatpush1.bf16.msra.mxu0 %v7468
  %7575 = vmatprep.subr.bf16.mxu0 0
  %7576 = vmatpush1.bf16.msra.mxu0 %v7467
  %7577 = vmatprep.subr.bf16.mxu0 0
  %7578 = vmatpush1.bf16.msra.mxu0 %v7466
  %7579 = vmatprep.subr.bf16.mxu0 0
  %7580 = vmatpush2.bf16.msra.mxu0 0
  %7581 = vmatprep.subr.bf16.mxu0 0
  %7582 = vmatpush2.bf16.msra.mxu0 0
  %7583 = vmatprep.subr.bf16.mxu0 0
  %7584 = vmatpush2.bf16.msra.mxu0 0
  %7585 = vmatprep.subr.bf16.mxu0 0
  %7586 = vmatpush2.bf16.msra.mxu0 0
  %7587 = vmatprep.subr.bf16.mxu0 0
  %7588 = vmatpush2.bf16.msra.mxu0 0
  %7589 = vmatprep.subr.bf16.mxu0 0
  %7590 = vmatpush2.bf16.msra.mxu0 0
  %7591 = vmatprep.subr.bf16.mxu0 0
  %7592 = vmatpush2.bf16.msra.mxu0 0
  %7593 = vmatprep.subr.bf16.mxu0 0
  %7594 = vmatpush2.bf16.msra.mxu0 0
  %7595 = vmatprep.mubr.bf16.mxu0 0
  %7596 = vmatmul.mubr.bf16.gmra.mxu0 %v6247
  %v7597 = vpop.f32.mrf.mxu0
  %v7598 = vadd.f32 %v7533, %v7597
  %v7599 = vpop.f32.mrf.mxu0
  %v7600 = vpop.f32.mrf.mxu0
  %v7601 = vadd.f32 %v7536, %v7600
  %v7602 = vpop.f32.mrf.mxu0
  %7603 = vmatprep.mubr.bf16.mxu0 0
  %7604 = vmatmul.mubr.bf16.gmra.mxu0 %v6250
  %v7605 = vpop.f32.mrf.mxu0
  %v7606 = vadd.f32 %v7541, %v7605
  %v7607 = vpop.f32.mrf.mxu0
  %v7608 = vpop.f32.mrf.mxu0
  %v7609 = vadd.f32 %v7544, %v7608
  %v7610 = vpop.f32.mrf.mxu0
  %7611 = vmatprep.mubr.bf16.mxu0 0
  %7612 = vmatmul.mubr.bf16.gmra.mxu0 %v6253
  %v7613 = vpop.f32.mrf.mxu0
  %v7614 = vadd.f32 %v7549, %v7613
  %v7615 = vpop.f32.mrf.mxu0
  %v7616 = vpop.f32.mrf.mxu0
  %v7617 = vadd.f32 %v7552, %v7616
  %v7618 = vpop.f32.mrf.mxu0
  %7619 = vmatprep.mubr.bf16.mxu0 0
  %7620 = vmatmul.mubr.bf16.gmra.mxu0 %v6256
  %v7621 = vpop.f32.mrf.mxu0
  %v7622 = vadd.f32 %v7557, %v7621
  %v7623 = vpop.f32.mrf.mxu0
  %v7624 = vpop.f32.mrf.mxu0
  %v7625 = vadd.f32 %v7560, %v7624
  %v7626 = vpop.f32.mrf.mxu0
  %7627 = vdwg.mxu0
  %v7628 = vadd.f32 %v7297, %v7598
  %v7629 = vadd.f32 %v7298, %v7601
  %v7630 = vadd.f32 %v7299, %v7606
  %v7631 = vadd.f32 %v7300, %v7609
  %v7632 = vadd.f32 %v7301, %v7614
  %v7633 = vadd.f32 %v7302, %v7617
  %v7634 = vadd.f32 %v7303, %v7622
  %v7635 = vadd.f32 %v7304, %v7625
  %s7636 = scalar_lea.vmem %s5, 768
  %v7637 = vld [vmem:[%s7636] sm:$0xf]
  %v7638 = vld [vmem:[%s7636 + $0x4] sm:$0xf]
  %v7639 = vld [vmem:[%s7636 + $0x8] sm:$0xf]
  %v7640 = vld [vmem:[%s7636 + $0xc] sm:$0xf]
  %v7641 = vld [vmem:[%s7636 + $0x10] sm:$0xf]
  %v7642 = vld [vmem:[%s7636 + $0x14] sm:$0xf]
  %v7643 = vld [vmem:[%s7636 + $0x18] sm:$0xf]
  %v7644 = vld [vmem:[%s7636 + $0x1c] sm:$0xf]
  %v7645 = vld [vmem:[%s7636 + $0x20] sm:$0xf]
  %v7646 = vld [vmem:[%s7636 + $0x24] sm:$0xf]
  %v7647 = vld [vmem:[%s7636 + $0x28] sm:$0xf]
  %v7648 = vld [vmem:[%s7636 + $0x2c] sm:$0xf]
  %v7649 = vld [vmem:[%s7636 + $0x30] sm:$0xf]
  %v7650 = vld [vmem:[%s7636 + $0x34] sm:$0xf]
  %v7651 = vld [vmem:[%s7636 + $0x38] sm:$0xf]
  %v7652 = vld [vmem:[%s7636 + $0x3c] sm:$0xf]
  %v7653 = vld [vmem:[%s7636 + $0x40] sm:$0xf]
  %v7654 = vld [vmem:[%s7636 + $0x44] sm:$0xf]
  %v7655 = vld [vmem:[%s7636 + $0x48] sm:$0xf]
  %v7656 = vld [vmem:[%s7636 + $0x4c] sm:$0xf]
  %v7657 = vld [vmem:[%s7636 + $0x50] sm:$0xf]
  %v7658 = vld [vmem:[%s7636 + $0x54] sm:$0xf]
  %v7659 = vld [vmem:[%s7636 + $0x58] sm:$0xf]
  %v7660 = vld [vmem:[%s7636 + $0x5c] sm:$0xf]
  %v7661 = vld [vmem:[%s7636 + $0x60] sm:$0xf]
  %v7662 = vld [vmem:[%s7636 + $0x64] sm:$0xf]
  %v7663 = vld [vmem:[%s7636 + $0x68] sm:$0xf]
  %v7664 = vld [vmem:[%s7636 + $0x6c] sm:$0xf]
  %v7665 = vld [vmem:[%s7636 + $0x70] sm:$0xf]
  %v7666 = vld [vmem:[%s7636 + $0x74] sm:$0xf]
  %v7667 = vld [vmem:[%s7636 + $0x78] sm:$0xf]
  %v7668 = vld [vmem:[%s7636 + $0x7c] sm:$0xf]
  %v7669 = vld [vmem:[%s7636 + $0x80] sm:$0xf]
  %v7670 = vld [vmem:[%s7636 + $0x84] sm:$0xf]
  %v7671 = vld [vmem:[%s7636 + $0x88] sm:$0xf]
  %v7672 = vld [vmem:[%s7636 + $0x8c] sm:$0xf]
  %v7673 = vld [vmem:[%s7636 + $0x90] sm:$0xf]
  %v7674 = vld [vmem:[%s7636 + $0x94] sm:$0xf]
  %v7675 = vld [vmem:[%s7636 + $0x98] sm:$0xf]
  %v7676 = vld [vmem:[%s7636 + $0x9c] sm:$0xf]
  %v7677 = vld [vmem:[%s7636 + $0xa0] sm:$0xf]
  %v7678 = vld [vmem:[%s7636 + $0xa4] sm:$0xf]
  %v7679 = vld [vmem:[%s7636 + $0xa8] sm:$0xf]
  %v7680 = vld [vmem:[%s7636 + $0xac] sm:$0xf]
  %v7681 = vld [vmem:[%s7636 + $0xb0] sm:$0xf]
  %v7682 = vld [vmem:[%s7636 + $0xb4] sm:$0xf]
  %v7683 = vld [vmem:[%s7636 + $0xb8] sm:$0xf]
  %v7684 = vld [vmem:[%s7636 + $0xbc] sm:$0xf]
  %v7733 = vunpack.c.l.b16 %v7637
  %v7734 = vunpack.c.l.b16 %v7638
  %v7735 = vunpack.c.l.b16 %v7639
  %v7736 = vunpack.c.l.b16 %v7640
  %v7737 = vunpack.c.l.b16 %v7641
  %v7738 = vunpack.c.l.b16 %v7642
  %v7739 = vunpack.c.l.b16 %v7643
  %v7740 = vunpack.c.l.b16 %v7644
  %v7741 = vunpack.c.l.b16 %v7645
  %v7742 = vunpack.c.l.b16 %v7646
  %v7743 = vunpack.c.l.b16 %v7647
  %v7744 = vunpack.c.l.b16 %v7648
  %v7745 = vunpack.c.l.b16 %v7649
  %v7746 = vunpack.c.l.b16 %v7650
  %v7747 = vunpack.c.l.b16 %v7651
  %v7748 = vunpack.c.l.b16 %v7652
  %v7749 = vunpack.c.l.b16 %v7653
  %v7750 = vunpack.c.l.b16 %v7654
  %v7751 = vunpack.c.l.b16 %v7655
  %v7752 = vunpack.c.l.b16 %v7656
  %v7753 = vunpack.c.l.b16 %v7657
  %v7754 = vunpack.c.l.b16 %v7658
  %v7755 = vunpack.c.l.b16 %v7659
  %v7756 = vunpack.c.l.b16 %v7660
  %v7757 = vunpack.c.l.b16 %v7661
  %v7758 = vunpack.c.l.b16 %v7662
  %v7759 = vunpack.c.l.b16 %v7663
  %v7760 = vunpack.c.l.b16 %v7664
  %v7761 = vunpack.c.l.b16 %v7665
  %v7762 = vunpack.c.l.b16 %v7666
  %v7763 = vunpack.c.l.b16 %v7667
  %v7764 = vunpack.c.l.b16 %v7668
  %v7765 = vunpack.c.l.b16 %v7669
  %v7766 = vunpack.c.l.b16 %v7670
  %v7767 = vunpack.c.l.b16 %v7671
  %v7768 = vunpack.c.l.b16 %v7672
  %v7769 = vunpack.c.l.b16 %v7673
  %v7770 = vunpack.c.l.b16 %v7674
  %v7771 = vunpack.c.l.b16 %v7675
  %v7772 = vunpack.c.l.b16 %v7676
  %v7773 = vunpack.c.l.b16 %v7677
  %v7774 = vunpack.c.l.b16 %v7678
  %v7775 = vunpack.c.l.b16 %v7679
  %v7776 = vunpack.c.l.b16 %v7680
  %v7777 = vunpack.c.l.b16 %v7681
  %v7778 = vunpack.c.l.b16 %v7682
  %v7779 = vunpack.c.l.b16 %v7683
  %v7780 = vunpack.c.l.b16 %v7684
  %v7781 = vpack.c.b16 %v7734, %v7733
  %v7782 = vpack.c.b16 %v7736, %v7735
  %v7783 = vpack.c.b16 %v7738, %v7737
  %v7784 = vpack.c.b16 %v7740, %v7739
  %v7785 = vpack.c.b16 %v7742, %v7741
  %v7786 = vpack.c.b16 %v7744, %v7743
  %v7787 = vpack.c.b16 %v7746, %v7745
  %v7788 = vpack.c.b16 %v7748, %v7747
  %v7789 = vpack.c.b16 %v7750, %v7749
  %v7790 = vpack.c.b16 %v7752, %v7751
  %v7791 = vpack.c.b16 %v7754, %v7753
  %v7792 = vpack.c.b16 %v7756, %v7755
  %v7793 = vpack.c.b16 %v7758, %v7757
  %v7794 = vpack.c.b16 %v7760, %v7759
  %v7795 = vpack.c.b16 %v7762, %v7761
  %v7796 = vpack.c.b16 %v7764, %v7763
  %v7797 = vpack.c.b16 %v7766, %v7765
  %v7798 = vpack.c.b16 %v7768, %v7767
  %v7799 = vpack.c.b16 %v7770, %v7769
  %v7800 = vpack.c.b16 %v7772, %v7771
  %v7801 = vpack.c.b16 %v7774, %v7773
  %v7802 = vpack.c.b16 %v7776, %v7775
  %v7803 = vpack.c.b16 %v7778, %v7777
  %v7804 = vpack.c.b16 %v7780, %v7779
  %7829 = vmatprep.subr.bf16.mxu0 0
  %7830 = vmatpush1.bf16.msra.mxu0 %v7788
  %7831 = vmatprep.subr.bf16.mxu0 0
  %7832 = vmatpush1.bf16.msra.mxu0 %v7787
  %7833 = vmatprep.subr.bf16.mxu0 0
  %7834 = vmatpush1.bf16.msra.mxu0 %v7786
  %7835 = vmatprep.subr.bf16.mxu0 0
  %7836 = vmatpush1.bf16.msra.mxu0 %v7785
  %7837 = vmatprep.subr.bf16.mxu0 0
  %7838 = vmatpush1.bf16.msra.mxu0 %v7784
  %7839 = vmatprep.subr.bf16.mxu0 0
  %7840 = vmatpush1.bf16.msra.mxu0 %v7783
  %7841 = vmatprep.subr.bf16.mxu0 0
  %7842 = vmatpush1.bf16.msra.mxu0 %v7782
  %7843 = vmatprep.subr.bf16.mxu0 0
  %7844 = vmatpush1.bf16.msra.mxu0 %v7781
  %7845 = vmatprep.subr.bf16.mxu0 0
  %7846 = vmatpush2.bf16.msra.mxu0 %v7796
  %7847 = vmatprep.subr.bf16.mxu0 0
  %7848 = vmatpush2.bf16.msra.mxu0 %v7795
  %7849 = vmatprep.subr.bf16.mxu0 0
  %7850 = vmatpush2.bf16.msra.mxu0 %v7794
  %7851 = vmatprep.subr.bf16.mxu0 0
  %7852 = vmatpush2.bf16.msra.mxu0 %v7793
  %7853 = vmatprep.subr.bf16.mxu0 0
  %7854 = vmatpush2.bf16.msra.mxu0 %v7792
  %7855 = vmatprep.subr.bf16.mxu0 0
  %7856 = vmatpush2.bf16.msra.mxu0 %v7791
  %7857 = vmatprep.subr.bf16.mxu0 0
  %7858 = vmatpush2.bf16.msra.mxu0 %v7790
  %7859 = vmatprep.subr.bf16.mxu0 0
  %7860 = vmatpush2.bf16.msra.mxu0 %v7789
  %7861 = vmatprep.mubr.bf16.mxu0 %v6258
  %7862 = vmatmul.mubr.bf16.gmra.mxu0 %v6257
  %v7863 = vpop.f32.mrf.mxu0
  %v7864 = vadd.f32 0.0, %v7863
  %v7865 = vpop.f32.mrf.mxu0
  %v7866 = vpop.f32.mrf.mxu0
  %v7867 = vadd.f32 0.0, %v7866
  %v7868 = vpop.f32.mrf.mxu0
  %7869 = vmatprep.mubr.bf16.mxu0 %v6261
  %7870 = vmatmul.mubr.bf16.gmra.mxu0 %v6260
  %v7871 = vpop.f32.mrf.mxu0
  %v7872 = vadd.f32 0.0, %v7871
  %v7873 = vpop.f32.mrf.mxu0
  %v7874 = vpop.f32.mrf.mxu0
  %v7875 = vadd.f32 0.0, %v7874
  %v7876 = vpop.f32.mrf.mxu0
  %7877 = vmatprep.mubr.bf16.mxu0 %v6264
  %7878 = vmatmul.mubr.bf16.gmra.mxu0 %v6263
  %v7879 = vpop.f32.mrf.mxu0
  %v7880 = vadd.f32 0.0, %v7879
  %v7881 = vpop.f32.mrf.mxu0
  %v7882 = vpop.f32.mrf.mxu0
  %v7883 = vadd.f32 0.0, %v7882
  %v7884 = vpop.f32.mrf.mxu0
  %7885 = vmatprep.mubr.bf16.mxu0 %v6267
  %7886 = vmatmul.mubr.bf16.gmra.mxu0 %v6266
  %v7887 = vpop.f32.mrf.mxu0
  %v7888 = vadd.f32 0.0, %v7887
  %v7889 = vpop.f32.mrf.mxu0
  %v7890 = vpop.f32.mrf.mxu0
  %v7891 = vadd.f32 0.0, %v7890
  %v7892 = vpop.f32.mrf.mxu0
  %7893 = vdwg.mxu0
  %7894 = vmatprep.subr.bf16.mxu0 0
  %7895 = vmatpush1.bf16.msra.mxu0 %v7804
  %7896 = vmatprep.subr.bf16.mxu0 0
  %7897 = vmatpush1.bf16.msra.mxu0 %v7803
  %7898 = vmatprep.subr.bf16.mxu0 0
  %7899 = vmatpush1.bf16.msra.mxu0 %v7802
  %7900 = vmatprep.subr.bf16.mxu0 0
  %7901 = vmatpush1.bf16.msra.mxu0 %v7801
  %7902 = vmatprep.subr.bf16.mxu0 0
  %7903 = vmatpush1.bf16.msra.mxu0 %v7800
  %7904 = vmatprep.subr.bf16.mxu0 0
  %7905 = vmatpush1.bf16.msra.mxu0 %v7799
  %7906 = vmatprep.subr.bf16.mxu0 0
  %7907 = vmatpush1.bf16.msra.mxu0 %v7798
  %7908 = vmatprep.subr.bf16.mxu0 0
  %7909 = vmatpush1.bf16.msra.mxu0 %v7797
  %7910 = vmatprep.subr.bf16.mxu0 0
  %7911 = vmatpush2.bf16.msra.mxu0 0
  %7912 = vmatprep.subr.bf16.mxu0 0
  %7913 = vmatpush2.bf16.msra.mxu0 0
  %7914 = vmatprep.subr.bf16.mxu0 0
  %7915 = vmatpush2.bf16.msra.mxu0 0
  %7916 = vmatprep.subr.bf16.mxu0 0
  %7917 = vmatpush2.bf16.msra.mxu0 0
  %7918 = vmatprep.subr.bf16.mxu0 0
  %7919 = vmatpush2.bf16.msra.mxu0 0
  %7920 = vmatprep.subr.bf16.mxu0 0
  %7921 = vmatpush2.bf16.msra.mxu0 0
  %7922 = vmatprep.subr.bf16.mxu0 0
  %7923 = vmatpush2.bf16.msra.mxu0 0
  %7924 = vmatprep.subr.bf16.mxu0 0
  %7925 = vmatpush2.bf16.msra.mxu0 0
  %7926 = vmatprep.mubr.bf16.mxu0 0
  %7927 = vmatmul.mubr.bf16.gmra.mxu0 %v6259
  %v7928 = vpop.f32.mrf.mxu0
  %v7929 = vadd.f32 %v7864, %v7928
  %v7930 = vpop.f32.mrf.mxu0
  %v7931 = vpop.f32.mrf.mxu0
  %v7932 = vadd.f32 %v7867, %v7931
  %v7933 = vpop.f32.mrf.mxu0
  %7934 = vmatprep.mubr.bf16.mxu0 0
  %7935 = vmatmul.mubr.bf16.gmra.mxu0 %v6262
  %v7936 = vpop.f32.mrf.mxu0
  %v7937 = vadd.f32 %v7872, %v7936
  %v7938 = vpop.f32.mrf.mxu0
  %v7939 = vpop.f32.mrf.mxu0
  %v7940 = vadd.f32 %v7875, %v7939
  %v7941 = vpop.f32.mrf.mxu0
  %7942 = vmatprep.mubr.bf16.mxu0 0
  %7943 = vmatmul.mubr.bf16.gmra.mxu0 %v6265
  %v7944 = vpop.f32.mrf.mxu0
  %v7945 = vadd.f32 %v7880, %v7944
  %v7946 = vpop.f32.mrf.mxu0
  %v7947 = vpop.f32.mrf.mxu0
  %v7948 = vadd.f32 %v7883, %v7947
  %v7949 = vpop.f32.mrf.mxu0
  %7950 = vmatprep.mubr.bf16.mxu0 0
  %7951 = vmatmul.mubr.bf16.gmra.mxu0 %v6268
  %v7952 = vpop.f32.mrf.mxu0
  %v7953 = vadd.f32 %v7888, %v7952
  %v7954 = vpop.f32.mrf.mxu0
  %v7955 = vpop.f32.mrf.mxu0
  %v7956 = vadd.f32 %v7891, %v7955
  %v7957 = vpop.f32.mrf.mxu0
  %7958 = vdwg.mxu0
  %v7959 = vadd.f32 %v7628, %v7929
  %v7960 = vadd.f32 %v7629, %v7932
  %v7961 = vadd.f32 %v7630, %v7937
  %v7962 = vadd.f32 %v7631, %v7940
  %v7963 = vadd.f32 %v7632, %v7945
  %v7964 = vadd.f32 %v7633, %v7948
  %v7965 = vadd.f32 %v7634, %v7953
  %v7966 = vadd.f32 %v7635, %v7956
  %s7967 = scalar_lea.vmem %s5, 960
  %v7968 = vld [vmem:[%s7967] sm:$0xf]
  %v7969 = vld [vmem:[%s7967 + $0x4] sm:$0xf]
  %v7970 = vld [vmem:[%s7967 + $0x8] sm:$0xf]
  %v7971 = vld [vmem:[%s7967 + $0xc] sm:$0xf]
  %v7972 = vld [vmem:[%s7967 + $0x10] sm:$0xf]
  %v7973 = vld [vmem:[%s7967 + $0x14] sm:$0xf]
  %v7974 = vld [vmem:[%s7967 + $0x18] sm:$0xf]
  %v7975 = vld [vmem:[%s7967 + $0x1c] sm:$0xf]
  %v7976 = vld [vmem:[%s7967 + $0x20] sm:$0xf]
  %v7977 = vld [vmem:[%s7967 + $0x24] sm:$0xf]
  %v7978 = vld [vmem:[%s7967 + $0x28] sm:$0xf]
  %v7979 = vld [vmem:[%s7967 + $0x2c] sm:$0xf]
  %v7980 = vld [vmem:[%s7967 + $0x30] sm:$0xf]
  %v7981 = vld [vmem:[%s7967 + $0x34] sm:$0xf]
  %v7982 = vld [vmem:[%s7967 + $0x38] sm:$0xf]
  %v7983 = vld [vmem:[%s7967 + $0x3c] sm:$0xf]
  %v7984 = vld [vmem:[%s7967 + $0x40] sm:$0xf]
  %v7985 = vld [vmem:[%s7967 + $0x44] sm:$0xf]
  %v7986 = vld [vmem:[%s7967 + $0x48] sm:$0xf]
  %v7987 = vld [vmem:[%s7967 + $0x4c] sm:$0xf]
  %v7988 = vld [vmem:[%s7967 + $0x50] sm:$0xf]
  %v7989 = vld [vmem:[%s7967 + $0x54] sm:$0xf]
  %v7990 = vld [vmem:[%s7967 + $0x58] sm:$0xf]
  %v7991 = vld [vmem:[%s7967 + $0x5c] sm:$0xf]
  %v7992 = vld [vmem:[%s7967 + $0x60] sm:$0xf]
  %v7993 = vld [vmem:[%s7967 + $0x64] sm:$0xf]
  %v7994 = vld [vmem:[%s7967 + $0x68] sm:$0xf]
  %v7995 = vld [vmem:[%s7967 + $0x6c] sm:$0xf]
  %v7996 = vld [vmem:[%s7967 + $0x70] sm:$0xf]
  %v7997 = vld [vmem:[%s7967 + $0x74] sm:$0xf]
  %v7998 = vld [vmem:[%s7967 + $0x78] sm:$0xf]
  %v7999 = vld [vmem:[%s7967 + $0x7c] sm:$0xf]
  %v8000 = vld [vmem:[%s7967 + $0x80] sm:$0xf]
  %v8001 = vld [vmem:[%s7967 + $0x84] sm:$0xf]
  %v8002 = vld [vmem:[%s7967 + $0x88] sm:$0xf]
  %v8003 = vld [vmem:[%s7967 + $0x8c] sm:$0xf]
  %v8004 = vld [vmem:[%s7967 + $0x90] sm:$0xf]
  %v8005 = vld [vmem:[%s7967 + $0x94] sm:$0xf]
  %v8006 = vld [vmem:[%s7967 + $0x98] sm:$0xf]
  %v8007 = vld [vmem:[%s7967 + $0x9c] sm:$0xf]
  %v8008 = vld [vmem:[%s7967 + $0xa0] sm:$0xf]
  %v8009 = vld [vmem:[%s7967 + $0xa4] sm:$0xf]
  %v8010 = vld [vmem:[%s7967 + $0xa8] sm:$0xf]
  %v8011 = vld [vmem:[%s7967 + $0xac] sm:$0xf]
  %v8012 = vld [vmem:[%s7967 + $0xb0] sm:$0xf]
  %v8013 = vld [vmem:[%s7967 + $0xb4] sm:$0xf]
  %v8014 = vld [vmem:[%s7967 + $0xb8] sm:$0xf]
  %v8015 = vld [vmem:[%s7967 + $0xbc] sm:$0xf]
  %v8064 = vunpack.c.l.b16 %v7968
  %v8065 = vunpack.c.l.b16 %v7969
  %v8066 = vunpack.c.l.b16 %v7970
  %v8067 = vunpack.c.l.b16 %v7971
  %v8068 = vunpack.c.l.b16 %v7972
  %v8069 = vunpack.c.l.b16 %v7973
  %v8070 = vunpack.c.l.b16 %v7974
  %v8071 = vunpack.c.l.b16 %v7975
  %v8072 = vunpack.c.l.b16 %v7976
  %v8073 = vunpack.c.l.b16 %v7977
  %v8074 = vunpack.c.l.b16 %v7978
  %v8075 = vunpack.c.l.b16 %v7979
  %v8076 = vunpack.c.l.b16 %v7980
  %v8077 = vunpack.c.l.b16 %v7981
  %v8078 = vunpack.c.l.b16 %v7982
  %v8079 = vunpack.c.l.b16 %v7983
  %v8080 = vunpack.c.l.b16 %v7984
  %v8081 = vunpack.c.l.b16 %v7985
  %v8082 = vunpack.c.l.b16 %v7986
  %v8083 = vunpack.c.l.b16 %v7987
  %v8084 = vunpack.c.l.b16 %v7988
  %v8085 = vunpack.c.l.b16 %v7989
  %v8086 = vunpack.c.l.b16 %v7990
  %v8087 = vunpack.c.l.b16 %v7991
  %v8088 = vunpack.c.l.b16 %v7992
  %v8089 = vunpack.c.l.b16 %v7993
  %v8090 = vunpack.c.l.b16 %v7994
  %v8091 = vunpack.c.l.b16 %v7995
  %v8092 = vunpack.c.l.b16 %v7996
  %v8093 = vunpack.c.l.b16 %v7997
  %v8094 = vunpack.c.l.b16 %v7998
  %v8095 = vunpack.c.l.b16 %v7999
  %v8096 = vunpack.c.l.b16 %v8000
  %v8097 = vunpack.c.l.b16 %v8001
  %v8098 = vunpack.c.l.b16 %v8002
  %v8099 = vunpack.c.l.b16 %v8003
  %v8100 = vunpack.c.l.b16 %v8004
  %v8101 = vunpack.c.l.b16 %v8005
  %v8102 = vunpack.c.l.b16 %v8006
  %v8103 = vunpack.c.l.b16 %v8007
  %v8104 = vunpack.c.l.b16 %v8008
  %v8105 = vunpack.c.l.b16 %v8009
  %v8106 = vunpack.c.l.b16 %v8010
  %v8107 = vunpack.c.l.b16 %v8011
  %v8108 = vunpack.c.l.b16 %v8012
  %v8109 = vunpack.c.l.b16 %v8013
  %v8110 = vunpack.c.l.b16 %v8014
  %v8111 = vunpack.c.l.b16 %v8015
  %v8112 = vpack.c.b16 %v8065, %v8064
  %v8113 = vpack.c.b16 %v8067, %v8066
  %v8114 = vpack.c.b16 %v8069, %v8068
  %v8115 = vpack.c.b16 %v8071, %v8070
  %v8116 = vpack.c.b16 %v8073, %v8072
  %v8117 = vpack.c.b16 %v8075, %v8074
  %v8118 = vpack.c.b16 %v8077, %v8076
  %v8119 = vpack.c.b16 %v8079, %v8078
  %v8120 = vpack.c.b16 %v8081, %v8080
  %v8121 = vpack.c.b16 %v8083, %v8082
  %v8122 = vpack.c.b16 %v8085, %v8084
  %v8123 = vpack.c.b16 %v8087, %v8086
  %v8124 = vpack.c.b16 %v8089, %v8088
  %v8125 = vpack.c.b16 %v8091, %v8090
  %v8126 = vpack.c.b16 %v8093, %v8092
  %v8127 = vpack.c.b16 %v8095, %v8094
  %v8128 = vpack.c.b16 %v8097, %v8096
  %v8129 = vpack.c.b16 %v8099, %v8098
  %v8130 = vpack.c.b16 %v8101, %v8100
  %v8131 = vpack.c.b16 %v8103, %v8102
  %v8132 = vpack.c.b16 %v8105, %v8104
  %v8133 = vpack.c.b16 %v8107, %v8106
  %v8134 = vpack.c.b16 %v8109, %v8108
  %v8135 = vpack.c.b16 %v8111, %v8110
  %8160 = vmatprep.subr.bf16.mxu0 0
  %8161 = vmatpush1.bf16.msra.mxu0 %v8119
  %8162 = vmatprep.subr.bf16.mxu0 0
  %8163 = vmatpush1.bf16.msra.mxu0 %v8118
  %8164 = vmatprep.subr.bf16.mxu0 0
  %8165 = vmatpush1.bf16.msra.mxu0 %v8117
  %8166 = vmatprep.subr.bf16.mxu0 0
  %8167 = vmatpush1.bf16.msra.mxu0 %v8116
  %8168 = vmatprep.subr.bf16.mxu0 0
  %8169 = vmatpush1.bf16.msra.mxu0 %v8115
  %8170 = vmatprep.subr.bf16.mxu0 0
  %8171 = vmatpush1.bf16.msra.mxu0 %v8114
  %8172 = vmatprep.subr.bf16.mxu0 0
  %8173 = vmatpush1.bf16.msra.mxu0 %v8113
  %8174 = vmatprep.subr.bf16.mxu0 0
  %8175 = vmatpush1.bf16.msra.mxu0 %v8112
  %8176 = vmatprep.subr.bf16.mxu0 0
  %8177 = vmatpush2.bf16.msra.mxu0 %v8127
  %8178 = vmatprep.subr.bf16.mxu0 0
  %8179 = vmatpush2.bf16.msra.mxu0 %v8126
  %8180 = vmatprep.subr.bf16.mxu0 0
  %8181 = vmatpush2.bf16.msra.mxu0 %v8125
  %8182 = vmatprep.subr.bf16.mxu0 0
  %8183 = vmatpush2.bf16.msra.mxu0 %v8124
  %8184 = vmatprep.subr.bf16.mxu0 0
  %8185 = vmatpush2.bf16.msra.mxu0 %v8123
  %8186 = vmatprep.subr.bf16.mxu0 0
  %8187 = vmatpush2.bf16.msra.mxu0 %v8122
  %8188 = vmatprep.subr.bf16.mxu0 0
  %8189 = vmatpush2.bf16.msra.mxu0 %v8121
  %8190 = vmatprep.subr.bf16.mxu0 0
  %8191 = vmatpush2.bf16.msra.mxu0 %v8120
  %8192 = vmatprep.mubr.bf16.mxu0 %v6270
  %8193 = vmatmul.mubr.bf16.gmra.mxu0 %v6269
  %v8194 = vpop.f32.mrf.mxu0
  %v8195 = vadd.f32 0.0, %v8194
  %v8196 = vpop.f32.mrf.mxu0
  %v8197 = vpop.f32.mrf.mxu0
  %v8198 = vadd.f32 0.0, %v8197
  %v8199 = vpop.f32.mrf.mxu0
  %8200 = vmatprep.mubr.bf16.mxu0 %v6273
  %8201 = vmatmul.mubr.bf16.gmra.mxu0 %v6272
  %v8202 = vpop.f32.mrf.mxu0
  %v8203 = vadd.f32 0.0, %v8202
  %v8204 = vpop.f32.mrf.mxu0
  %v8205 = vpop.f32.mrf.mxu0
  %v8206 = vadd.f32 0.0, %v8205
  %v8207 = vpop.f32.mrf.mxu0
  %8208 = vmatprep.mubr.bf16.mxu0 %v6276
  %8209 = vmatmul.mubr.bf16.gmra.mxu0 %v6275
  %v8210 = vpop.f32.mrf.mxu0
  %v8211 = vadd.f32 0.0, %v8210
  %v8212 = vpop.f32.mrf.mxu0
  %v8213 = vpop.f32.mrf.mxu0
  %v8214 = vadd.f32 0.0, %v8213
  %v8215 = vpop.f32.mrf.mxu0
  %8216 = vmatprep.mubr.bf16.mxu0 %v6279
  %8217 = vmatmul.mubr.bf16.gmra.mxu0 %v6278
  %v8218 = vpop.f32.mrf.mxu0
  %v8219 = vadd.f32 0.0, %v8218
  %v8220 = vpop.f32.mrf.mxu0
  %v8221 = vpop.f32.mrf.mxu0
  %v8222 = vadd.f32 0.0, %v8221
  %v8223 = vpop.f32.mrf.mxu0
  %8224 = vdwg.mxu0
  %8225 = vmatprep.subr.bf16.mxu0 0
  %8226 = vmatpush1.bf16.msra.mxu0 %v8135
  %8227 = vmatprep.subr.bf16.mxu0 0
  %8228 = vmatpush1.bf16.msra.mxu0 %v8134
  %8229 = vmatprep.subr.bf16.mxu0 0
  %8230 = vmatpush1.bf16.msra.mxu0 %v8133
  %8231 = vmatprep.subr.bf16.mxu0 0
  %8232 = vmatpush1.bf16.msra.mxu0 %v8132
  %8233 = vmatprep.subr.bf16.mxu0 0
  %8234 = vmatpush1.bf16.msra.mxu0 %v8131
  %8235 = vmatprep.subr.bf16.mxu0 0
  %8236 = vmatpush1.bf16.msra.mxu0 %v8130
  %8237 = vmatprep.subr.bf16.mxu0 0
  %8238 = vmatpush1.bf16.msra.mxu0 %v8129
  %8239 = vmatprep.subr.bf16.mxu0 0
  %8240 = vmatpush1.bf16.msra.mxu0 %v8128
  %8241 = vmatprep.subr.bf16.mxu0 0
  %8242 = vmatpush2.bf16.msra.mxu0 0
  %8243 = vmatprep.subr.bf16.mxu0 0
  %8244 = vmatpush2.bf16.msra.mxu0 0
  %8245 = vmatprep.subr.bf16.mxu0 0
  %8246 = vmatpush2.bf16.msra.mxu0 0
  %8247 = vmatprep.subr.bf16.mxu0 0
  %8248 = vmatpush2.bf16.msra.mxu0 0
  %8249 = vmatprep.subr.bf16.mxu0 0
  %8250 = vmatpush2.bf16.msra.mxu0 0
  %8251 = vmatprep.subr.bf16.mxu0 0
  %8252 = vmatpush2.bf16.msra.mxu0 0
  %8253 = vmatprep.subr.bf16.mxu0 0
  %8254 = vmatpush2.bf16.msra.mxu0 0
  %8255 = vmatprep.subr.bf16.mxu0 0
  %8256 = vmatpush2.bf16.msra.mxu0 0
  %8257 = vmatprep.mubr.bf16.mxu0 0
  %8258 = vmatmul.mubr.bf16.gmra.mxu0 %v6271
  %v8259 = vpop.f32.mrf.mxu0
  %v8260 = vadd.f32 %v8195, %v8259
  %v8261 = vpop.f32.mrf.mxu0
  %v8262 = vpop.f32.mrf.mxu0
  %v8263 = vadd.f32 %v8198, %v8262
  %v8264 = vpop.f32.mrf.mxu0
  %8265 = vmatprep.mubr.bf16.mxu0 0
  %8266 = vmatmul.mubr.bf16.gmra.mxu0 %v6274
  %v8267 = vpop.f32.mrf.mxu0
  %v8268 = vadd.f32 %v8203, %v8267
  %v8269 = vpop.f32.mrf.mxu0
  %v8270 = vpop.f32.mrf.mxu0
  %v8271 = vadd.f32 %v8206, %v8270
  %v8272 = vpop.f32.mrf.mxu0
  %8273 = vmatprep.mubr.bf16.mxu0 0
  %8274 = vmatmul.mubr.bf16.gmra.mxu0 %v6277
  %v8275 = vpop.f32.mrf.mxu0
  %v8276 = vadd.f32 %v8211, %v8275
  %v8277 = vpop.f32.mrf.mxu0
  %v8278 = vpop.f32.mrf.mxu0
  %v8279 = vadd.f32 %v8214, %v8278
  %v8280 = vpop.f32.mrf.mxu0
  %8281 = vmatprep.mubr.bf16.mxu0 0
  %8282 = vmatmul.mubr.bf16.gmra.mxu0 %v6280
  %v8283 = vpop.f32.mrf.mxu0
  %v8284 = vadd.f32 %v8219, %v8283
  %v8285 = vpop.f32.mrf.mxu0
  %v8286 = vpop.f32.mrf.mxu0
  %v8287 = vadd.f32 %v8222, %v8286
  %v8288 = vpop.f32.mrf.mxu0
  %8289 = vdwg.mxu0
  %v8290 = vadd.f32 %v7959, %v8260
  %v8291 = vadd.f32 %v7960, %v8263
  %v8292 = vadd.f32 %v7961, %v8268
  %v8293 = vadd.f32 %v7962, %v8271
  %v8294 = vadd.f32 %v7963, %v8276
  %v8295 = vadd.f32 %v7964, %v8279
  %v8296 = vadd.f32 %v7965, %v8284
  %v8297 = vadd.f32 %v7966, %v8287
  %s8298 = scalar_lea.vmem %s5, 1152
  %v8299 = vld [vmem:[%s8298] sm:$0xf]
  %v8300 = vld [vmem:[%s8298 + $0x4] sm:$0xf]
  %v8301 = vld [vmem:[%s8298 + $0x8] sm:$0xf]
  %v8302 = vld [vmem:[%s8298 + $0xc] sm:$0xf]
  %v8303 = vld [vmem:[%s8298 + $0x10] sm:$0xf]
  %v8304 = vld [vmem:[%s8298 + $0x14] sm:$0xf]
  %v8305 = vld [vmem:[%s8298 + $0x18] sm:$0xf]
  %v8306 = vld [vmem:[%s8298 + $0x1c] sm:$0xf]
  %v8307 = vld [vmem:[%s8298 + $0x20] sm:$0xf]
  %v8308 = vld [vmem:[%s8298 + $0x24] sm:$0xf]
  %v8309 = vld [vmem:[%s8298 + $0x28] sm:$0xf]
  %v8310 = vld [vmem:[%s8298 + $0x2c] sm:$0xf]
  %v8311 = vld [vmem:[%s8298 + $0x30] sm:$0xf]
  %v8312 = vld [vmem:[%s8298 + $0x34] sm:$0xf]
  %v8313 = vld [vmem:[%s8298 + $0x38] sm:$0xf]
  %v8314 = vld [vmem:[%s8298 + $0x3c] sm:$0xf]
  %v8315 = vld [vmem:[%s8298 + $0x40] sm:$0xf]
  %v8316 = vld [vmem:[%s8298 + $0x44] sm:$0xf]
  %v8317 = vld [vmem:[%s8298 + $0x48] sm:$0xf]
  %v8318 = vld [vmem:[%s8298 + $0x4c] sm:$0xf]
  %v8319 = vld [vmem:[%s8298 + $0x50] sm:$0xf]
  %v8320 = vld [vmem:[%s8298 + $0x54] sm:$0xf]
  %v8321 = vld [vmem:[%s8298 + $0x58] sm:$0xf]
  %v8322 = vld [vmem:[%s8298 + $0x5c] sm:$0xf]
  %v8323 = vld [vmem:[%s8298 + $0x60] sm:$0xf]
  %v8324 = vld [vmem:[%s8298 + $0x64] sm:$0xf]
  %v8325 = vld [vmem:[%s8298 + $0x68] sm:$0xf]
  %v8326 = vld [vmem:[%s8298 + $0x6c] sm:$0xf]
  %v8327 = vld [vmem:[%s8298 + $0x70] sm:$0xf]
  %v8328 = vld [vmem:[%s8298 + $0x74] sm:$0xf]
  %v8329 = vld [vmem:[%s8298 + $0x78] sm:$0xf]
  %v8330 = vld [vmem:[%s8298 + $0x7c] sm:$0xf]
  %v8331 = vld [vmem:[%s8298 + $0x80] sm:$0xf]
  %v8332 = vld [vmem:[%s8298 + $0x84] sm:$0xf]
  %v8333 = vld [vmem:[%s8298 + $0x88] sm:$0xf]
  %v8334 = vld [vmem:[%s8298 + $0x8c] sm:$0xf]
  %v8335 = vld [vmem:[%s8298 + $0x90] sm:$0xf]
  %v8336 = vld [vmem:[%s8298 + $0x94] sm:$0xf]
  %v8337 = vld [vmem:[%s8298 + $0x98] sm:$0xf]
  %v8338 = vld [vmem:[%s8298 + $0x9c] sm:$0xf]
  %v8339 = vld [vmem:[%s8298 + $0xa0] sm:$0xf]
  %v8340 = vld [vmem:[%s8298 + $0xa4] sm:$0xf]
  %v8341 = vld [vmem:[%s8298 + $0xa8] sm:$0xf]
  %v8342 = vld [vmem:[%s8298 + $0xac] sm:$0xf]
  %v8343 = vld [vmem:[%s8298 + $0xb0] sm:$0xf]
  %v8344 = vld [vmem:[%s8298 + $0xb4] sm:$0xf]
  %v8345 = vld [vmem:[%s8298 + $0xb8] sm:$0xf]
  %v8346 = vld [vmem:[%s8298 + $0xbc] sm:$0xf]
  %v8395 = vunpack.c.l.b16 %v8299
  %v8396 = vunpack.c.l.b16 %v8300
  %v8397 = vunpack.c.l.b16 %v8301
  %v8398 = vunpack.c.l.b16 %v8302
  %v8399 = vunpack.c.l.b16 %v8303
  %v8400 = vunpack.c.l.b16 %v8304
  %v8401 = vunpack.c.l.b16 %v8305
  %v8402 = vunpack.c.l.b16 %v8306
  %v8403 = vunpack.c.l.b16 %v8307
  %v8404 = vunpack.c.l.b16 %v8308
  %v8405 = vunpack.c.l.b16 %v8309
  %v8406 = vunpack.c.l.b16 %v8310
  %v8407 = vunpack.c.l.b16 %v8311
  %v8408 = vunpack.c.l.b16 %v8312
  %v8409 = vunpack.c.l.b16 %v8313
  %v8410 = vunpack.c.l.b16 %v8314
  %v8411 = vunpack.c.l.b16 %v8315
  %v8412 = vunpack.c.l.b16 %v8316
  %v8413 = vunpack.c.l.b16 %v8317
  %v8414 = vunpack.c.l.b16 %v8318
  %v8415 = vunpack.c.l.b16 %v8319
  %v8416 = vunpack.c.l.b16 %v8320
  %v8417 = vunpack.c.l.b16 %v8321
  %v8418 = vunpack.c.l.b16 %v8322
  %v8419 = vunpack.c.l.b16 %v8323
  %v8420 = vunpack.c.l.b16 %v8324
  %v8421 = vunpack.c.l.b16 %v8325
  %v8422 = vunpack.c.l.b16 %v8326
  %v8423 = vunpack.c.l.b16 %v8327
  %v8424 = vunpack.c.l.b16 %v8328
  %v8425 = vunpack.c.l.b16 %v8329
  %v8426 = vunpack.c.l.b16 %v8330
  %v8427 = vunpack.c.l.b16 %v8331
  %v8428 = vunpack.c.l.b16 %v8332
  %v8429 = vunpack.c.l.b16 %v8333
  %v8430 = vunpack.c.l.b16 %v8334
  %v8431 = vunpack.c.l.b16 %v8335
  %v8432 = vunpack.c.l.b16 %v8336
  %v8433 = vunpack.c.l.b16 %v8337
  %v8434 = vunpack.c.l.b16 %v8338
  %v8435 = vunpack.c.l.b16 %v8339
  %v8436 = vunpack.c.l.b16 %v8340
  %v8437 = vunpack.c.l.b16 %v8341
  %v8438 = vunpack.c.l.b16 %v8342
  %v8439 = vunpack.c.l.b16 %v8343
  %v8440 = vunpack.c.l.b16 %v8344
  %v8441 = vunpack.c.l.b16 %v8345
  %v8442 = vunpack.c.l.b16 %v8346
  %v8443 = vpack.c.b16 %v8396, %v8395
  %v8444 = vpack.c.b16 %v8398, %v8397
  %v8445 = vpack.c.b16 %v8400, %v8399
  %v8446 = vpack.c.b16 %v8402, %v8401
  %v8447 = vpack.c.b16 %v8404, %v8403
  %v8448 = vpack.c.b16 %v8406, %v8405
  %v8449 = vpack.c.b16 %v8408, %v8407
  %v8450 = vpack.c.b16 %v8410, %v8409
  %v8451 = vpack.c.b16 %v8412, %v8411
  %v8452 = vpack.c.b16 %v8414, %v8413
  %v8453 = vpack.c.b16 %v8416, %v8415
  %v8454 = vpack.c.b16 %v8418, %v8417
  %v8455 = vpack.c.b16 %v8420, %v8419
  %v8456 = vpack.c.b16 %v8422, %v8421
  %v8457 = vpack.c.b16 %v8424, %v8423
  %v8458 = vpack.c.b16 %v8426, %v8425
  %v8459 = vpack.c.b16 %v8428, %v8427
  %v8460 = vpack.c.b16 %v8430, %v8429
  %v8461 = vpack.c.b16 %v8432, %v8431
  %v8462 = vpack.c.b16 %v8434, %v8433
  %v8463 = vpack.c.b16 %v8436, %v8435
  %v8464 = vpack.c.b16 %v8438, %v8437
  %v8465 = vpack.c.b16 %v8440, %v8439
  %v8466 = vpack.c.b16 %v8442, %v8441
  %8491 = vmatprep.subr.bf16.mxu0 0
  %8492 = vmatpush1.bf16.msra.mxu0 %v8450
  %8493 = vmatprep.subr.bf16.mxu0 0
  %8494 = vmatpush1.bf16.msra.mxu0 %v8449
  %8495 = vmatprep.subr.bf16.mxu0 0
  %8496 = vmatpush1.bf16.msra.mxu0 %v8448
  %8497 = vmatprep.subr.bf16.mxu0 0
  %8498 = vmatpush1.bf16.msra.mxu0 %v8447
  %8499 = vmatprep.subr.bf16.mxu0 0
  %8500 = vmatpush1.bf16.msra.mxu0 %v8446
  %8501 = vmatprep.subr.bf16.mxu0 0
  %8502 = vmatpush1.bf16.msra.mxu0 %v8445
  %8503 = vmatprep.subr.bf16.mxu0 0
  %8504 = vmatpush1.bf16.msra.mxu0 %v8444
  %8505 = vmatprep.subr.bf16.mxu0 0
  %8506 = vmatpush1.bf16.msra.mxu0 %v8443
  %8507 = vmatprep.subr.bf16.mxu0 0
  %8508 = vmatpush2.bf16.msra.mxu0 %v8458
  %8509 = vmatprep.subr.bf16.mxu0 0
  %8510 = vmatpush2.bf16.msra.mxu0 %v8457
  %8511 = vmatprep.subr.bf16.mxu0 0
  %8512 = vmatpush2.bf16.msra.mxu0 %v8456
  %8513 = vmatprep.subr.bf16.mxu0 0
  %8514 = vmatpush2.bf16.msra.mxu0 %v8455
  %8515 = vmatprep.subr.bf16.mxu0 0
  %8516 = vmatpush2.bf16.msra.mxu0 %v8454
  %8517 = vmatprep.subr.bf16.mxu0 0
  %8518 = vmatpush2.bf16.msra.mxu0 %v8453
  %8519 = vmatprep.subr.bf16.mxu0 0
  %8520 = vmatpush2.bf16.msra.mxu0 %v8452
  %8521 = vmatprep.subr.bf16.mxu0 0
  %8522 = vmatpush2.bf16.msra.mxu0 %v8451
  %8523 = vmatprep.mubr.bf16.mxu0 %v6282
  %8524 = vmatmul.mubr.bf16.gmra.mxu0 %v6281
  %v8525 = vpop.f32.mrf.mxu0
  %v8526 = vadd.f32 0.0, %v8525
  %v8527 = vpop.f32.mrf.mxu0
  %v8528 = vpop.f32.mrf.mxu0
  %v8529 = vadd.f32 0.0, %v8528
  %v8530 = vpop.f32.mrf.mxu0
  %8531 = vmatprep.mubr.bf16.mxu0 %v6285
  %8532 = vmatmul.mubr.bf16.gmra.mxu0 %v6284
  %v8533 = vpop.f32.mrf.mxu0
  %v8534 = vadd.f32 0.0, %v8533
  %v8535 = vpop.f32.mrf.mxu0
  %v8536 = vpop.f32.mrf.mxu0
  %v8537 = vadd.f32 0.0, %v8536
  %v8538 = vpop.f32.mrf.mxu0
  %8539 = vmatprep.mubr.bf16.mxu0 %v6288
  %8540 = vmatmul.mubr.bf16.gmra.mxu0 %v6287
  %v8541 = vpop.f32.mrf.mxu0
  %v8542 = vadd.f32 0.0, %v8541
  %v8543 = vpop.f32.mrf.mxu0
  %v8544 = vpop.f32.mrf.mxu0
  %v8545 = vadd.f32 0.0, %v8544
  %v8546 = vpop.f32.mrf.mxu0
  %8547 = vmatprep.mubr.bf16.mxu0 %v6291
  %8548 = vmatmul.mubr.bf16.gmra.mxu0 %v6290
  %v8549 = vpop.f32.mrf.mxu0
  %v8550 = vadd.f32 0.0, %v8549
  %v8551 = vpop.f32.mrf.mxu0
  %v8552 = vpop.f32.mrf.mxu0
  %v8553 = vadd.f32 0.0, %v8552
  %v8554 = vpop.f32.mrf.mxu0
  %8555 = vdwg.mxu0
  %8556 = vmatprep.subr.bf16.mxu0 0
  %8557 = vmatpush1.bf16.msra.mxu0 %v8466
  %8558 = vmatprep.subr.bf16.mxu0 0
  %8559 = vmatpush1.bf16.msra.mxu0 %v8465
  %8560 = vmatprep.subr.bf16.mxu0 0
  %8561 = vmatpush1.bf16.msra.mxu0 %v8464
  %8562 = vmatprep.subr.bf16.mxu0 0
  %8563 = vmatpush1.bf16.msra.mxu0 %v8463
  %8564 = vmatprep.subr.bf16.mxu0 0
  %8565 = vmatpush1.bf16.msra.mxu0 %v8462
  %8566 = vmatprep.subr.bf16.mxu0 0
  %8567 = vmatpush1.bf16.msra.mxu0 %v8461
  %8568 = vmatprep.subr.bf16.mxu0 0
  %8569 = vmatpush1.bf16.msra.mxu0 %v8460
  %8570 = vmatprep.subr.bf16.mxu0 0
  %8571 = vmatpush1.bf16.msra.mxu0 %v8459
  %8572 = vmatprep.subr.bf16.mxu0 0
  %8573 = vmatpush2.bf16.msra.mxu0 0
  %8574 = vmatprep.subr.bf16.mxu0 0
  %8575 = vmatpush2.bf16.msra.mxu0 0
  %8576 = vmatprep.subr.bf16.mxu0 0
  %8577 = vmatpush2.bf16.msra.mxu0 0
  %8578 = vmatprep.subr.bf16.mxu0 0
  %8579 = vmatpush2.bf16.msra.mxu0 0
  %8580 = vmatprep.subr.bf16.mxu0 0
  %8581 = vmatpush2.bf16.msra.mxu0 0
  %8582 = vmatprep.subr.bf16.mxu0 0
  %8583 = vmatpush2.bf16.msra.mxu0 0
  %8584 = vmatprep.subr.bf16.mxu0 0
  %8585 = vmatpush2.bf16.msra.mxu0 0
  %8586 = vmatprep.subr.bf16.mxu0 0
  %8587 = vmatpush2.bf16.msra.mxu0 0
  %8588 = vmatprep.mubr.bf16.mxu0 0
  %8589 = vmatmul.mubr.bf16.gmra.mxu0 %v6283
  %v8590 = vpop.f32.mrf.mxu0
  %v8591 = vadd.f32 %v8526, %v8590
  %v8592 = vpop.f32.mrf.mxu0
  %v8593 = vpop.f32.mrf.mxu0
  %v8594 = vadd.f32 %v8529, %v8593
  %v8595 = vpop.f32.mrf.mxu0
  %8596 = vmatprep.mubr.bf16.mxu0 0
  %8597 = vmatmul.mubr.bf16.gmra.mxu0 %v6286
  %v8598 = vpop.f32.mrf.mxu0
  %v8599 = vadd.f32 %v8534, %v8598
  %v8600 = vpop.f32.mrf.mxu0
  %v8601 = vpop.f32.mrf.mxu0
  %v8602 = vadd.f32 %v8537, %v8601
  %v8603 = vpop.f32.mrf.mxu0
  %8604 = vmatprep.mubr.bf16.mxu0 0
  %8605 = vmatmul.mubr.bf16.gmra.mxu0 %v6289
  %v8606 = vpop.f32.mrf.mxu0
  %v8607 = vadd.f32 %v8542, %v8606
  %v8608 = vpop.f32.mrf.mxu0
  %v8609 = vpop.f32.mrf.mxu0
  %v8610 = vadd.f32 %v8545, %v8609
  %v8611 = vpop.f32.mrf.mxu0
  %8612 = vmatprep.mubr.bf16.mxu0 0
  %8613 = vmatmul.mubr.bf16.gmra.mxu0 %v6292
  %v8614 = vpop.f32.mrf.mxu0
  %v8615 = vadd.f32 %v8550, %v8614
  %v8616 = vpop.f32.mrf.mxu0
  %v8617 = vpop.f32.mrf.mxu0
  %v8618 = vadd.f32 %v8553, %v8617
  %v8619 = vpop.f32.mrf.mxu0
  %8620 = vdwg.mxu0
  %v8621 = vadd.f32 %v8290, %v8591
  %v8622 = vadd.f32 %v8291, %v8594
  %v8623 = vadd.f32 %v8292, %v8599
  %v8624 = vadd.f32 %v8293, %v8602
  %v8625 = vadd.f32 %v8294, %v8607
  %v8626 = vadd.f32 %v8295, %v8610
  %v8627 = vadd.f32 %v8296, %v8615
  %v8628 = vadd.f32 %v8297, %v8618
  %s8629 = scalar_lea.vmem %s5, 1344
  %v8630 = vld [vmem:[%s8629] sm:$0xf]
  %v8631 = vld [vmem:[%s8629 + $0x4] sm:$0xf]
  %v8632 = vld [vmem:[%s8629 + $0x8] sm:$0xf]
  %v8633 = vld [vmem:[%s8629 + $0xc] sm:$0xf]
  %v8634 = vld [vmem:[%s8629 + $0x10] sm:$0xf]
  %v8635 = vld [vmem:[%s8629 + $0x14] sm:$0xf]
  %v8636 = vld [vmem:[%s8629 + $0x18] sm:$0xf]
  %v8637 = vld [vmem:[%s8629 + $0x1c] sm:$0xf]
  %v8638 = vld [vmem:[%s8629 + $0x20] sm:$0xf]
  %v8639 = vld [vmem:[%s8629 + $0x24] sm:$0xf]
  %v8640 = vld [vmem:[%s8629 + $0x28] sm:$0xf]
  %v8641 = vld [vmem:[%s8629 + $0x2c] sm:$0xf]
  %v8642 = vld [vmem:[%s8629 + $0x30] sm:$0xf]
  %v8643 = vld [vmem:[%s8629 + $0x34] sm:$0xf]
  %v8644 = vld [vmem:[%s8629 + $0x38] sm:$0xf]
  %v8645 = vld [vmem:[%s8629 + $0x3c] sm:$0xf]
  %v8646 = vld [vmem:[%s8629 + $0x40] sm:$0xf]
  %v8647 = vld [vmem:[%s8629 + $0x44] sm:$0xf]
  %v8648 = vld [vmem:[%s8629 + $0x48] sm:$0xf]
  %v8649 = vld [vmem:[%s8629 + $0x4c] sm:$0xf]
  %v8650 = vld [vmem:[%s8629 + $0x50] sm:$0xf]
  %v8651 = vld [vmem:[%s8629 + $0x54] sm:$0xf]
  %v8652 = vld [vmem:[%s8629 + $0x58] sm:$0xf]
  %v8653 = vld [vmem:[%s8629 + $0x5c] sm:$0xf]
  %v8654 = vld [vmem:[%s8629 + $0x60] sm:$0xf]
  %v8655 = vld [vmem:[%s8629 + $0x64] sm:$0xf]
  %v8656 = vld [vmem:[%s8629 + $0x68] sm:$0xf]
  %v8657 = vld [vmem:[%s8629 + $0x6c] sm:$0xf]
  %v8658 = vld [vmem:[%s8629 + $0x70] sm:$0xf]
  %v8659 = vld [vmem:[%s8629 + $0x74] sm:$0xf]
  %v8660 = vld [vmem:[%s8629 + $0x78] sm:$0xf]
  %v8661 = vld [vmem:[%s8629 + $0x7c] sm:$0xf]
  %v8662 = vld [vmem:[%s8629 + $0x80] sm:$0xf]
  %v8663 = vld [vmem:[%s8629 + $0x84] sm:$0xf]
  %v8664 = vld [vmem:[%s8629 + $0x88] sm:$0xf]
  %v8665 = vld [vmem:[%s8629 + $0x8c] sm:$0xf]
  %v8666 = vld [vmem:[%s8629 + $0x90] sm:$0xf]
  %v8667 = vld [vmem:[%s8629 + $0x94] sm:$0xf]
  %v8668 = vld [vmem:[%s8629 + $0x98] sm:$0xf]
  %v8669 = vld [vmem:[%s8629 + $0x9c] sm:$0xf]
  %v8670 = vld [vmem:[%s8629 + $0xa0] sm:$0xf]
  %v8671 = vld [vmem:[%s8629 + $0xa4] sm:$0xf]
  %v8672 = vld [vmem:[%s8629 + $0xa8] sm:$0xf]
  %v8673 = vld [vmem:[%s8629 + $0xac] sm:$0xf]
  %v8674 = vld [vmem:[%s8629 + $0xb0] sm:$0xf]
  %v8675 = vld [vmem:[%s8629 + $0xb4] sm:$0xf]
  %v8676 = vld [vmem:[%s8629 + $0xb8] sm:$0xf]
  %v8677 = vld [vmem:[%s8629 + $0xbc] sm:$0xf]
  %v8726 = vunpack.c.l.b16 %v8630
  %v8727 = vunpack.c.l.b16 %v8631
  %v8728 = vunpack.c.l.b16 %v8632
  %v8729 = vunpack.c.l.b16 %v8633
  %v8730 = vunpack.c.l.b16 %v8634
  %v8731 = vunpack.c.l.b16 %v8635
  %v8732 = vunpack.c.l.b16 %v8636
  %v8733 = vunpack.c.l.b16 %v8637
  %v8734 = vunpack.c.l.b16 %v8638
  %v8735 = vunpack.c.l.b16 %v8639
  %v8736 = vunpack.c.l.b16 %v8640
  %v8737 = vunpack.c.l.b16 %v8641
  %v8738 = vunpack.c.l.b16 %v8642
  %v8739 = vunpack.c.l.b16 %v8643
  %v8740 = vunpack.c.l.b16 %v8644
  %v8741 = vunpack.c.l.b16 %v8645
  %v8742 = vunpack.c.l.b16 %v8646
  %v8743 = vunpack.c.l.b16 %v8647
  %v8744 = vunpack.c.l.b16 %v8648
  %v8745 = vunpack.c.l.b16 %v8649
  %v8746 = vunpack.c.l.b16 %v8650
  %v8747 = vunpack.c.l.b16 %v8651
  %v8748 = vunpack.c.l.b16 %v8652
  %v8749 = vunpack.c.l.b16 %v8653
  %v8750 = vunpack.c.l.b16 %v8654
  %v8751 = vunpack.c.l.b16 %v8655
  %v8752 = vunpack.c.l.b16 %v8656
  %v8753 = vunpack.c.l.b16 %v8657
  %v8754 = vunpack.c.l.b16 %v8658
  %v8755 = vunpack.c.l.b16 %v8659
  %v8756 = vunpack.c.l.b16 %v8660
  %v8757 = vunpack.c.l.b16 %v8661
  %v8758 = vunpack.c.l.b16 %v8662
  %v8759 = vunpack.c.l.b16 %v8663
  %v8760 = vunpack.c.l.b16 %v8664
  %v8761 = vunpack.c.l.b16 %v8665
  %v8762 = vunpack.c.l.b16 %v8666
  %v8763 = vunpack.c.l.b16 %v8667
  %v8764 = vunpack.c.l.b16 %v8668
  %v8765 = vunpack.c.l.b16 %v8669
  %v8766 = vunpack.c.l.b16 %v8670
  %v8767 = vunpack.c.l.b16 %v8671
  %v8768 = vunpack.c.l.b16 %v8672
  %v8769 = vunpack.c.l.b16 %v8673
  %v8770 = vunpack.c.l.b16 %v8674
  %v8771 = vunpack.c.l.b16 %v8675
  %v8772 = vunpack.c.l.b16 %v8676
  %v8773 = vunpack.c.l.b16 %v8677
  %v8774 = vpack.c.b16 %v8727, %v8726
  %v8775 = vpack.c.b16 %v8729, %v8728
  %v8776 = vpack.c.b16 %v8731, %v8730
  %v8777 = vpack.c.b16 %v8733, %v8732
  %v8778 = vpack.c.b16 %v8735, %v8734
  %v8779 = vpack.c.b16 %v8737, %v8736
  %v8780 = vpack.c.b16 %v8739, %v8738
  %v8781 = vpack.c.b16 %v8741, %v8740
  %v8782 = vpack.c.b16 %v8743, %v8742
  %v8783 = vpack.c.b16 %v8745, %v8744
  %v8784 = vpack.c.b16 %v8747, %v8746
  %v8785 = vpack.c.b16 %v8749, %v8748
  %v8786 = vpack.c.b16 %v8751, %v8750
  %v8787 = vpack.c.b16 %v8753, %v8752
  %v8788 = vpack.c.b16 %v8755, %v8754
  %v8789 = vpack.c.b16 %v8757, %v8756
  %v8790 = vpack.c.b16 %v8759, %v8758
  %v8791 = vpack.c.b16 %v8761, %v8760
  %v8792 = vpack.c.b16 %v8763, %v8762
  %v8793 = vpack.c.b16 %v8765, %v8764
  %v8794 = vpack.c.b16 %v8767, %v8766
  %v8795 = vpack.c.b16 %v8769, %v8768
  %v8796 = vpack.c.b16 %v8771, %v8770
  %v8797 = vpack.c.b16 %v8773, %v8772
  %8822 = vmatprep.subr.bf16.mxu0 0
  %8823 = vmatpush1.bf16.msra.mxu0 %v8781
  %8824 = vmatprep.subr.bf16.mxu0 0
  %8825 = vmatpush1.bf16.msra.mxu0 %v8780
  %8826 = vmatprep.subr.bf16.mxu0 0
  %8827 = vmatpush1.bf16.msra.mxu0 %v8779
  %8828 = vmatprep.subr.bf16.mxu0 0
  %8829 = vmatpush1.bf16.msra.mxu0 %v8778
  %8830 = vmatprep.subr.bf16.mxu0 0
  %8831 = vmatpush1.bf16.msra.mxu0 %v8777
  %8832 = vmatprep.subr.bf16.mxu0 0
  %8833 = vmatpush1.bf16.msra.mxu0 %v8776
  %8834 = vmatprep.subr.bf16.mxu0 0
  %8835 = vmatpush1.bf16.msra.mxu0 %v8775
  %8836 = vmatprep.subr.bf16.mxu0 0
  %8837 = vmatpush1.bf16.msra.mxu0 %v8774
  %8838 = vmatprep.subr.bf16.mxu0 0
  %8839 = vmatpush2.bf16.msra.mxu0 %v8789
  %8840 = vmatprep.subr.bf16.mxu0 0
  %8841 = vmatpush2.bf16.msra.mxu0 %v8788
  %8842 = vmatprep.subr.bf16.mxu0 0
  %8843 = vmatpush2.bf16.msra.mxu0 %v8787
  %8844 = vmatprep.subr.bf16.mxu0 0
  %8845 = vmatpush2.bf16.msra.mxu0 %v8786
  %8846 = vmatprep.subr.bf16.mxu0 0
  %8847 = vmatpush2.bf16.msra.mxu0 %v8785
  %8848 = vmatprep.subr.bf16.mxu0 0
  %8849 = vmatpush2.bf16.msra.mxu0 %v8784
  %8850 = vmatprep.subr.bf16.mxu0 0
  %8851 = vmatpush2.bf16.msra.mxu0 %v8783
  %8852 = vmatprep.subr.bf16.mxu0 0
  %8853 = vmatpush2.bf16.msra.mxu0 %v8782
  %8854 = vmatprep.mubr.bf16.mxu0 %v6294
  %8855 = vmatmul.mubr.bf16.gmra.mxu0 %v6293
  %v8856 = vpop.f32.mrf.mxu0
  %v8857 = vadd.f32 0.0, %v8856
  %v8858 = vpop.f32.mrf.mxu0
  %v8859 = vpop.f32.mrf.mxu0
  %v8860 = vadd.f32 0.0, %v8859
  %v8861 = vpop.f32.mrf.mxu0
  %8862 = vmatprep.mubr.bf16.mxu0 %v6297
  %8863 = vmatmul.mubr.bf16.gmra.mxu0 %v6296
  %v8864 = vpop.f32.mrf.mxu0
  %v8865 = vadd.f32 0.0, %v8864
  %v8866 = vpop.f32.mrf.mxu0
  %v8867 = vpop.f32.mrf.mxu0
  %v8868 = vadd.f32 0.0, %v8867
  %v8869 = vpop.f32.mrf.mxu0
  %8870 = vmatprep.mubr.bf16.mxu0 %v6300
  %8871 = vmatmul.mubr.bf16.gmra.mxu0 %v6299
  %v8872 = vpop.f32.mrf.mxu0
  %v8873 = vadd.f32 0.0, %v8872
  %v8874 = vpop.f32.mrf.mxu0
  %v8875 = vpop.f32.mrf.mxu0
  %v8876 = vadd.f32 0.0, %v8875
  %v8877 = vpop.f32.mrf.mxu0
  %8878 = vmatprep.mubr.bf16.mxu0 %v6303
  %8879 = vmatmul.mubr.bf16.gmra.mxu0 %v6302
  %v8880 = vpop.f32.mrf.mxu0
  %v8881 = vadd.f32 0.0, %v8880
  %v8882 = vpop.f32.mrf.mxu0
  %v8883 = vpop.f32.mrf.mxu0
  %v8884 = vadd.f32 0.0, %v8883
  %v8885 = vpop.f32.mrf.mxu0
  %8886 = vdwg.mxu0
  %8887 = vmatprep.subr.bf16.mxu0 0
  %8888 = vmatpush1.bf16.msra.mxu0 %v8797
  %8889 = vmatprep.subr.bf16.mxu0 0
  %8890 = vmatpush1.bf16.msra.mxu0 %v8796
  %8891 = vmatprep.subr.bf16.mxu0 0
  %8892 = vmatpush1.bf16.msra.mxu0 %v8795
  %8893 = vmatprep.subr.bf16.mxu0 0
  %8894 = vmatpush1.bf16.msra.mxu0 %v8794
  %8895 = vmatprep.subr.bf16.mxu0 0
  %8896 = vmatpush1.bf16.msra.mxu0 %v8793
  %8897 = vmatprep.subr.bf16.mxu0 0
  %8898 = vmatpush1.bf16.msra.mxu0 %v8792
  %8899 = vmatprep.subr.bf16.mxu0 0
  %8900 = vmatpush1.bf16.msra.mxu0 %v8791
  %8901 = vmatprep.subr.bf16.mxu0 0
  %8902 = vmatpush1.bf16.msra.mxu0 %v8790
  %8903 = vmatprep.subr.bf16.mxu0 0
  %8904 = vmatpush2.bf16.msra.mxu0 0
  %8905 = vmatprep.subr.bf16.mxu0 0
  %8906 = vmatpush2.bf16.msra.mxu0 0
  %8907 = vmatprep.subr.bf16.mxu0 0
  %8908 = vmatpush2.bf16.msra.mxu0 0
  %8909 = vmatprep.subr.bf16.mxu0 0
  %8910 = vmatpush2.bf16.msra.mxu0 0
  %8911 = vmatprep.subr.bf16.mxu0 0
  %8912 = vmatpush2.bf16.msra.mxu0 0
  %8913 = vmatprep.subr.bf16.mxu0 0
  %8914 = vmatpush2.bf16.msra.mxu0 0
  %8915 = vmatprep.subr.bf16.mxu0 0
  %8916 = vmatpush2.bf16.msra.mxu0 0
  %8917 = vmatprep.subr.bf16.mxu0 0
  %8918 = vmatpush2.bf16.msra.mxu0 0
  %8919 = vmatprep.mubr.bf16.mxu0 0
  %8920 = vmatmul.mubr.bf16.gmra.mxu0 %v6295
  %v8921 = vpop.f32.mrf.mxu0
  %v8922 = vadd.f32 %v8857, %v8921
  %v8923 = vpop.f32.mrf.mxu0
  %v8924 = vpop.f32.mrf.mxu0
  %v8925 = vadd.f32 %v8860, %v8924
  %v8926 = vpop.f32.mrf.mxu0
  %8927 = vmatprep.mubr.bf16.mxu0 0
  %8928 = vmatmul.mubr.bf16.gmra.mxu0 %v6298
  %v8929 = vpop.f32.mrf.mxu0
  %v8930 = vadd.f32 %v8865, %v8929
  %v8931 = vpop.f32.mrf.mxu0
  %v8932 = vpop.f32.mrf.mxu0
  %v8933 = vadd.f32 %v8868, %v8932
  %v8934 = vpop.f32.mrf.mxu0
  %8935 = vmatprep.mubr.bf16.mxu0 0
  %8936 = vmatmul.mubr.bf16.gmra.mxu0 %v6301
  %v8937 = vpop.f32.mrf.mxu0
  %v8938 = vadd.f32 %v8873, %v8937
  %v8939 = vpop.f32.mrf.mxu0
  %v8940 = vpop.f32.mrf.mxu0
  %v8941 = vadd.f32 %v8876, %v8940
  %v8942 = vpop.f32.mrf.mxu0
  %8943 = vmatprep.mubr.bf16.mxu0 0
  %8944 = vmatmul.mubr.bf16.gmra.mxu0 %v6304
  %v8945 = vpop.f32.mrf.mxu0
  %v8946 = vadd.f32 %v8881, %v8945
  %v8947 = vpop.f32.mrf.mxu0
  %v8948 = vpop.f32.mrf.mxu0
  %v8949 = vadd.f32 %v8884, %v8948
  %v8950 = vpop.f32.mrf.mxu0
  %8951 = vdwg.mxu0
  %v8952 = vadd.f32 %v8621, %v8922
  %v8953 = vadd.f32 %v8622, %v8925
  %v8954 = vadd.f32 %v8623, %v8930
  %v8955 = vadd.f32 %v8624, %v8933
  %v8956 = vadd.f32 %v8625, %v8938
  %v8957 = vadd.f32 %v8626, %v8941
  %v8958 = vadd.f32 %v8627, %v8946
  %v8959 = vadd.f32 %v8628, %v8949
  %s8960 = scalar_lea.vmem %s5, 1536
  %v8961 = vld [vmem:[%s8960] sm:$0xf]
  %v8962 = vld [vmem:[%s8960 + $0x4] sm:$0xf]
  %v8963 = vld [vmem:[%s8960 + $0x8] sm:$0xf]
  %v8964 = vld [vmem:[%s8960 + $0xc] sm:$0xf]
  %v8965 = vld [vmem:[%s8960 + $0x10] sm:$0xf]
  %v8966 = vld [vmem:[%s8960 + $0x14] sm:$0xf]
  %v8967 = vld [vmem:[%s8960 + $0x18] sm:$0xf]
  %v8968 = vld [vmem:[%s8960 + $0x1c] sm:$0xf]
  %v8969 = vld [vmem:[%s8960 + $0x20] sm:$0xf]
  %v8970 = vld [vmem:[%s8960 + $0x24] sm:$0xf]
  %v8971 = vld [vmem:[%s8960 + $0x28] sm:$0xf]
  %v8972 = vld [vmem:[%s8960 + $0x2c] sm:$0xf]
  %v8973 = vld [vmem:[%s8960 + $0x30] sm:$0xf]
  %v8974 = vld [vmem:[%s8960 + $0x34] sm:$0xf]
  %v8975 = vld [vmem:[%s8960 + $0x38] sm:$0xf]
  %v8976 = vld [vmem:[%s8960 + $0x3c] sm:$0xf]
  %v8977 = vld [vmem:[%s8960 + $0x40] sm:$0xf]
  %v8978 = vld [vmem:[%s8960 + $0x44] sm:$0xf]
  %v8979 = vld [vmem:[%s8960 + $0x48] sm:$0xf]
  %v8980 = vld [vmem:[%s8960 + $0x4c] sm:$0xf]
  %v8981 = vld [vmem:[%s8960 + $0x50] sm:$0xf]
  %v8982 = vld [vmem:[%s8960 + $0x54] sm:$0xf]
  %v8983 = vld [vmem:[%s8960 + $0x58] sm:$0xf]
  %v8984 = vld [vmem:[%s8960 + $0x5c] sm:$0xf]
  %v8985 = vld [vmem:[%s8960 + $0x60] sm:$0xf]
  %v8986 = vld [vmem:[%s8960 + $0x64] sm:$0xf]
  %v8987 = vld [vmem:[%s8960 + $0x68] sm:$0xf]
  %v8988 = vld [vmem:[%s8960 + $0x6c] sm:$0xf]
  %v8989 = vld [vmem:[%s8960 + $0x70] sm:$0xf]
  %v8990 = vld [vmem:[%s8960 + $0x74] sm:$0xf]
  %v8991 = vld [vmem:[%s8960 + $0x78] sm:$0xf]
  %v8992 = vld [vmem:[%s8960 + $0x7c] sm:$0xf]
  %v8993 = vld [vmem:[%s8960 + $0x80] sm:$0xf]
  %v8994 = vld [vmem:[%s8960 + $0x84] sm:$0xf]
  %v8995 = vld [vmem:[%s8960 + $0x88] sm:$0xf]
  %v8996 = vld [vmem:[%s8960 + $0x8c] sm:$0xf]
  %v8997 = vld [vmem:[%s8960 + $0x90] sm:$0xf]
  %v8998 = vld [vmem:[%s8960 + $0x94] sm:$0xf]
  %v8999 = vld [vmem:[%s8960 + $0x98] sm:$0xf]
  %v9000 = vld [vmem:[%s8960 + $0x9c] sm:$0xf]
  %v9001 = vld [vmem:[%s8960 + $0xa0] sm:$0xf]
  %v9002 = vld [vmem:[%s8960 + $0xa4] sm:$0xf]
  %v9003 = vld [vmem:[%s8960 + $0xa8] sm:$0xf]
  %v9004 = vld [vmem:[%s8960 + $0xac] sm:$0xf]
  %v9005 = vld [vmem:[%s8960 + $0xb0] sm:$0xf]
  %v9006 = vld [vmem:[%s8960 + $0xb4] sm:$0xf]
  %v9007 = vld [vmem:[%s8960 + $0xb8] sm:$0xf]
  %v9008 = vld [vmem:[%s8960 + $0xbc] sm:$0xf]
  %v9057 = vunpack.c.l.b16 %v8961
  %v9058 = vunpack.c.l.b16 %v8962
  %v9059 = vunpack.c.l.b16 %v8963
  %v9060 = vunpack.c.l.b16 %v8964
  %v9061 = vunpack.c.l.b16 %v8965
  %v9062 = vunpack.c.l.b16 %v8966
  %v9063 = vunpack.c.l.b16 %v8967
  %v9064 = vunpack.c.l.b16 %v8968
  %v9065 = vunpack.c.l.b16 %v8969
  %v9066 = vunpack.c.l.b16 %v8970
  %v9067 = vunpack.c.l.b16 %v8971
  %v9068 = vunpack.c.l.b16 %v8972
  %v9069 = vunpack.c.l.b16 %v8973
  %v9070 = vunpack.c.l.b16 %v8974
  %v9071 = vunpack.c.l.b16 %v8975
  %v9072 = vunpack.c.l.b16 %v8976
  %v9073 = vunpack.c.l.b16 %v8977
  %v9074 = vunpack.c.l.b16 %v8978
  %v9075 = vunpack.c.l.b16 %v8979
  %v9076 = vunpack.c.l.b16 %v8980
  %v9077 = vunpack.c.l.b16 %v8981
  %v9078 = vunpack.c.l.b16 %v8982
  %v9079 = vunpack.c.l.b16 %v8983
  %v9080 = vunpack.c.l.b16 %v8984
  %v9081 = vunpack.c.l.b16 %v8985
  %v9082 = vunpack.c.l.b16 %v8986
  %v9083 = vunpack.c.l.b16 %v8987
  %v9084 = vunpack.c.l.b16 %v8988
  %v9085 = vunpack.c.l.b16 %v8989
  %v9086 = vunpack.c.l.b16 %v8990
  %v9087 = vunpack.c.l.b16 %v8991
  %v9088 = vunpack.c.l.b16 %v8992
  %v9089 = vunpack.c.l.b16 %v8993
  %v9090 = vunpack.c.l.b16 %v8994
  %v9091 = vunpack.c.l.b16 %v8995
  %v9092 = vunpack.c.l.b16 %v8996
  %v9093 = vunpack.c.l.b16 %v8997
  %v9094 = vunpack.c.l.b16 %v8998
  %v9095 = vunpack.c.l.b16 %v8999
  %v9096 = vunpack.c.l.b16 %v9000
  %v9097 = vunpack.c.l.b16 %v9001
  %v9098 = vunpack.c.l.b16 %v9002
  %v9099 = vunpack.c.l.b16 %v9003
  %v9100 = vunpack.c.l.b16 %v9004
  %v9101 = vunpack.c.l.b16 %v9005
  %v9102 = vunpack.c.l.b16 %v9006
  %v9103 = vunpack.c.l.b16 %v9007
  %v9104 = vunpack.c.l.b16 %v9008
  %v9105 = vpack.c.b16 %v9058, %v9057
  %v9106 = vpack.c.b16 %v9060, %v9059
  %v9107 = vpack.c.b16 %v9062, %v9061
  %v9108 = vpack.c.b16 %v9064, %v9063
  %v9109 = vpack.c.b16 %v9066, %v9065
  %v9110 = vpack.c.b16 %v9068, %v9067
  %v9111 = vpack.c.b16 %v9070, %v9069
  %v9112 = vpack.c.b16 %v9072, %v9071
  %v9113 = vpack.c.b16 %v9074, %v9073
  %v9114 = vpack.c.b16 %v9076, %v9075
  %v9115 = vpack.c.b16 %v9078, %v9077
  %v9116 = vpack.c.b16 %v9080, %v9079
  %v9117 = vpack.c.b16 %v9082, %v9081
  %v9118 = vpack.c.b16 %v9084, %v9083
  %v9119 = vpack.c.b16 %v9086, %v9085
  %v9120 = vpack.c.b16 %v9088, %v9087
  %v9121 = vpack.c.b16 %v9090, %v9089
  %v9122 = vpack.c.b16 %v9092, %v9091
  %v9123 = vpack.c.b16 %v9094, %v9093
  %v9124 = vpack.c.b16 %v9096, %v9095
  %v9125 = vpack.c.b16 %v9098, %v9097
  %v9126 = vpack.c.b16 %v9100, %v9099
  %v9127 = vpack.c.b16 %v9102, %v9101
  %v9128 = vpack.c.b16 %v9104, %v9103
  %9153 = vmatprep.subr.bf16.mxu0 0
  %9154 = vmatpush1.bf16.msra.mxu0 %v9112
  %9155 = vmatprep.subr.bf16.mxu0 0
  %9156 = vmatpush1.bf16.msra.mxu0 %v9111
  %9157 = vmatprep.subr.bf16.mxu0 0
  %9158 = vmatpush1.bf16.msra.mxu0 %v9110
  %9159 = vmatprep.subr.bf16.mxu0 0
  %9160 = vmatpush1.bf16.msra.mxu0 %v9109
  %9161 = vmatprep.subr.bf16.mxu0 0
  %9162 = vmatpush1.bf16.msra.mxu0 %v9108
  %9163 = vmatprep.subr.bf16.mxu0 0
  %9164 = vmatpush1.bf16.msra.mxu0 %v9107
  %9165 = vmatprep.subr.bf16.mxu0 0
  %9166 = vmatpush1.bf16.msra.mxu0 %v9106
  %9167 = vmatprep.subr.bf16.mxu0 0
  %9168 = vmatpush1.bf16.msra.mxu0 %v9105
  %9169 = vmatprep.subr.bf16.mxu0 0
  %9170 = vmatpush2.bf16.msra.mxu0 %v9120
  %9171 = vmatprep.subr.bf16.mxu0 0
  %9172 = vmatpush2.bf16.msra.mxu0 %v9119
  %9173 = vmatprep.subr.bf16.mxu0 0
  %9174 = vmatpush2.bf16.msra.mxu0 %v9118
  %9175 = vmatprep.subr.bf16.mxu0 0
  %9176 = vmatpush2.bf16.msra.mxu0 %v9117
  %9177 = vmatprep.subr.bf16.mxu0 0
  %9178 = vmatpush2.bf16.msra.mxu0 %v9116
  %9179 = vmatprep.subr.bf16.mxu0 0
  %9180 = vmatpush2.bf16.msra.mxu0 %v9115
  %9181 = vmatprep.subr.bf16.mxu0 0
  %9182 = vmatpush2.bf16.msra.mxu0 %v9114
  %9183 = vmatprep.subr.bf16.mxu0 0
  %9184 = vmatpush2.bf16.msra.mxu0 %v9113
  %9185 = vmatprep.mubr.bf16.mxu0 %v6306
  %9186 = vmatmul.mubr.bf16.gmra.mxu0 %v6305
  %v9187 = vpop.f32.mrf.mxu0
  %v9188 = vadd.f32 0.0, %v9187
  %v9189 = vpop.f32.mrf.mxu0
  %v9190 = vpop.f32.mrf.mxu0
  %v9191 = vadd.f32 0.0, %v9190
  %v9192 = vpop.f32.mrf.mxu0
  %9193 = vmatprep.mubr.bf16.mxu0 %v6309
  %9194 = vmatmul.mubr.bf16.gmra.mxu0 %v6308
  %v9195 = vpop.f32.mrf.mxu0
  %v9196 = vadd.f32 0.0, %v9195
  %v9197 = vpop.f32.mrf.mxu0
  %v9198 = vpop.f32.mrf.mxu0
  %v9199 = vadd.f32 0.0, %v9198
  %v9200 = vpop.f32.mrf.mxu0
  %9201 = vmatprep.mubr.bf16.mxu0 %v6312
  %9202 = vmatmul.mubr.bf16.gmra.mxu0 %v6311
  %v9203 = vpop.f32.mrf.mxu0
  %v9204 = vadd.f32 0.0, %v9203
  %v9205 = vpop.f32.mrf.mxu0
  %v9206 = vpop.f32.mrf.mxu0
  %v9207 = vadd.f32 0.0, %v9206
  %v9208 = vpop.f32.mrf.mxu0
  %9209 = vmatprep.mubr.bf16.mxu0 %v6315
  %9210 = vmatmul.mubr.bf16.gmra.mxu0 %v6314
  %v9211 = vpop.f32.mrf.mxu0
  %v9212 = vadd.f32 0.0, %v9211
  %v9213 = vpop.f32.mrf.mxu0
  %v9214 = vpop.f32.mrf.mxu0
  %v9215 = vadd.f32 0.0, %v9214
  %v9216 = vpop.f32.mrf.mxu0
  %9217 = vdwg.mxu0
  %9218 = vmatprep.subr.bf16.mxu0 0
  %9219 = vmatpush1.bf16.msra.mxu0 %v9128
  %9220 = vmatprep.subr.bf16.mxu0 0
  %9221 = vmatpush1.bf16.msra.mxu0 %v9127
  %9222 = vmatprep.subr.bf16.mxu0 0
  %9223 = vmatpush1.bf16.msra.mxu0 %v9126
  %9224 = vmatprep.subr.bf16.mxu0 0
  %9225 = vmatpush1.bf16.msra.mxu0 %v9125
  %9226 = vmatprep.subr.bf16.mxu0 0
  %9227 = vmatpush1.bf16.msra.mxu0 %v9124
  %9228 = vmatprep.subr.bf16.mxu0 0
  %9229 = vmatpush1.bf16.msra.mxu0 %v9123
  %9230 = vmatprep.subr.bf16.mxu0 0
  %9231 = vmatpush1.bf16.msra.mxu0 %v9122
  %9232 = vmatprep.subr.bf16.mxu0 0
  %9233 = vmatpush1.bf16.msra.mxu0 %v9121
  %9234 = vmatprep.subr.bf16.mxu0 0
  %9235 = vmatpush2.bf16.msra.mxu0 0
  %9236 = vmatprep.subr.bf16.mxu0 0
  %9237 = vmatpush2.bf16.msra.mxu0 0
  %9238 = vmatprep.subr.bf16.mxu0 0
  %9239 = vmatpush2.bf16.msra.mxu0 0
  %9240 = vmatprep.subr.bf16.mxu0 0
  %9241 = vmatpush2.bf16.msra.mxu0 0
  %9242 = vmatprep.subr.bf16.mxu0 0
  %9243 = vmatpush2.bf16.msra.mxu0 0
  %9244 = vmatprep.subr.bf16.mxu0 0
  %9245 = vmatpush2.bf16.msra.mxu0 0
  %9246 = vmatprep.subr.bf16.mxu0 0
  %9247 = vmatpush2.bf16.msra.mxu0 0
  %9248 = vmatprep.subr.bf16.mxu0 0
  %9249 = vmatpush2.bf16.msra.mxu0 0
  %9250 = vmatprep.mubr.bf16.mxu0 0
  %9251 = vmatmul.mubr.bf16.gmra.mxu0 %v6307
  %v9252 = vpop.f32.mrf.mxu0
  %v9253 = vadd.f32 %v9188, %v9252
  %v9254 = vpop.f32.mrf.mxu0
  %v9255 = vpop.f32.mrf.mxu0
  %v9256 = vadd.f32 %v9191, %v9255
  %v9257 = vpop.f32.mrf.mxu0
  %9258 = vmatprep.mubr.bf16.mxu0 0
  %9259 = vmatmul.mubr.bf16.gmra.mxu0 %v6310
  %v9260 = vpop.f32.mrf.mxu0
  %v9261 = vadd.f32 %v9196, %v9260
  %v9262 = vpop.f32.mrf.mxu0
  %v9263 = vpop.f32.mrf.mxu0
  %v9264 = vadd.f32 %v9199, %v9263
  %v9265 = vpop.f32.mrf.mxu0
  %9266 = vmatprep.mubr.bf16.mxu0 0
  %9267 = vmatmul.mubr.bf16.gmra.mxu0 %v6313
  %v9268 = vpop.f32.mrf.mxu0
  %v9269 = vadd.f32 %v9204, %v9268
  %v9270 = vpop.f32.mrf.mxu0
  %v9271 = vpop.f32.mrf.mxu0
  %v9272 = vadd.f32 %v9207, %v9271
  %v9273 = vpop.f32.mrf.mxu0
  %9274 = vmatprep.mubr.bf16.mxu0 0
  %9275 = vmatmul.mubr.bf16.gmra.mxu0 %v6316
  %v9276 = vpop.f32.mrf.mxu0
  %v9277 = vadd.f32 %v9212, %v9276
  %v9278 = vpop.f32.mrf.mxu0
  %v9279 = vpop.f32.mrf.mxu0
  %v9280 = vadd.f32 %v9215, %v9279
  %v9281 = vpop.f32.mrf.mxu0
  %9282 = vdwg.mxu0
  %v9283 = vadd.f32 %v8952, %v9253
  %v9284 = vadd.f32 %v8953, %v9256
  %v9285 = vadd.f32 %v8954, %v9261
  %v9286 = vadd.f32 %v8955, %v9264
  %v9287 = vadd.f32 %v8956, %v9269
  %v9288 = vadd.f32 %v8957, %v9272
  %v9289 = vadd.f32 %v8958, %v9277
  %v9290 = vadd.f32 %v8959, %v9280
  %s9291 = scalar_lea.vmem %s5, 1728
  %v9292 = vld [vmem:[%s9291] sm:$0xf]
  %v9293 = vld [vmem:[%s9291 + $0x4] sm:$0xf]
  %v9294 = vld [vmem:[%s9291 + $0x8] sm:$0xf]
  %v9295 = vld [vmem:[%s9291 + $0xc] sm:$0xf]
  %v9296 = vld [vmem:[%s9291 + $0x10] sm:$0xf]
  %v9297 = vld [vmem:[%s9291 + $0x14] sm:$0xf]
  %v9298 = vld [vmem:[%s9291 + $0x18] sm:$0xf]
  %v9299 = vld [vmem:[%s9291 + $0x1c] sm:$0xf]
  %v9300 = vld [vmem:[%s9291 + $0x20] sm:$0xf]
  %v9301 = vld [vmem:[%s9291 + $0x24] sm:$0xf]
  %v9302 = vld [vmem:[%s9291 + $0x28] sm:$0xf]
  %v9303 = vld [vmem:[%s9291 + $0x2c] sm:$0xf]
  %v9304 = vld [vmem:[%s9291 + $0x30] sm:$0xf]
  %v9305 = vld [vmem:[%s9291 + $0x34] sm:$0xf]
  %v9306 = vld [vmem:[%s9291 + $0x38] sm:$0xf]
  %v9307 = vld [vmem:[%s9291 + $0x3c] sm:$0xf]
  %v9308 = vld [vmem:[%s9291 + $0x40] sm:$0xf]
  %v9309 = vld [vmem:[%s9291 + $0x44] sm:$0xf]
  %v9310 = vld [vmem:[%s9291 + $0x48] sm:$0xf]
  %v9311 = vld [vmem:[%s9291 + $0x4c] sm:$0xf]
  %v9312 = vld [vmem:[%s9291 + $0x50] sm:$0xf]
  %v9313 = vld [vmem:[%s9291 + $0x54] sm:$0xf]
  %v9314 = vld [vmem:[%s9291 + $0x58] sm:$0xf]
  %v9315 = vld [vmem:[%s9291 + $0x5c] sm:$0xf]
  %v9316 = vld [vmem:[%s9291 + $0x60] sm:$0xf]
  %v9317 = vld [vmem:[%s9291 + $0x64] sm:$0xf]
  %v9318 = vld [vmem:[%s9291 + $0x68] sm:$0xf]
  %v9319 = vld [vmem:[%s9291 + $0x6c] sm:$0xf]
  %v9320 = vld [vmem:[%s9291 + $0x70] sm:$0xf]
  %v9321 = vld [vmem:[%s9291 + $0x74] sm:$0xf]
  %v9322 = vld [vmem:[%s9291 + $0x78] sm:$0xf]
  %v9323 = vld [vmem:[%s9291 + $0x7c] sm:$0xf]
  %v9324 = vld [vmem:[%s9291 + $0x80] sm:$0xf]
  %v9325 = vld [vmem:[%s9291 + $0x84] sm:$0xf]
  %v9326 = vld [vmem:[%s9291 + $0x88] sm:$0xf]
  %v9327 = vld [vmem:[%s9291 + $0x8c] sm:$0xf]
  %v9328 = vld [vmem:[%s9291 + $0x90] sm:$0xf]
  %v9329 = vld [vmem:[%s9291 + $0x94] sm:$0xf]
  %v9330 = vld [vmem:[%s9291 + $0x98] sm:$0xf]
  %v9331 = vld [vmem:[%s9291 + $0x9c] sm:$0xf]
  %v9332 = vld [vmem:[%s9291 + $0xa0] sm:$0xf]
  %v9333 = vld [vmem:[%s9291 + $0xa4] sm:$0xf]
  %v9334 = vld [vmem:[%s9291 + $0xa8] sm:$0xf]
  %v9335 = vld [vmem:[%s9291 + $0xac] sm:$0xf]
  %v9336 = vld [vmem:[%s9291 + $0xb0] sm:$0xf]
  %v9337 = vld [vmem:[%s9291 + $0xb4] sm:$0xf]
  %v9338 = vld [vmem:[%s9291 + $0xb8] sm:$0xf]
  %v9339 = vld [vmem:[%s9291 + $0xbc] sm:$0xf]
  %v9388 = vunpack.c.l.b16 %v9292
  %v9389 = vunpack.c.l.b16 %v9293
  %v9390 = vunpack.c.l.b16 %v9294
  %v9391 = vunpack.c.l.b16 %v9295
  %v9392 = vunpack.c.l.b16 %v9296
  %v9393 = vunpack.c.l.b16 %v9297
  %v9394 = vunpack.c.l.b16 %v9298
  %v9395 = vunpack.c.l.b16 %v9299
  %v9396 = vunpack.c.l.b16 %v9300
  %v9397 = vunpack.c.l.b16 %v9301
  %v9398 = vunpack.c.l.b16 %v9302
  %v9399 = vunpack.c.l.b16 %v9303
  %v9400 = vunpack.c.l.b16 %v9304
  %v9401 = vunpack.c.l.b16 %v9305
  %v9402 = vunpack.c.l.b16 %v9306
  %v9403 = vunpack.c.l.b16 %v9307
  %v9404 = vunpack.c.l.b16 %v9308
  %v9405 = vunpack.c.l.b16 %v9309
  %v9406 = vunpack.c.l.b16 %v9310
  %v9407 = vunpack.c.l.b16 %v9311
  %v9408 = vunpack.c.l.b16 %v9312
  %v9409 = vunpack.c.l.b16 %v9313
  %v9410 = vunpack.c.l.b16 %v9314
  %v9411 = vunpack.c.l.b16 %v9315
  %v9412 = vunpack.c.l.b16 %v9316
  %v9413 = vunpack.c.l.b16 %v9317
  %v9414 = vunpack.c.l.b16 %v9318
  %v9415 = vunpack.c.l.b16 %v9319
  %v9416 = vunpack.c.l.b16 %v9320
  %v9417 = vunpack.c.l.b16 %v9321
  %v9418 = vunpack.c.l.b16 %v9322
  %v9419 = vunpack.c.l.b16 %v9323
  %v9420 = vunpack.c.l.b16 %v9324
  %v9421 = vunpack.c.l.b16 %v9325
  %v9422 = vunpack.c.l.b16 %v9326
  %v9423 = vunpack.c.l.b16 %v9327
  %v9424 = vunpack.c.l.b16 %v9328
  %v9425 = vunpack.c.l.b16 %v9329
  %v9426 = vunpack.c.l.b16 %v9330
  %v9427 = vunpack.c.l.b16 %v9331
  %v9428 = vunpack.c.l.b16 %v9332
  %v9429 = vunpack.c.l.b16 %v9333
  %v9430 = vunpack.c.l.b16 %v9334
  %v9431 = vunpack.c.l.b16 %v9335
  %v9432 = vunpack.c.l.b16 %v9336
  %v9433 = vunpack.c.l.b16 %v9337
  %v9434 = vunpack.c.l.b16 %v9338
  %v9435 = vunpack.c.l.b16 %v9339
  %v9436 = vpack.c.b16 %v9389, %v9388
  %v9437 = vpack.c.b16 %v9391, %v9390
  %v9438 = vpack.c.b16 %v9393, %v9392
  %v9439 = vpack.c.b16 %v9395, %v9394
  %v9440 = vpack.c.b16 %v9397, %v9396
  %v9441 = vpack.c.b16 %v9399, %v9398
  %v9442 = vpack.c.b16 %v9401, %v9400
  %v9443 = vpack.c.b16 %v9403, %v9402
  %v9444 = vpack.c.b16 %v9405, %v9404
  %v9445 = vpack.c.b16 %v9407, %v9406
  %v9446 = vpack.c.b16 %v9409, %v9408
  %v9447 = vpack.c.b16 %v9411, %v9410
  %v9448 = vpack.c.b16 %v9413, %v9412
  %v9449 = vpack.c.b16 %v9415, %v9414
  %v9450 = vpack.c.b16 %v9417, %v9416
  %v9451 = vpack.c.b16 %v9419, %v9418
  %v9452 = vpack.c.b16 %v9421, %v9420
  %v9453 = vpack.c.b16 %v9423, %v9422
  %v9454 = vpack.c.b16 %v9425, %v9424
  %v9455 = vpack.c.b16 %v9427, %v9426
  %v9456 = vpack.c.b16 %v9429, %v9428
  %v9457 = vpack.c.b16 %v9431, %v9430
  %v9458 = vpack.c.b16 %v9433, %v9432
  %v9459 = vpack.c.b16 %v9435, %v9434
  %9484 = vmatprep.subr.bf16.mxu0 0
  %9485 = vmatpush1.bf16.msra.mxu0 %v9443
  %9486 = vmatprep.subr.bf16.mxu0 0
  %9487 = vmatpush1.bf16.msra.mxu0 %v9442
  %9488 = vmatprep.subr.bf16.mxu0 0
  %9489 = vmatpush1.bf16.msra.mxu0 %v9441
  %9490 = vmatprep.subr.bf16.mxu0 0
  %9491 = vmatpush1.bf16.msra.mxu0 %v9440
  %9492 = vmatprep.subr.bf16.mxu0 0
  %9493 = vmatpush1.bf16.msra.mxu0 %v9439
  %9494 = vmatprep.subr.bf16.mxu0 0
  %9495 = vmatpush1.bf16.msra.mxu0 %v9438
  %9496 = vmatprep.subr.bf16.mxu0 0
  %9497 = vmatpush1.bf16.msra.mxu0 %v9437
  %9498 = vmatprep.subr.bf16.mxu0 0
  %9499 = vmatpush1.bf16.msra.mxu0 %v9436
  %9500 = vmatprep.subr.bf16.mxu0 0
  %9501 = vmatpush2.bf16.msra.mxu0 %v9451
  %9502 = vmatprep.subr.bf16.mxu0 0
  %9503 = vmatpush2.bf16.msra.mxu0 %v9450
  %9504 = vmatprep.subr.bf16.mxu0 0
  %9505 = vmatpush2.bf16.msra.mxu0 %v9449
  %9506 = vmatprep.subr.bf16.mxu0 0
  %9507 = vmatpush2.bf16.msra.mxu0 %v9448
  %9508 = vmatprep.subr.bf16.mxu0 0
  %9509 = vmatpush2.bf16.msra.mxu0 %v9447
  %9510 = vmatprep.subr.bf16.mxu0 0
  %9511 = vmatpush2.bf16.msra.mxu0 %v9446
  %9512 = vmatprep.subr.bf16.mxu0 0
  %9513 = vmatpush2.bf16.msra.mxu0 %v9445
  %9514 = vmatprep.subr.bf16.mxu0 0
  %9515 = vmatpush2.bf16.msra.mxu0 %v9444
  %9516 = vmatprep.mubr.bf16.mxu0 %v6318
  %9517 = vmatmul.mubr.bf16.gmra.mxu0 %v6317
  %v9518 = vpop.f32.mrf.mxu0
  %v9519 = vadd.f32 0.0, %v9518
  %v9520 = vpop.f32.mrf.mxu0
  %v9521 = vpop.f32.mrf.mxu0
  %v9522 = vadd.f32 0.0, %v9521
  %v9523 = vpop.f32.mrf.mxu0
  %9524 = vmatprep.mubr.bf16.mxu0 %v6321
  %9525 = vmatmul.mubr.bf16.gmra.mxu0 %v6320
  %v9526 = vpop.f32.mrf.mxu0
  %v9527 = vadd.f32 0.0, %v9526
  %v9528 = vpop.f32.mrf.mxu0
  %v9529 = vpop.f32.mrf.mxu0
  %v9530 = vadd.f32 0.0, %v9529
  %v9531 = vpop.f32.mrf.mxu0
  %9532 = vmatprep.mubr.bf16.mxu0 %v6324
  %9533 = vmatmul.mubr.bf16.gmra.mxu0 %v6323
  %v9534 = vpop.f32.mrf.mxu0
  %v9535 = vadd.f32 0.0, %v9534
  %v9536 = vpop.f32.mrf.mxu0
  %v9537 = vpop.f32.mrf.mxu0
  %v9538 = vadd.f32 0.0, %v9537
  %v9539 = vpop.f32.mrf.mxu0
  %9540 = vmatprep.mubr.bf16.mxu0 %v6327
  %9541 = vmatmul.mubr.bf16.gmra.mxu0 %v6326
  %v9542 = vpop.f32.mrf.mxu0
  %v9543 = vadd.f32 0.0, %v9542
  %v9544 = vpop.f32.mrf.mxu0
  %v9545 = vpop.f32.mrf.mxu0
  %v9546 = vadd.f32 0.0, %v9545
  %v9547 = vpop.f32.mrf.mxu0
  %9548 = vdwg.mxu0
  %9549 = vmatprep.subr.bf16.mxu0 0
  %9550 = vmatpush1.bf16.msra.mxu0 %v9459
  %9551 = vmatprep.subr.bf16.mxu0 0
  %9552 = vmatpush1.bf16.msra.mxu0 %v9458
  %9553 = vmatprep.subr.bf16.mxu0 0
  %9554 = vmatpush1.bf16.msra.mxu0 %v9457
  %9555 = vmatprep.subr.bf16.mxu0 0
  %9556 = vmatpush1.bf16.msra.mxu0 %v9456
  %9557 = vmatprep.subr.bf16.mxu0 0
  %9558 = vmatpush1.bf16.msra.mxu0 %v9455
  %9559 = vmatprep.subr.bf16.mxu0 0
  %9560 = vmatpush1.bf16.msra.mxu0 %v9454
  %9561 = vmatprep.subr.bf16.mxu0 0
  %9562 = vmatpush1.bf16.msra.mxu0 %v9453
  %9563 = vmatprep.subr.bf16.mxu0 0
  %9564 = vmatpush1.bf16.msra.mxu0 %v9452
  %9565 = vmatprep.subr.bf16.mxu0 0
  %9566 = vmatpush2.bf16.msra.mxu0 0
  %9567 = vmatprep.subr.bf16.mxu0 0
  %9568 = vmatpush2.bf16.msra.mxu0 0
  %9569 = vmatprep.subr.bf16.mxu0 0
  %9570 = vmatpush2.bf16.msra.mxu0 0
  %9571 = vmatprep.subr.bf16.mxu0 0
  %9572 = vmatpush2.bf16.msra.mxu0 0
  %9573 = vmatprep.subr.bf16.mxu0 0
  %9574 = vmatpush2.bf16.msra.mxu0 0
  %9575 = vmatprep.subr.bf16.mxu0 0
  %9576 = vmatpush2.bf16.msra.mxu0 0
  %9577 = vmatprep.subr.bf16.mxu0 0
  %9578 = vmatpush2.bf16.msra.mxu0 0
  %9579 = vmatprep.subr.bf16.mxu0 0
  %9580 = vmatpush2.bf16.msra.mxu0 0
  %9581 = vmatprep.mubr.bf16.mxu0 0
  %9582 = vmatmul.mubr.bf16.gmra.mxu0 %v6319
  %v9583 = vpop.f32.mrf.mxu0
  %v9584 = vadd.f32 %v9519, %v9583
  %v9585 = vpop.f32.mrf.mxu0
  %v9586 = vpop.f32.mrf.mxu0
  %v9587 = vadd.f32 %v9522, %v9586
  %v9588 = vpop.f32.mrf.mxu0
  %9589 = vmatprep.mubr.bf16.mxu0 0
  %9590 = vmatmul.mubr.bf16.gmra.mxu0 %v6322
  %v9591 = vpop.f32.mrf.mxu0
  %v9592 = vadd.f32 %v9527, %v9591
  %v9593 = vpop.f32.mrf.mxu0
  %v9594 = vpop.f32.mrf.mxu0
  %v9595 = vadd.f32 %v9530, %v9594
  %v9596 = vpop.f32.mrf.mxu0
  %9597 = vmatprep.mubr.bf16.mxu0 0
  %9598 = vmatmul.mubr.bf16.gmra.mxu0 %v6325
  %v9599 = vpop.f32.mrf.mxu0
  %v9600 = vadd.f32 %v9535, %v9599
  %v9601 = vpop.f32.mrf.mxu0
  %v9602 = vpop.f32.mrf.mxu0
  %v9603 = vadd.f32 %v9538, %v9602
  %v9604 = vpop.f32.mrf.mxu0
  %9605 = vmatprep.mubr.bf16.mxu0 0
  %9606 = vmatmul.mubr.bf16.gmra.mxu0 %v6328
  %v9607 = vpop.f32.mrf.mxu0
  %v9608 = vadd.f32 %v9543, %v9607
  %v9609 = vpop.f32.mrf.mxu0
  %v9610 = vpop.f32.mrf.mxu0
  %v9611 = vadd.f32 %v9546, %v9610
  %v9612 = vpop.f32.mrf.mxu0
  %9613 = vdwg.mxu0
  %v9614 = vadd.f32 %v9283, %v9584
  %v9615 = vadd.f32 %v9284, %v9587
  %v9616 = vadd.f32 %v9285, %v9592
  %v9617 = vadd.f32 %v9286, %v9595
  %v9618 = vadd.f32 %v9287, %v9600
  %v9619 = vadd.f32 %v9288, %v9603
  %v9620 = vadd.f32 %v9289, %v9608
  %v9621 = vadd.f32 %v9290, %v9611
  %v9622 = vld [vmem:[%s6] sm:$0x1]
  %v9624 = vlaneseq
  %v9625 = vshrl.u32 %v9624, 7
  %v9626 = vsub.s32 0, %v9625
  %v9627 = vrot.slane %v9622, %v9626
  %v9629 = vadd.f32 %v9614, %v9627
  %v9630 = vadd.f32 %v9615, %v9627
  %v9631 = vadd.f32 %v9616, %v9627
  %v9632 = vadd.f32 %v9617, %v9627
  %v9633 = vadd.f32 %v9618, %v9627
  %v9634 = vadd.f32 %v9619, %v9627
  %v9635 = vadd.f32 %v9620, %v9627
  %v9636 = vadd.f32 %v9621, %v9627
  %v9637 = vmax.f32 %v9629, 0.0
  %v9638 = vmax.f32 %v9630, 0.0
  %v9639 = vmax.f32 %v9631, 0.0
  %v9640 = vmax.f32 %v9632, 0.0
  %v9641 = vmax.f32 %v9633, 0.0
  %v9642 = vmax.f32 %v9634, 0.0
  %v9643 = vmax.f32 %v9635, 0.0
  %v9644 = vmax.f32 %v9636, 0.0
  %v9645 = vpack.c.bf16 %v9638, %v9637
  %v9646 = vpack.c.bf16 %v9640, %v9639
  %v9647 = vpack.c.bf16 %v9642, %v9641
  %v9648 = vpack.c.bf16 %v9644, %v9643
  %v9649 = vld [vmem:[%s7] sm:$0xf]
  %v9650 = vld [vmem:[%s7 + $0x4] sm:$0xf]
  %v9651 = vld [vmem:[%s7 + $0x8] sm:$0xf]
  %v9652 = vld [vmem:[%s7 + $0xc] sm:$0xf]
  %v9653 = vld [vmem:[%s7 + $0x10] sm:$0xf]
  %v9654 = vld [vmem:[%s7 + $0x14] sm:$0xf]
  %v9655 = vld [vmem:[%s7 + $0x18] sm:$0xf]
  %v9656 = vld [vmem:[%s7 + $0x1c] sm:$0xf]
  %v9657 = vld [vmem:[%s8] sm:$0x1]
  %v9659 = vlaneseq
  %v9660 = vshrl.u32 %v9659, 7
  %v9661 = vsub.s32 0, %v9660
  %v9662 = vrot.slane %v9657, %v9661
  %v9672 = vunpack.c.l.b16 %v9649
  %v9673 = vunpack.c.l.b16 %v9650
  %v9674 = vunpack.c.l.b16 %v9651
  %v9675 = vunpack.c.l.b16 %v9652
  %v9676 = vunpack.c.l.b16 %v9653
  %v9677 = vunpack.c.l.b16 %v9654
  %v9678 = vunpack.c.l.b16 %v9655
  %v9679 = vunpack.c.l.b16 %v9656
  %v9680 = vpack.c.b16 %v9673, %v9672
  %v9681 = vpack.c.b16 %v9675, %v9674
  %v9682 = vpack.c.b16 %v9677, %v9676
  %v9683 = vpack.c.b16 %v9679, %v9678
  %v9689 = vsel %vm2557, %v9645, 0
  %v9692 = vsel %vm2557, %v9646, 0
  %v9695 = vsel %vm2557, %v9647, 0
  %v9698 = vsel %vm2557, %v9648, 0
  %9700 = vmatprep.subr.bf16.mxu0 0
  %9701 = vmatpush1.bf16.msra.mxu0 0
  %9702 = vmatprep.subr.bf16.mxu0 0
  %9703 = vmatpush1.bf16.msra.mxu0 0
  %9704 = vmatprep.subr.bf16.mxu0 0
  %9705 = vmatpush1.bf16.msra.mxu0 0
  %9706 = vmatprep.subr.bf16.mxu0 0
  %9707 = vmatpush1.bf16.msra.mxu0 0
  %9708 = vmatprep.subr.bf16.mxu0 0
  %9709 = vmatpush1.bf16.msra.mxu0 %v9683
  %9710 = vmatprep.subr.bf16.mxu0 0
  %9711 = vmatpush1.bf16.msra.mxu0 %v9682
  %9712 = vmatprep.subr.bf16.mxu0 0
  %9713 = vmatpush1.bf16.msra.mxu0 %v9681
  %9714 = vmatprep.subr.bf16.mxu0 0
  %9715 = vmatpush1.bf16.msra.mxu0 %v9680
  %9716 = vmatprep.subr.bf16.mxu0 0
  %9717 = vmatpush2.bf16.msra.mxu0 0
  %9718 = vmatprep.subr.bf16.mxu0 0
  %9719 = vmatpush2.bf16.msra.mxu0 0
  %9720 = vmatprep.subr.bf16.mxu0 0
  %9721 = vmatpush2.bf16.msra.mxu0 0
  %9722 = vmatprep.subr.bf16.mxu0 0
  %9723 = vmatpush2.bf16.msra.mxu0 0
  %9724 = vmatprep.subr.bf16.mxu0 0
  %9725 = vmatpush2.bf16.msra.mxu0 0
  %9726 = vmatprep.subr.bf16.mxu0 0
  %9727 = vmatpush2.bf16.msra.mxu0 0
  %9728 = vmatprep.subr.bf16.mxu0 0
  %9729 = vmatpush2.bf16.msra.mxu0 0
  %9730 = vmatprep.subr.bf16.mxu0 0
  %9731 = vmatpush2.bf16.msra.mxu0 0
  %9732 = vmatprep.mubr.bf16.mxu0 0
  %9733 = vmatmul.mubr.bf16.gmra.mxu0 %v9689
  %v9734 = vpop.f32.mrf.mxu0
  %v9735 = vadd.f32 %v9662, %v9734
  %v9736 = vpop.f32.mrf.mxu0
  %v9737 = vpop.f32.mrf.mxu0
  %v9738 = vadd.f32 %v9662, %v9737
  %v9739 = vpop.f32.mrf.mxu0
  %9740 = vmatprep.mubr.bf16.mxu0 0
  %9741 = vmatmul.mubr.bf16.gmra.mxu0 %v9692
  %v9742 = vpop.f32.mrf.mxu0
  %v9743 = vadd.f32 %v9662, %v9742
  %v9744 = vpop.f32.mrf.mxu0
  %v9745 = vpop.f32.mrf.mxu0
  %v9746 = vadd.f32 %v9662, %v9745
  %v9747 = vpop.f32.mrf.mxu0
  %9748 = vmatprep.mubr.bf16.mxu0 0
  %9749 = vmatmul.mubr.bf16.gmra.mxu0 %v9695
  %v9750 = vpop.f32.mrf.mxu0
  %v9751 = vadd.f32 %v9662, %v9750
  %v9752 = vpop.f32.mrf.mxu0
  %v9753 = vpop.f32.mrf.mxu0
  %v9754 = vadd.f32 %v9662, %v9753
  %v9755 = vpop.f32.mrf.mxu0
  %9756 = vmatprep.mubr.bf16.mxu0 0
  %9757 = vmatmul.mubr.bf16.gmra.mxu0 %v9698
  %v9758 = vpop.f32.mrf.mxu0
  %v9759 = vadd.f32 %v9662, %v9758
  %v9760 = vpop.f32.mrf.mxu0
  %v9761 = vpop.f32.mrf.mxu0
  %v9762 = vadd.f32 %v9662, %v9761
  %v9763 = vpop.f32.mrf.mxu0
  %9764 = vdwg.mxu0
  %9765 = vst [vmem:[%s9] sm:$0xff] %v9735
  %9766 = vst [vmem:[%s9 + $0x8] sm:$0xff] %v9738
  %9767 = vst [vmem:[%s9 + $0x10] sm:$0xff] %v9743
  %9768 = vst [vmem:[%s9 + $0x18] sm:$0xff] %v9746
  %9769 = vst [vmem:[%s9 + $0x20] sm:$0xff] %v9751
  %9770 = vst [vmem:[%s9 + $0x28] sm:$0xff] %v9754
  %9771 = vst [vmem:[%s9 + $0x30] sm:$0xff] %v9759
  %9772 = vst [vmem:[%s9 + $0x38] sm:$0xff] %v9762
  // Predicated region
  $region38: #{forward.1} parent=0 // pred_check
    _
  $region39: #{forward.1} parent=0 // pred_check_branch
    %9774 = sbr.rel (0) target = $region41
  $region40: #{forward.1} parent=0 // pred_region
    _
  $region41: #{forward.1} parent=0 // pred_fallthru
    _
  // Predicated region
  $region42: #{forward.1} parent=0 // pred_check
    _
  $region43: #{forward.1} parent=0 // pred_check_branch
    %9776 = sbr.rel (0) target = $region45
  $region44: #{forward.1} parent=0 // pred_region
    _
  $region45: #{forward.1} parent=0 // pred_fallthru
    _

</llo_original>
